<compile_context>
chip_gen: v7x
topology: tpu7x:2x2x1
jax: 0.10.0
libtpu: 0.0.40
codegen_flags: <defaults>
</compile_context>

<pallas_src>
import numpy as np
import jax
import jax.numpy as jnp
from jax.experimental import pallas as pl
from jax.experimental.pallas import tpu as pltpu

LEAKY_RELU_GAIN = float(np.sqrt(2.0 / (1.0 + 0.2 ** 2)))


# ----------------------- host-side constant matrices ------------------------ #
def _shift_mats(H, W):
    """(9, N, N) tap-selection matrices: (act @ S[tap]) realizes the shifted /
    zero-padded read of a 3x3 'same' conv entirely on the MXU (no rolls/slices)."""
    N = H * W
    S = np.zeros((9, N, N), np.float32)
    for dy in range(3):
        for dx in range(3):
            t = dy * 3 + dx
            for y in range(H):
                sy = y + dy - 1
                if not (0 <= sy < H):
                    continue
                for x in range(W):
                    sx = x + dx - 1
                    if 0 <= sx < W:
                        S[t, sy * W + sx, y * W + x] = 1.0
    return S


def _pool_mat(H, W):
    """(N, N/4) matrix: act @ P == AvgPool2d(kernel=2, stride=2) in (C, HW) layout."""
    N = H * W
    Ho, Wo = H // 2, W // 2
    P = np.zeros((N, Ho * Wo), np.float32)
    for y in range(H):
        for x in range(W):
            P[y * W + x, (y // 2) * Wo + (x // 2)] = 0.25
    return P


# ------------------------------ in-kernel ops -------------------------------- #
def _leaky(z):
    return jnp.where(z > 0, z, 0.2 * z)


def _conv3x3_same(x, w_ref, b_ref, s_ref):
    """3x3 / stride 1 / pad 1 conv in (Cin, N) layout.
    w_ref: (3, 3, Cout, Cin) [ky, kx, out, in], b_ref: (Cout, 1),
    s_ref: (9, N, N) tap-selection matrices."""
    Cout = w_ref.shape[2]
    N = x.shape[1]
    acc = jnp.zeros((Cout, N), jnp.float32)
    for dy in range(3):
        for dx in range(3):
            xs = jnp.dot(x, s_ref[dy * 3 + dx],
                         preferred_element_type=jnp.float32)        # (Cin, N)
            acc = acc + jnp.dot(w_ref[dy, dx], xs,
                                preferred_element_type=jnp.float32)  # (Cout, N)
    return acc + b_ref[...]


def _disc_conv(h, w1_ref, b1_ref, w2_ref, b2_ref, s_ref, p_ref):
    """Disc_Conv: WS -> conv3x3(Cin->Cin) -> LReLU -> WS -> conv3x3(Cin->Cout)
    -> LReLU -> AvgPool2d(2,2).  h: (Cin, N) -> (Cout, N//4)."""
    Cin = w1_ref.shape[3]
    ws = LEAKY_RELU_GAIN / np.sqrt(Cin * 9.0)        # Weight_Scaling(Cin*3*3, gain)
    y = _leaky(_conv3x3_same(h * ws, w1_ref, b1_ref, s_ref))
    y = _leaky(_conv3x3_same(y * ws, w2_ref, b2_ref, s_ref))
    return jnp.dot(y, p_ref[...], preferred_element_type=jnp.float32)


def _non_local(h, wq_ref, bq_ref, wk_ref, bk_ref, wv_ref, bv_ref,
               wsa_ref, bsa_ref, gamma_ref):
    """Non_Local self-attention block (residual included), (C, N) layout."""
    C = h.shape[0]
    Ci = wq_ref.shape[0]
    xs = h * (1.0 / np.sqrt(C))                       # Weight_Scaling(C*1*1, 1)
    q = jnp.dot(wq_ref[...], xs, preferred_element_type=jnp.float32) + bq_ref[...]
    k = jnp.dot(wk_ref[...], xs, preferred_element_type=jnp.float32) + bk_ref[...]
    v = jnp.dot(wv_ref[...], xs, preferred_element_type=jnp.float32) + bv_ref[...]
    logits = jnp.dot(q.T, k, preferred_element_type=jnp.float32)     # (N, N)
    logits = logits - jnp.max(logits, axis=-1, keepdims=True)
    e = jnp.exp(logits)
    attn = e / jnp.sum(e, axis=-1, keepdims=True)
    # sa[c, i] = sum_j v[c, j] * attn[i, j]   (== v @ attn^T)
    sa = jax.lax.dot_general(v, attn, (((1,), (1,)), ((), ())),
                             preferred_element_type=jnp.float32)     # (Ci, N)
    sa = sa * (1.0 / np.sqrt(Ci))                     # Weight_Scaling(C//4, 1)
    sa = jnp.dot(wsa_ref[...], sa, preferred_element_type=jnp.float32) + bsa_ref[...]
    return gamma_ref[0, 0] * sa + h


# ------------------------------ Pallas kernels ------------------------------- #
def _disc_body_kernel(x_ref, s0_ref, p0_ref, s1_ref, p1_ref,
                      w0_ref, b0_ref,
                      c1w1_ref, c1b1_ref, c1w2_ref, c1b2_ref,
                      wq_ref, bq_ref, wk_ref, bk_ref, wv_ref, bv_ref,
                      wsa_ref, bsa_ref, gamma_ref,
                      c2w1_ref, c2b1_ref, c2w2_ref, c2b2_ref,
                      o_ref):
    """Per-batch-element trunk: stem 1x1 conv, Disc_Conv(C0->C1), Non_Local(C1),
    Disc_Conv(C1->C2).  Everything stays in VMEM in (C, HW) layout."""
    x = x_ref[0]                                      # (3, H*W)

    ws0 = LEAKY_RELU_GAIN / np.sqrt(3.0)              # Weight_Scaling(3*1*1, gain)
    h = jnp.dot(w0_ref[...], x * ws0, preferred_element_type=jnp.float32) + b0_ref[...]
    h = _leaky(h)                                     # (C0, H*W)

    h = _disc_conv(h, c1w1_ref, c1b1_ref, c1w2_ref, c1b2_ref, s0_ref, p0_ref)
    h = _non_local(h, wq_ref, bq_ref, wk_ref, bk_ref, wv_ref, bv_ref,
                   wsa_ref, bsa_ref, gamma_ref)
    h = _disc_conv(h, c2w1_ref, c2b1_ref, c2w2_ref, c2b2_ref, s1_ref, p1_ref)

    o_ref[0] = h                                      # (C2, (H//4)*(W//4))


def _disc_head_kernel(x_ref, s_ref, w3_ref, b3_ref, w4_ref, b4_ref,
                      w5_ref, b5_ref, o_ref):
    """Cross-batch head: Minibatch_Stddev + 3x3 conv + 4x4 valid conv + Linear."""
    B, C, N = x_ref.shape
    x = x_ref[...]                                    # (B, C, N)

    # Minibatch_Stddev: unbiased std over batch, mean over channels, concat.
    mean_b = jnp.mean(x, axis=0, keepdims=True)                   # (1, C, N)
    var_b = jnp.sum((x - mean_b) ** 2, axis=0) / (B - 1)          # (C, N)
    stat = jnp.mean(jnp.sqrt(var_b), axis=0, keepdims=True)       # (1, N)

    ws3 = LEAKY_RELU_GAIN / np.sqrt((C + 1) * 9.0)    # Weight_Scaling((C+1)*3*3)
    ws4 = LEAKY_RELU_GAIN / np.sqrt(C * float(N))     # Weight_Scaling(C*4*4), N == 16
    ws5 = 1.0 / np.sqrt(C)                            # Weight_Scaling(C, 1)

    outs = []
    for b in range(B):
        xb = jnp.concatenate([x[b], stat], axis=0) * ws3          # (C+1, N)
        y = _leaky(_conv3x3_same(xb, w3_ref, b3_ref, s_ref))      # (C, N)
        y = y * ws4
        # 4x4 'valid' conv on a 4x4 map == full contraction over (channel, pixel).
        acc = jnp.zeros((C, 1), jnp.float32)
        for p in range(N):
            acc = acc + jnp.dot(w4_ref[p], y[:, p:p + 1],
                                preferred_element_type=jnp.float32)
        z = _leaky(acc + b4_ref[...])                              # (C, 1)
        o = jnp.dot(w5_ref[...], z * ws5,
                    preferred_element_type=jnp.float32) + b5_ref[...]   # (1, 1)
        outs.append(o)
    o_ref[...] = jnp.concatenate(outs, axis=0)        # (B, 1)


# --------------------------------- wrapper ----------------------------------- #
def _full_spec(shape):
    zeros = (0,) * len(shape)
    return pl.BlockSpec(shape, lambda *_: zeros)


def discriminator_forward(x, params):
    """x: (B, 3, H, W) float32 NCHW -> (B, 1) critic scores."""
    B, Cin, H, W = x.shape
    assert Cin == 3 and B >= 2, "need RGB input and batch >= 2 (Minibatch_Stddev)"
    C2 = params["dc2_w2"].shape[2]
    Hh, Wh = H // 2, W // 2
    Hq, Wq = H // 4, W // 4
    assert (Hq, Wq) == (4, 4), "disc_last_size must be 4 (Flatten -> Linear)"

    # Host-precomputed conv-tap / pooling matrices (become device constants).
    s0 = jnp.asarray(_shift_mats(H, W))               # (9, HW, HW)
    p0 = jnp.asarray(_pool_mat(H, W))                 # (HW, HW/4)
    s1 = jnp.asarray(_shift_mats(Hh, Wh))
    p1 = jnp.asarray(_pool_mat(Hh, Wh))
    s2 = jnp.asarray(_shift_mats(Hq, Wq))

    x_flat = x.reshape(B, Cin, H * W).astype(jnp.float32)   # pixels on lanes

    body_params = (params["stem_w"], params["stem_b"],
                   params["dc1_w1"], params["dc1_b1"],
                   params["dc1_w2"], params["dc1_b2"],
                   params["nl_wq"], params["nl_bq"],
                   params["nl_wk"], params["nl_bk"],
                   params["nl_wv"], params["nl_bv"],
                   params["nl_wsa"], params["nl_bsa"], params["nl_gamma"],
                   params["dc2_w1"], params["dc2_b1"],
                   params["dc2_w2"], params["dc2_b2"])

    feats = pl.pallas_call(
        _disc_body_kernel,
        out_shape=jax.ShapeDtypeStruct((B, C2, Hq * Wq), jnp.float32),
        grid=(B,),
        in_specs=[pl.BlockSpec((1, Cin, H * W), lambda b: (b, 0, 0)),
                  _full_spec(s0.shape), _full_spec(p0.shape),
                  _full_spec(s1.shape), _full_spec(p1.shape)]
                 + [_full_spec(p.shape) for p in body_params],
        out_specs=pl.BlockSpec((1, C2, Hq * Wq), lambda b: (b, 0, 0)),
        compiler_params=pltpu.CompilerParams(
            dimension_semantics=("parallel",)),
    )(x_flat, s0, p0, s1, p1, *body_params)

    head_params = (params["post_w3"], params["post_b3"],
                   params["post_w4"], params["post_b4"],
                   params["fc_w"], params["fc_b"])

    out = pl.pallas_call(
        _disc_head_kernel,
        out_shape=jax.ShapeDtypeStruct((B, 1), jnp.float32),
        grid=(1,),
        in_specs=[_full_spec(feats.shape), _full_spec(s2.shape)]
                 + [_full_spec(p.shape) for p in head_params],
        out_specs=pl.BlockSpec((B, 1), lambda i: (0, 0)),
        compiler_params=pltpu.CompilerParams(
            dimension_semantics=("arbitrary",)),
    )(feats, s2, *head_params)

    return out


# ----------------------------------- main ------------------------------------ #
if __name__ == "__main__":
    # Discriminator(disc_first_channel=8, disc_last_size=4, disc_nonlocal_loc=1,
    #               img_size=16):
    #   3 -(1x1)-> 8 -> Disc_Conv(8,16) -> Non_Local(16) -> Disc_Conv(16,32)
    #   -> Minibatch_Stddev -> conv3x3(33,32) -> conv4x4(32,32) -> Linear(32,1)
    B, H, W = 2, 16, 16
    C0, C1, C2 = 8, 16, 32
    Ci = C1 // 4                       # Non_Local inner channels (div_num=4)

    key = jax.random.PRNGKey(0)
    ks = iter(jax.random.split(key, 32))

    def nrm(shape, scale=1.0):
        return scale * jax.random.normal(next(ks), shape, dtype=jnp.float32)

    x = nrm((B, 3, H, W))

    params = {
        # stem 1x1 conv: weight (C0, 3), bias (C0, 1)
        "stem_w": nrm((C0, 3)), "stem_b": nrm((C0, 1), 0.1),
        # Disc_Conv(C0, C1); conv weights stored (ky, kx, Cout, Cin)
        "dc1_w1": nrm((3, 3, C0, C0)), "dc1_b1": nrm((C0, 1), 0.1),
        "dc1_w2": nrm((3, 3, C1, C0)), "dc1_b2": nrm((C1, 1), 0.1),
        # Non_Local(C1, div_num=4): 1x1 convs as channel matmuls
        "nl_wq": nrm((Ci, C1)), "nl_bq": nrm((Ci, 1), 0.1),
        "nl_wk": nrm((Ci, C1)), "nl_bk": nrm((Ci, 1), 0.1),
        "nl_wv": nrm((Ci, C1)), "nl_bv": nrm((Ci, 1), 0.1),
        "nl_wsa": nrm((C1, Ci)), "nl_bsa": nrm((C1, 1), 0.1),
        # torch initializes gamma to 0; use a nonzero value to exercise the path
        "nl_gamma": jnp.full((1, 1), 0.5, jnp.float32),
        # Disc_Conv(C1, C2)
        "dc2_w1": nrm((3, 3, C1, C1)), "dc2_b1": nrm((C1, 1), 0.1),
        "dc2_w2": nrm((3, 3, C2, C1)), "dc2_b2": nrm((C2, 1), 0.1),
        # post-Minibatch_Stddev 3x3 conv (C2+1 -> C2)
        "post_w3": nrm((3, 3, C2, C2 + 1)), "post_b3": nrm((C2, 1), 0.1),
        # 4x4 valid conv, stored (ky*4+kx, Cout, Cin)
        "post_w4": nrm((16, C2, C2)), "post_b4": nrm((C2, 1), 0.1),
        # final Linear(C2, 1)
        "fc_w": nrm((1, C2)), "fc_b": nrm((1, 1), 0.1),
    }

    out = discriminator_forward(x, params)
    out = jax.block_until_ready(out)
    assert out.shape == (B, 1), out.shape
    assert bool(jnp.all(jnp.isfinite(out)))
    print("KERNEL_OK")
</pallas_src>

<mosaic_0001>
module attributes {stable_mosaic.version = 11 : i64} {
  func.func @_disc_body_kernel(%arg0: i32, %arg1: memref<1x3x256xf32, #tpu.memory_space<vmem>>, %arg2: memref<9x256x256xf32, #tpu.memory_space<vmem>>, %arg3: memref<256x64xf32, #tpu.memory_space<vmem>>, %arg4: memref<9x64x64xf32, #tpu.memory_space<vmem>>, %arg5: memref<64x16xf32, #tpu.memory_space<vmem>>, %arg6: memref<8x3xf32, #tpu.memory_space<vmem>>, %arg7: memref<8x1xf32, #tpu.memory_space<vmem>>, %arg8: memref<3x3x8x8xf32, #tpu.memory_space<vmem>>, %arg9: memref<8x1xf32, #tpu.memory_space<vmem>>, %arg10: memref<3x3x16x8xf32, #tpu.memory_space<vmem>>, %arg11: memref<16x1xf32, #tpu.memory_space<vmem>>, %arg12: memref<4x16xf32, #tpu.memory_space<vmem>>, %arg13: memref<4x1xf32, #tpu.memory_space<vmem>>, %arg14: memref<4x16xf32, #tpu.memory_space<vmem>>, %arg15: memref<4x1xf32, #tpu.memory_space<vmem>>, %arg16: memref<4x16xf32, #tpu.memory_space<vmem>>, %arg17: memref<4x1xf32, #tpu.memory_space<vmem>>, %arg18: memref<16x4xf32, #tpu.memory_space<vmem>>, %arg19: memref<16x1xf32, #tpu.memory_space<vmem>>, %arg20: memref<1x1xf32, #tpu.memory_space<vmem>>, %arg21: memref<3x3x16x16xf32, #tpu.memory_space<vmem>>, %arg22: memref<16x1xf32, #tpu.memory_space<vmem>>, %arg23: memref<3x3x32x16xf32, #tpu.memory_space<vmem>>, %arg24: memref<32x1xf32, #tpu.memory_space<vmem>>, %arg25: memref<1x32x16xf32, #tpu.memory_space<vmem>>) attributes {dimension_semantics = [#tpu.dimension_semantics<parallel>], iteration_bounds = array<i64: 2>, scalar_prefetch = 0 : i64, scratch_operands = 0 : i64, tpu.core_type = #tpu.core_type<tc>, window_params = [{transform_indices = @transform_0, window_bounds = array<i64: 1, 3, 256>}, {pipeline_mode = #tpu.pipeline_mode<synchronous>, transform_indices = @transform_1, window_bounds = array<i64: 9, 256, 256>}, {pipeline_mode = #tpu.pipeline_mode<synchronous>, transform_indices = @transform_2, window_bounds = array<i64: 256, 64>}, {pipeline_mode = #tpu.pipeline_mode<synchronous>, transform_indices = @transform_3, window_bounds = array<i64: 9, 64, 64>}, {pipeline_mode = #tpu.pipeline_mode<synchronous>, transform_indices = @transform_4, window_bounds = array<i64: 64, 16>}, {pipeline_mode = #tpu.pipeline_mode<synchronous>, transform_indices = @transform_5, window_bounds = array<i64: 8, 3>}, {pipeline_mode = #tpu.pipeline_mode<synchronous>, transform_indices = @transform_6, window_bounds = array<i64: 8, 1>}, {pipeline_mode = #tpu.pipeline_mode<synchronous>, transform_indices = @transform_7, window_bounds = array<i64: 3, 3, 8, 8>}, {pipeline_mode = #tpu.pipeline_mode<synchronous>, transform_indices = @transform_8, window_bounds = array<i64: 8, 1>}, {pipeline_mode = #tpu.pipeline_mode<synchronous>, transform_indices = @transform_9, window_bounds = array<i64: 3, 3, 16, 8>}, {pipeline_mode = #tpu.pipeline_mode<synchronous>, transform_indices = @transform_10, window_bounds = array<i64: 16, 1>}, {pipeline_mode = #tpu.pipeline_mode<synchronous>, transform_indices = @transform_11, window_bounds = array<i64: 4, 16>}, {pipeline_mode = #tpu.pipeline_mode<synchronous>, transform_indices = @transform_12, window_bounds = array<i64: 4, 1>}, {pipeline_mode = #tpu.pipeline_mode<synchronous>, transform_indices = @transform_13, window_bounds = array<i64: 4, 16>}, {pipeline_mode = #tpu.pipeline_mode<synchronous>, transform_indices = @transform_14, window_bounds = array<i64: 4, 1>}, {pipeline_mode = #tpu.pipeline_mode<synchronous>, transform_indices = @transform_15, window_bounds = array<i64: 4, 16>}, {pipeline_mode = #tpu.pipeline_mode<synchronous>, transform_indices = @transform_16, window_bounds = array<i64: 4, 1>}, {pipeline_mode = #tpu.pipeline_mode<synchronous>, transform_indices = @transform_17, window_bounds = array<i64: 16, 4>}, {pipeline_mode = #tpu.pipeline_mode<synchronous>, transform_indices = @transform_18, window_bounds = array<i64: 16, 1>}, {pipeline_mode = #tpu.pipeline_mode<synchronous>, transform_indices = @transform_19, window_bounds = array<i64: 1, 1>}, {pipeline_mode = #tpu.pipeline_mode<synchronous>, transform_indices = @transform_20, window_bounds = array<i64: 3, 3, 16, 16>}, {pipeline_mode = #tpu.pipeline_mode<synchronous>, transform_indices = @transform_21, window_bounds = array<i64: 16, 1>}, {pipeline_mode = #tpu.pipeline_mode<synchronous>, transform_indices = @transform_22, window_bounds = array<i64: 3, 3, 32, 16>}, {pipeline_mode = #tpu.pipeline_mode<synchronous>, transform_indices = @transform_23, window_bounds = array<i64: 32, 1>}, {transform_indices = @transform_24, window_bounds = array<i64: 1, 32, 16>}]} {
    %c0 = arith.constant 0 : index
    %c0_0 = arith.constant 0 : index
    %c0_1 = arith.constant 0 : index
    %0 = vector.load %arg1[%c0, %c0_0, %c0_1] : memref<1x3x256xf32, #tpu.memory_space<vmem>>, vector<1x3x256xf32>
    %1 = vector.shape_cast %0 : vector<1x3x256xf32> to vector<3x256xf32>
    %c0_2 = arith.constant 0 : index
    %c0_3 = arith.constant 0 : index
    %2 = vector.load %arg6[%c0_2, %c0_3] : memref<8x3xf32, #tpu.memory_space<vmem>>, vector<8x3xf32>
    %cst = arith.constant 0.800640761 : f32
    %3 = vector.broadcast %cst : f32 to vector<3x256xf32>
    %4 = arith.mulf %1, %3 : vector<3x256xf32>
    %cst_4 = arith.constant dense<0.000000e+00> : vector<8x256xf32>
    %5 = tpu.matmul %2, %4, %cst_4 {dimension_numbers = #tpu.dot_dimension_numbers<[1], [0], [0], [1], [0, 0, 1, 1], [], []>} : vector<8x3xf32>, vector<3x256xf32>, vector<8x256xf32> -> vector<8x256xf32>
    %c0_5 = arith.constant 0 : index
    %c0_6 = arith.constant 0 : index
    %6 = vector.load %arg7[%c0_5, %c0_6] : memref<8x1xf32, #tpu.memory_space<vmem>>, vector<8x1xf32>
    %7 = vector.broadcast %6 : vector<8x1xf32> to vector<8x256xf32>
    %8 = arith.addf %5, %7 : vector<8x256xf32>
    %cst_7 = arith.constant 0.000000e+00 : f32
    %9 = vector.broadcast %cst_7 : f32 to vector<8x256xf32>
    %10 = arith.cmpf ogt, %8, %9 : vector<8x256xf32>
    %cst_8 = arith.constant 2.000000e-01 : f32
    %11 = vector.broadcast %cst_8 : f32 to vector<8x256xf32>
    %12 = arith.mulf %11, %8 : vector<8x256xf32>
    %13 = arith.select %10, %8, %12 : vector<8x256xi1>, vector<8x256xf32>
    %cst_9 = arith.constant 0.16343011 : f32
    %14 = vector.broadcast %cst_9 : f32 to vector<8x256xf32>
    %15 = arith.mulf %13, %14 : vector<8x256xf32>
    %cst_10 = arith.constant 0.000000e+00 : f32
    %16 = vector.broadcast %cst_10 : f32 to vector<8x256xf32>
    %c0_11 = arith.constant 0 : index
    %c0_12 = arith.constant 0 : index
    %c0_13 = arith.constant 0 : index
    %17 = vector.load %arg2[%c0_11, %c0_12, %c0_13] : memref<9x256x256xf32, #tpu.memory_space<vmem>>, vector<1x256x256xf32>
    %18 = vector.shape_cast %17 : vector<1x256x256xf32> to vector<256x256xf32>
    %cst_14 = arith.constant dense<0.000000e+00> : vector<8x256xf32>
    %19 = tpu.matmul %15, %18, %cst_14 {dimension_numbers = #tpu.dot_dimension_numbers<[1], [0], [0], [1], [0, 0, 1, 1], [], []>} : vector<8x256xf32>, vector<256x256xf32>, vector<8x256xf32> -> vector<8x256xf32>
    %c0_15 = arith.constant 0 : index
    %c0_16 = arith.constant 0 : index
    %c0_17 = arith.constant 0 : index
    %c0_18 = arith.constant 0 : index
    %20 = vector.load %arg8[%c0_15, %c0_16, %c0_17, %c0_18] : memref<3x3x8x8xf32, #tpu.memory_space<vmem>>, vector<1x1x8x8xf32>
    %21 = vector.shape_cast %20 : vector<1x1x8x8xf32> to vector<8x8xf32>
    %cst_19 = arith.constant dense<0.000000e+00> : vector<8x256xf32>
    %22 = tpu.matmul %21, %19, %cst_19 {dimension_numbers = #tpu.dot_dimension_numbers<[1], [0], [0], [1], [0, 0, 1, 1], [], []>} : vector<8x8xf32>, vector<8x256xf32>, vector<8x256xf32> -> vector<8x256xf32>
    %23 = arith.addf %16, %22 : vector<8x256xf32>
    %c1 = arith.constant 1 : index
    %c0_20 = arith.constant 0 : index
    %c0_21 = arith.constant 0 : index
    %24 = vector.load %arg2[%c1, %c0_20, %c0_21] : memref<9x256x256xf32, #tpu.memory_space<vmem>>, vector<1x256x256xf32>
    %25 = vector.shape_cast %24 : vector<1x256x256xf32> to vector<256x256xf32>
    %cst_22 = arith.constant dense<0.000000e+00> : vector<8x256xf32>
    %26 = tpu.matmul %15, %25, %cst_22 {dimension_numbers = #tpu.dot_dimension_numbers<[1], [0], [0], [1], [0, 0, 1, 1], [], []>} : vector<8x256xf32>, vector<256x256xf32>, vector<8x256xf32> -> vector<8x256xf32>
    %c0_23 = arith.constant 0 : index
    %c1_24 = arith.constant 1 : index
    %c0_25 = arith.constant 0 : index
    %c0_26 = arith.constant 0 : index
    %27 = vector.load %arg8[%c0_23, %c1_24, %c0_25, %c0_26] : memref<3x3x8x8xf32, #tpu.memory_space<vmem>>, vector<1x1x8x8xf32>
    %28 = vector.shape_cast %27 : vector<1x1x8x8xf32> to vector<8x8xf32>
    %cst_27 = arith.constant dense<0.000000e+00> : vector<8x256xf32>
    %29 = tpu.matmul %28, %26, %cst_27 {dimension_numbers = #tpu.dot_dimension_numbers<[1], [0], [0], [1], [0, 0, 1, 1], [], []>} : vector<8x8xf32>, vector<8x256xf32>, vector<8x256xf32> -> vector<8x256xf32>
    %30 = arith.addf %23, %29 : vector<8x256xf32>
    %c2 = arith.constant 2 : index
    %c0_28 = arith.constant 0 : index
    %c0_29 = arith.constant 0 : index
    %31 = vector.load %arg2[%c2, %c0_28, %c0_29] : memref<9x256x256xf32, #tpu.memory_space<vmem>>, vector<1x256x256xf32>
    %32 = vector.shape_cast %31 : vector<1x256x256xf32> to vector<256x256xf32>
    %cst_30 = arith.constant dense<0.000000e+00> : vector<8x256xf32>
    %33 = tpu.matmul %15, %32, %cst_30 {dimension_numbers = #tpu.dot_dimension_numbers<[1], [0], [0], [1], [0, 0, 1, 1], [], []>} : vector<8x256xf32>, vector<256x256xf32>, vector<8x256xf32> -> vector<8x256xf32>
    %c0_31 = arith.constant 0 : index
    %c2_32 = arith.constant 2 : index
    %c0_33 = arith.constant 0 : index
    %c0_34 = arith.constant 0 : index
    %34 = vector.load %arg8[%c0_31, %c2_32, %c0_33, %c0_34] : memref<3x3x8x8xf32, #tpu.memory_space<vmem>>, vector<1x1x8x8xf32>
    %35 = vector.shape_cast %34 : vector<1x1x8x8xf32> to vector<8x8xf32>
    %cst_35 = arith.constant dense<0.000000e+00> : vector<8x256xf32>
    %36 = tpu.matmul %35, %33, %cst_35 {dimension_numbers = #tpu.dot_dimension_numbers<[1], [0], [0], [1], [0, 0, 1, 1], [], []>} : vector<8x8xf32>, vector<8x256xf32>, vector<8x256xf32> -> vector<8x256xf32>
    %37 = arith.addf %30, %36 : vector<8x256xf32>
    %c3 = arith.constant 3 : index
    %c0_36 = arith.constant 0 : index
    %c0_37 = arith.constant 0 : index
    %38 = vector.load %arg2[%c3, %c0_36, %c0_37] : memref<9x256x256xf32, #tpu.memory_space<vmem>>, vector<1x256x256xf32>
    %39 = vector.shape_cast %38 : vector<1x256x256xf32> to vector<256x256xf32>
    %cst_38 = arith.constant dense<0.000000e+00> : vector<8x256xf32>
    %40 = tpu.matmul %15, %39, %cst_38 {dimension_numbers = #tpu.dot_dimension_numbers<[1], [0], [0], [1], [0, 0, 1, 1], [], []>} : vector<8x256xf32>, vector<256x256xf32>, vector<8x256xf32> -> vector<8x256xf32>
    %c1_39 = arith.constant 1 : index
    %c0_40 = arith.constant 0 : index
    %c0_41 = arith.constant 0 : index
    %c0_42 = arith.constant 0 : index
    %41 = vector.load %arg8[%c1_39, %c0_40, %c0_41, %c0_42] : memref<3x3x8x8xf32, #tpu.memory_space<vmem>>, vector<1x1x8x8xf32>
    %42 = vector.shape_cast %41 : vector<1x1x8x8xf32> to vector<8x8xf32>
    %cst_43 = arith.constant dense<0.000000e+00> : vector<8x256xf32>
    %43 = tpu.matmul %42, %40, %cst_43 {dimension_numbers = #tpu.dot_dimension_numbers<[1], [0], [0], [1], [0, 0, 1, 1], [], []>} : vector<8x8xf32>, vector<8x256xf32>, vector<8x256xf32> -> vector<8x256xf32>
    %44 = arith.addf %37, %43 : vector<8x256xf32>
    %c4 = arith.constant 4 : index
    %c0_44 = arith.constant 0 : index
    %c0_45 = arith.constant 0 : index
    %45 = vector.load %arg2[%c4, %c0_44, %c0_45] : memref<9x256x256xf32, #tpu.memory_space<vmem>>, vector<1x256x256xf32>
    %46 = vector.shape_cast %45 : vector<1x256x256xf32> to vector<256x256xf32>
    %cst_46 = arith.constant dense<0.000000e+00> : vector<8x256xf32>
    %47 = tpu.matmul %15, %46, %cst_46 {dimension_numbers = #tpu.dot_dimension_numbers<[1], [0], [0], [1], [0, 0, 1, 1], [], []>} : vector<8x256xf32>, vector<256x256xf32>, vector<8x256xf32> -> vector<8x256xf32>
    %c1_47 = arith.constant 1 : index
    %c1_48 = arith.constant 1 : index
    %c0_49 = arith.constant 0 : index
    %c0_50 = arith.constant 0 : index
    %48 = vector.load %arg8[%c1_47, %c1_48, %c0_49, %c0_50] : memref<3x3x8x8xf32, #tpu.memory_space<vmem>>, vector<1x1x8x8xf32>
    %49 = vector.shape_cast %48 : vector<1x1x8x8xf32> to vector<8x8xf32>
    %cst_51 = arith.constant dense<0.000000e+00> : vector<8x256xf32>
    %50 = tpu.matmul %49, %47, %cst_51 {dimension_numbers = #tpu.dot_dimension_numbers<[1], [0], [0], [1], [0, 0, 1, 1], [], []>} : vector<8x8xf32>, vector<8x256xf32>, vector<8x256xf32> -> vector<8x256xf32>
    %51 = arith.addf %44, %50 : vector<8x256xf32>
    %c5 = arith.constant 5 : index
    %c0_52 = arith.constant 0 : index
    %c0_53 = arith.constant 0 : index
    %52 = vector.load %arg2[%c5, %c0_52, %c0_53] : memref<9x256x256xf32, #tpu.memory_space<vmem>>, vector<1x256x256xf32>
    %53 = vector.shape_cast %52 : vector<1x256x256xf32> to vector<256x256xf32>
    %cst_54 = arith.constant dense<0.000000e+00> : vector<8x256xf32>
    %54 = tpu.matmul %15, %53, %cst_54 {dimension_numbers = #tpu.dot_dimension_numbers<[1], [0], [0], [1], [0, 0, 1, 1], [], []>} : vector<8x256xf32>, vector<256x256xf32>, vector<8x256xf32> -> vector<8x256xf32>
    %c1_55 = arith.constant 1 : index
    %c2_56 = arith.constant 2 : index
    %c0_57 = arith.constant 0 : index
    %c0_58 = arith.constant 0 : index
    %55 = vector.load %arg8[%c1_55, %c2_56, %c0_57, %c0_58] : memref<3x3x8x8xf32, #tpu.memory_space<vmem>>, vector<1x1x8x8xf32>
    %56 = vector.shape_cast %55 : vector<1x1x8x8xf32> to vector<8x8xf32>
    %cst_59 = arith.constant dense<0.000000e+00> : vector<8x256xf32>
    %57 = tpu.matmul %56, %54, %cst_59 {dimension_numbers = #tpu.dot_dimension_numbers<[1], [0], [0], [1], [0, 0, 1, 1], [], []>} : vector<8x8xf32>, vector<8x256xf32>, vector<8x256xf32> -> vector<8x256xf32>
    %58 = arith.addf %51, %57 : vector<8x256xf32>
    %c6 = arith.constant 6 : index
    %c0_60 = arith.constant 0 : index
    %c0_61 = arith.constant 0 : index
    %59 = vector.load %arg2[%c6, %c0_60, %c0_61] : memref<9x256x256xf32, #tpu.memory_space<vmem>>, vector<1x256x256xf32>
    %60 = vector.shape_cast %59 : vector<1x256x256xf32> to vector<256x256xf32>
    %cst_62 = arith.constant dense<0.000000e+00> : vector<8x256xf32>
    %61 = tpu.matmul %15, %60, %cst_62 {dimension_numbers = #tpu.dot_dimension_numbers<[1], [0], [0], [1], [0, 0, 1, 1], [], []>} : vector<8x256xf32>, vector<256x256xf32>, vector<8x256xf32> -> vector<8x256xf32>
    %c2_63 = arith.constant 2 : index
    %c0_64 = arith.constant 0 : index
    %c0_65 = arith.constant 0 : index
    %c0_66 = arith.constant 0 : index
    %62 = vector.load %arg8[%c2_63, %c0_64, %c0_65, %c0_66] : memref<3x3x8x8xf32, #tpu.memory_space<vmem>>, vector<1x1x8x8xf32>
    %63 = vector.shape_cast %62 : vector<1x1x8x8xf32> to vector<8x8xf32>
    %cst_67 = arith.constant dense<0.000000e+00> : vector<8x256xf32>
    %64 = tpu.matmul %63, %61, %cst_67 {dimension_numbers = #tpu.dot_dimension_numbers<[1], [0], [0], [1], [0, 0, 1, 1], [], []>} : vector<8x8xf32>, vector<8x256xf32>, vector<8x256xf32> -> vector<8x256xf32>
    %65 = arith.addf %58, %64 : vector<8x256xf32>
    %c7 = arith.constant 7 : index
    %c0_68 = arith.constant 0 : index
    %c0_69 = arith.constant 0 : index
    %66 = vector.load %arg2[%c7, %c0_68, %c0_69] : memref<9x256x256xf32, #tpu.memory_space<vmem>>, vector<1x256x256xf32>
    %67 = vector.shape_cast %66 : vector<1x256x256xf32> to vector<256x256xf32>
    %cst_70 = arith.constant dense<0.000000e+00> : vector<8x256xf32>
    %68 = tpu.matmul %15, %67, %cst_70 {dimension_numbers = #tpu.dot_dimension_numbers<[1], [0], [0], [1], [0, 0, 1, 1], [], []>} : vector<8x256xf32>, vector<256x256xf32>, vector<8x256xf32> -> vector<8x256xf32>
    %c2_71 = arith.constant 2 : index
    %c1_72 = arith.constant 1 : index
    %c0_73 = arith.constant 0 : index
    %c0_74 = arith.constant 0 : index
    %69 = vector.load %arg8[%c2_71, %c1_72, %c0_73, %c0_74] : memref<3x3x8x8xf32, #tpu.memory_space<vmem>>, vector<1x1x8x8xf32>
    %70 = vector.shape_cast %69 : vector<1x1x8x8xf32> to vector<8x8xf32>
    %cst_75 = arith.constant dense<0.000000e+00> : vector<8x256xf32>
    %71 = tpu.matmul %70, %68, %cst_75 {dimension_numbers = #tpu.dot_dimension_numbers<[1], [0], [0], [1], [0, 0, 1, 1], [], []>} : vector<8x8xf32>, vector<8x256xf32>, vector<8x256xf32> -> vector<8x256xf32>
    %72 = arith.addf %65, %71 : vector<8x256xf32>
    %c8 = arith.constant 8 : index
    %c0_76 = arith.constant 0 : index
    %c0_77 = arith.constant 0 : index
    %73 = vector.load %arg2[%c8, %c0_76, %c0_77] : memref<9x256x256xf32, #tpu.memory_space<vmem>>, vector<1x256x256xf32>
    %74 = vector.shape_cast %73 : vector<1x256x256xf32> to vector<256x256xf32>
    %cst_78 = arith.constant dense<0.000000e+00> : vector<8x256xf32>
    %75 = tpu.matmul %15, %74, %cst_78 {dimension_numbers = #tpu.dot_dimension_numbers<[1], [0], [0], [1], [0, 0, 1, 1], [], []>} : vector<8x256xf32>, vector<256x256xf32>, vector<8x256xf32> -> vector<8x256xf32>
    %c2_79 = arith.constant 2 : index
    %c2_80 = arith.constant 2 : index
    %c0_81 = arith.constant 0 : index
    %c0_82 = arith.constant 0 : index
    %76 = vector.load %arg8[%c2_79, %c2_80, %c0_81, %c0_82] : memref<3x3x8x8xf32, #tpu.memory_space<vmem>>, vector<1x1x8x8xf32>
    %77 = vector.shape_cast %76 : vector<1x1x8x8xf32> to vector<8x8xf32>
    %cst_83 = arith.constant dense<0.000000e+00> : vector<8x256xf32>
    %78 = tpu.matmul %77, %75, %cst_83 {dimension_numbers = #tpu.dot_dimension_numbers<[1], [0], [0], [1], [0, 0, 1, 1], [], []>} : vector<8x8xf32>, vector<8x256xf32>, vector<8x256xf32> -> vector<8x256xf32>
    %79 = arith.addf %72, %78 : vector<8x256xf32>
    %c0_84 = arith.constant 0 : index
    %c0_85 = arith.constant 0 : index
    %80 = vector.load %arg9[%c0_84, %c0_85] : memref<8x1xf32, #tpu.memory_space<vmem>>, vector<8x1xf32>
    %81 = vector.broadcast %80 : vector<8x1xf32> to vector<8x256xf32>
    %82 = arith.addf %79, %81 : vector<8x256xf32>
    %cst_86 = arith.constant 0.000000e+00 : f32
    %83 = vector.broadcast %cst_86 : f32 to vector<8x256xf32>
    %84 = arith.cmpf ogt, %82, %83 : vector<8x256xf32>
    %cst_87 = arith.constant 2.000000e-01 : f32
    %85 = vector.broadcast %cst_87 : f32 to vector<8x256xf32>
    %86 = arith.mulf %85, %82 : vector<8x256xf32>
    %87 = arith.select %84, %82, %86 : vector<8x256xi1>, vector<8x256xf32>
    %cst_88 = arith.constant 0.16343011 : f32
    %88 = vector.broadcast %cst_88 : f32 to vector<8x256xf32>
    %89 = arith.mulf %87, %88 : vector<8x256xf32>
    %cst_89 = arith.constant 0.000000e+00 : f32
    %90 = vector.broadcast %cst_89 : f32 to vector<16x256xf32>
    %c0_90 = arith.constant 0 : index
    %c0_91 = arith.constant 0 : index
    %c0_92 = arith.constant 0 : index
    %91 = vector.load %arg2[%c0_90, %c0_91, %c0_92] : memref<9x256x256xf32, #tpu.memory_space<vmem>>, vector<1x256x256xf32>
    %92 = vector.shape_cast %91 : vector<1x256x256xf32> to vector<256x256xf32>
    %cst_93 = arith.constant dense<0.000000e+00> : vector<8x256xf32>
    %93 = tpu.matmul %89, %92, %cst_93 {dimension_numbers = #tpu.dot_dimension_numbers<[1], [0], [0], [1], [0, 0, 1, 1], [], []>} : vector<8x256xf32>, vector<256x256xf32>, vector<8x256xf32> -> vector<8x256xf32>
    %c0_94 = arith.constant 0 : index
    %c0_95 = arith.constant 0 : index
    %c0_96 = arith.constant 0 : index
    %c0_97 = arith.constant 0 : index
    %94 = vector.load %arg10[%c0_94, %c0_95, %c0_96, %c0_97] : memref<3x3x16x8xf32, #tpu.memory_space<vmem>>, vector<1x1x16x8xf32>
    %95 = vector.shape_cast %94 : vector<1x1x16x8xf32> to vector<16x8xf32>
    %cst_98 = arith.constant dense<0.000000e+00> : vector<16x256xf32>
    %96 = tpu.matmul %95, %93, %cst_98 {dimension_numbers = #tpu.dot_dimension_numbers<[1], [0], [0], [1], [0, 0, 1, 1], [], []>} : vector<16x8xf32>, vector<8x256xf32>, vector<16x256xf32> -> vector<16x256xf32>
    %97 = arith.addf %90, %96 : vector<16x256xf32>
    %c1_99 = arith.constant 1 : index
    %c0_100 = arith.constant 0 : index
    %c0_101 = arith.constant 0 : index
    %98 = vector.load %arg2[%c1_99, %c0_100, %c0_101] : memref<9x256x256xf32, #tpu.memory_space<vmem>>, vector<1x256x256xf32>
    %99 = vector.shape_cast %98 : vector<1x256x256xf32> to vector<256x256xf32>
    %cst_102 = arith.constant dense<0.000000e+00> : vector<8x256xf32>
    %100 = tpu.matmul %89, %99, %cst_102 {dimension_numbers = #tpu.dot_dimension_numbers<[1], [0], [0], [1], [0, 0, 1, 1], [], []>} : vector<8x256xf32>, vector<256x256xf32>, vector<8x256xf32> -> vector<8x256xf32>
    %c0_103 = arith.constant 0 : index
    %c1_104 = arith.constant 1 : index
    %c0_105 = arith.constant 0 : index
    %c0_106 = arith.constant 0 : index
    %101 = vector.load %arg10[%c0_103, %c1_104, %c0_105, %c0_106] : memref<3x3x16x8xf32, #tpu.memory_space<vmem>>, vector<1x1x16x8xf32>
    %102 = vector.shape_cast %101 : vector<1x1x16x8xf32> to vector<16x8xf32>
    %cst_107 = arith.constant dense<0.000000e+00> : vector<16x256xf32>
    %103 = tpu.matmul %102, %100, %cst_107 {dimension_numbers = #tpu.dot_dimension_numbers<[1], [0], [0], [1], [0, 0, 1, 1], [], []>} : vector<16x8xf32>, vector<8x256xf32>, vector<16x256xf32> -> vector<16x256xf32>
    %104 = arith.addf %97, %103 : vector<16x256xf32>
    %c2_108 = arith.constant 2 : index
    %c0_109 = arith.constant 0 : index
    %c0_110 = arith.constant 0 : index
    %105 = vector.load %arg2[%c2_108, %c0_109, %c0_110] : memref<9x256x256xf32, #tpu.memory_space<vmem>>, vector<1x256x256xf32>
    %106 = vector.shape_cast %105 : vector<1x256x256xf32> to vector<256x256xf32>
    %cst_111 = arith.constant dense<0.000000e+00> : vector<8x256xf32>
    %107 = tpu.matmul %89, %106, %cst_111 {dimension_numbers = #tpu.dot_dimension_numbers<[1], [0], [0], [1], [0, 0, 1, 1], [], []>} : vector<8x256xf32>, vector<256x256xf32>, vector<8x256xf32> -> vector<8x256xf32>
    %c0_112 = arith.constant 0 : index
    %c2_113 = arith.constant 2 : index
    %c0_114 = arith.constant 0 : index
    %c0_115 = arith.constant 0 : index
    %108 = vector.load %arg10[%c0_112, %c2_113, %c0_114, %c0_115] : memref<3x3x16x8xf32, #tpu.memory_space<vmem>>, vector<1x1x16x8xf32>
    %109 = vector.shape_cast %108 : vector<1x1x16x8xf32> to vector<16x8xf32>
    %cst_116 = arith.constant dense<0.000000e+00> : vector<16x256xf32>
    %110 = tpu.matmul %109, %107, %cst_116 {dimension_numbers = #tpu.dot_dimension_numbers<[1], [0], [0], [1], [0, 0, 1, 1], [], []>} : vector<16x8xf32>, vector<8x256xf32>, vector<16x256xf32> -> vector<16x256xf32>
    %111 = arith.addf %104, %110 : vector<16x256xf32>
    %c3_117 = arith.constant 3 : index
    %c0_118 = arith.constant 0 : index
    %c0_119 = arith.constant 0 : index
    %112 = vector.load %arg2[%c3_117, %c0_118, %c0_119] : memref<9x256x256xf32, #tpu.memory_space<vmem>>, vector<1x256x256xf32>
    %113 = vector.shape_cast %112 : vector<1x256x256xf32> to vector<256x256xf32>
    %cst_120 = arith.constant dense<0.000000e+00> : vector<8x256xf32>
    %114 = tpu.matmul %89, %113, %cst_120 {dimension_numbers = #tpu.dot_dimension_numbers<[1], [0], [0], [1], [0, 0, 1, 1], [], []>} : vector<8x256xf32>, vector<256x256xf32>, vector<8x256xf32> -> vector<8x256xf32>
    %c1_121 = arith.constant 1 : index
    %c0_122 = arith.constant 0 : index
    %c0_123 = arith.constant 0 : index
    %c0_124 = arith.constant 0 : index
    %115 = vector.load %arg10[%c1_121, %c0_122, %c0_123, %c0_124] : memref<3x3x16x8xf32, #tpu.memory_space<vmem>>, vector<1x1x16x8xf32>
    %116 = vector.shape_cast %115 : vector<1x1x16x8xf32> to vector<16x8xf32>
    %cst_125 = arith.constant dense<0.000000e+00> : vector<16x256xf32>
    %117 = tpu.matmul %116, %114, %cst_125 {dimension_numbers = #tpu.dot_dimension_numbers<[1], [0], [0], [1], [0, 0, 1, 1], [], []>} : vector<16x8xf32>, vector<8x256xf32>, vector<16x256xf32> -> vector<16x256xf32>
    %118 = arith.addf %111, %117 : vector<16x256xf32>
    %c4_126 = arith.constant 4 : index
    %c0_127 = arith.constant 0 : index
    %c0_128 = arith.constant 0 : index
    %119 = vector.load %arg2[%c4_126, %c0_127, %c0_128] : memref<9x256x256xf32, #tpu.memory_space<vmem>>, vector<1x256x256xf32>
    %120 = vector.shape_cast %119 : vector<1x256x256xf32> to vector<256x256xf32>
    %cst_129 = arith.constant dense<0.000000e+00> : vector<8x256xf32>
    %121 = tpu.matmul %89, %120, %cst_129 {dimension_numbers = #tpu.dot_dimension_numbers<[1], [0], [0], [1], [0, 0, 1, 1], [], []>} : vector<8x256xf32>, vector<256x256xf32>, vector<8x256xf32> -> vector<8x256xf32>
    %c1_130 = arith.constant 1 : index
    %c1_131 = arith.constant 1 : index
    %c0_132 = arith.constant 0 : index
    %c0_133 = arith.constant 0 : index
    %122 = vector.load %arg10[%c1_130, %c1_131, %c0_132, %c0_133] : memref<3x3x16x8xf32, #tpu.memory_space<vmem>>, vector<1x1x16x8xf32>
    %123 = vector.shape_cast %122 : vector<1x1x16x8xf32> to vector<16x8xf32>
    %cst_134 = arith.constant dense<0.000000e+00> : vector<16x256xf32>
    %124 = tpu.matmul %123, %121, %cst_134 {dimension_numbers = #tpu.dot_dimension_numbers<[1], [0], [0], [1], [0, 0, 1, 1], [], []>} : vector<16x8xf32>, vector<8x256xf32>, vector<16x256xf32> -> vector<16x256xf32>
    %125 = arith.addf %118, %124 : vector<16x256xf32>
    %c5_135 = arith.constant 5 : index
    %c0_136 = arith.constant 0 : index
    %c0_137 = arith.constant 0 : index
    %126 = vector.load %arg2[%c5_135, %c0_136, %c0_137] : memref<9x256x256xf32, #tpu.memory_space<vmem>>, vector<1x256x256xf32>
    %127 = vector.shape_cast %126 : vector<1x256x256xf32> to vector<256x256xf32>
    %cst_138 = arith.constant dense<0.000000e+00> : vector<8x256xf32>
    %128 = tpu.matmul %89, %127, %cst_138 {dimension_numbers = #tpu.dot_dimension_numbers<[1], [0], [0], [1], [0, 0, 1, 1], [], []>} : vector<8x256xf32>, vector<256x256xf32>, vector<8x256xf32> -> vector<8x256xf32>
    %c1_139 = arith.constant 1 : index
    %c2_140 = arith.constant 2 : index
    %c0_141 = arith.constant 0 : index
    %c0_142 = arith.constant 0 : index
    %129 = vector.load %arg10[%c1_139, %c2_140, %c0_141, %c0_142] : memref<3x3x16x8xf32, #tpu.memory_space<vmem>>, vector<1x1x16x8xf32>
    %130 = vector.shape_cast %129 : vector<1x1x16x8xf32> to vector<16x8xf32>
    %cst_143 = arith.constant dense<0.000000e+00> : vector<16x256xf32>
    %131 = tpu.matmul %130, %128, %cst_143 {dimension_numbers = #tpu.dot_dimension_numbers<[1], [0], [0], [1], [0, 0, 1, 1], [], []>} : vector<16x8xf32>, vector<8x256xf32>, vector<16x256xf32> -> vector<16x256xf32>
    %132 = arith.addf %125, %131 : vector<16x256xf32>
    %c6_144 = arith.constant 6 : index
    %c0_145 = arith.constant 0 : index
    %c0_146 = arith.constant 0 : index
    %133 = vector.load %arg2[%c6_144, %c0_145, %c0_146] : memref<9x256x256xf32, #tpu.memory_space<vmem>>, vector<1x256x256xf32>
    %134 = vector.shape_cast %133 : vector<1x256x256xf32> to vector<256x256xf32>
    %cst_147 = arith.constant dense<0.000000e+00> : vector<8x256xf32>
    %135 = tpu.matmul %89, %134, %cst_147 {dimension_numbers = #tpu.dot_dimension_numbers<[1], [0], [0], [1], [0, 0, 1, 1], [], []>} : vector<8x256xf32>, vector<256x256xf32>, vector<8x256xf32> -> vector<8x256xf32>
    %c2_148 = arith.constant 2 : index
    %c0_149 = arith.constant 0 : index
    %c0_150 = arith.constant 0 : index
    %c0_151 = arith.constant 0 : index
    %136 = vector.load %arg10[%c2_148, %c0_149, %c0_150, %c0_151] : memref<3x3x16x8xf32, #tpu.memory_space<vmem>>, vector<1x1x16x8xf32>
    %137 = vector.shape_cast %136 : vector<1x1x16x8xf32> to vector<16x8xf32>
    %cst_152 = arith.constant dense<0.000000e+00> : vector<16x256xf32>
    %138 = tpu.matmul %137, %135, %cst_152 {dimension_numbers = #tpu.dot_dimension_numbers<[1], [0], [0], [1], [0, 0, 1, 1], [], []>} : vector<16x8xf32>, vector<8x256xf32>, vector<16x256xf32> -> vector<16x256xf32>
    %139 = arith.addf %132, %138 : vector<16x256xf32>
    %c7_153 = arith.constant 7 : index
    %c0_154 = arith.constant 0 : index
    %c0_155 = arith.constant 0 : index
    %140 = vector.load %arg2[%c7_153, %c0_154, %c0_155] : memref<9x256x256xf32, #tpu.memory_space<vmem>>, vector<1x256x256xf32>
    %141 = vector.shape_cast %140 : vector<1x256x256xf32> to vector<256x256xf32>
    %cst_156 = arith.constant dense<0.000000e+00> : vector<8x256xf32>
    %142 = tpu.matmul %89, %141, %cst_156 {dimension_numbers = #tpu.dot_dimension_numbers<[1], [0], [0], [1], [0, 0, 1, 1], [], []>} : vector<8x256xf32>, vector<256x256xf32>, vector<8x256xf32> -> vector<8x256xf32>
    %c2_157 = arith.constant 2 : index
    %c1_158 = arith.constant 1 : index
    %c0_159 = arith.constant 0 : index
    %c0_160 = arith.constant 0 : index
    %143 = vector.load %arg10[%c2_157, %c1_158, %c0_159, %c0_160] : memref<3x3x16x8xf32, #tpu.memory_space<vmem>>, vector<1x1x16x8xf32>
    %144 = vector.shape_cast %143 : vector<1x1x16x8xf32> to vector<16x8xf32>
    %cst_161 = arith.constant dense<0.000000e+00> : vector<16x256xf32>
    %145 = tpu.matmul %144, %142, %cst_161 {dimension_numbers = #tpu.dot_dimension_numbers<[1], [0], [0], [1], [0, 0, 1, 1], [], []>} : vector<16x8xf32>, vector<8x256xf32>, vector<16x256xf32> -> vector<16x256xf32>
    %146 = arith.addf %139, %145 : vector<16x256xf32>
    %c8_162 = arith.constant 8 : index
    %c0_163 = arith.constant 0 : index
    %c0_164 = arith.constant 0 : index
    %147 = vector.load %arg2[%c8_162, %c0_163, %c0_164] : memref<9x256x256xf32, #tpu.memory_space<vmem>>, vector<1x256x256xf32>
    %148 = vector.shape_cast %147 : vector<1x256x256xf32> to vector<256x256xf32>
    %cst_165 = arith.constant dense<0.000000e+00> : vector<8x256xf32>
    %149 = tpu.matmul %89, %148, %cst_165 {dimension_numbers = #tpu.dot_dimension_numbers<[1], [0], [0], [1], [0, 0, 1, 1], [], []>} : vector<8x256xf32>, vector<256x256xf32>, vector<8x256xf32> -> vector<8x256xf32>
    %c2_166 = arith.constant 2 : index
    %c2_167 = arith.constant 2 : index
    %c0_168 = arith.constant 0 : index
    %c0_169 = arith.constant 0 : index
    %150 = vector.load %arg10[%c2_166, %c2_167, %c0_168, %c0_169] : memref<3x3x16x8xf32, #tpu.memory_space<vmem>>, vector<1x1x16x8xf32>
    %151 = vector.shape_cast %150 : vector<1x1x16x8xf32> to vector<16x8xf32>
    %cst_170 = arith.constant dense<0.000000e+00> : vector<16x256xf32>
    %152 = tpu.matmul %151, %149, %cst_170 {dimension_numbers = #tpu.dot_dimension_numbers<[1], [0], [0], [1], [0, 0, 1, 1], [], []>} : vector<16x8xf32>, vector<8x256xf32>, vector<16x256xf32> -> vector<16x256xf32>
    %153 = arith.addf %146, %152 : vector<16x256xf32>
    %c0_171 = arith.constant 0 : index
    %c0_172 = arith.constant 0 : index
    %154 = vector.load %arg11[%c0_171, %c0_172] : memref<16x1xf32, #tpu.memory_space<vmem>>, vector<16x1xf32>
    %155 = vector.broadcast %154 : vector<16x1xf32> to vector<16x256xf32>
    %156 = arith.addf %153, %155 : vector<16x256xf32>
    %cst_173 = arith.constant 0.000000e+00 : f32
    %157 = vector.broadcast %cst_173 : f32 to vector<16x256xf32>
    %158 = arith.cmpf ogt, %156, %157 : vector<16x256xf32>
    %cst_174 = arith.constant 2.000000e-01 : f32
    %159 = vector.broadcast %cst_174 : f32 to vector<16x256xf32>
    %160 = arith.mulf %159, %156 : vector<16x256xf32>
    %161 = arith.select %158, %156, %160 : vector<16x256xi1>, vector<16x256xf32>
    %c0_175 = arith.constant 0 : index
    %c0_176 = arith.constant 0 : index
    %162 = vector.load %arg3[%c0_175, %c0_176] : memref<256x64xf32, #tpu.memory_space<vmem>>, vector<256x64xf32>
    %cst_177 = arith.constant dense<0.000000e+00> : vector<16x64xf32>
    %163 = tpu.matmul %161, %162, %cst_177 {dimension_numbers = #tpu.dot_dimension_numbers<[1], [0], [0], [1], [0, 0, 1, 1], [], []>} : vector<16x256xf32>, vector<256x64xf32>, vector<16x64xf32> -> vector<16x64xf32>
    %cst_178 = arith.constant 2.500000e-01 : f32
    %164 = vector.broadcast %cst_178 : f32 to vector<16x64xf32>
    %165 = arith.mulf %163, %164 : vector<16x64xf32>
    %c0_179 = arith.constant 0 : index
    %c0_180 = arith.constant 0 : index
    %166 = vector.load %arg12[%c0_179, %c0_180] : memref<4x16xf32, #tpu.memory_space<vmem>>, vector<4x16xf32>
    %cst_181 = arith.constant dense<0.000000e+00> : vector<4x64xf32>
    %167 = tpu.matmul %166, %165, %cst_181 {dimension_numbers = #tpu.dot_dimension_numbers<[1], [0], [0], [1], [0, 0, 1, 1], [], []>} : vector<4x16xf32>, vector<16x64xf32>, vector<4x64xf32> -> vector<4x64xf32>
    %c0_182 = arith.constant 0 : index
    %c0_183 = arith.constant 0 : index
    %168 = vector.load %arg13[%c0_182, %c0_183] : memref<4x1xf32, #tpu.memory_space<vmem>>, vector<4x1xf32>
    %169 = vector.broadcast %168 : vector<4x1xf32> to vector<4x64xf32>
    %170 = arith.addf %167, %169 : vector<4x64xf32>
    %c0_184 = arith.constant 0 : index
    %c0_185 = arith.constant 0 : index
    %171 = vector.load %arg14[%c0_184, %c0_185] : memref<4x16xf32, #tpu.memory_space<vmem>>, vector<4x16xf32>
    %cst_186 = arith.constant dense<0.000000e+00> : vector<4x64xf32>
    %172 = tpu.matmul %171, %165, %cst_186 {dimension_numbers = #tpu.dot_dimension_numbers<[1], [0], [0], [1], [0, 0, 1, 1], [], []>} : vector<4x16xf32>, vector<16x64xf32>, vector<4x64xf32> -> vector<4x64xf32>
    %c0_187 = arith.constant 0 : index
    %c0_188 = arith.constant 0 : index
    %173 = vector.load %arg15[%c0_187, %c0_188] : memref<4x1xf32, #tpu.memory_space<vmem>>, vector<4x1xf32>
    %174 = vector.broadcast %173 : vector<4x1xf32> to vector<4x64xf32>
    %175 = arith.addf %172, %174 : vector<4x64xf32>
    %c0_189 = arith.constant 0 : index
    %c0_190 = arith.constant 0 : index
    %176 = vector.load %arg16[%c0_189, %c0_190] : memref<4x16xf32, #tpu.memory_space<vmem>>, vector<4x16xf32>
    %cst_191 = arith.constant dense<0.000000e+00> : vector<4x64xf32>
    %177 = tpu.matmul %176, %165, %cst_191 {dimension_numbers = #tpu.dot_dimension_numbers<[1], [0], [0], [1], [0, 0, 1, 1], [], []>} : vector<4x16xf32>, vector<16x64xf32>, vector<4x64xf32> -> vector<4x64xf32>
    %c0_192 = arith.constant 0 : index
    %c0_193 = arith.constant 0 : index
    %178 = vector.load %arg17[%c0_192, %c0_193] : memref<4x1xf32, #tpu.memory_space<vmem>>, vector<4x1xf32>
    %179 = vector.broadcast %178 : vector<4x1xf32> to vector<4x64xf32>
    %180 = arith.addf %177, %179 : vector<4x64xf32>
    %181 = tpu.transpose %170, [1, 0] : vector<4x64xf32> -> vector<64x4xf32>
    %cst_194 = arith.constant dense<0.000000e+00> : vector<64x64xf32>
    %182 = tpu.matmul %181, %175, %cst_194 {dimension_numbers = #tpu.dot_dimension_numbers<[1], [0], [0], [1], [0, 0, 1, 1], [], []>} : vector<64x4xf32>, vector<4x64xf32>, vector<64x64xf32> -> vector<64x64xf32>
    %cst_195 = arith.constant dense<0xFF800000> : vector<64xf32>
    %183 = vector.multi_reduction <maximumf>, %182, %cst_195 [1] : vector<64x64xf32> to vector<64xf32>
    %184 = vector.shape_cast %183 : vector<64xf32> to vector<64x1xf32>
    %185 = vector.broadcast %184 : vector<64x1xf32> to vector<64x64xf32>
    %186 = arith.subf %182, %185 : vector<64x64xf32>
    %187 = math.exp %186 : vector<64x64xf32>
    %cst_196 = arith.constant dense<0.000000e+00> : vector<64xf32>
    %188 = vector.multi_reduction <add>, %187, %cst_196 [1] : vector<64x64xf32> to vector<64xf32>
    %189 = vector.shape_cast %188 : vector<64xf32> to vector<64x1xf32>
    %190 = vector.broadcast %189 : vector<64x1xf32> to vector<64x64xf32>
    %191 = arith.divf %187, %190 : vector<64x64xf32>
    %cst_197 = arith.constant dense<0.000000e+00> : vector<4x64xf32>
    %192 = tpu.matmul %180, %191, %cst_197 {dimension_numbers = #tpu.dot_dimension_numbers<[1], [1], [0], [0], [0, 0, 1, 0], [], []>} : vector<4x64xf32>, vector<64x64xf32>, vector<4x64xf32> -> vector<4x64xf32>
    %cst_198 = arith.constant 5.000000e-01 : f32
    %193 = vector.broadcast %cst_198 : f32 to vector<4x64xf32>
    %194 = arith.mulf %192, %193 : vector<4x64xf32>
    %c0_199 = arith.constant 0 : index
    %c0_200 = arith.constant 0 : index
    %195 = vector.load %arg18[%c0_199, %c0_200] : memref<16x4xf32, #tpu.memory_space<vmem>>, vector<16x4xf32>
    %cst_201 = arith.constant dense<0.000000e+00> : vector<16x64xf32>
    %196 = tpu.matmul %195, %194, %cst_201 {dimension_numbers = #tpu.dot_dimension_numbers<[1], [0], [0], [1], [0, 0, 1, 1], [], []>} : vector<16x4xf32>, vector<4x64xf32>, vector<16x64xf32> -> vector<16x64xf32>
    %c0_202 = arith.constant 0 : index
    %c0_203 = arith.constant 0 : index
    %197 = vector.load %arg19[%c0_202, %c0_203] : memref<16x1xf32, #tpu.memory_space<vmem>>, vector<16x1xf32>
    %198 = vector.broadcast %197 : vector<16x1xf32> to vector<16x64xf32>
    %199 = arith.addf %196, %198 : vector<16x64xf32>
    %c0_204 = arith.constant 0 : index
    %c0_205 = arith.constant 0 : index
    %200 = vector.load %arg20[%c0_204, %c0_205] : memref<1x1xf32, #tpu.memory_space<vmem>>, vector<1x1xf32>
    %201 = vector.extract %200[0, 0] : f32 from vector<1x1xf32>
    %202 = vector.broadcast %201 : f32 to vector<16x64xf32>
    %203 = arith.mulf %202, %199 : vector<16x64xf32>
    %204 = arith.addf %203, %163 : vector<16x64xf32>
    %cst_206 = arith.constant 0.115562543 : f32
    %205 = vector.broadcast %cst_206 : f32 to vector<16x64xf32>
    %206 = arith.mulf %204, %205 : vector<16x64xf32>
    %cst_207 = arith.constant 0.000000e+00 : f32
    %207 = vector.broadcast %cst_207 : f32 to vector<16x64xf32>
    %c0_208 = arith.constant 0 : index
    %c0_209 = arith.constant 0 : index
    %c0_210 = arith.constant 0 : index
    %208 = vector.load %arg4[%c0_208, %c0_209, %c0_210] : memref<9x64x64xf32, #tpu.memory_space<vmem>>, vector<1x64x64xf32>
    %209 = vector.shape_cast %208 : vector<1x64x64xf32> to vector<64x64xf32>
    %cst_211 = arith.constant dense<0.000000e+00> : vector<16x64xf32>
    %210 = tpu.matmul %206, %209, %cst_211 {dimension_numbers = #tpu.dot_dimension_numbers<[1], [0], [0], [1], [0, 0, 1, 1], [], []>} : vector<16x64xf32>, vector<64x64xf32>, vector<16x64xf32> -> vector<16x64xf32>
    %c0_212 = arith.constant 0 : index
    %c0_213 = arith.constant 0 : index
    %c0_214 = arith.constant 0 : index
    %c0_215 = arith.constant 0 : index
    %211 = vector.load %arg21[%c0_212, %c0_213, %c0_214, %c0_215] : memref<3x3x16x16xf32, #tpu.memory_space<vmem>>, vector<1x1x16x16xf32>
    %212 = vector.shape_cast %211 : vector<1x1x16x16xf32> to vector<16x16xf32>
    %cst_216 = arith.constant dense<0.000000e+00> : vector<16x64xf32>
    %213 = tpu.matmul %212, %210, %cst_216 {dimension_numbers = #tpu.dot_dimension_numbers<[1], [0], [0], [1], [0, 0, 1, 1], [], []>} : vector<16x16xf32>, vector<16x64xf32>, vector<16x64xf32> -> vector<16x64xf32>
    %214 = arith.addf %207, %213 : vector<16x64xf32>
    %c1_217 = arith.constant 1 : index
    %c0_218 = arith.constant 0 : index
    %c0_219 = arith.constant 0 : index
    %215 = vector.load %arg4[%c1_217, %c0_218, %c0_219] : memref<9x64x64xf32, #tpu.memory_space<vmem>>, vector<1x64x64xf32>
    %216 = vector.shape_cast %215 : vector<1x64x64xf32> to vector<64x64xf32>
    %cst_220 = arith.constant dense<0.000000e+00> : vector<16x64xf32>
    %217 = tpu.matmul %206, %216, %cst_220 {dimension_numbers = #tpu.dot_dimension_numbers<[1], [0], [0], [1], [0, 0, 1, 1], [], []>} : vector<16x64xf32>, vector<64x64xf32>, vector<16x64xf32> -> vector<16x64xf32>
    %c0_221 = arith.constant 0 : index
    %c1_222 = arith.constant 1 : index
    %c0_223 = arith.constant 0 : index
    %c0_224 = arith.constant 0 : index
    %218 = vector.load %arg21[%c0_221, %c1_222, %c0_223, %c0_224] : memref<3x3x16x16xf32, #tpu.memory_space<vmem>>, vector<1x1x16x16xf32>
    %219 = vector.shape_cast %218 : vector<1x1x16x16xf32> to vector<16x16xf32>
    %cst_225 = arith.constant dense<0.000000e+00> : vector<16x64xf32>
    %220 = tpu.matmul %219, %217, %cst_225 {dimension_numbers = #tpu.dot_dimension_numbers<[1], [0], [0], [1], [0, 0, 1, 1], [], []>} : vector<16x16xf32>, vector<16x64xf32>, vector<16x64xf32> -> vector<16x64xf32>
    %221 = arith.addf %214, %220 : vector<16x64xf32>
    %c2_226 = arith.constant 2 : index
    %c0_227 = arith.constant 0 : index
    %c0_228 = arith.constant 0 : index
    %222 = vector.load %arg4[%c2_226, %c0_227, %c0_228] : memref<9x64x64xf32, #tpu.memory_space<vmem>>, vector<1x64x64xf32>
    %223 = vector.shape_cast %222 : vector<1x64x64xf32> to vector<64x64xf32>
    %cst_229 = arith.constant dense<0.000000e+00> : vector<16x64xf32>
    %224 = tpu.matmul %206, %223, %cst_229 {dimension_numbers = #tpu.dot_dimension_numbers<[1], [0], [0], [1], [0, 0, 1, 1], [], []>} : vector<16x64xf32>, vector<64x64xf32>, vector<16x64xf32> -> vector<16x64xf32>
    %c0_230 = arith.constant 0 : index
    %c2_231 = arith.constant 2 : index
    %c0_232 = arith.constant 0 : index
    %c0_233 = arith.constant 0 : index
    %225 = vector.load %arg21[%c0_230, %c2_231, %c0_232, %c0_233] : memref<3x3x16x16xf32, #tpu.memory_space<vmem>>, vector<1x1x16x16xf32>
    %226 = vector.shape_cast %225 : vector<1x1x16x16xf32> to vector<16x16xf32>
    %cst_234 = arith.constant dense<0.000000e+00> : vector<16x64xf32>
    %227 = tpu.matmul %226, %224, %cst_234 {dimension_numbers = #tpu.dot_dimension_numbers<[1], [0], [0], [1], [0, 0, 1, 1], [], []>} : vector<16x16xf32>, vector<16x64xf32>, vector<16x64xf32> -> vector<16x64xf32>
    %228 = arith.addf %221, %227 : vector<16x64xf32>
    %c3_235 = arith.constant 3 : index
    %c0_236 = arith.constant 0 : index
    %c0_237 = arith.constant 0 : index
    %229 = vector.load %arg4[%c3_235, %c0_236, %c0_237] : memref<9x64x64xf32, #tpu.memory_space<vmem>>, vector<1x64x64xf32>
    %230 = vector.shape_cast %229 : vector<1x64x64xf32> to vector<64x64xf32>
    %cst_238 = arith.constant dense<0.000000e+00> : vector<16x64xf32>
    %231 = tpu.matmul %206, %230, %cst_238 {dimension_numbers = #tpu.dot_dimension_numbers<[1], [0], [0], [1], [0, 0, 1, 1], [], []>} : vector<16x64xf32>, vector<64x64xf32>, vector<16x64xf32> -> vector<16x64xf32>
    %c1_239 = arith.constant 1 : index
    %c0_240 = arith.constant 0 : index
    %c0_241 = arith.constant 0 : index
    %c0_242 = arith.constant 0 : index
    %232 = vector.load %arg21[%c1_239, %c0_240, %c0_241, %c0_242] : memref<3x3x16x16xf32, #tpu.memory_space<vmem>>, vector<1x1x16x16xf32>
    %233 = vector.shape_cast %232 : vector<1x1x16x16xf32> to vector<16x16xf32>
    %cst_243 = arith.constant dense<0.000000e+00> : vector<16x64xf32>
    %234 = tpu.matmul %233, %231, %cst_243 {dimension_numbers = #tpu.dot_dimension_numbers<[1], [0], [0], [1], [0, 0, 1, 1], [], []>} : vector<16x16xf32>, vector<16x64xf32>, vector<16x64xf32> -> vector<16x64xf32>
    %235 = arith.addf %228, %234 : vector<16x64xf32>
    %c4_244 = arith.constant 4 : index
    %c0_245 = arith.constant 0 : index
    %c0_246 = arith.constant 0 : index
    %236 = vector.load %arg4[%c4_244, %c0_245, %c0_246] : memref<9x64x64xf32, #tpu.memory_space<vmem>>, vector<1x64x64xf32>
    %237 = vector.shape_cast %236 : vector<1x64x64xf32> to vector<64x64xf32>
    %cst_247 = arith.constant dense<0.000000e+00> : vector<16x64xf32>
    %238 = tpu.matmul %206, %237, %cst_247 {dimension_numbers = #tpu.dot_dimension_numbers<[1], [0], [0], [1], [0, 0, 1, 1], [], []>} : vector<16x64xf32>, vector<64x64xf32>, vector<16x64xf32> -> vector<16x64xf32>
    %c1_248 = arith.constant 1 : index
    %c1_249 = arith.constant 1 : index
    %c0_250 = arith.constant 0 : index
    %c0_251 = arith.constant 0 : index
    %239 = vector.load %arg21[%c1_248, %c1_249, %c0_250, %c0_251] : memref<3x3x16x16xf32, #tpu.memory_space<vmem>>, vector<1x1x16x16xf32>
    %240 = vector.shape_cast %239 : vector<1x1x16x16xf32> to vector<16x16xf32>
    %cst_252 = arith.constant dense<0.000000e+00> : vector<16x64xf32>
    %241 = tpu.matmul %240, %238, %cst_252 {dimension_numbers = #tpu.dot_dimension_numbers<[1], [0], [0], [1], [0, 0, 1, 1], [], []>} : vector<16x16xf32>, vector<16x64xf32>, vector<16x64xf32> -> vector<16x64xf32>
    %242 = arith.addf %235, %241 : vector<16x64xf32>
    %c5_253 = arith.constant 5 : index
    %c0_254 = arith.constant 0 : index
    %c0_255 = arith.constant 0 : index
    %243 = vector.load %arg4[%c5_253, %c0_254, %c0_255] : memref<9x64x64xf32, #tpu.memory_space<vmem>>, vector<1x64x64xf32>
    %244 = vector.shape_cast %243 : vector<1x64x64xf32> to vector<64x64xf32>
    %cst_256 = arith.constant dense<0.000000e+00> : vector<16x64xf32>
    %245 = tpu.matmul %206, %244, %cst_256 {dimension_numbers = #tpu.dot_dimension_numbers<[1], [0], [0], [1], [0, 0, 1, 1], [], []>} : vector<16x64xf32>, vector<64x64xf32>, vector<16x64xf32> -> vector<16x64xf32>
    %c1_257 = arith.constant 1 : index
    %c2_258 = arith.constant 2 : index
    %c0_259 = arith.constant 0 : index
    %c0_260 = arith.constant 0 : index
    %246 = vector.load %arg21[%c1_257, %c2_258, %c0_259, %c0_260] : memref<3x3x16x16xf32, #tpu.memory_space<vmem>>, vector<1x1x16x16xf32>
    %247 = vector.shape_cast %246 : vector<1x1x16x16xf32> to vector<16x16xf32>
    %cst_261 = arith.constant dense<0.000000e+00> : vector<16x64xf32>
    %248 = tpu.matmul %247, %245, %cst_261 {dimension_numbers = #tpu.dot_dimension_numbers<[1], [0], [0], [1], [0, 0, 1, 1], [], []>} : vector<16x16xf32>, vector<16x64xf32>, vector<16x64xf32> -> vector<16x64xf32>
    %249 = arith.addf %242, %248 : vector<16x64xf32>
    %c6_262 = arith.constant 6 : index
    %c0_263 = arith.constant 0 : index
    %c0_264 = arith.constant 0 : index
    %250 = vector.load %arg4[%c6_262, %c0_263, %c0_264] : memref<9x64x64xf32, #tpu.memory_space<vmem>>, vector<1x64x64xf32>
    %251 = vector.shape_cast %250 : vector<1x64x64xf32> to vector<64x64xf32>
    %cst_265 = arith.constant dense<0.000000e+00> : vector<16x64xf32>
    %252 = tpu.matmul %206, %251, %cst_265 {dimension_numbers = #tpu.dot_dimension_numbers<[1], [0], [0], [1], [0, 0, 1, 1], [], []>} : vector<16x64xf32>, vector<64x64xf32>, vector<16x64xf32> -> vector<16x64xf32>
    %c2_266 = arith.constant 2 : index
    %c0_267 = arith.constant 0 : index
    %c0_268 = arith.constant 0 : index
    %c0_269 = arith.constant 0 : index
    %253 = vector.load %arg21[%c2_266, %c0_267, %c0_268, %c0_269] : memref<3x3x16x16xf32, #tpu.memory_space<vmem>>, vector<1x1x16x16xf32>
    %254 = vector.shape_cast %253 : vector<1x1x16x16xf32> to vector<16x16xf32>
    %cst_270 = arith.constant dense<0.000000e+00> : vector<16x64xf32>
    %255 = tpu.matmul %254, %252, %cst_270 {dimension_numbers = #tpu.dot_dimension_numbers<[1], [0], [0], [1], [0, 0, 1, 1], [], []>} : vector<16x16xf32>, vector<16x64xf32>, vector<16x64xf32> -> vector<16x64xf32>
    %256 = arith.addf %249, %255 : vector<16x64xf32>
    %c7_271 = arith.constant 7 : index
    %c0_272 = arith.constant 0 : index
    %c0_273 = arith.constant 0 : index
    %257 = vector.load %arg4[%c7_271, %c0_272, %c0_273] : memref<9x64x64xf32, #tpu.memory_space<vmem>>, vector<1x64x64xf32>
    %258 = vector.shape_cast %257 : vector<1x64x64xf32> to vector<64x64xf32>
    %cst_274 = arith.constant dense<0.000000e+00> : vector<16x64xf32>
    %259 = tpu.matmul %206, %258, %cst_274 {dimension_numbers = #tpu.dot_dimension_numbers<[1], [0], [0], [1], [0, 0, 1, 1], [], []>} : vector<16x64xf32>, vector<64x64xf32>, vector<16x64xf32> -> vector<16x64xf32>
    %c2_275 = arith.constant 2 : index
    %c1_276 = arith.constant 1 : index
    %c0_277 = arith.constant 0 : index
    %c0_278 = arith.constant 0 : index
    %260 = vector.load %arg21[%c2_275, %c1_276, %c0_277, %c0_278] : memref<3x3x16x16xf32, #tpu.memory_space<vmem>>, vector<1x1x16x16xf32>
    %261 = vector.shape_cast %260 : vector<1x1x16x16xf32> to vector<16x16xf32>
    %cst_279 = arith.constant dense<0.000000e+00> : vector<16x64xf32>
    %262 = tpu.matmul %261, %259, %cst_279 {dimension_numbers = #tpu.dot_dimension_numbers<[1], [0], [0], [1], [0, 0, 1, 1], [], []>} : vector<16x16xf32>, vector<16x64xf32>, vector<16x64xf32> -> vector<16x64xf32>
    %263 = arith.addf %256, %262 : vector<16x64xf32>
    %c8_280 = arith.constant 8 : index
    %c0_281 = arith.constant 0 : index
    %c0_282 = arith.constant 0 : index
    %264 = vector.load %arg4[%c8_280, %c0_281, %c0_282] : memref<9x64x64xf32, #tpu.memory_space<vmem>>, vector<1x64x64xf32>
    %265 = vector.shape_cast %264 : vector<1x64x64xf32> to vector<64x64xf32>
    %cst_283 = arith.constant dense<0.000000e+00> : vector<16x64xf32>
    %266 = tpu.matmul %206, %265, %cst_283 {dimension_numbers = #tpu.dot_dimension_numbers<[1], [0], [0], [1], [0, 0, 1, 1], [], []>} : vector<16x64xf32>, vector<64x64xf32>, vector<16x64xf32> -> vector<16x64xf32>
    %c2_284 = arith.constant 2 : index
    %c2_285 = arith.constant 2 : index
    %c0_286 = arith.constant 0 : index
    %c0_287 = arith.constant 0 : index
    %267 = vector.load %arg21[%c2_284, %c2_285, %c0_286, %c0_287] : memref<3x3x16x16xf32, #tpu.memory_space<vmem>>, vector<1x1x16x16xf32>
    %268 = vector.shape_cast %267 : vector<1x1x16x16xf32> to vector<16x16xf32>
    %cst_288 = arith.constant dense<0.000000e+00> : vector<16x64xf32>
    %269 = tpu.matmul %268, %266, %cst_288 {dimension_numbers = #tpu.dot_dimension_numbers<[1], [0], [0], [1], [0, 0, 1, 1], [], []>} : vector<16x16xf32>, vector<16x64xf32>, vector<16x64xf32> -> vector<16x64xf32>
    %270 = arith.addf %263, %269 : vector<16x64xf32>
    %c0_289 = arith.constant 0 : index
    %c0_290 = arith.constant 0 : index
    %271 = vector.load %arg22[%c0_289, %c0_290] : memref<16x1xf32, #tpu.memory_space<vmem>>, vector<16x1xf32>
    %272 = vector.broadcast %271 : vector<16x1xf32> to vector<16x64xf32>
    %273 = arith.addf %270, %272 : vector<16x64xf32>
    %cst_291 = arith.constant 0.000000e+00 : f32
    %274 = vector.broadcast %cst_291 : f32 to vector<16x64xf32>
    %275 = arith.cmpf ogt, %273, %274 : vector<16x64xf32>
    %cst_292 = arith.constant 2.000000e-01 : f32
    %276 = vector.broadcast %cst_292 : f32 to vector<16x64xf32>
    %277 = arith.mulf %276, %273 : vector<16x64xf32>
    %278 = arith.select %275, %273, %277 : vector<16x64xi1>, vector<16x64xf32>
    %cst_293 = arith.constant 0.115562543 : f32
    %279 = vector.broadcast %cst_293 : f32 to vector<16x64xf32>
    %280 = arith.mulf %278, %279 : vector<16x64xf32>
    %cst_294 = arith.constant 0.000000e+00 : f32
    %281 = vector.broadcast %cst_294 : f32 to vector<32x64xf32>
    %c0_295 = arith.constant 0 : index
    %c0_296 = arith.constant 0 : index
    %c0_297 = arith.constant 0 : index
    %282 = vector.load %arg4[%c0_295, %c0_296, %c0_297] : memref<9x64x64xf32, #tpu.memory_space<vmem>>, vector<1x64x64xf32>
    %283 = vector.shape_cast %282 : vector<1x64x64xf32> to vector<64x64xf32>
    %cst_298 = arith.constant dense<0.000000e+00> : vector<16x64xf32>
    %284 = tpu.matmul %280, %283, %cst_298 {dimension_numbers = #tpu.dot_dimension_numbers<[1], [0], [0], [1], [0, 0, 1, 1], [], []>} : vector<16x64xf32>, vector<64x64xf32>, vector<16x64xf32> -> vector<16x64xf32>
    %c0_299 = arith.constant 0 : index
    %c0_300 = arith.constant 0 : index
    %c0_301 = arith.constant 0 : index
    %c0_302 = arith.constant 0 : index
    %285 = vector.load %arg23[%c0_299, %c0_300, %c0_301, %c0_302] : memref<3x3x32x16xf32, #tpu.memory_space<vmem>>, vector<1x1x32x16xf32>
    %286 = vector.shape_cast %285 : vector<1x1x32x16xf32> to vector<32x16xf32>
    %cst_303 = arith.constant dense<0.000000e+00> : vector<32x64xf32>
    %287 = tpu.matmul %286, %284, %cst_303 {dimension_numbers = #tpu.dot_dimension_numbers<[1], [0], [0], [1], [0, 0, 1, 1], [], []>} : vector<32x16xf32>, vector<16x64xf32>, vector<32x64xf32> -> vector<32x64xf32>
    %288 = arith.addf %281, %287 : vector<32x64xf32>
    %c1_304 = arith.constant 1 : index
    %c0_305 = arith.constant 0 : index
    %c0_306 = arith.constant 0 : index
    %289 = vector.load %arg4[%c1_304, %c0_305, %c0_306] : memref<9x64x64xf32, #tpu.memory_space<vmem>>, vector<1x64x64xf32>
    %290 = vector.shape_cast %289 : vector<1x64x64xf32> to vector<64x64xf32>
    %cst_307 = arith.constant dense<0.000000e+00> : vector<16x64xf32>
    %291 = tpu.matmul %280, %290, %cst_307 {dimension_numbers = #tpu.dot_dimension_numbers<[1], [0], [0], [1], [0, 0, 1, 1], [], []>} : vector<16x64xf32>, vector<64x64xf32>, vector<16x64xf32> -> vector<16x64xf32>
    %c0_308 = arith.constant 0 : index
    %c1_309 = arith.constant 1 : index
    %c0_310 = arith.constant 0 : index
    %c0_311 = arith.constant 0 : index
    %292 = vector.load %arg23[%c0_308, %c1_309, %c0_310, %c0_311] : memref<3x3x32x16xf32, #tpu.memory_space<vmem>>, vector<1x1x32x16xf32>
    %293 = vector.shape_cast %292 : vector<1x1x32x16xf32> to vector<32x16xf32>
    %cst_312 = arith.constant dense<0.000000e+00> : vector<32x64xf32>
    %294 = tpu.matmul %293, %291, %cst_312 {dimension_numbers = #tpu.dot_dimension_numbers<[1], [0], [0], [1], [0, 0, 1, 1], [], []>} : vector<32x16xf32>, vector<16x64xf32>, vector<32x64xf32> -> vector<32x64xf32>
    %295 = arith.addf %288, %294 : vector<32x64xf32>
    %c2_313 = arith.constant 2 : index
    %c0_314 = arith.constant 0 : index
    %c0_315 = arith.constant 0 : index
    %296 = vector.load %arg4[%c2_313, %c0_314, %c0_315] : memref<9x64x64xf32, #tpu.memory_space<vmem>>, vector<1x64x64xf32>
    %297 = vector.shape_cast %296 : vector<1x64x64xf32> to vector<64x64xf32>
    %cst_316 = arith.constant dense<0.000000e+00> : vector<16x64xf32>
    %298 = tpu.matmul %280, %297, %cst_316 {dimension_numbers = #tpu.dot_dimension_numbers<[1], [0], [0], [1], [0, 0, 1, 1], [], []>} : vector<16x64xf32>, vector<64x64xf32>, vector<16x64xf32> -> vector<16x64xf32>
    %c0_317 = arith.constant 0 : index
    %c2_318 = arith.constant 2 : index
    %c0_319 = arith.constant 0 : index
    %c0_320 = arith.constant 0 : index
    %299 = vector.load %arg23[%c0_317, %c2_318, %c0_319, %c0_320] : memref<3x3x32x16xf32, #tpu.memory_space<vmem>>, vector<1x1x32x16xf32>
    %300 = vector.shape_cast %299 : vector<1x1x32x16xf32> to vector<32x16xf32>
    %cst_321 = arith.constant dense<0.000000e+00> : vector<32x64xf32>
    %301 = tpu.matmul %300, %298, %cst_321 {dimension_numbers = #tpu.dot_dimension_numbers<[1], [0], [0], [1], [0, 0, 1, 1], [], []>} : vector<32x16xf32>, vector<16x64xf32>, vector<32x64xf32> -> vector<32x64xf32>
    %302 = arith.addf %295, %301 : vector<32x64xf32>
    %c3_322 = arith.constant 3 : index
    %c0_323 = arith.constant 0 : index
    %c0_324 = arith.constant 0 : index
    %303 = vector.load %arg4[%c3_322, %c0_323, %c0_324] : memref<9x64x64xf32, #tpu.memory_space<vmem>>, vector<1x64x64xf32>
    %304 = vector.shape_cast %303 : vector<1x64x64xf32> to vector<64x64xf32>
    %cst_325 = arith.constant dense<0.000000e+00> : vector<16x64xf32>
    %305 = tpu.matmul %280, %304, %cst_325 {dimension_numbers = #tpu.dot_dimension_numbers<[1], [0], [0], [1], [0, 0, 1, 1], [], []>} : vector<16x64xf32>, vector<64x64xf32>, vector<16x64xf32> -> vector<16x64xf32>
    %c1_326 = arith.constant 1 : index
    %c0_327 = arith.constant 0 : index
    %c0_328 = arith.constant 0 : index
    %c0_329 = arith.constant 0 : index
    %306 = vector.load %arg23[%c1_326, %c0_327, %c0_328, %c0_329] : memref<3x3x32x16xf32, #tpu.memory_space<vmem>>, vector<1x1x32x16xf32>
    %307 = vector.shape_cast %306 : vector<1x1x32x16xf32> to vector<32x16xf32>
    %cst_330 = arith.constant dense<0.000000e+00> : vector<32x64xf32>
    %308 = tpu.matmul %307, %305, %cst_330 {dimension_numbers = #tpu.dot_dimension_numbers<[1], [0], [0], [1], [0, 0, 1, 1], [], []>} : vector<32x16xf32>, vector<16x64xf32>, vector<32x64xf32> -> vector<32x64xf32>
    %309 = arith.addf %302, %308 : vector<32x64xf32>
    %c4_331 = arith.constant 4 : index
    %c0_332 = arith.constant 0 : index
    %c0_333 = arith.constant 0 : index
    %310 = vector.load %arg4[%c4_331, %c0_332, %c0_333] : memref<9x64x64xf32, #tpu.memory_space<vmem>>, vector<1x64x64xf32>
    %311 = vector.shape_cast %310 : vector<1x64x64xf32> to vector<64x64xf32>
    %cst_334 = arith.constant dense<0.000000e+00> : vector<16x64xf32>
    %312 = tpu.matmul %280, %311, %cst_334 {dimension_numbers = #tpu.dot_dimension_numbers<[1], [0], [0], [1], [0, 0, 1, 1], [], []>} : vector<16x64xf32>, vector<64x64xf32>, vector<16x64xf32> -> vector<16x64xf32>
    %c1_335 = arith.constant 1 : index
    %c1_336 = arith.constant 1 : index
    %c0_337 = arith.constant 0 : index
    %c0_338 = arith.constant 0 : index
    %313 = vector.load %arg23[%c1_335, %c1_336, %c0_337, %c0_338] : memref<3x3x32x16xf32, #tpu.memory_space<vmem>>, vector<1x1x32x16xf32>
    %314 = vector.shape_cast %313 : vector<1x1x32x16xf32> to vector<32x16xf32>
    %cst_339 = arith.constant dense<0.000000e+00> : vector<32x64xf32>
    %315 = tpu.matmul %314, %312, %cst_339 {dimension_numbers = #tpu.dot_dimension_numbers<[1], [0], [0], [1], [0, 0, 1, 1], [], []>} : vector<32x16xf32>, vector<16x64xf32>, vector<32x64xf32> -> vector<32x64xf32>
    %316 = arith.addf %309, %315 : vector<32x64xf32>
    %c5_340 = arith.constant 5 : index
    %c0_341 = arith.constant 0 : index
    %c0_342 = arith.constant 0 : index
    %317 = vector.load %arg4[%c5_340, %c0_341, %c0_342] : memref<9x64x64xf32, #tpu.memory_space<vmem>>, vector<1x64x64xf32>
    %318 = vector.shape_cast %317 : vector<1x64x64xf32> to vector<64x64xf32>
    %cst_343 = arith.constant dense<0.000000e+00> : vector<16x64xf32>
    %319 = tpu.matmul %280, %318, %cst_343 {dimension_numbers = #tpu.dot_dimension_numbers<[1], [0], [0], [1], [0, 0, 1, 1], [], []>} : vector<16x64xf32>, vector<64x64xf32>, vector<16x64xf32> -> vector<16x64xf32>
    %c1_344 = arith.constant 1 : index
    %c2_345 = arith.constant 2 : index
    %c0_346 = arith.constant 0 : index
    %c0_347 = arith.constant 0 : index
    %320 = vector.load %arg23[%c1_344, %c2_345, %c0_346, %c0_347] : memref<3x3x32x16xf32, #tpu.memory_space<vmem>>, vector<1x1x32x16xf32>
    %321 = vector.shape_cast %320 : vector<1x1x32x16xf32> to vector<32x16xf32>
    %cst_348 = arith.constant dense<0.000000e+00> : vector<32x64xf32>
    %322 = tpu.matmul %321, %319, %cst_348 {dimension_numbers = #tpu.dot_dimension_numbers<[1], [0], [0], [1], [0, 0, 1, 1], [], []>} : vector<32x16xf32>, vector<16x64xf32>, vector<32x64xf32> -> vector<32x64xf32>
    %323 = arith.addf %316, %322 : vector<32x64xf32>
    %c6_349 = arith.constant 6 : index
    %c0_350 = arith.constant 0 : index
    %c0_351 = arith.constant 0 : index
    %324 = vector.load %arg4[%c6_349, %c0_350, %c0_351] : memref<9x64x64xf32, #tpu.memory_space<vmem>>, vector<1x64x64xf32>
    %325 = vector.shape_cast %324 : vector<1x64x64xf32> to vector<64x64xf32>
    %cst_352 = arith.constant dense<0.000000e+00> : vector<16x64xf32>
    %326 = tpu.matmul %280, %325, %cst_352 {dimension_numbers = #tpu.dot_dimension_numbers<[1], [0], [0], [1], [0, 0, 1, 1], [], []>} : vector<16x64xf32>, vector<64x64xf32>, vector<16x64xf32> -> vector<16x64xf32>
    %c2_353 = arith.constant 2 : index
    %c0_354 = arith.constant 0 : index
    %c0_355 = arith.constant 0 : index
    %c0_356 = arith.constant 0 : index
    %327 = vector.load %arg23[%c2_353, %c0_354, %c0_355, %c0_356] : memref<3x3x32x16xf32, #tpu.memory_space<vmem>>, vector<1x1x32x16xf32>
    %328 = vector.shape_cast %327 : vector<1x1x32x16xf32> to vector<32x16xf32>
    %cst_357 = arith.constant dense<0.000000e+00> : vector<32x64xf32>
    %329 = tpu.matmul %328, %326, %cst_357 {dimension_numbers = #tpu.dot_dimension_numbers<[1], [0], [0], [1], [0, 0, 1, 1], [], []>} : vector<32x16xf32>, vector<16x64xf32>, vector<32x64xf32> -> vector<32x64xf32>
    %330 = arith.addf %323, %329 : vector<32x64xf32>
    %c7_358 = arith.constant 7 : index
    %c0_359 = arith.constant 0 : index
    %c0_360 = arith.constant 0 : index
    %331 = vector.load %arg4[%c7_358, %c0_359, %c0_360] : memref<9x64x64xf32, #tpu.memory_space<vmem>>, vector<1x64x64xf32>
    %332 = vector.shape_cast %331 : vector<1x64x64xf32> to vector<64x64xf32>
    %cst_361 = arith.constant dense<0.000000e+00> : vector<16x64xf32>
    %333 = tpu.matmul %280, %332, %cst_361 {dimension_numbers = #tpu.dot_dimension_numbers<[1], [0], [0], [1], [0, 0, 1, 1], [], []>} : vector<16x64xf32>, vector<64x64xf32>, vector<16x64xf32> -> vector<16x64xf32>
    %c2_362 = arith.constant 2 : index
    %c1_363 = arith.constant 1 : index
    %c0_364 = arith.constant 0 : index
    %c0_365 = arith.constant 0 : index
    %334 = vector.load %arg23[%c2_362, %c1_363, %c0_364, %c0_365] : memref<3x3x32x16xf32, #tpu.memory_space<vmem>>, vector<1x1x32x16xf32>
    %335 = vector.shape_cast %334 : vector<1x1x32x16xf32> to vector<32x16xf32>
    %cst_366 = arith.constant dense<0.000000e+00> : vector<32x64xf32>
    %336 = tpu.matmul %335, %333, %cst_366 {dimension_numbers = #tpu.dot_dimension_numbers<[1], [0], [0], [1], [0, 0, 1, 1], [], []>} : vector<32x16xf32>, vector<16x64xf32>, vector<32x64xf32> -> vector<32x64xf32>
    %337 = arith.addf %330, %336 : vector<32x64xf32>
    %c8_367 = arith.constant 8 : index
    %c0_368 = arith.constant 0 : index
    %c0_369 = arith.constant 0 : index
    %338 = vector.load %arg4[%c8_367, %c0_368, %c0_369] : memref<9x64x64xf32, #tpu.memory_space<vmem>>, vector<1x64x64xf32>
    %339 = vector.shape_cast %338 : vector<1x64x64xf32> to vector<64x64xf32>
    %cst_370 = arith.constant dense<0.000000e+00> : vector<16x64xf32>
    %340 = tpu.matmul %280, %339, %cst_370 {dimension_numbers = #tpu.dot_dimension_numbers<[1], [0], [0], [1], [0, 0, 1, 1], [], []>} : vector<16x64xf32>, vector<64x64xf32>, vector<16x64xf32> -> vector<16x64xf32>
    %c2_371 = arith.constant 2 : index
    %c2_372 = arith.constant 2 : index
    %c0_373 = arith.constant 0 : index
    %c0_374 = arith.constant 0 : index
    %341 = vector.load %arg23[%c2_371, %c2_372, %c0_373, %c0_374] : memref<3x3x32x16xf32, #tpu.memory_space<vmem>>, vector<1x1x32x16xf32>
    %342 = vector.shape_cast %341 : vector<1x1x32x16xf32> to vector<32x16xf32>
    %cst_375 = arith.constant dense<0.000000e+00> : vector<32x64xf32>
    %343 = tpu.matmul %342, %340, %cst_375 {dimension_numbers = #tpu.dot_dimension_numbers<[1], [0], [0], [1], [0, 0, 1, 1], [], []>} : vector<32x16xf32>, vector<16x64xf32>, vector<32x64xf32> -> vector<32x64xf32>
    %344 = arith.addf %337, %343 : vector<32x64xf32>
    %c0_376 = arith.constant 0 : index
    %c0_377 = arith.constant 0 : index
    %345 = vector.load %arg24[%c0_376, %c0_377] : memref<32x1xf32, #tpu.memory_space<vmem>>, vector<32x1xf32>
    %346 = vector.broadcast %345 : vector<32x1xf32> to vector<32x64xf32>
    %347 = arith.addf %344, %346 : vector<32x64xf32>
    %cst_378 = arith.constant 0.000000e+00 : f32
    %348 = vector.broadcast %cst_378 : f32 to vector<32x64xf32>
    %349 = arith.cmpf ogt, %347, %348 : vector<32x64xf32>
    %cst_379 = arith.constant 2.000000e-01 : f32
    %350 = vector.broadcast %cst_379 : f32 to vector<32x64xf32>
    %351 = arith.mulf %350, %347 : vector<32x64xf32>
    %352 = arith.select %349, %347, %351 : vector<32x64xi1>, vector<32x64xf32>
    %c0_380 = arith.constant 0 : index
    %c0_381 = arith.constant 0 : index
    %353 = vector.load %arg5[%c0_380, %c0_381] : memref<64x16xf32, #tpu.memory_space<vmem>>, vector<64x16xf32>
    %cst_382 = arith.constant dense<0.000000e+00> : vector<32x16xf32>
    %354 = tpu.matmul %352, %353, %cst_382 {dimension_numbers = #tpu.dot_dimension_numbers<[1], [0], [0], [1], [0, 0, 1, 1], [], []>} : vector<32x64xf32>, vector<64x16xf32>, vector<32x16xf32> -> vector<32x16xf32>
    %c0_383 = arith.constant 0 : index
    %c0_384 = arith.constant 0 : index
    %c0_385 = arith.constant 0 : index
    %355 = vector.load %arg25[%c0_383, %c0_384, %c0_385] : memref<1x32x16xf32, #tpu.memory_space<vmem>>, vector<1x32x16xf32>
    %356 = vector.shape_cast %355 : vector<1x32x16xf32> to vector<32x16xf32>
    %357 = vector.shape_cast %354 : vector<32x16xf32> to vector<1x32x16xf32>
    tpu.vector_store %arg25[%c0_383, %c0_384, %c0_385], %357 {strides = array<i32>} : memref<1x32x16xf32, #tpu.memory_space<vmem>>, vector<1x32x16xf32>,
    return
  }
  func.func @transform_0(%arg0: i32) -> (i32, i32, i32) {
    %c0_i32 = arith.constant 0 : i32
    %c0_i32_0 = arith.constant 0 : i32
    %c0_i32_1 = arith.constant 0 : i32
    return %arg0, %c0_i32, %c0_i32_0 : i32, i32, i32
  }
  func.func @transform_1(%arg0: i32) -> (i32, i32, i32) {
    %c0_i32 = arith.constant 0 : i32
    %c0_i32_0 = arith.constant 0 : i32
    %c0_i32_1 = arith.constant 0 : i32
    %c0_i32_2 = arith.constant 0 : i32
    return %c0_i32, %c0_i32_0, %c0_i32_1 : i32, i32, i32
  }
  func.func @transform_2(%arg0: i32) -> (i32, i32) {
    %c0_i32 = arith.constant 0 : i32
    %c0_i32_0 = arith.constant 0 : i32
    %c0_i32_1 = arith.constant 0 : i32
    return %c0_i32, %c0_i32_0 : i32, i32
  }
  func.func @transform_3(%arg0: i32) -> (i32, i32, i32) {
    %c0_i32 = arith.constant 0 : i32
    %c0_i32_0 = arith.constant 0 : i32
    %c0_i32_1 = arith.constant 0 : i32
    %c0_i32_2 = arith.constant 0 : i32
    return %c0_i32, %c0_i32_0, %c0_i32_1 : i32, i32, i32
  }
  func.func @transform_4(%arg0: i32) -> (i32, i32) {
    %c0_i32 = arith.constant 0 : i32
    %c0_i32_0 = arith.constant 0 : i32
    %c0_i32_1 = arith.constant 0 : i32
    return %c0_i32, %c0_i32_0 : i32, i32
  }
  func.func @transform_5(%arg0: i32) -> (i32, i32) {
    %c0_i32 = arith.constant 0 : i32
    %c0_i32_0 = arith.constant 0 : i32
    %c0_i32_1 = arith.constant 0 : i32
    return %c0_i32, %c0_i32_0 : i32, i32
  }
  func.func @transform_6(%arg0: i32) -> (i32, i32) {
    %c0_i32 = arith.constant 0 : i32
    %c0_i32_0 = arith.constant 0 : i32
    %c0_i32_1 = arith.constant 0 : i32
    return %c0_i32, %c0_i32_0 : i32, i32
  }
  func.func @transform_7(%arg0: i32) -> (i32, i32, i32, i32) {
    %c0_i32 = arith.constant 0 : i32
    %c0_i32_0 = arith.constant 0 : i32
    %c0_i32_1 = arith.constant 0 : i32
    %c0_i32_2 = arith.constant 0 : i32
    %c0_i32_3 = arith.constant 0 : i32
    return %c0_i32, %c0_i32_0, %c0_i32_1, %c0_i32_2 : i32, i32, i32, i32
  }
  func.func @transform_8(%arg0: i32) -> (i32, i32) {
    %c0_i32 = arith.constant 0 : i32
    %c0_i32_0 = arith.constant 0 : i32
    %c0_i32_1 = arith.constant 0 : i32
    return %c0_i32, %c0_i32_0 : i32, i32
  }
  func.func @transform_9(%arg0: i32) -> (i32, i32, i32, i32) {
    %c0_i32 = arith.constant 0 : i32
    %c0_i32_0 = arith.constant 0 : i32
    %c0_i32_1 = arith.constant 0 : i32
    %c0_i32_2 = arith.constant 0 : i32
    %c0_i32_3 = arith.constant 0 : i32
    return %c0_i32, %c0_i32_0, %c0_i32_1, %c0_i32_2 : i32, i32, i32, i32
  }
  func.func @transform_10(%arg0: i32) -> (i32, i32) {
    %c0_i32 = arith.constant 0 : i32
    %c0_i32_0 = arith.constant 0 : i32
    %c0_i32_1 = arith.constant 0 : i32
    return %c0_i32, %c0_i32_0 : i32, i32
  }
  func.func @transform_11(%arg0: i32) -> (i32, i32) {
    %c0_i32 = arith.constant 0 : i32
    %c0_i32_0 = arith.constant 0 : i32
    %c0_i32_1 = arith.constant 0 : i32
    return %c0_i32, %c0_i32_0 : i32, i32
  }
  func.func @transform_12(%arg0: i32) -> (i32, i32) {
    %c0_i32 = arith.constant 0 : i32
    %c0_i32_0 = arith.constant 0 : i32
    %c0_i32_1 = arith.constant 0 : i32
    return %c0_i32, %c0_i32_0 : i32, i32
  }
  func.func @transform_13(%arg0: i32) -> (i32, i32) {
    %c0_i32 = arith.constant 0 : i32
    %c0_i32_0 = arith.constant 0 : i32
    %c0_i32_1 = arith.constant 0 : i32
    return %c0_i32, %c0_i32_0 : i32, i32
  }
  func.func @transform_14(%arg0: i32) -> (i32, i32) {
    %c0_i32 = arith.constant 0 : i32
    %c0_i32_0 = arith.constant 0 : i32
    %c0_i32_1 = arith.constant 0 : i32
    return %c0_i32, %c0_i32_0 : i32, i32
  }
  func.func @transform_15(%arg0: i32) -> (i32, i32) {
    %c0_i32 = arith.constant 0 : i32
    %c0_i32_0 = arith.constant 0 : i32
    %c0_i32_1 = arith.constant 0 : i32
    return %c0_i32, %c0_i32_0 : i32, i32
  }
  func.func @transform_16(%arg0: i32) -> (i32, i32) {
    %c0_i32 = arith.constant 0 : i32
    %c0_i32_0 = arith.constant 0 : i32
    %c0_i32_1 = arith.constant 0 : i32
    return %c0_i32, %c0_i32_0 : i32, i32
  }
  func.func @transform_17(%arg0: i32) -> (i32, i32) {
    %c0_i32 = arith.constant 0 : i32
    %c0_i32_0 = arith.constant 0 : i32
    %c0_i32_1 = arith.constant 0 : i32
    return %c0_i32, %c0_i32_0 : i32, i32
  }
  func.func @transform_18(%arg0: i32) -> (i32, i32) {
    %c0_i32 = arith.constant 0 : i32
    %c0_i32_0 = arith.constant 0 : i32
    %c0_i32_1 = arith.constant 0 : i32
    return %c0_i32, %c0_i32_0 : i32, i32
  }
  func.func @transform_19(%arg0: i32) -> (i32, i32) {
    %c0_i32 = arith.constant 0 : i32
    %c0_i32_0 = arith.constant 0 : i32
    %c0_i32_1 = arith.constant 0 : i32
    return %c0_i32, %c0_i32_0 : i32, i32
  }
  func.func @transform_20(%arg0: i32) -> (i32, i32, i32, i32) {
    %c0_i32 = arith.constant 0 : i32
    %c0_i32_0 = arith.constant 0 : i32
    %c0_i32_1 = arith.constant 0 : i32
    %c0_i32_2 = arith.constant 0 : i32
    %c0_i32_3 = arith.constant 0 : i32
    return %c0_i32, %c0_i32_0, %c0_i32_1, %c0_i32_2 : i32, i32, i32, i32
  }
  func.func @transform_21(%arg0: i32) -> (i32, i32) {
    %c0_i32 = arith.constant 0 : i32
    %c0_i32_0 = arith.constant 0 : i32
    %c0_i32_1 = arith.constant 0 : i32
    return %c0_i32, %c0_i32_0 : i32, i32
  }
  func.func @transform_22(%arg0: i32) -> (i32, i32, i32, i32) {
    %c0_i32 = arith.constant 0 : i32
    %c0_i32_0 = arith.constant 0 : i32
    %c0_i32_1 = arith.constant 0 : i32
    %c0_i32_2 = arith.constant 0 : i32
    %c0_i32_3 = arith.constant 0 : i32
    return %c0_i32, %c0_i32_0, %c0_i32_1, %c0_i32_2 : i32, i32, i32, i32
  }
  func.func @transform_23(%arg0: i32) -> (i32, i32) {
    %c0_i32 = arith.constant 0 : i32
    %c0_i32_0 = arith.constant 0 : i32
    %c0_i32_1 = arith.constant 0 : i32
    return %c0_i32, %c0_i32_0 : i32, i32
  }
  func.func @transform_24(%arg0: i32) -> (i32, i32, i32) {
    %c0_i32 = arith.constant 0 : i32
    %c0_i32_0 = arith.constant 0 : i32
    %c0_i32_1 = arith.constant 0 : i32
    return %arg0, %c0_i32, %c0_i32_0 : i32, i32, i32
  }
}

</mosaic_0001>

<llo_original>
// kernel: tpu_custom_call.1
$region0: #{tpu_custom_call.1}
  #allocation0 [shape = 'u32[]', space=smem, size = 0x4, offset = 0x4, fixed_abs, tag = 'smem constant byte address 0x4 - core index']
  #allocation1 [shape = 'u32[144,128]{1,0:T(1,128)}', space=vmem, size = 0x12000, scoped, tag = 'internal scratch']
  #allocation2 [shape = 'f32[1,1]{1,0:T(1,128)S(1)}', space=vmem, size = 0x200, scoped, tag = 'scoped memory for tpu_custom_call.1']
  %s0 = inlined_call_operand.vmem [shape: f32[2,3,256], index: 0, kind: input, shape index: {}]
  %s1 = inlined_call_operand.hbm [shape: f32[9,256,256], index: 1, kind: input, shape index: {}]
  %s2 = inlined_call_operand.vmem [shape: f32[256,64], index: 2, kind: input, shape index: {}]
  %s3 = inlined_call_operand.hbm [shape: f32[9,64,64], index: 3, kind: input, shape index: {}]
  %s4 = inlined_call_operand.vmem [shape: f32[64,16], index: 4, kind: input, shape index: {}]
  %s5 = inlined_call_operand.vmem [shape: f32[8,3], index: 5, kind: input, shape index: {}]
  %s6 = inlined_call_operand.vmem [shape: f32[8,1], index: 6, kind: input, shape index: {}]
  %s7 = inlined_call_operand.hbm [shape: f32[3,3,8,8], index: 7, kind: input, shape index: {}]
  %s8 = inlined_call_operand.vmem [shape: f32[8,1], index: 8, kind: input, shape index: {}]
  %s9 = inlined_call_operand.vmem [shape: f32[3,3,16,8], index: 9, kind: input, shape index: {}]
  %s10 = inlined_call_operand.vmem [shape: f32[16,1], index: 10, kind: input, shape index: {}]
  %s11 = inlined_call_operand.hbm [shape: f32[4,16], index: 11, kind: input, shape index: {}]
  %s12 = inlined_call_operand.vmem [shape: f32[4,1], index: 12, kind: input, shape index: {}]
  %s13 = inlined_call_operand.hbm [shape: f32[4,16], index: 13, kind: input, shape index: {}]
  %s14 = inlined_call_operand.vmem [shape: f32[4,1], index: 14, kind: input, shape index: {}]
  %s15 = inlined_call_operand.hbm [shape: f32[4,16], index: 15, kind: input, shape index: {}]
  %s16 = inlined_call_operand.vmem [shape: f32[4,1], index: 16, kind: input, shape index: {}]
  %s17 = inlined_call_operand.vmem [shape: f32[16,4], index: 17, kind: input, shape index: {}]
  %s18 = inlined_call_operand.vmem [shape: f32[16,1], index: 18, kind: input, shape index: {}]
  %s19 = inlined_call_operand.<no memory space> [shape: f32[1,1], index: 19, kind: input, shape index: {}]
  %s20 = inlined_call_operand.hbm [shape: f32[3,3,16,16], index: 20, kind: input, shape index: {}]
  %s21 = inlined_call_operand.vmem [shape: f32[16,1], index: 21, kind: input, shape index: {}]
  %s22 = inlined_call_operand.vmem [shape: f32[3,3,32,16], index: 22, kind: input, shape index: {}]
  %s23 = inlined_call_operand.vmem [shape: f32[32,1], index: 23, kind: input, shape index: {}]
  %s24 = inlined_call_operand.vmem [shape: f32[2,32,16], index: 24, kind: output, shape index: {}]
  %s25 = sld [smem:[#allocation0]]
  $region157: #{tpu_custom_call.1} parent=0
    _
  %s27 = ssub.s32 1, %s25
  %s28 = scalar_select 0, %s27, %s25
  %v29 = vstv %s19
  %30 = vst [vmem:[#allocation2] sm:$0x1] %v29
  $region1: #{tpu_custom_call.1} parent=0
    #allocation3 [shape = 'u8[2359296]{0}', space=vmem, size = 0x240000, scoped, tag = 'input window, operand 1, single buffered']
    #allocation4 [shape = 's32[2]{0}', space=sflag, size = 0x8, scoped, tag = 'scoped memory for tpu_custom_call.1']
    #allocation5 [shape = 'u8[294912]{0}', space=vmem, size = 0x48000, scoped, tag = 'input window, operand 3, single buffered']
    #allocation6 [shape = 's32[1]{0}', space=sflag, size = 0x4, scoped, tag = 'scoped memory for tpu_custom_call.1']
    #allocation7 [shape = 'u8[36864]{0}', space=vmem, size = 0x9000, scoped, tag = 'input window, operand 7, single buffered']
    #allocation8 [shape = 'u8[2048]{0}', space=vmem, size = 0x800, scoped, tag = 'input window, operand 11, single buffered']
    #allocation9 [shape = 's32[1]{0}', space=sflag, size = 0x4, scoped, tag = 'scoped memory for tpu_custom_call.1']
    #allocation10 [shape = 'u8[2048]{0}', space=vmem, size = 0x800, scoped, tag = 'input window, operand 13, single buffered']
    #allocation11 [shape = 'u8[2048]{0}', space=vmem, size = 0x800, scoped, tag = 'input window, operand 15, single buffered']
    #allocation12 [shape = 's32[1]{0}', space=sflag, size = 0x4, scoped, tag = 'scoped memory for tpu_custom_call.1']
    #allocation13 [shape = 'u8[73728]{0}', space=vmem, size = 0x12000, scoped, tag = 'input window, operand 20, single buffered']
    %31 = vsyncpa [#allocation4], 0
    %32 = vsyncpa [#allocation6], 0
    %33 = vsyncpa [#allocation9], 0
    %34 = vsyncpa [#allocation12], 0
    loop: start=0, step=1, limit=4
    $region2: #{tpu_custom_call.1} parent=1 // loop_pre_header
      _
    $region3: #{tpu_custom_call.1} parent=1 // loop_header
      %s36 = sphi 0, %s40
      %p37 = scmp.ge.s32.totalorder %s36, 4
      %s46 = sphi 0, %s48
      %s49 = sphi 0, %s46
      %s50 = sphi 0, %s49
      %s66 = sphi 0, %s50
      %s70 = sphi 0, %s70
      %s72 = sphi 0, %s70
      %s73 = sphi 0, %s72
      %s87 = sphi 0, %s73
      %s91 = sphi 0, %s91
      %s93 = sphi 0, %s91
      %s94 = sphi 0, %s93
      %s108 = sphi 0, %s94
      %s112 = sphi 0, %s112
      %s114 = sphi 0, %s112
      %s115 = sphi 0, %s114
      %s129 = sphi 0, %s115
      %s133 = sphi 0, %s133
      %s135 = sphi 0, %s133
      %s136 = sphi 0, %s135
      %s150 = sphi 0, %s136
      %s154 = sphi 0, %s154
      %s156 = sphi 0, %s154
      %s157 = sphi 0, %s156
      %s171 = sphi 0, %s157
      %s175 = sphi 0, %s175
      %s177 = sphi 0, %s175
      %s178 = sphi 0, %s177
      %s192 = sphi 0, %s178
      %s196 = sphi 0, %s196
      %s198 = sphi 0, %s196
      %s199 = sphi 0, %s198
      %s213 = sphi 0, %s199
      %s217 = sphi 0, %s217
      %s219 = sphi 0, %s217
      %s220 = sphi 0, %s219
      %s234 = sphi 0, %s220
      %s238 = sphi 0, %s238
      %s240 = sphi 0, %s238
      %s241 = sphi 0, %s240
      %s255 = sphi 0, %s241
      %s259 = sphi 0, %s259
      %s261 = sphi 0, %s259
      %s262 = sphi 0, %s261
      %s276 = sphi 0, %s262
      %s280 = sphi 0, %s280
      %s282 = sphi 0, %s280
      %s283 = sphi 0, %s282
      %s297 = sphi 0, %s283
      %s301 = sphi 0, %s301
      %s303 = sphi 0, %s301
      %s304 = sphi 0, %s303
      %s318 = sphi 0, %s304
      %s322 = sphi 0, %s322
      %s324 = sphi 0, %s322
      %s325 = sphi 0, %s324
      %s339 = sphi 0, %s325
      %s343 = sphi 0, %s343
      %s345 = sphi 0, %s343
      %s346 = sphi 0, %s345
      %s360 = sphi 0, %s346
      %s364 = sphi 0, %s364
      %s366 = sphi 0, %s364
      %s367 = sphi 0, %s366
      %s381 = sphi 0, %s367
      %s385 = sphi 0, %s385
      %s387 = sphi 0, %s385
      %s388 = sphi 0, %s387
      %s402 = sphi 0, %s388
      %s406 = sphi 0, %s406
      %s408 = sphi 0, %s406
      %s409 = sphi 0, %s408
      %s423 = sphi 0, %s409
      %s427 = sphi 0, %s427
      %s429 = sphi 0, %s427
      %s430 = sphi 0, %s429
      %s444 = sphi 0, %s430
      %s448 = sphi 0, %s448
      %s450 = sphi 0, %s448
      %s451 = sphi 0, %s450
      %s465 = sphi 0, %s451
      %s469 = sphi 0, %s469
      %s471 = sphi 0, %s469
      %s472 = sphi 0, %s471
      %s486 = sphi 0, %s472
      %s490 = sphi 0, %s490
      %s492 = sphi 0, %s490
      %s493 = sphi 0, %s492
      %s507 = sphi 0, %s493
      %s511 = sphi 0, %s511
      %s513 = sphi 0, %s511
      %s514 = sphi 0, %s513
      %s528 = sphi 0, %s514
      %s532 = sphi 0, %s532
      %s534 = sphi 0, %s532
      %s535 = sphi 0, %s534
      %s549 = sphi 0, %s535
      %s555 = sphi 0, %s557
      %s558 = sphi 0, %s555
      %s559 = sphi 0, %s558
      %s575 = sphi 0, %s559
    $region4: #{tpu_custom_call.1} parent=1 // loop_header_branch
      %39 = sbr.rel (%p37) target = $region8
    $region5: #{tpu_custom_call.1} parent=1 // loop_body
      %s41 = ssub.s32 %s36, 1
      %s42 = ssub.s32 %s36, 2
      %s43 = sadd.s32 %s36, 1
      %s44 = ssub.s32 %s36, %s43
      %p45 = scmp.eq.s32.totalorder %s44, 0
      %s47 = sadd.s32 %s46, 1
      %s48 = scalar_select %p45, %s46, %s47
      %p51 = pneg %p45
      %p52 = scmp.eq.s32.totalorder %s36, 1
      %p53 = por %p51, %p52
      %p54 = scmp.ne.s32.totalorder %s46, %s49
      %p55 = scmp.eq.s32.totalorder %s36, 0
      %p56 = por %p54, %p55
      %p57 = scmp.ne.s32.totalorder %s46, %s49
      %p58 = scmp.eq.s32.totalorder %s41, 1
      %p59 = por %p57, %p58
      %p60 = scmp.ne.s32.totalorder %s49, %s50
      %p61 = scmp.eq.s32.totalorder %s41, 0
      %p62 = por %p60, %p61
      %p63 = scmp.ne.s32.totalorder %s49, %s50
      %p64 = scmp.eq.s32.totalorder %s42, 1
      %p65 = por %p63, %p64
      %p67 = scmp.ne.s32.totalorder %s50, %s66
      %p68 = scmp.eq.s32.totalorder %s42, 0
      %p69 = por %p67, %p68
      %s71 = sadd.s32 %s70, 1
      %p74 = scmp.eq.s32.totalorder %s36, 1
      %p75 = scmp.ne.s32.totalorder %s70, %s72
      %p76 = scmp.eq.s32.totalorder %s36, 0
      %p77 = por %p75, %p76
      %p78 = scmp.ne.s32.totalorder %s70, %s72
      %p79 = scmp.eq.s32.totalorder %s41, 1
      %p80 = por %p78, %p79
      %p81 = scmp.ne.s32.totalorder %s72, %s73
      %p82 = scmp.eq.s32.totalorder %s41, 0
      %p83 = por %p81, %p82
      %p84 = scmp.ne.s32.totalorder %s72, %s73
      %p85 = scmp.eq.s32.totalorder %s42, 1
      %p86 = por %p84, %p85
      %p88 = scmp.ne.s32.totalorder %s73, %s87
      %p89 = scmp.eq.s32.totalorder %s42, 0
      %p90 = por %p88, %p89
      %s92 = sadd.s32 %s91, 1
      %p95 = scmp.eq.s32.totalorder %s36, 1
      %p96 = scmp.ne.s32.totalorder %s91, %s93
      %p97 = scmp.eq.s32.totalorder %s36, 0
      %p98 = por %p96, %p97
      %p99 = scmp.ne.s32.totalorder %s91, %s93
      %p100 = scmp.eq.s32.totalorder %s41, 1
      %p101 = por %p99, %p100
      %p102 = scmp.ne.s32.totalorder %s93, %s94
      %p103 = scmp.eq.s32.totalorder %s41, 0
      %p104 = por %p102, %p103
      %p105 = scmp.ne.s32.totalorder %s93, %s94
      %p106 = scmp.eq.s32.totalorder %s42, 1
      %p107 = por %p105, %p106
      %p109 = scmp.ne.s32.totalorder %s94, %s108
      %p110 = scmp.eq.s32.totalorder %s42, 0
      %p111 = por %p109, %p110
      %s113 = sadd.s32 %s112, 1
      %p116 = scmp.eq.s32.totalorder %s36, 1
      %p117 = scmp.ne.s32.totalorder %s112, %s114
      %p118 = scmp.eq.s32.totalorder %s36, 0
      %p119 = por %p117, %p118
      %p120 = scmp.ne.s32.totalorder %s112, %s114
      %p121 = scmp.eq.s32.totalorder %s41, 1
      %p122 = por %p120, %p121
      %p123 = scmp.ne.s32.totalorder %s114, %s115
      %p124 = scmp.eq.s32.totalorder %s41, 0
      %p125 = por %p123, %p124
      %p126 = scmp.ne.s32.totalorder %s114, %s115
      %p127 = scmp.eq.s32.totalorder %s42, 1
      %p128 = por %p126, %p127
      %p130 = scmp.ne.s32.totalorder %s115, %s129
      %p131 = scmp.eq.s32.totalorder %s42, 0
      %p132 = por %p130, %p131
      %s134 = sadd.s32 %s133, 1
      %p137 = scmp.eq.s32.totalorder %s36, 1
      %p138 = scmp.ne.s32.totalorder %s133, %s135
      %p139 = scmp.eq.s32.totalorder %s36, 0
      %p140 = por %p138, %p139
      %p141 = scmp.ne.s32.totalorder %s133, %s135
      %p142 = scmp.eq.s32.totalorder %s41, 1
      %p143 = por %p141, %p142
      %p144 = scmp.ne.s32.totalorder %s135, %s136
      %p145 = scmp.eq.s32.totalorder %s41, 0
      %p146 = por %p144, %p145
      %p147 = scmp.ne.s32.totalorder %s135, %s136
      %p148 = scmp.eq.s32.totalorder %s42, 1
      %p149 = por %p147, %p148
      %p151 = scmp.ne.s32.totalorder %s136, %s150
      %p152 = scmp.eq.s32.totalorder %s42, 0
      %p153 = por %p151, %p152
      %s155 = sadd.s32 %s154, 1
      %p158 = scmp.eq.s32.totalorder %s36, 1
      %p159 = scmp.ne.s32.totalorder %s154, %s156
      %p160 = scmp.eq.s32.totalorder %s36, 0
      %p161 = por %p159, %p160
      %p162 = scmp.ne.s32.totalorder %s154, %s156
      %p163 = scmp.eq.s32.totalorder %s41, 1
      %p164 = por %p162, %p163
      %p165 = scmp.ne.s32.totalorder %s156, %s157
      %p166 = scmp.eq.s32.totalorder %s41, 0
      %p167 = por %p165, %p166
      %p168 = scmp.ne.s32.totalorder %s156, %s157
      %p169 = scmp.eq.s32.totalorder %s42, 1
      %p170 = por %p168, %p169
      %p172 = scmp.ne.s32.totalorder %s157, %s171
      %p173 = scmp.eq.s32.totalorder %s42, 0
      %p174 = por %p172, %p173
      %s176 = sadd.s32 %s175, 1
      %p179 = scmp.eq.s32.totalorder %s36, 1
      %p180 = scmp.ne.s32.totalorder %s175, %s177
      %p181 = scmp.eq.s32.totalorder %s36, 0
      %p182 = por %p180, %p181
      %p183 = scmp.ne.s32.totalorder %s175, %s177
      %p184 = scmp.eq.s32.totalorder %s41, 1
      %p185 = por %p183, %p184
      %p186 = scmp.ne.s32.totalorder %s177, %s178
      %p187 = scmp.eq.s32.totalorder %s41, 0
      %p188 = por %p186, %p187
      %p189 = scmp.ne.s32.totalorder %s177, %s178
      %p190 = scmp.eq.s32.totalorder %s42, 1
      %p191 = por %p189, %p190
      %p193 = scmp.ne.s32.totalorder %s178, %s192
      %p194 = scmp.eq.s32.totalorder %s42, 0
      %p195 = por %p193, %p194
      %s197 = sadd.s32 %s196, 1
      %p200 = scmp.eq.s32.totalorder %s36, 1
      %p201 = scmp.ne.s32.totalorder %s196, %s198
      %p202 = scmp.eq.s32.totalorder %s36, 0
      %p203 = por %p201, %p202
      %p204 = scmp.ne.s32.totalorder %s196, %s198
      %p205 = scmp.eq.s32.totalorder %s41, 1
      %p206 = por %p204, %p205
      %p207 = scmp.ne.s32.totalorder %s198, %s199
      %p208 = scmp.eq.s32.totalorder %s41, 0
      %p209 = por %p207, %p208
      %p210 = scmp.ne.s32.totalorder %s198, %s199
      %p211 = scmp.eq.s32.totalorder %s42, 1
      %p212 = por %p210, %p211
      %p214 = scmp.ne.s32.totalorder %s199, %s213
      %p215 = scmp.eq.s32.totalorder %s42, 0
      %p216 = por %p214, %p215
      %s218 = sadd.s32 %s217, 1
      %p221 = scmp.eq.s32.totalorder %s36, 1
      %p222 = scmp.ne.s32.totalorder %s217, %s219
      %p223 = scmp.eq.s32.totalorder %s36, 0
      %p224 = por %p222, %p223
      %p225 = scmp.ne.s32.totalorder %s217, %s219
      %p226 = scmp.eq.s32.totalorder %s41, 1
      %p227 = por %p225, %p226
      %p228 = scmp.ne.s32.totalorder %s219, %s220
      %p229 = scmp.eq.s32.totalorder %s41, 0
      %p230 = por %p228, %p229
      %p231 = scmp.ne.s32.totalorder %s219, %s220
      %p232 = scmp.eq.s32.totalorder %s42, 1
      %p233 = por %p231, %p232
      %p235 = scmp.ne.s32.totalorder %s220, %s234
      %p236 = scmp.eq.s32.totalorder %s42, 0
      %p237 = por %p235, %p236
      %s239 = sadd.s32 %s238, 1
      %p242 = scmp.eq.s32.totalorder %s36, 1
      %p243 = scmp.ne.s32.totalorder %s238, %s240
      %p244 = scmp.eq.s32.totalorder %s36, 0
      %p245 = por %p243, %p244
      %p246 = scmp.ne.s32.totalorder %s238, %s240
      %p247 = scmp.eq.s32.totalorder %s41, 1
      %p248 = por %p246, %p247
      %p249 = scmp.ne.s32.totalorder %s240, %s241
      %p250 = scmp.eq.s32.totalorder %s41, 0
      %p251 = por %p249, %p250
      %p252 = scmp.ne.s32.totalorder %s240, %s241
      %p253 = scmp.eq.s32.totalorder %s42, 1
      %p254 = por %p252, %p253
      %p256 = scmp.ne.s32.totalorder %s241, %s255
      %p257 = scmp.eq.s32.totalorder %s42, 0
      %p258 = por %p256, %p257
      %s260 = sadd.s32 %s259, 1
      %p263 = scmp.eq.s32.totalorder %s36, 1
      %p264 = scmp.ne.s32.totalorder %s259, %s261
      %p265 = scmp.eq.s32.totalorder %s36, 0
      %p266 = por %p264, %p265
      %p267 = scmp.ne.s32.totalorder %s259, %s261
      %p268 = scmp.eq.s32.totalorder %s41, 1
      %p269 = por %p267, %p268
      %p270 = scmp.ne.s32.totalorder %s261, %s262
      %p271 = scmp.eq.s32.totalorder %s41, 0
      %p272 = por %p270, %p271
      %p273 = scmp.ne.s32.totalorder %s261, %s262
      %p274 = scmp.eq.s32.totalorder %s42, 1
      %p275 = por %p273, %p274
      %p277 = scmp.ne.s32.totalorder %s262, %s276
      %p278 = scmp.eq.s32.totalorder %s42, 0
      %p279 = por %p277, %p278
      %s281 = sadd.s32 %s280, 1
      %p284 = scmp.eq.s32.totalorder %s36, 1
      %p285 = scmp.ne.s32.totalorder %s280, %s282
      %p286 = scmp.eq.s32.totalorder %s36, 0
      %p287 = por %p285, %p286
      %p288 = scmp.ne.s32.totalorder %s280, %s282
      %p289 = scmp.eq.s32.totalorder %s41, 1
      %p290 = por %p288, %p289
      %p291 = scmp.ne.s32.totalorder %s282, %s283
      %p292 = scmp.eq.s32.totalorder %s41, 0
      %p293 = por %p291, %p292
      %p294 = scmp.ne.s32.totalorder %s282, %s283
      %p295 = scmp.eq.s32.totalorder %s42, 1
      %p296 = por %p294, %p295
      %p298 = scmp.ne.s32.totalorder %s283, %s297
      %p299 = scmp.eq.s32.totalorder %s42, 0
      %p300 = por %p298, %p299
      %s302 = sadd.s32 %s301, 1
      %p305 = scmp.eq.s32.totalorder %s36, 1
      %p306 = scmp.ne.s32.totalorder %s301, %s303
      %p307 = scmp.eq.s32.totalorder %s36, 0
      %p308 = por %p306, %p307
      %p309 = scmp.ne.s32.totalorder %s301, %s303
      %p310 = scmp.eq.s32.totalorder %s41, 1
      %p311 = por %p309, %p310
      %p312 = scmp.ne.s32.totalorder %s303, %s304
      %p313 = scmp.eq.s32.totalorder %s41, 0
      %p314 = por %p312, %p313
      %p315 = scmp.ne.s32.totalorder %s303, %s304
      %p316 = scmp.eq.s32.totalorder %s42, 1
      %p317 = por %p315, %p316
      %p319 = scmp.ne.s32.totalorder %s304, %s318
      %p320 = scmp.eq.s32.totalorder %s42, 0
      %p321 = por %p319, %p320
      %s323 = sadd.s32 %s322, 1
      %p326 = scmp.eq.s32.totalorder %s36, 1
      %p327 = scmp.ne.s32.totalorder %s322, %s324
      %p328 = scmp.eq.s32.totalorder %s36, 0
      %p329 = por %p327, %p328
      %p330 = scmp.ne.s32.totalorder %s322, %s324
      %p331 = scmp.eq.s32.totalorder %s41, 1
      %p332 = por %p330, %p331
      %p333 = scmp.ne.s32.totalorder %s324, %s325
      %p334 = scmp.eq.s32.totalorder %s41, 0
      %p335 = por %p333, %p334
      %p336 = scmp.ne.s32.totalorder %s324, %s325
      %p337 = scmp.eq.s32.totalorder %s42, 1
      %p338 = por %p336, %p337
      %p340 = scmp.ne.s32.totalorder %s325, %s339
      %p341 = scmp.eq.s32.totalorder %s42, 0
      %p342 = por %p340, %p341
      %s344 = sadd.s32 %s343, 1
      %p347 = scmp.eq.s32.totalorder %s36, 1
      %p348 = scmp.ne.s32.totalorder %s343, %s345
      %p349 = scmp.eq.s32.totalorder %s36, 0
      %p350 = por %p348, %p349
      %p351 = scmp.ne.s32.totalorder %s343, %s345
      %p352 = scmp.eq.s32.totalorder %s41, 1
      %p353 = por %p351, %p352
      %p354 = scmp.ne.s32.totalorder %s345, %s346
      %p355 = scmp.eq.s32.totalorder %s41, 0
      %p356 = por %p354, %p355
      %p357 = scmp.ne.s32.totalorder %s345, %s346
      %p358 = scmp.eq.s32.totalorder %s42, 1
      %p359 = por %p357, %p358
      %p361 = scmp.ne.s32.totalorder %s346, %s360
      %p362 = scmp.eq.s32.totalorder %s42, 0
      %p363 = por %p361, %p362
      %s365 = sadd.s32 %s364, 1
      %p368 = scmp.eq.s32.totalorder %s36, 1
      %p369 = scmp.ne.s32.totalorder %s364, %s366
      %p370 = scmp.eq.s32.totalorder %s36, 0
      %p371 = por %p369, %p370
      %p372 = scmp.ne.s32.totalorder %s364, %s366
      %p373 = scmp.eq.s32.totalorder %s41, 1
      %p374 = por %p372, %p373
      %p375 = scmp.ne.s32.totalorder %s366, %s367
      %p376 = scmp.eq.s32.totalorder %s41, 0
      %p377 = por %p375, %p376
      %p378 = scmp.ne.s32.totalorder %s366, %s367
      %p379 = scmp.eq.s32.totalorder %s42, 1
      %p380 = por %p378, %p379
      %p382 = scmp.ne.s32.totalorder %s367, %s381
      %p383 = scmp.eq.s32.totalorder %s42, 0
      %p384 = por %p382, %p383
      %s386 = sadd.s32 %s385, 1
      %p389 = scmp.eq.s32.totalorder %s36, 1
      %p390 = scmp.ne.s32.totalorder %s385, %s387
      %p391 = scmp.eq.s32.totalorder %s36, 0
      %p392 = por %p390, %p391
      %p393 = scmp.ne.s32.totalorder %s385, %s387
      %p394 = scmp.eq.s32.totalorder %s41, 1
      %p395 = por %p393, %p394
      %p396 = scmp.ne.s32.totalorder %s387, %s388
      %p397 = scmp.eq.s32.totalorder %s41, 0
      %p398 = por %p396, %p397
      %p399 = scmp.ne.s32.totalorder %s387, %s388
      %p400 = scmp.eq.s32.totalorder %s42, 1
      %p401 = por %p399, %p400
      %p403 = scmp.ne.s32.totalorder %s388, %s402
      %p404 = scmp.eq.s32.totalorder %s42, 0
      %p405 = por %p403, %p404
      %s407 = sadd.s32 %s406, 1
      %p410 = scmp.eq.s32.totalorder %s36, 1
      %p411 = scmp.ne.s32.totalorder %s406, %s408
      %p412 = scmp.eq.s32.totalorder %s36, 0
      %p413 = por %p411, %p412
      %p414 = scmp.ne.s32.totalorder %s406, %s408
      %p415 = scmp.eq.s32.totalorder %s41, 1
      %p416 = por %p414, %p415
      %p417 = scmp.ne.s32.totalorder %s408, %s409
      %p418 = scmp.eq.s32.totalorder %s41, 0
      %p419 = por %p417, %p418
      %p420 = scmp.ne.s32.totalorder %s408, %s409
      %p421 = scmp.eq.s32.totalorder %s42, 1
      %p422 = por %p420, %p421
      %p424 = scmp.ne.s32.totalorder %s409, %s423
      %p425 = scmp.eq.s32.totalorder %s42, 0
      %p426 = por %p424, %p425
      %s428 = sadd.s32 %s427, 1
      %p431 = scmp.eq.s32.totalorder %s36, 1
      %p432 = scmp.ne.s32.totalorder %s427, %s429
      %p433 = scmp.eq.s32.totalorder %s36, 0
      %p434 = por %p432, %p433
      %p435 = scmp.ne.s32.totalorder %s427, %s429
      %p436 = scmp.eq.s32.totalorder %s41, 1
      %p437 = por %p435, %p436
      %p438 = scmp.ne.s32.totalorder %s429, %s430
      %p439 = scmp.eq.s32.totalorder %s41, 0
      %p440 = por %p438, %p439
      %p441 = scmp.ne.s32.totalorder %s429, %s430
      %p442 = scmp.eq.s32.totalorder %s42, 1
      %p443 = por %p441, %p442
      %p445 = scmp.ne.s32.totalorder %s430, %s444
      %p446 = scmp.eq.s32.totalorder %s42, 0
      %p447 = por %p445, %p446
      %s449 = sadd.s32 %s448, 1
      %p452 = scmp.eq.s32.totalorder %s36, 1
      %p453 = scmp.ne.s32.totalorder %s448, %s450
      %p454 = scmp.eq.s32.totalorder %s36, 0
      %p455 = por %p453, %p454
      %p456 = scmp.ne.s32.totalorder %s448, %s450
      %p457 = scmp.eq.s32.totalorder %s41, 1
      %p458 = por %p456, %p457
      %p459 = scmp.ne.s32.totalorder %s450, %s451
      %p460 = scmp.eq.s32.totalorder %s41, 0
      %p461 = por %p459, %p460
      %p462 = scmp.ne.s32.totalorder %s450, %s451
      %p463 = scmp.eq.s32.totalorder %s42, 1
      %p464 = por %p462, %p463
      %p466 = scmp.ne.s32.totalorder %s451, %s465
      %p467 = scmp.eq.s32.totalorder %s42, 0
      %p468 = por %p466, %p467
      %s470 = sadd.s32 %s469, 1
      %p473 = scmp.eq.s32.totalorder %s36, 1
      %p474 = scmp.ne.s32.totalorder %s469, %s471
      %p475 = scmp.eq.s32.totalorder %s36, 0
      %p476 = por %p474, %p475
      %p477 = scmp.ne.s32.totalorder %s469, %s471
      %p478 = scmp.eq.s32.totalorder %s41, 1
      %p479 = por %p477, %p478
      %p480 = scmp.ne.s32.totalorder %s471, %s472
      %p481 = scmp.eq.s32.totalorder %s41, 0
      %p482 = por %p480, %p481
      %p483 = scmp.ne.s32.totalorder %s471, %s472
      %p484 = scmp.eq.s32.totalorder %s42, 1
      %p485 = por %p483, %p484
      %p487 = scmp.ne.s32.totalorder %s472, %s486
      %p488 = scmp.eq.s32.totalorder %s42, 0
      %p489 = por %p487, %p488
      %s491 = sadd.s32 %s490, 1
      %p494 = scmp.eq.s32.totalorder %s36, 1
      %p495 = scmp.ne.s32.totalorder %s490, %s492
      %p496 = scmp.eq.s32.totalorder %s36, 0
      %p497 = por %p495, %p496
      %p498 = scmp.ne.s32.totalorder %s490, %s492
      %p499 = scmp.eq.s32.totalorder %s41, 1
      %p500 = por %p498, %p499
      %p501 = scmp.ne.s32.totalorder %s492, %s493
      %p502 = scmp.eq.s32.totalorder %s41, 0
      %p503 = por %p501, %p502
      %p504 = scmp.ne.s32.totalorder %s492, %s493
      %p505 = scmp.eq.s32.totalorder %s42, 1
      %p506 = por %p504, %p505
      %p508 = scmp.ne.s32.totalorder %s493, %s507
      %p509 = scmp.eq.s32.totalorder %s42, 0
      %p510 = por %p508, %p509
      %s512 = sadd.s32 %s511, 1
      %p515 = scmp.eq.s32.totalorder %s36, 1
      %p516 = scmp.ne.s32.totalorder %s511, %s513
      %p517 = scmp.eq.s32.totalorder %s36, 0
      %p518 = por %p516, %p517
      %p519 = scmp.ne.s32.totalorder %s511, %s513
      %p520 = scmp.eq.s32.totalorder %s41, 1
      %p521 = por %p519, %p520
      %p522 = scmp.ne.s32.totalorder %s513, %s514
      %p523 = scmp.eq.s32.totalorder %s41, 0
      %p524 = por %p522, %p523
      %p525 = scmp.ne.s32.totalorder %s513, %s514
      %p526 = scmp.eq.s32.totalorder %s42, 1
      %p527 = por %p525, %p526
      %p529 = scmp.ne.s32.totalorder %s514, %s528
      %p530 = scmp.eq.s32.totalorder %s42, 0
      %p531 = por %p529, %p530
      %s533 = sadd.s32 %s532, 1
      %p536 = scmp.eq.s32.totalorder %s36, 1
      %p537 = scmp.ne.s32.totalorder %s532, %s534
      %p538 = scmp.eq.s32.totalorder %s36, 0
      %p539 = por %p537, %p538
      %p540 = scmp.ne.s32.totalorder %s532, %s534
      %p541 = scmp.eq.s32.totalorder %s41, 1
      %p542 = por %p540, %p541
      %p543 = scmp.ne.s32.totalorder %s534, %s535
      %p544 = scmp.eq.s32.totalorder %s41, 0
      %p545 = por %p543, %p544
      %p546 = scmp.ne.s32.totalorder %s534, %s535
      %p547 = scmp.eq.s32.totalorder %s42, 1
      %p548 = por %p546, %p547
      %p550 = scmp.ne.s32.totalorder %s535, %s549
      %p551 = scmp.eq.s32.totalorder %s42, 0
      %p552 = por %p550, %p551
      %s553 = ssub.s32 %s36, %s43
      %p554 = scmp.eq.s32.totalorder %s553, 0
      %s556 = sadd.s32 %s555, 1
      %s557 = scalar_select %p554, %s555, %s556
      %p560 = pneg %p554
      %p561 = scmp.eq.s32.totalorder %s36, 1
      %p562 = por %p560, %p561
      %p563 = scmp.ne.s32.totalorder %s555, %s558
      %p564 = scmp.eq.s32.totalorder %s36, 0
      %p565 = por %p563, %p564
      %p566 = scmp.ne.s32.totalorder %s555, %s558
      %p567 = scmp.eq.s32.totalorder %s41, 1
      %p568 = por %p566, %p567
      %p569 = scmp.ne.s32.totalorder %s558, %s559
      %p570 = scmp.eq.s32.totalorder %s41, 0
      %p571 = por %p569, %p570
      %p572 = scmp.ne.s32.totalorder %s558, %s559
      %p573 = scmp.eq.s32.totalorder %s42, 1
      %p574 = por %p572, %p573
      %p576 = scmp.ne.s32.totalorder %s559, %s575
      %p577 = scmp.eq.s32.totalorder %s42, 0
      %p578 = por %p576, %p577
      %p579 = scmp.le.s32.totalorder 1, %s36
      %p580 = scmp.lt.s32.totalorder %s36, 3
      %p581 = pnand %p579, %p580
      %p582 = pneg %p581
      // Predicated region
      $region9: #{tpu_custom_call.1} parent=5 // pred_check
        _
      $region10: #{tpu_custom_call.1} parent=5 // pred_check_branch
        %584 = sbr.rel (%p581) target = $region12
      $region11: #{tpu_custom_call.1} parent=5 // pred_region
        %s585 = ssub.s32 %s36, 1
        // Predicated region
        $region13: #{tpu_custom_call.1} parent=11 // pred_check
          %p586 = pneg %p83
        $region14: #{tpu_custom_call.1} parent=11 // pred_check_branch
          %588 = sbr.rel (%p586) target = $region16
        $region15: #{tpu_custom_call.1} parent=11 // pred_region
          %s590 = ssub.s32 73728, 73728
          %591 = vsyncadd [#allocation4], %s590
          %s592 = sshll.u32 [#allocation3], 4
          %s593 = int_to_ptr.vmem [resolvable:$true] %s592
          %598 = dma.hbm_to_vmem [thread:$0]  %s1, 73728, %s593, [#allocation4], 256, 256, 16
        $region16: #{tpu_custom_call.1} parent=11 // pred_fallthru
          _
        // Predicated region
        $region17: #{tpu_custom_call.1} parent=11 // pred_check
          %p599 = pneg %p104
        $region18: #{tpu_custom_call.1} parent=11 // pred_check_branch
          %601 = sbr.rel (%p599) target = $region20
        $region19: #{tpu_custom_call.1} parent=11 // pred_region
          _
        $region20: #{tpu_custom_call.1} parent=11 // pred_fallthru
          _
        // Predicated region
        $region21: #{tpu_custom_call.1} parent=11 // pred_check
          %p602 = pneg %p125
        $region22: #{tpu_custom_call.1} parent=11 // pred_check_branch
          %604 = sbr.rel (%p602) target = $region24
        $region23: #{tpu_custom_call.1} parent=11 // pred_region
          %s606 = ssub.s32 9216, 9216
          %607 = vsyncadd [#allocation6], %s606
          %s608 = sshll.u32 [#allocation5], 4
          %s609 = int_to_ptr.vmem [resolvable:$true] %s608
          %614 = dma.hbm_to_vmem [thread:$0]  %s3, 9216, %s609, [#allocation6], 128, 128, 8
        $region24: #{tpu_custom_call.1} parent=11 // pred_fallthru
          _
        // Predicated region
        $region25: #{tpu_custom_call.1} parent=11 // pred_check
          %p615 = pneg %p146
        $region26: #{tpu_custom_call.1} parent=11 // pred_check_branch
          %617 = sbr.rel (%p615) target = $region28
        $region27: #{tpu_custom_call.1} parent=11 // pred_region
          _
        $region28: #{tpu_custom_call.1} parent=11 // pred_fallthru
          _
        // Predicated region
        $region29: #{tpu_custom_call.1} parent=11 // pred_check
          %p618 = pneg %p167
        $region30: #{tpu_custom_call.1} parent=11 // pred_check_branch
          %620 = sbr.rel (%p618) target = $region32
        $region31: #{tpu_custom_call.1} parent=11 // pred_region
          _
        $region32: #{tpu_custom_call.1} parent=11 // pred_fallthru
          _
        // Predicated region
        $region33: #{tpu_custom_call.1} parent=11 // pred_check
          %p621 = pneg %p188
        $region34: #{tpu_custom_call.1} parent=11 // pred_check_branch
          %623 = sbr.rel (%p621) target = $region36
        $region35: #{tpu_custom_call.1} parent=11 // pred_region
          _
        $region36: #{tpu_custom_call.1} parent=11 // pred_fallthru
          _
        // Predicated region
        $region37: #{tpu_custom_call.1} parent=11 // pred_check
          %p624 = pneg %p209
        $region38: #{tpu_custom_call.1} parent=11 // pred_check_branch
          %626 = sbr.rel (%p624) target = $region40
        $region39: #{tpu_custom_call.1} parent=11 // pred_region
          %s628 = ssub.s32 1152, 1152
          %629 = vsyncadd [#allocation6], %s628
          %s630 = sshll.u32 [#allocation7], 4
          %s631 = int_to_ptr.vmem [resolvable:$true] %s630
          %636 = dma.hbm_to_vmem [thread:$0]  %s7, 1152, %s631, [#allocation6], 128, 128, 8
        $region40: #{tpu_custom_call.1} parent=11 // pred_fallthru
          _
        // Predicated region
        $region41: #{tpu_custom_call.1} parent=11 // pred_check
          %p637 = pneg %p230
        $region42: #{tpu_custom_call.1} parent=11 // pred_check_branch
          %639 = sbr.rel (%p637) target = $region44
        $region43: #{tpu_custom_call.1} parent=11 // pred_region
          _
        $region44: #{tpu_custom_call.1} parent=11 // pred_fallthru
          _
        // Predicated region
        $region45: #{tpu_custom_call.1} parent=11 // pred_check
          %p640 = pneg %p251
        $region46: #{tpu_custom_call.1} parent=11 // pred_check_branch
          %642 = sbr.rel (%p640) target = $region48
        $region47: #{tpu_custom_call.1} parent=11 // pred_region
          _
        $region48: #{tpu_custom_call.1} parent=11 // pred_fallthru
          _
        // Predicated region
        $region49: #{tpu_custom_call.1} parent=11 // pred_check
          %p643 = pneg %p272
        $region50: #{tpu_custom_call.1} parent=11 // pred_check_branch
          %645 = sbr.rel (%p643) target = $region52
        $region51: #{tpu_custom_call.1} parent=11 // pred_region
          _
        $region52: #{tpu_custom_call.1} parent=11 // pred_fallthru
          _
        // Predicated region
        $region53: #{tpu_custom_call.1} parent=11 // pred_check
          %p646 = pneg %p293
        $region54: #{tpu_custom_call.1} parent=11 // pred_check_branch
          %648 = sbr.rel (%p646) target = $region56
        $region55: #{tpu_custom_call.1} parent=11 // pred_region
          %s650 = ssub.s32 64, 64
          %651 = vsyncadd [#allocation9], %s650
          %s653 = sshll.u32 [#allocation8], 4
          %s654 = int_to_ptr.vmem [resolvable:$true] %s653
          %656 = dma.hbm_to_vmem [thread:$0]  %s11, 64, %s654, [#allocation9]
        $region56: #{tpu_custom_call.1} parent=11 // pred_fallthru
          _
        // Predicated region
        $region57: #{tpu_custom_call.1} parent=11 // pred_check
          %p657 = pneg %p314
        $region58: #{tpu_custom_call.1} parent=11 // pred_check_branch
          %659 = sbr.rel (%p657) target = $region60
        $region59: #{tpu_custom_call.1} parent=11 // pred_region
          _
        $region60: #{tpu_custom_call.1} parent=11 // pred_fallthru
          _
        // Predicated region
        $region61: #{tpu_custom_call.1} parent=11 // pred_check
          %p660 = pneg %p335
        $region62: #{tpu_custom_call.1} parent=11 // pred_check_branch
          %662 = sbr.rel (%p660) target = $region64
        $region63: #{tpu_custom_call.1} parent=11 // pred_region
          %s664 = ssub.s32 64, 64
          %665 = vsyncadd [#allocation9], %s664
          %s667 = sshll.u32 [#allocation10], 4
          %s668 = int_to_ptr.vmem [resolvable:$true] %s667
          %670 = dma.hbm_to_vmem [thread:$0]  %s13, 64, %s668, [#allocation9]
        $region64: #{tpu_custom_call.1} parent=11 // pred_fallthru
          _
        // Predicated region
        $region65: #{tpu_custom_call.1} parent=11 // pred_check
          %p671 = pneg %p356
        $region66: #{tpu_custom_call.1} parent=11 // pred_check_branch
          %673 = sbr.rel (%p671) target = $region68
        $region67: #{tpu_custom_call.1} parent=11 // pred_region
          _
        $region68: #{tpu_custom_call.1} parent=11 // pred_fallthru
          _
        // Predicated region
        $region69: #{tpu_custom_call.1} parent=11 // pred_check
          %p674 = pneg %p377
        $region70: #{tpu_custom_call.1} parent=11 // pred_check_branch
          %676 = sbr.rel (%p674) target = $region72
        $region71: #{tpu_custom_call.1} parent=11 // pred_region
          %s678 = ssub.s32 64, 64
          %679 = vsyncadd [#allocation12], %s678
          %s681 = sshll.u32 [#allocation11], 4
          %s682 = int_to_ptr.vmem [resolvable:$true] %s681
          %684 = dma.hbm_to_vmem [thread:$0]  %s15, 64, %s682, [#allocation12]
        $region72: #{tpu_custom_call.1} parent=11 // pred_fallthru
          _
        // Predicated region
        $region73: #{tpu_custom_call.1} parent=11 // pred_check
          %p685 = pneg %p398
        $region74: #{tpu_custom_call.1} parent=11 // pred_check_branch
          %687 = sbr.rel (%p685) target = $region76
        $region75: #{tpu_custom_call.1} parent=11 // pred_region
          _
        $region76: #{tpu_custom_call.1} parent=11 // pred_fallthru
          _
        // Predicated region
        $region77: #{tpu_custom_call.1} parent=11 // pred_check
          %p688 = pneg %p419
        $region78: #{tpu_custom_call.1} parent=11 // pred_check_branch
          %690 = sbr.rel (%p688) target = $region80
        $region79: #{tpu_custom_call.1} parent=11 // pred_region
          _
        $region80: #{tpu_custom_call.1} parent=11 // pred_fallthru
          _
        // Predicated region
        $region81: #{tpu_custom_call.1} parent=11 // pred_check
          %p691 = pneg %p440
        $region82: #{tpu_custom_call.1} parent=11 // pred_check_branch
          %693 = sbr.rel (%p691) target = $region84
        $region83: #{tpu_custom_call.1} parent=11 // pred_region
          _
        $region84: #{tpu_custom_call.1} parent=11 // pred_fallthru
          _
        // Predicated region
        $region85: #{tpu_custom_call.1} parent=11 // pred_check
          %p694 = pneg %p461
        $region86: #{tpu_custom_call.1} parent=11 // pred_check_branch
          %696 = sbr.rel (%p694) target = $region88
        $region87: #{tpu_custom_call.1} parent=11 // pred_region
          _
        $region88: #{tpu_custom_call.1} parent=11 // pred_fallthru
          _
        // Predicated region
        $region89: #{tpu_custom_call.1} parent=11 // pred_check
          %p697 = pneg %p482
        $region90: #{tpu_custom_call.1} parent=11 // pred_check_branch
          %699 = sbr.rel (%p697) target = $region92
        $region91: #{tpu_custom_call.1} parent=11 // pred_region
          %s701 = ssub.s32 2304, 2304
          %702 = vsyncadd [#allocation12], %s701
          %s703 = sshll.u32 [#allocation13], 4
          %s704 = int_to_ptr.vmem [resolvable:$true] %s703
          %709 = dma.hbm_to_vmem [thread:$0]  %s20, 2304, %s704, [#allocation12], 128, 128, 8
        $region92: #{tpu_custom_call.1} parent=11 // pred_fallthru
          _
        // Predicated region
        $region93: #{tpu_custom_call.1} parent=11 // pred_check
          %p710 = pneg %p503
        $region94: #{tpu_custom_call.1} parent=11 // pred_check_branch
          %712 = sbr.rel (%p710) target = $region96
        $region95: #{tpu_custom_call.1} parent=11 // pred_region
          _
        $region96: #{tpu_custom_call.1} parent=11 // pred_fallthru
          _
        // Predicated region
        $region97: #{tpu_custom_call.1} parent=11 // pred_check
          %p713 = pneg %p524
        $region98: #{tpu_custom_call.1} parent=11 // pred_check_branch
          %715 = sbr.rel (%p713) target = $region100
        $region99: #{tpu_custom_call.1} parent=11 // pred_region
          _
        $region100: #{tpu_custom_call.1} parent=11 // pred_fallthru
          _
        // Predicated region
        $region101: #{tpu_custom_call.1} parent=11 // pred_check
          %p716 = pneg %p545
        $region102: #{tpu_custom_call.1} parent=11 // pred_check_branch
          %718 = sbr.rel (%p716) target = $region104
        $region103: #{tpu_custom_call.1} parent=11 // pred_region
          _
        $region104: #{tpu_custom_call.1} parent=11 // pred_fallthru
          _
      $region12: #{tpu_custom_call.1} parent=5 // pred_fallthru
        _
      %p719 = scmp.lt.s32.totalorder %s36, 2
      // Predicated region
      $region105: #{tpu_custom_call.1} parent=5 // pred_check
        %p720 = pneg %p719
      $region106: #{tpu_custom_call.1} parent=5 // pred_check_branch
        %722 = sbr.rel (%p720) target = $region108
      $region107: #{tpu_custom_call.1} parent=5 // pred_region
        // Predicated region
        $region109: #{tpu_custom_call.1} parent=107 // pred_check
          %p723 = pneg %p56
        $region110: #{tpu_custom_call.1} parent=107 // pred_check_branch
          %725 = sbr.rel (%p723) target = $region112
        $region111: #{tpu_custom_call.1} parent=107 // pred_region
          %p726 = scmp.lt.s32.totalorder %s36, 1
          %s727 = scalar_select %p726, %s36, 1
          %s728 = smul.addr %s727, 2
          %s729 = smul.addr %s728, 4
          %s730 = scalar_lea.vmem %s0, %s729
        $region112: #{tpu_custom_call.1} parent=107 // pred_fallthru
          _
      $region108: #{tpu_custom_call.1} parent=5 // pred_fallthru
        _
      %p731 = scmp.le.s32.totalorder 1, %s36
      %p732 = scmp.lt.s32.totalorder %s36, 3
      %p733 = pnand %p731, %p732
      %p734 = pneg %p733
      // Predicated region
      $region113: #{tpu_custom_call.1} parent=5 // pred_check
        _
      $region114: #{tpu_custom_call.1} parent=5 // pred_check_branch
        %736 = sbr.rel (%p733) target = $region116
      $region115: #{tpu_custom_call.1} parent=5 // pred_region
        %s737 = ssub.s32 %s36, 1
        // Predicated region
        $region117: #{tpu_custom_call.1} parent=115 // pred_check
          %p738 = pneg %p83
        $region118: #{tpu_custom_call.1} parent=115 // pred_check_branch
          %740 = sbr.rel (%p738) target = $region120
        $region119: #{tpu_custom_call.1} parent=115 // pred_region
          %741 = dma.done [#allocation4], 73728
        $region120: #{tpu_custom_call.1} parent=115 // pred_fallthru
          _
        // Predicated region
        $region121: #{tpu_custom_call.1} parent=115 // pred_check
          %p742 = pneg %p125
        $region122: #{tpu_custom_call.1} parent=115 // pred_check_branch
          %744 = sbr.rel (%p742) target = $region124
        $region123: #{tpu_custom_call.1} parent=115 // pred_region
          %745 = dma.done [#allocation6], 9216
        $region124: #{tpu_custom_call.1} parent=115 // pred_fallthru
          _
        // Predicated region
        $region125: #{tpu_custom_call.1} parent=115 // pred_check
          %p746 = pneg %p209
        $region126: #{tpu_custom_call.1} parent=115 // pred_check_branch
          %748 = sbr.rel (%p746) target = $region128
        $region127: #{tpu_custom_call.1} parent=115 // pred_region
          %749 = dma.done [#allocation6], 1152
        $region128: #{tpu_custom_call.1} parent=115 // pred_fallthru
          _
        // Predicated region
        $region129: #{tpu_custom_call.1} parent=115 // pred_check
          %p750 = pneg %p293
        $region130: #{tpu_custom_call.1} parent=115 // pred_check_branch
          %752 = sbr.rel (%p750) target = $region132
        $region131: #{tpu_custom_call.1} parent=115 // pred_region
          %753 = dma.done [#allocation9], 64
        $region132: #{tpu_custom_call.1} parent=115 // pred_fallthru
          _
        // Predicated region
        $region133: #{tpu_custom_call.1} parent=115 // pred_check
          %p754 = pneg %p335
        $region134: #{tpu_custom_call.1} parent=115 // pred_check_branch
          %756 = sbr.rel (%p754) target = $region136
        $region135: #{tpu_custom_call.1} parent=115 // pred_region
          %757 = dma.done [#allocation9], 64
        $region136: #{tpu_custom_call.1} parent=115 // pred_fallthru
          _
        // Predicated region
        $region137: #{tpu_custom_call.1} parent=115 // pred_check
          %p758 = pneg %p377
        $region138: #{tpu_custom_call.1} parent=115 // pred_check_branch
          %760 = sbr.rel (%p758) target = $region140
        $region139: #{tpu_custom_call.1} parent=115 // pred_region
          %761 = dma.done [#allocation12], 64
        $region140: #{tpu_custom_call.1} parent=115 // pred_fallthru
          _
        // Predicated region
        $region141: #{tpu_custom_call.1} parent=115 // pred_check
          %p762 = pneg %p482
        $region142: #{tpu_custom_call.1} parent=115 // pred_check_branch
          %764 = sbr.rel (%p762) target = $region144
        $region143: #{tpu_custom_call.1} parent=115 // pred_region
          %765 = dma.done [#allocation12], 2304
        $region144: #{tpu_custom_call.1} parent=115 // pred_fallthru
          _
        %p766 = scmp.lt.s32.totalorder %s41, 1
        %s767 = scalar_select %p766, %s41, 1
        %s768 = smul.addr %s767, 2
        %s769 = smul.addr %s768, 4
        %s770 = scalar_lea.vmem %s0, %s769
        %p771 = pneg %p62
        %p772 = pneg %p59
        %p773 = pneg %p83
        %p774 = pneg %p80
        %p775 = pneg %p104
        %p776 = pneg %p101
        %p777 = pneg %p125
        %p778 = pneg %p122
        %p779 = pneg %p146
        %p780 = pneg %p143
        %p781 = pneg %p167
        %p782 = pneg %p164
        %p783 = pneg %p188
        %p784 = pneg %p185
        %p785 = pneg %p209
        %p786 = pneg %p206
        %p787 = pneg %p230
        %p788 = pneg %p227
        %p789 = pneg %p251
        %p790 = pneg %p248
        %p791 = pneg %p272
        %p792 = pneg %p269
        %p793 = pneg %p293
        %p794 = pneg %p290
        %p795 = pneg %p314
        %p796 = pneg %p311
        %p797 = pneg %p335
        %p798 = pneg %p332
        %p799 = pneg %p356
        %p800 = pneg %p353
        %p801 = pneg %p377
        %p802 = pneg %p374
        %p803 = pneg %p398
        %p804 = pneg %p395
        %p805 = pneg %p419
        %p806 = pneg %p416
        %p807 = pneg %p440
        %p808 = pneg %p437
        %p809 = pneg %p461
        %p810 = pneg %p458
        %p811 = pneg %p482
        %p812 = pneg %p479
        %p813 = pneg %p503
        %p814 = pneg %p500
        %p815 = pneg %p524
        %p816 = pneg %p521
        %p817 = pneg %p545
        %p818 = pneg %p542
        %p819 = pneg %p571
        %p820 = pneg %p568
        %p821 = scmp.lt.s32.totalorder %s41, 1
        %s822 = scalar_select %p821, %s41, 1
        %s823 = smul.addr %s822, 4
        %s824 = smul.addr %s823, 8
        %s825 = scalar_lea.vmem %s24, %s824
        %p826 = scmp.lt.s32.totalorder %s41, 1
        %s827 = scalar_select %p826, %s41, 1
        %s828 = smul.addr %s827, 2
        %s829 = smul.addr %s828, 4
        %s830 = scalar_lea.vmem %s0, %s829
        %p831 = scmp.lt.s32.totalorder %s41, 1
        %s832 = scalar_select %p831, %s41, 1
        %s833 = smul.addr %s832, 4
        %s834 = smul.addr %s833, 8
        %s835 = scalar_lea.vmem %s24, %s834
        %v836 = vld [vmem:[%s830] sm:$0x77]
        %v837 = vld [vmem:[%s5] sm:$0xff]
        %v838 = vmul.f32 %v836, 0.80064076
        %v839 = vld [vmem:[%s6] sm:$0xff]
        %841 = vset.pattern.permute.xlu0 0
        %842 = vperm.xlu0 %841, %v839
        %v843 = vpop.permute.xlu0 %842
        %v846 = vcombine.high %v838, %v838
        %vm847 = vcmask 23552
        %v849 = vsel %vm847, %v837, 0
        %vm851 = vcmask 1042432
        %v852 = vsel %vm851, %v838, 0
        %v854 = vsel %vm851, %v846, 0
        %856 = vmatprep.subr.mxu0 %v854
        %857 = vmatpush1.msra.mxu0 %v852
        %858 = vmatprep.subr.mxu0 0.0
        %859 = vmatpush1.msra.mxu0 0.0
        %860 = vmatprep.subr.mxu0 0.0
        %861 = vmatpush1.msra.mxu0 0.0
        %862 = vmatprep.subr.mxu0 0.0
        %863 = vmatpush1.msra.mxu0 0.0
        %864 = vmatprep.subr.mxu0 0.0
        %865 = vmatpush1.msra.mxu0 0.0
        %866 = vmatprep.subr.mxu0 0.0
        %867 = vmatpush1.msra.mxu0 0.0
        %868 = vmatprep.subr.mxu0 0.0
        %869 = vmatpush1.msra.mxu0 0.0
        %870 = vmatprep.subr.mxu0 0.0
        %871 = vmatpush1.msra.mxu0 0.0
        %872 = vmatprep.subr.mxu0 0.0
        %873 = vmatpush1.msra.mxu0 0.0
        %874 = vmatprep.subr.mxu0 0.0
        %875 = vmatpush1.msra.mxu0 0.0
        %876 = vmatprep.subr.mxu0 0.0
        %877 = vmatpush1.msra.mxu0 0.0
        %878 = vmatprep.subr.mxu0 0.0
        %879 = vmatpush1.msra.mxu0 0.0
        %880 = vmatprep.subr.mxu0 0.0
        %881 = vmatpush1.msra.mxu0 0.0
        %882 = vmatprep.subr.mxu0 0.0
        %883 = vmatpush1.msra.mxu0 0.0
        %884 = vmatprep.subr.mxu0 0.0
        %885 = vmatpush1.msra.mxu0 0.0
        %886 = vmatprep.subr.mxu0 0.0
        %887 = vmatpush1.msra.mxu0 0.0
        %888 = vmatprep.subr.mxu0 0.0
        %889 = vmatpush1.msra.mxu0 0.0
        %890 = vmatprep.subr.mxu0 0.0
        %891 = vmatpush1.msra.mxu0 0.0
        %892 = vmatprep.subr.mxu0 0.0
        %893 = vmatpush1.msra.mxu0 0.0
        %894 = vmatprep.subr.mxu0 0.0
        %895 = vmatpush1.msra.mxu0 0.0
        %896 = vmatprep.subr.mxu0 0.0
        %897 = vmatpush1.msra.mxu0 0.0
        %898 = vmatprep.subr.mxu0 0.0
        %899 = vmatpush1.msra.mxu0 0.0
        %900 = vmatprep.subr.mxu0 0.0
        %901 = vmatpush1.msra.mxu0 0.0
        %902 = vmatprep.subr.mxu0 0.0
        %903 = vmatpush1.msra.mxu0 0.0
        %904 = vmatprep.subr.mxu0 0.0
        %905 = vmatpush1.msra.mxu0 0.0
        %906 = vmatprep.subr.mxu0 0.0
        %907 = vmatpush1.msra.mxu0 0.0
        %908 = vmatprep.subr.mxu0 0.0
        %909 = vmatpush1.msra.mxu0 0.0
        %910 = vmatprep.subr.mxu0 0.0
        %911 = vmatpush1.msra.mxu0 0.0
        %912 = vmatprep.subr.mxu0 0.0
        %913 = vmatpush1.msra.mxu0 0.0
        %914 = vmatprep.subr.mxu0 0.0
        %915 = vmatpush1.msra.mxu0 0.0
        %916 = vmatprep.subr.mxu0 0.0
        %917 = vmatpush1.msra.mxu0 0.0
        %918 = vmatprep.subr.mxu0 0.0
        %919 = vmatpush1.msra.mxu0 0.0
        %920 = vmatprep.mubr.f32.mxu0 0.0
        %921 = vmatmul.mubr.f32.gmra.mrb[0].mxu0 %v849
        %v922 = vpop.f32.mrb[0].mxu0
        %v923 = vadd.f32 %v843, %v922
        %v924 = vpop.f32.mrb[0].mxu0
        %v925 = vadd.f32 %v843, %v924
        %926 = vdwg.mxu0
        %vm927 = vcmp.gt.f32.partialorder %v923, 0.0
        %vm928 = vcmp.gt.f32.partialorder %v925, 0.0
        %v929 = vmul.f32 %v923, 0.2
        %v930 = vmul.f32 %v925, 0.2
        %v931 = vsel %vm927, %v923, %v929
        %v932 = vsel %vm928, %v925, %v930
        %v933 = vmul.f32 %v931, 0.16343011
        %v934 = vmul.f32 %v932, 0.16343011
        %v935 = vld [vmem:[#allocation3] sm:$0xff]
        %v936 = vld [vmem:[#allocation3 + $0x8] sm:$0xff]
        %v937 = vld [vmem:[#allocation3 + $0x10] sm:$0xff]
        %v938 = vld [vmem:[#allocation3 + $0x18] sm:$0xff]
        %v939 = vld [vmem:[#allocation3 + $0x20] sm:$0xff]
        %v940 = vld [vmem:[#allocation3 + $0x28] sm:$0xff]
        %v941 = vld [vmem:[#allocation3 + $0x30] sm:$0xff]
        %v942 = vld [vmem:[#allocation3 + $0x38] sm:$0xff]
        %v943 = vld [vmem:[#allocation3 + $0x40] sm:$0xff]
        %v944 = vld [vmem:[#allocation3 + $0x48] sm:$0xff]
        %v945 = vld [vmem:[#allocation3 + $0x50] sm:$0xff]
        %v946 = vld [vmem:[#allocation3 + $0x58] sm:$0xff]
        %v947 = vld [vmem:[#allocation3 + $0x60] sm:$0xff]
        %v948 = vld [vmem:[#allocation3 + $0x68] sm:$0xff]
        %v949 = vld [vmem:[#allocation3 + $0x70] sm:$0xff]
        %v950 = vld [vmem:[#allocation3 + $0x78] sm:$0xff]
        %v951 = vld [vmem:[#allocation3 + $0x80] sm:$0xff]
        %v952 = vld [vmem:[#allocation3 + $0x88] sm:$0xff]
        %v953 = vld [vmem:[#allocation3 + $0x90] sm:$0xff]
        %v954 = vld [vmem:[#allocation3 + $0x98] sm:$0xff]
        %v955 = vld [vmem:[#allocation3 + $0xa0] sm:$0xff]
        %v956 = vld [vmem:[#allocation3 + $0xa8] sm:$0xff]
        %v957 = vld [vmem:[#allocation3 + $0xb0] sm:$0xff]
        %v958 = vld [vmem:[#allocation3 + $0xb8] sm:$0xff]
        %v959 = vld [vmem:[#allocation3 + $0xc0] sm:$0xff]
        %v960 = vld [vmem:[#allocation3 + $0xc8] sm:$0xff]
        %v961 = vld [vmem:[#allocation3 + $0xd0] sm:$0xff]
        %v962 = vld [vmem:[#allocation3 + $0xd8] sm:$0xff]
        %v963 = vld [vmem:[#allocation3 + $0xe0] sm:$0xff]
        %v964 = vld [vmem:[#allocation3 + $0xe8] sm:$0xff]
        %v965 = vld [vmem:[#allocation3 + $0xf0] sm:$0xff]
        %v966 = vld [vmem:[#allocation3 + $0xf8] sm:$0xff]
        %v967 = vld [vmem:[#allocation3 + $0x100] sm:$0xff]
        %v968 = vld [vmem:[#allocation3 + $0x108] sm:$0xff]
        %v969 = vld [vmem:[#allocation3 + $0x110] sm:$0xff]
        %v970 = vld [vmem:[#allocation3 + $0x118] sm:$0xff]
        %v971 = vld [vmem:[#allocation3 + $0x120] sm:$0xff]
        %v972 = vld [vmem:[#allocation3 + $0x128] sm:$0xff]
        %v973 = vld [vmem:[#allocation3 + $0x130] sm:$0xff]
        %v974 = vld [vmem:[#allocation3 + $0x138] sm:$0xff]
        %v975 = vld [vmem:[#allocation3 + $0x140] sm:$0xff]
        %v976 = vld [vmem:[#allocation3 + $0x148] sm:$0xff]
        %v977 = vld [vmem:[#allocation3 + $0x150] sm:$0xff]
        %v978 = vld [vmem:[#allocation3 + $0x158] sm:$0xff]
        %v979 = vld [vmem:[#allocation3 + $0x160] sm:$0xff]
        %v980 = vld [vmem:[#allocation3 + $0x168] sm:$0xff]
        %v981 = vld [vmem:[#allocation3 + $0x170] sm:$0xff]
        %v982 = vld [vmem:[#allocation3 + $0x178] sm:$0xff]
        %v983 = vld [vmem:[#allocation3 + $0x180] sm:$0xff]
        %v984 = vld [vmem:[#allocation3 + $0x188] sm:$0xff]
        %v985 = vld [vmem:[#allocation3 + $0x190] sm:$0xff]
        %v986 = vld [vmem:[#allocation3 + $0x198] sm:$0xff]
        %v987 = vld [vmem:[#allocation3 + $0x1a0] sm:$0xff]
        %v988 = vld [vmem:[#allocation3 + $0x1a8] sm:$0xff]
        %v989 = vld [vmem:[#allocation3 + $0x1b0] sm:$0xff]
        %v990 = vld [vmem:[#allocation3 + $0x1b8] sm:$0xff]
        %v991 = vld [vmem:[#allocation3 + $0x1c0] sm:$0xff]
        %v992 = vld [vmem:[#allocation3 + $0x1c8] sm:$0xff]
        %v993 = vld [vmem:[#allocation3 + $0x1d0] sm:$0xff]
        %v994 = vld [vmem:[#allocation3 + $0x1d8] sm:$0xff]
        %v995 = vld [vmem:[#allocation3 + $0x1e0] sm:$0xff]
        %v996 = vld [vmem:[#allocation3 + $0x1e8] sm:$0xff]
        %v997 = vld [vmem:[#allocation3 + $0x1f0] sm:$0xff]
        %v998 = vld [vmem:[#allocation3 + $0x1f8] sm:$0xff]
        %999 = vmatprep.subr.mxu0 %v936
        %1000 = vmatpush1.msra.mxu0 %v935
        %1001 = vmatprep.subr.mxu0 %v938
        %1002 = vmatpush1.msra.mxu0 %v937
        %1003 = vmatprep.subr.mxu0 %v940
        %1004 = vmatpush1.msra.mxu0 %v939
        %1005 = vmatprep.subr.mxu0 %v942
        %1006 = vmatpush1.msra.mxu0 %v941
        %1007 = vmatprep.subr.mxu0 %v944
        %1008 = vmatpush1.msra.mxu0 %v943
        %1009 = vmatprep.subr.mxu0 %v946
        %1010 = vmatpush1.msra.mxu0 %v945
        %1011 = vmatprep.subr.mxu0 %v948
        %1012 = vmatpush1.msra.mxu0 %v947
        %1013 = vmatprep.subr.mxu0 %v950
        %1014 = vmatpush1.msra.mxu0 %v949
        %1015 = vmatprep.subr.mxu0 %v952
        %1016 = vmatpush1.msra.mxu0 %v951
        %1017 = vmatprep.subr.mxu0 %v954
        %1018 = vmatpush1.msra.mxu0 %v953
        %1019 = vmatprep.subr.mxu0 %v956
        %1020 = vmatpush1.msra.mxu0 %v955
        %1021 = vmatprep.subr.mxu0 %v958
        %1022 = vmatpush1.msra.mxu0 %v957
        %1023 = vmatprep.subr.mxu0 %v960
        %1024 = vmatpush1.msra.mxu0 %v959
        %1025 = vmatprep.subr.mxu0 %v962
        %1026 = vmatpush1.msra.mxu0 %v961
        %1027 = vmatprep.subr.mxu0 %v964
        %1028 = vmatpush1.msra.mxu0 %v963
        %1029 = vmatprep.subr.mxu0 %v966
        %1030 = vmatpush1.msra.mxu0 %v965
        %1031 = vmatprep.subr.mxu0 %v968
        %1032 = vmatpush1.msra.mxu0 %v967
        %1033 = vmatprep.subr.mxu0 %v970
        %1034 = vmatpush1.msra.mxu0 %v969
        %1035 = vmatprep.subr.mxu0 %v972
        %1036 = vmatpush1.msra.mxu0 %v971
        %1037 = vmatprep.subr.mxu0 %v974
        %1038 = vmatpush1.msra.mxu0 %v973
        %1039 = vmatprep.subr.mxu0 %v976
        %1040 = vmatpush1.msra.mxu0 %v975
        %1041 = vmatprep.subr.mxu0 %v978
        %1042 = vmatpush1.msra.mxu0 %v977
        %1043 = vmatprep.subr.mxu0 %v980
        %1044 = vmatpush1.msra.mxu0 %v979
        %1045 = vmatprep.subr.mxu0 %v982
        %1046 = vmatpush1.msra.mxu0 %v981
        %1047 = vmatprep.subr.mxu0 %v984
        %1048 = vmatpush1.msra.mxu0 %v983
        %1049 = vmatprep.subr.mxu0 %v986
        %1050 = vmatpush1.msra.mxu0 %v985
        %1051 = vmatprep.subr.mxu0 %v988
        %1052 = vmatpush1.msra.mxu0 %v987
        %1053 = vmatprep.subr.mxu0 %v990
        %1054 = vmatpush1.msra.mxu0 %v989
        %1055 = vmatprep.subr.mxu0 %v992
        %1056 = vmatpush1.msra.mxu0 %v991
        %1057 = vmatprep.subr.mxu0 %v994
        %1058 = vmatpush1.msra.mxu0 %v993
        %1059 = vmatprep.subr.mxu0 %v996
        %1060 = vmatpush1.msra.mxu0 %v995
        %1061 = vmatprep.subr.mxu0 %v998
        %1062 = vmatpush1.msra.mxu0 %v997
        %1063 = vmatprep.mubr.f32.mxu0 %v934
        %1064 = vmatmul.mubr.f32.gmra.mrb[0].mxu0 %v933
        %v1065 = vpop.f32.mrb[0].mxu0
        %v1066 = vadd.f32 0.0, %v1065
        %v1067 = vpop.f32.mrb[0].mxu0
        %v1068 = vadd.f32 0.0, %v1067
        %1069 = vdwg.mxu0
        %v1070 = vld [vmem:[#allocation7] sm:$0xff]
        %s1071 = scalar_lea.vmem [#allocation3], 512
        %v1072 = vld [vmem:[%s1071] sm:$0xff]
        %v1073 = vld [vmem:[%s1071 + $0x8] sm:$0xff]
        %v1074 = vld [vmem:[%s1071 + $0x10] sm:$0xff]
        %v1075 = vld [vmem:[%s1071 + $0x18] sm:$0xff]
        %v1076 = vld [vmem:[%s1071 + $0x20] sm:$0xff]
        %v1077 = vld [vmem:[%s1071 + $0x28] sm:$0xff]
        %v1078 = vld [vmem:[%s1071 + $0x30] sm:$0xff]
        %v1079 = vld [vmem:[%s1071 + $0x38] sm:$0xff]
        %v1080 = vld [vmem:[%s1071 + $0x40] sm:$0xff]
        %v1081 = vld [vmem:[%s1071 + $0x48] sm:$0xff]
        %v1082 = vld [vmem:[%s1071 + $0x50] sm:$0xff]
        %v1083 = vld [vmem:[%s1071 + $0x58] sm:$0xff]
        %v1084 = vld [vmem:[%s1071 + $0x60] sm:$0xff]
        %v1085 = vld [vmem:[%s1071 + $0x68] sm:$0xff]
        %v1086 = vld [vmem:[%s1071 + $0x70] sm:$0xff]
        %v1087 = vld [vmem:[%s1071 + $0x78] sm:$0xff]
        %v1088 = vld [vmem:[%s1071 + $0x80] sm:$0xff]
        %v1089 = vld [vmem:[%s1071 + $0x88] sm:$0xff]
        %v1090 = vld [vmem:[%s1071 + $0x90] sm:$0xff]
        %v1091 = vld [vmem:[%s1071 + $0x98] sm:$0xff]
        %v1092 = vld [vmem:[%s1071 + $0xa0] sm:$0xff]
        %v1093 = vld [vmem:[%s1071 + $0xa8] sm:$0xff]
        %v1094 = vld [vmem:[%s1071 + $0xb0] sm:$0xff]
        %v1095 = vld [vmem:[%s1071 + $0xb8] sm:$0xff]
        %v1096 = vld [vmem:[%s1071 + $0xc0] sm:$0xff]
        %v1097 = vld [vmem:[%s1071 + $0xc8] sm:$0xff]
        %v1098 = vld [vmem:[%s1071 + $0xd0] sm:$0xff]
        %v1099 = vld [vmem:[%s1071 + $0xd8] sm:$0xff]
        %v1100 = vld [vmem:[%s1071 + $0xe0] sm:$0xff]
        %v1101 = vld [vmem:[%s1071 + $0xe8] sm:$0xff]
        %v1102 = vld [vmem:[%s1071 + $0xf0] sm:$0xff]
        %v1103 = vld [vmem:[%s1071 + $0xf8] sm:$0xff]
        %v1104 = vld [vmem:[%s1071 + $0x100] sm:$0xff]
        %v1105 = vld [vmem:[%s1071 + $0x108] sm:$0xff]
        %v1106 = vld [vmem:[%s1071 + $0x110] sm:$0xff]
        %v1107 = vld [vmem:[%s1071 + $0x118] sm:$0xff]
        %v1108 = vld [vmem:[%s1071 + $0x120] sm:$0xff]
        %v1109 = vld [vmem:[%s1071 + $0x128] sm:$0xff]
        %v1110 = vld [vmem:[%s1071 + $0x130] sm:$0xff]
        %v1111 = vld [vmem:[%s1071 + $0x138] sm:$0xff]
        %v1112 = vld [vmem:[%s1071 + $0x140] sm:$0xff]
        %v1113 = vld [vmem:[%s1071 + $0x148] sm:$0xff]
        %v1114 = vld [vmem:[%s1071 + $0x150] sm:$0xff]
        %v1115 = vld [vmem:[%s1071 + $0x158] sm:$0xff]
        %v1116 = vld [vmem:[%s1071 + $0x160] sm:$0xff]
        %v1117 = vld [vmem:[%s1071 + $0x168] sm:$0xff]
        %v1118 = vld [vmem:[%s1071 + $0x170] sm:$0xff]
        %v1119 = vld [vmem:[%s1071 + $0x178] sm:$0xff]
        %v1120 = vld [vmem:[%s1071 + $0x180] sm:$0xff]
        %v1121 = vld [vmem:[%s1071 + $0x188] sm:$0xff]
        %v1122 = vld [vmem:[%s1071 + $0x190] sm:$0xff]
        %v1123 = vld [vmem:[%s1071 + $0x198] sm:$0xff]
        %v1124 = vld [vmem:[%s1071 + $0x1a0] sm:$0xff]
        %v1125 = vld [vmem:[%s1071 + $0x1a8] sm:$0xff]
        %v1126 = vld [vmem:[%s1071 + $0x1b0] sm:$0xff]
        %v1127 = vld [vmem:[%s1071 + $0x1b8] sm:$0xff]
        %v1128 = vld [vmem:[%s1071 + $0x1c0] sm:$0xff]
        %v1129 = vld [vmem:[%s1071 + $0x1c8] sm:$0xff]
        %v1130 = vld [vmem:[%s1071 + $0x1d0] sm:$0xff]
        %v1131 = vld [vmem:[%s1071 + $0x1d8] sm:$0xff]
        %v1132 = vld [vmem:[%s1071 + $0x1e0] sm:$0xff]
        %v1133 = vld [vmem:[%s1071 + $0x1e8] sm:$0xff]
        %v1134 = vld [vmem:[%s1071 + $0x1f0] sm:$0xff]
        %v1135 = vld [vmem:[%s1071 + $0x1f8] sm:$0xff]
        %1136 = vmatprep.subr.mxu0 %v1073
        %1137 = vmatpush1.msra.mxu0 %v1072
        %1138 = vmatprep.subr.mxu0 %v1075
        %1139 = vmatpush1.msra.mxu0 %v1074
        %1140 = vmatprep.subr.mxu0 %v1077
        %1141 = vmatpush1.msra.mxu0 %v1076
        %1142 = vmatprep.subr.mxu0 %v1079
        %1143 = vmatpush1.msra.mxu0 %v1078
        %1144 = vmatprep.subr.mxu0 %v1081
        %1145 = vmatpush1.msra.mxu0 %v1080
        %1146 = vmatprep.subr.mxu0 %v1083
        %1147 = vmatpush1.msra.mxu0 %v1082
        %1148 = vmatprep.subr.mxu0 %v1085
        %1149 = vmatpush1.msra.mxu0 %v1084
        %1150 = vmatprep.subr.mxu0 %v1087
        %1151 = vmatpush1.msra.mxu0 %v1086
        %1152 = vmatprep.subr.mxu0 %v1089
        %1153 = vmatpush1.msra.mxu0 %v1088
        %1154 = vmatprep.subr.mxu0 %v1091
        %1155 = vmatpush1.msra.mxu0 %v1090
        %1156 = vmatprep.subr.mxu0 %v1093
        %1157 = vmatpush1.msra.mxu0 %v1092
        %1158 = vmatprep.subr.mxu0 %v1095
        %1159 = vmatpush1.msra.mxu0 %v1094
        %1160 = vmatprep.subr.mxu0 %v1097
        %1161 = vmatpush1.msra.mxu0 %v1096
        %1162 = vmatprep.subr.mxu0 %v1099
        %1163 = vmatpush1.msra.mxu0 %v1098
        %1164 = vmatprep.subr.mxu0 %v1101
        %1165 = vmatpush1.msra.mxu0 %v1100
        %1166 = vmatprep.subr.mxu0 %v1103
        %1167 = vmatpush1.msra.mxu0 %v1102
        %1168 = vmatprep.subr.mxu0 %v1105
        %1169 = vmatpush1.msra.mxu0 %v1104
        %1170 = vmatprep.subr.mxu0 %v1107
        %1171 = vmatpush1.msra.mxu0 %v1106
        %1172 = vmatprep.subr.mxu0 %v1109
        %1173 = vmatpush1.msra.mxu0 %v1108
        %1174 = vmatprep.subr.mxu0 %v1111
        %1175 = vmatpush1.msra.mxu0 %v1110
        %1176 = vmatprep.subr.mxu0 %v1113
        %1177 = vmatpush1.msra.mxu0 %v1112
        %1178 = vmatprep.subr.mxu0 %v1115
        %1179 = vmatpush1.msra.mxu0 %v1114
        %1180 = vmatprep.subr.mxu0 %v1117
        %1181 = vmatpush1.msra.mxu0 %v1116
        %1182 = vmatprep.subr.mxu0 %v1119
        %1183 = vmatpush1.msra.mxu0 %v1118
        %1184 = vmatprep.subr.mxu0 %v1121
        %1185 = vmatpush1.msra.mxu0 %v1120
        %1186 = vmatprep.subr.mxu0 %v1123
        %1187 = vmatpush1.msra.mxu0 %v1122
        %1188 = vmatprep.subr.mxu0 %v1125
        %1189 = vmatpush1.msra.mxu0 %v1124
        %1190 = vmatprep.subr.mxu0 %v1127
        %1191 = vmatpush1.msra.mxu0 %v1126
        %1192 = vmatprep.subr.mxu0 %v1129
        %1193 = vmatpush1.msra.mxu0 %v1128
        %1194 = vmatprep.subr.mxu0 %v1131
        %1195 = vmatpush1.msra.mxu0 %v1130
        %1196 = vmatprep.subr.mxu0 %v1133
        %1197 = vmatpush1.msra.mxu0 %v1132
        %1198 = vmatprep.subr.mxu0 %v1135
        %1199 = vmatpush1.msra.mxu0 %v1134
        %1200 = vmatprep.mubr.f32.mxu0 %v934
        %1201 = vmatmul.mubr.f32.gmra.mrb[0].mxu0 %v933
        %v1202 = vpop.f32.mrb[0].mxu0
        %v1203 = vadd.f32 0.0, %v1202
        %v1204 = vpop.f32.mrb[0].mxu0
        %v1205 = vadd.f32 0.0, %v1204
        %1206 = vdwg.mxu0
        %s1207 = scalar_lea.vmem [#allocation7], 8
        %v1208 = vld [vmem:[%s1207] sm:$0xff]
        %vm1209 = vcmask 64512
        %v1211 = vsel %vm1209, %v1208, 0
        %1213 = vmatprep.subr.mxu0 %v1205
        %1214 = vmatpush1.msra.mxu0 %v1203
        %1215 = vmatprep.subr.mxu0 0.0
        %1216 = vmatpush1.msra.mxu0 0.0
        %1217 = vmatprep.subr.mxu0 0.0
        %1218 = vmatpush1.msra.mxu0 0.0
        %1219 = vmatprep.subr.mxu0 0.0
        %1220 = vmatpush1.msra.mxu0 0.0
        %1221 = vmatprep.subr.mxu0 0.0
        %1222 = vmatpush1.msra.mxu0 0.0
        %1223 = vmatprep.subr.mxu0 0.0
        %1224 = vmatpush1.msra.mxu0 0.0
        %1225 = vmatprep.subr.mxu0 0.0
        %1226 = vmatpush1.msra.mxu0 0.0
        %1227 = vmatprep.subr.mxu0 0.0
        %1228 = vmatpush1.msra.mxu0 0.0
        %1229 = vmatprep.subr.mxu0 0.0
        %1230 = vmatpush1.msra.mxu0 0.0
        %1231 = vmatprep.subr.mxu0 0.0
        %1232 = vmatpush1.msra.mxu0 0.0
        %1233 = vmatprep.subr.mxu0 0.0
        %1234 = vmatpush1.msra.mxu0 0.0
        %1235 = vmatprep.subr.mxu0 0.0
        %1236 = vmatpush1.msra.mxu0 0.0
        %1237 = vmatprep.subr.mxu0 0.0
        %1238 = vmatpush1.msra.mxu0 0.0
        %1239 = vmatprep.subr.mxu0 0.0
        %1240 = vmatpush1.msra.mxu0 0.0
        %1241 = vmatprep.subr.mxu0 0.0
        %1242 = vmatpush1.msra.mxu0 0.0
        %1243 = vmatprep.subr.mxu0 0.0
        %1244 = vmatpush1.msra.mxu0 0.0
        %1245 = vmatprep.subr.mxu0 0.0
        %1246 = vmatpush1.msra.mxu0 0.0
        %1247 = vmatprep.subr.mxu0 0.0
        %1248 = vmatpush1.msra.mxu0 0.0
        %1249 = vmatprep.subr.mxu0 0.0
        %1250 = vmatpush1.msra.mxu0 0.0
        %1251 = vmatprep.subr.mxu0 0.0
        %1252 = vmatpush1.msra.mxu0 0.0
        %1253 = vmatprep.subr.mxu0 0.0
        %1254 = vmatpush1.msra.mxu0 0.0
        %1255 = vmatprep.subr.mxu0 0.0
        %1256 = vmatpush1.msra.mxu0 0.0
        %1257 = vmatprep.subr.mxu0 0.0
        %1258 = vmatpush1.msra.mxu0 0.0
        %1259 = vmatprep.subr.mxu0 0.0
        %1260 = vmatpush1.msra.mxu0 0.0
        %1261 = vmatprep.subr.mxu0 0.0
        %1262 = vmatpush1.msra.mxu0 0.0
        %1263 = vmatprep.subr.mxu0 0.0
        %1264 = vmatpush1.msra.mxu0 0.0
        %1265 = vmatprep.subr.mxu0 0.0
        %1266 = vmatpush1.msra.mxu0 0.0
        %1267 = vmatprep.subr.mxu0 0.0
        %1268 = vmatpush1.msra.mxu0 0.0
        %1269 = vmatprep.subr.mxu0 0.0
        %1270 = vmatpush1.msra.mxu0 0.0
        %1271 = vmatprep.subr.mxu0 0.0
        %1272 = vmatpush1.msra.mxu0 0.0
        %1273 = vmatprep.subr.mxu0 0.0
        %1274 = vmatpush1.msra.mxu0 0.0
        %1275 = vmatprep.subr.mxu0 0.0
        %1276 = vmatpush1.msra.mxu0 0.0
        %1277 = vmatprep.mubr.f32.mxu0 0.0
        %1278 = vmatmul.mubr.f32.gmra.mrb[0].mxu0 %v1211
        %v1279 = vpop.f32.mrb[0].mxu0
        %v1280 = vadd.f32 0.0, %v1279
        %v1281 = vpop.f32.mrb[0].mxu0
        %v1282 = vadd.f32 0.0, %v1281
        %1283 = vdwg.mxu0
        %v1285 = vsel %vm1209, %v1070, 0
        %1287 = vmatprep.subr.mxu0 %v1068
        %1288 = vmatpush1.msra.mxu0 %v1066
        %1289 = vmatprep.subr.mxu0 0.0
        %1290 = vmatpush1.msra.mxu0 0.0
        %1291 = vmatprep.subr.mxu0 0.0
        %1292 = vmatpush1.msra.mxu0 0.0
        %1293 = vmatprep.subr.mxu0 0.0
        %1294 = vmatpush1.msra.mxu0 0.0
        %1295 = vmatprep.subr.mxu0 0.0
        %1296 = vmatpush1.msra.mxu0 0.0
        %1297 = vmatprep.subr.mxu0 0.0
        %1298 = vmatpush1.msra.mxu0 0.0
        %1299 = vmatprep.subr.mxu0 0.0
        %1300 = vmatpush1.msra.mxu0 0.0
        %1301 = vmatprep.subr.mxu0 0.0
        %1302 = vmatpush1.msra.mxu0 0.0
        %1303 = vmatprep.subr.mxu0 0.0
        %1304 = vmatpush1.msra.mxu0 0.0
        %1305 = vmatprep.subr.mxu0 0.0
        %1306 = vmatpush1.msra.mxu0 0.0
        %1307 = vmatprep.subr.mxu0 0.0
        %1308 = vmatpush1.msra.mxu0 0.0
        %1309 = vmatprep.subr.mxu0 0.0
        %1310 = vmatpush1.msra.mxu0 0.0
        %1311 = vmatprep.subr.mxu0 0.0
        %1312 = vmatpush1.msra.mxu0 0.0
        %1313 = vmatprep.subr.mxu0 0.0
        %1314 = vmatpush1.msra.mxu0 0.0
        %1315 = vmatprep.subr.mxu0 0.0
        %1316 = vmatpush1.msra.mxu0 0.0
        %1317 = vmatprep.subr.mxu0 0.0
        %1318 = vmatpush1.msra.mxu0 0.0
        %1319 = vmatprep.subr.mxu0 0.0
        %1320 = vmatpush1.msra.mxu0 0.0
        %1321 = vmatprep.subr.mxu0 0.0
        %1322 = vmatpush1.msra.mxu0 0.0
        %1323 = vmatprep.subr.mxu0 0.0
        %1324 = vmatpush1.msra.mxu0 0.0
        %1325 = vmatprep.subr.mxu0 0.0
        %1326 = vmatpush1.msra.mxu0 0.0
        %1327 = vmatprep.subr.mxu0 0.0
        %1328 = vmatpush1.msra.mxu0 0.0
        %1329 = vmatprep.subr.mxu0 0.0
        %1330 = vmatpush1.msra.mxu0 0.0
        %1331 = vmatprep.subr.mxu0 0.0
        %1332 = vmatpush1.msra.mxu0 0.0
        %1333 = vmatprep.subr.mxu0 0.0
        %1334 = vmatpush1.msra.mxu0 0.0
        %1335 = vmatprep.subr.mxu0 0.0
        %1336 = vmatpush1.msra.mxu0 0.0
        %1337 = vmatprep.subr.mxu0 0.0
        %1338 = vmatpush1.msra.mxu0 0.0
        %1339 = vmatprep.subr.mxu0 0.0
        %1340 = vmatpush1.msra.mxu0 0.0
        %1341 = vmatprep.subr.mxu0 0.0
        %1342 = vmatpush1.msra.mxu0 0.0
        %1343 = vmatprep.subr.mxu0 0.0
        %1344 = vmatpush1.msra.mxu0 0.0
        %1345 = vmatprep.subr.mxu0 0.0
        %1346 = vmatpush1.msra.mxu0 0.0
        %1347 = vmatprep.subr.mxu0 0.0
        %1348 = vmatpush1.msra.mxu0 0.0
        %1349 = vmatprep.subr.mxu0 0.0
        %1350 = vmatpush1.msra.mxu0 0.0
        %1351 = vmatprep.mubr.f32.mxu0 0.0
        %1352 = vmatmul.mubr.f32.gmra.mrb[0].mxu0 %v1285
        %v1353 = vpop.f32.mrb[0].mxu0
        %v1354 = vadd.f32 %v1280, %v1353
        %v1355 = vpop.f32.mrb[0].mxu0
        %v1356 = vadd.f32 %v1282, %v1355
        %1357 = vdwg.mxu0
        %s1358 = scalar_lea.vmem [#allocation3], 1024
        %v1359 = vld [vmem:[%s1358] sm:$0xff]
        %v1360 = vld [vmem:[%s1358 + $0x8] sm:$0xff]
        %v1361 = vld [vmem:[%s1358 + $0x10] sm:$0xff]
        %v1362 = vld [vmem:[%s1358 + $0x18] sm:$0xff]
        %v1363 = vld [vmem:[%s1358 + $0x20] sm:$0xff]
        %v1364 = vld [vmem:[%s1358 + $0x28] sm:$0xff]
        %v1365 = vld [vmem:[%s1358 + $0x30] sm:$0xff]
        %v1366 = vld [vmem:[%s1358 + $0x38] sm:$0xff]
        %v1367 = vld [vmem:[%s1358 + $0x40] sm:$0xff]
        %v1368 = vld [vmem:[%s1358 + $0x48] sm:$0xff]
        %v1369 = vld [vmem:[%s1358 + $0x50] sm:$0xff]
        %v1370 = vld [vmem:[%s1358 + $0x58] sm:$0xff]
        %v1371 = vld [vmem:[%s1358 + $0x60] sm:$0xff]
        %v1372 = vld [vmem:[%s1358 + $0x68] sm:$0xff]
        %v1373 = vld [vmem:[%s1358 + $0x70] sm:$0xff]
        %v1374 = vld [vmem:[%s1358 + $0x78] sm:$0xff]
        %v1375 = vld [vmem:[%s1358 + $0x80] sm:$0xff]
        %v1376 = vld [vmem:[%s1358 + $0x88] sm:$0xff]
        %v1377 = vld [vmem:[%s1358 + $0x90] sm:$0xff]
        %v1378 = vld [vmem:[%s1358 + $0x98] sm:$0xff]
        %v1379 = vld [vmem:[%s1358 + $0xa0] sm:$0xff]
        %v1380 = vld [vmem:[%s1358 + $0xa8] sm:$0xff]
        %v1381 = vld [vmem:[%s1358 + $0xb0] sm:$0xff]
        %v1382 = vld [vmem:[%s1358 + $0xb8] sm:$0xff]
        %v1383 = vld [vmem:[%s1358 + $0xc0] sm:$0xff]
        %v1384 = vld [vmem:[%s1358 + $0xc8] sm:$0xff]
        %v1385 = vld [vmem:[%s1358 + $0xd0] sm:$0xff]
        %v1386 = vld [vmem:[%s1358 + $0xd8] sm:$0xff]
        %v1387 = vld [vmem:[%s1358 + $0xe0] sm:$0xff]
        %v1388 = vld [vmem:[%s1358 + $0xe8] sm:$0xff]
        %v1389 = vld [vmem:[%s1358 + $0xf0] sm:$0xff]
        %v1390 = vld [vmem:[%s1358 + $0xf8] sm:$0xff]
        %v1391 = vld [vmem:[%s1358 + $0x100] sm:$0xff]
        %v1392 = vld [vmem:[%s1358 + $0x108] sm:$0xff]
        %v1393 = vld [vmem:[%s1358 + $0x110] sm:$0xff]
        %v1394 = vld [vmem:[%s1358 + $0x118] sm:$0xff]
        %v1395 = vld [vmem:[%s1358 + $0x120] sm:$0xff]
        %v1396 = vld [vmem:[%s1358 + $0x128] sm:$0xff]
        %v1397 = vld [vmem:[%s1358 + $0x130] sm:$0xff]
        %v1398 = vld [vmem:[%s1358 + $0x138] sm:$0xff]
        %v1399 = vld [vmem:[%s1358 + $0x140] sm:$0xff]
        %v1400 = vld [vmem:[%s1358 + $0x148] sm:$0xff]
        %v1401 = vld [vmem:[%s1358 + $0x150] sm:$0xff]
        %v1402 = vld [vmem:[%s1358 + $0x158] sm:$0xff]
        %v1403 = vld [vmem:[%s1358 + $0x160] sm:$0xff]
        %v1404 = vld [vmem:[%s1358 + $0x168] sm:$0xff]
        %v1405 = vld [vmem:[%s1358 + $0x170] sm:$0xff]
        %v1406 = vld [vmem:[%s1358 + $0x178] sm:$0xff]
        %v1407 = vld [vmem:[%s1358 + $0x180] sm:$0xff]
        %v1408 = vld [vmem:[%s1358 + $0x188] sm:$0xff]
        %v1409 = vld [vmem:[%s1358 + $0x190] sm:$0xff]
        %v1410 = vld [vmem:[%s1358 + $0x198] sm:$0xff]
        %v1411 = vld [vmem:[%s1358 + $0x1a0] sm:$0xff]
        %v1412 = vld [vmem:[%s1358 + $0x1a8] sm:$0xff]
        %v1413 = vld [vmem:[%s1358 + $0x1b0] sm:$0xff]
        %v1414 = vld [vmem:[%s1358 + $0x1b8] sm:$0xff]
        %v1415 = vld [vmem:[%s1358 + $0x1c0] sm:$0xff]
        %v1416 = vld [vmem:[%s1358 + $0x1c8] sm:$0xff]
        %v1417 = vld [vmem:[%s1358 + $0x1d0] sm:$0xff]
        %v1418 = vld [vmem:[%s1358 + $0x1d8] sm:$0xff]
        %v1419 = vld [vmem:[%s1358 + $0x1e0] sm:$0xff]
        %v1420 = vld [vmem:[%s1358 + $0x1e8] sm:$0xff]
        %v1421 = vld [vmem:[%s1358 + $0x1f0] sm:$0xff]
        %v1422 = vld [vmem:[%s1358 + $0x1f8] sm:$0xff]
        %1423 = vmatprep.subr.mxu0 %v1360
        %1424 = vmatpush1.msra.mxu0 %v1359
        %1425 = vmatprep.subr.mxu0 %v1362
        %1426 = vmatpush1.msra.mxu0 %v1361
        %1427 = vmatprep.subr.mxu0 %v1364
        %1428 = vmatpush1.msra.mxu0 %v1363
        %1429 = vmatprep.subr.mxu0 %v1366
        %1430 = vmatpush1.msra.mxu0 %v1365
        %1431 = vmatprep.subr.mxu0 %v1368
        %1432 = vmatpush1.msra.mxu0 %v1367
        %1433 = vmatprep.subr.mxu0 %v1370
        %1434 = vmatpush1.msra.mxu0 %v1369
        %1435 = vmatprep.subr.mxu0 %v1372
        %1436 = vmatpush1.msra.mxu0 %v1371
        %1437 = vmatprep.subr.mxu0 %v1374
        %1438 = vmatpush1.msra.mxu0 %v1373
        %1439 = vmatprep.subr.mxu0 %v1376
        %1440 = vmatpush1.msra.mxu0 %v1375
        %1441 = vmatprep.subr.mxu0 %v1378
        %1442 = vmatpush1.msra.mxu0 %v1377
        %1443 = vmatprep.subr.mxu0 %v1380
        %1444 = vmatpush1.msra.mxu0 %v1379
        %1445 = vmatprep.subr.mxu0 %v1382
        %1446 = vmatpush1.msra.mxu0 %v1381
        %1447 = vmatprep.subr.mxu0 %v1384
        %1448 = vmatpush1.msra.mxu0 %v1383
        %1449 = vmatprep.subr.mxu0 %v1386
        %1450 = vmatpush1.msra.mxu0 %v1385
        %1451 = vmatprep.subr.mxu0 %v1388
        %1452 = vmatpush1.msra.mxu0 %v1387
        %1453 = vmatprep.subr.mxu0 %v1390
        %1454 = vmatpush1.msra.mxu0 %v1389
        %1455 = vmatprep.subr.mxu0 %v1392
        %1456 = vmatpush1.msra.mxu0 %v1391
        %1457 = vmatprep.subr.mxu0 %v1394
        %1458 = vmatpush1.msra.mxu0 %v1393
        %1459 = vmatprep.subr.mxu0 %v1396
        %1460 = vmatpush1.msra.mxu0 %v1395
        %1461 = vmatprep.subr.mxu0 %v1398
        %1462 = vmatpush1.msra.mxu0 %v1397
        %1463 = vmatprep.subr.mxu0 %v1400
        %1464 = vmatpush1.msra.mxu0 %v1399
        %1465 = vmatprep.subr.mxu0 %v1402
        %1466 = vmatpush1.msra.mxu0 %v1401
        %1467 = vmatprep.subr.mxu0 %v1404
        %1468 = vmatpush1.msra.mxu0 %v1403
        %1469 = vmatprep.subr.mxu0 %v1406
        %1470 = vmatpush1.msra.mxu0 %v1405
        %1471 = vmatprep.subr.mxu0 %v1408
        %1472 = vmatpush1.msra.mxu0 %v1407
        %1473 = vmatprep.subr.mxu0 %v1410
        %1474 = vmatpush1.msra.mxu0 %v1409
        %1475 = vmatprep.subr.mxu0 %v1412
        %1476 = vmatpush1.msra.mxu0 %v1411
        %1477 = vmatprep.subr.mxu0 %v1414
        %1478 = vmatpush1.msra.mxu0 %v1413
        %1479 = vmatprep.subr.mxu0 %v1416
        %1480 = vmatpush1.msra.mxu0 %v1415
        %1481 = vmatprep.subr.mxu0 %v1418
        %1482 = vmatpush1.msra.mxu0 %v1417
        %1483 = vmatprep.subr.mxu0 %v1420
        %1484 = vmatpush1.msra.mxu0 %v1419
        %1485 = vmatprep.subr.mxu0 %v1422
        %1486 = vmatpush1.msra.mxu0 %v1421
        %1487 = vmatprep.mubr.f32.mxu0 %v934
        %1488 = vmatmul.mubr.f32.gmra.mrb[0].mxu0 %v933
        %v1489 = vpop.f32.mrb[0].mxu0
        %v1490 = vadd.f32 0.0, %v1489
        %v1491 = vpop.f32.mrb[0].mxu0
        %v1492 = vadd.f32 0.0, %v1491
        %1493 = vdwg.mxu0
        %s1494 = scalar_lea.vmem [#allocation7], 16
        %v1495 = vld [vmem:[%s1494] sm:$0xff]
        %v1497 = vsel %vm1209, %v1495, 0
        %1499 = vmatprep.subr.mxu0 %v1492
        %1500 = vmatpush1.msra.mxu0 %v1490
        %1501 = vmatprep.subr.mxu0 0.0
        %1502 = vmatpush1.msra.mxu0 0.0
        %1503 = vmatprep.subr.mxu0 0.0
        %1504 = vmatpush1.msra.mxu0 0.0
        %1505 = vmatprep.subr.mxu0 0.0
        %1506 = vmatpush1.msra.mxu0 0.0
        %1507 = vmatprep.subr.mxu0 0.0
        %1508 = vmatpush1.msra.mxu0 0.0
        %1509 = vmatprep.subr.mxu0 0.0
        %1510 = vmatpush1.msra.mxu0 0.0
        %1511 = vmatprep.subr.mxu0 0.0
        %1512 = vmatpush1.msra.mxu0 0.0
        %1513 = vmatprep.subr.mxu0 0.0
        %1514 = vmatpush1.msra.mxu0 0.0
        %1515 = vmatprep.subr.mxu0 0.0
        %1516 = vmatpush1.msra.mxu0 0.0
        %1517 = vmatprep.subr.mxu0 0.0
        %1518 = vmatpush1.msra.mxu0 0.0
        %1519 = vmatprep.subr.mxu0 0.0
        %1520 = vmatpush1.msra.mxu0 0.0
        %1521 = vmatprep.subr.mxu0 0.0
        %1522 = vmatpush1.msra.mxu0 0.0
        %1523 = vmatprep.subr.mxu0 0.0
        %1524 = vmatpush1.msra.mxu0 0.0
        %1525 = vmatprep.subr.mxu0 0.0
        %1526 = vmatpush1.msra.mxu0 0.0
        %1527 = vmatprep.subr.mxu0 0.0
        %1528 = vmatpush1.msra.mxu0 0.0
        %1529 = vmatprep.subr.mxu0 0.0
        %1530 = vmatpush1.msra.mxu0 0.0
        %1531 = vmatprep.subr.mxu0 0.0
        %1532 = vmatpush1.msra.mxu0 0.0
        %1533 = vmatprep.subr.mxu0 0.0
        %1534 = vmatpush1.msra.mxu0 0.0
        %1535 = vmatprep.subr.mxu0 0.0
        %1536 = vmatpush1.msra.mxu0 0.0
        %1537 = vmatprep.subr.mxu0 0.0
        %1538 = vmatpush1.msra.mxu0 0.0
        %1539 = vmatprep.subr.mxu0 0.0
        %1540 = vmatpush1.msra.mxu0 0.0
        %1541 = vmatprep.subr.mxu0 0.0
        %1542 = vmatpush1.msra.mxu0 0.0
        %1543 = vmatprep.subr.mxu0 0.0
        %1544 = vmatpush1.msra.mxu0 0.0
        %1545 = vmatprep.subr.mxu0 0.0
        %1546 = vmatpush1.msra.mxu0 0.0
        %1547 = vmatprep.subr.mxu0 0.0
        %1548 = vmatpush1.msra.mxu0 0.0
        %1549 = vmatprep.subr.mxu0 0.0
        %1550 = vmatpush1.msra.mxu0 0.0
        %1551 = vmatprep.subr.mxu0 0.0
        %1552 = vmatpush1.msra.mxu0 0.0
        %1553 = vmatprep.subr.mxu0 0.0
        %1554 = vmatpush1.msra.mxu0 0.0
        %1555 = vmatprep.subr.mxu0 0.0
        %1556 = vmatpush1.msra.mxu0 0.0
        %1557 = vmatprep.subr.mxu0 0.0
        %1558 = vmatpush1.msra.mxu0 0.0
        %1559 = vmatprep.subr.mxu0 0.0
        %1560 = vmatpush1.msra.mxu0 0.0
        %1561 = vmatprep.subr.mxu0 0.0
        %1562 = vmatpush1.msra.mxu0 0.0
        %1563 = vmatprep.mubr.f32.mxu0 0.0
        %1564 = vmatmul.mubr.f32.gmra.mrb[0].mxu0 %v1497
        %v1565 = vpop.f32.mrb[0].mxu0
        %v1566 = vadd.f32 0.0, %v1565
        %v1567 = vpop.f32.mrb[0].mxu0
        %v1568 = vadd.f32 0.0, %v1567
        %1569 = vdwg.mxu0
        %v1570 = vadd.f32 %v1354, %v1566
        %v1571 = vadd.f32 %v1356, %v1568
        %s1572 = scalar_lea.vmem [#allocation3], 1536
        %v1573 = vld [vmem:[%s1572] sm:$0xff]
        %v1574 = vld [vmem:[%s1572 + $0x8] sm:$0xff]
        %v1575 = vld [vmem:[%s1572 + $0x10] sm:$0xff]
        %v1576 = vld [vmem:[%s1572 + $0x18] sm:$0xff]
        %v1577 = vld [vmem:[%s1572 + $0x20] sm:$0xff]
        %v1578 = vld [vmem:[%s1572 + $0x28] sm:$0xff]
        %v1579 = vld [vmem:[%s1572 + $0x30] sm:$0xff]
        %v1580 = vld [vmem:[%s1572 + $0x38] sm:$0xff]
        %v1581 = vld [vmem:[%s1572 + $0x40] sm:$0xff]
        %v1582 = vld [vmem:[%s1572 + $0x48] sm:$0xff]
        %v1583 = vld [vmem:[%s1572 + $0x50] sm:$0xff]
        %v1584 = vld [vmem:[%s1572 + $0x58] sm:$0xff]
        %v1585 = vld [vmem:[%s1572 + $0x60] sm:$0xff]
        %v1586 = vld [vmem:[%s1572 + $0x68] sm:$0xff]
        %v1587 = vld [vmem:[%s1572 + $0x70] sm:$0xff]
        %v1588 = vld [vmem:[%s1572 + $0x78] sm:$0xff]
        %v1589 = vld [vmem:[%s1572 + $0x80] sm:$0xff]
        %v1590 = vld [vmem:[%s1572 + $0x88] sm:$0xff]
        %v1591 = vld [vmem:[%s1572 + $0x90] sm:$0xff]
        %v1592 = vld [vmem:[%s1572 + $0x98] sm:$0xff]
        %v1593 = vld [vmem:[%s1572 + $0xa0] sm:$0xff]
        %v1594 = vld [vmem:[%s1572 + $0xa8] sm:$0xff]
        %v1595 = vld [vmem:[%s1572 + $0xb0] sm:$0xff]
        %v1596 = vld [vmem:[%s1572 + $0xb8] sm:$0xff]
        %v1597 = vld [vmem:[%s1572 + $0xc0] sm:$0xff]
        %v1598 = vld [vmem:[%s1572 + $0xc8] sm:$0xff]
        %v1599 = vld [vmem:[%s1572 + $0xd0] sm:$0xff]
        %v1600 = vld [vmem:[%s1572 + $0xd8] sm:$0xff]
        %v1601 = vld [vmem:[%s1572 + $0xe0] sm:$0xff]
        %v1602 = vld [vmem:[%s1572 + $0xe8] sm:$0xff]
        %v1603 = vld [vmem:[%s1572 + $0xf0] sm:$0xff]
        %v1604 = vld [vmem:[%s1572 + $0xf8] sm:$0xff]
        %v1605 = vld [vmem:[%s1572 + $0x100] sm:$0xff]
        %v1606 = vld [vmem:[%s1572 + $0x108] sm:$0xff]
        %v1607 = vld [vmem:[%s1572 + $0x110] sm:$0xff]
        %v1608 = vld [vmem:[%s1572 + $0x118] sm:$0xff]
        %v1609 = vld [vmem:[%s1572 + $0x120] sm:$0xff]
        %v1610 = vld [vmem:[%s1572 + $0x128] sm:$0xff]
        %v1611 = vld [vmem:[%s1572 + $0x130] sm:$0xff]
        %v1612 = vld [vmem:[%s1572 + $0x138] sm:$0xff]
        %v1613 = vld [vmem:[%s1572 + $0x140] sm:$0xff]
        %v1614 = vld [vmem:[%s1572 + $0x148] sm:$0xff]
        %v1615 = vld [vmem:[%s1572 + $0x150] sm:$0xff]
        %v1616 = vld [vmem:[%s1572 + $0x158] sm:$0xff]
        %v1617 = vld [vmem:[%s1572 + $0x160] sm:$0xff]
        %v1618 = vld [vmem:[%s1572 + $0x168] sm:$0xff]
        %v1619 = vld [vmem:[%s1572 + $0x170] sm:$0xff]
        %v1620 = vld [vmem:[%s1572 + $0x178] sm:$0xff]
        %v1621 = vld [vmem:[%s1572 + $0x180] sm:$0xff]
        %v1622 = vld [vmem:[%s1572 + $0x188] sm:$0xff]
        %v1623 = vld [vmem:[%s1572 + $0x190] sm:$0xff]
        %v1624 = vld [vmem:[%s1572 + $0x198] sm:$0xff]
        %v1625 = vld [vmem:[%s1572 + $0x1a0] sm:$0xff]
        %v1626 = vld [vmem:[%s1572 + $0x1a8] sm:$0xff]
        %v1627 = vld [vmem:[%s1572 + $0x1b0] sm:$0xff]
        %v1628 = vld [vmem:[%s1572 + $0x1b8] sm:$0xff]
        %v1629 = vld [vmem:[%s1572 + $0x1c0] sm:$0xff]
        %v1630 = vld [vmem:[%s1572 + $0x1c8] sm:$0xff]
        %v1631 = vld [vmem:[%s1572 + $0x1d0] sm:$0xff]
        %v1632 = vld [vmem:[%s1572 + $0x1d8] sm:$0xff]
        %v1633 = vld [vmem:[%s1572 + $0x1e0] sm:$0xff]
        %v1634 = vld [vmem:[%s1572 + $0x1e8] sm:$0xff]
        %v1635 = vld [vmem:[%s1572 + $0x1f0] sm:$0xff]
        %v1636 = vld [vmem:[%s1572 + $0x1f8] sm:$0xff]
        %1637 = vmatprep.subr.mxu0 %v1574
        %1638 = vmatpush1.msra.mxu0 %v1573
        %1639 = vmatprep.subr.mxu0 %v1576
        %1640 = vmatpush1.msra.mxu0 %v1575
        %1641 = vmatprep.subr.mxu0 %v1578
        %1642 = vmatpush1.msra.mxu0 %v1577
        %1643 = vmatprep.subr.mxu0 %v1580
        %1644 = vmatpush1.msra.mxu0 %v1579
        %1645 = vmatprep.subr.mxu0 %v1582
        %1646 = vmatpush1.msra.mxu0 %v1581
        %1647 = vmatprep.subr.mxu0 %v1584
        %1648 = vmatpush1.msra.mxu0 %v1583
        %1649 = vmatprep.subr.mxu0 %v1586
        %1650 = vmatpush1.msra.mxu0 %v1585
        %1651 = vmatprep.subr.mxu0 %v1588
        %1652 = vmatpush1.msra.mxu0 %v1587
        %1653 = vmatprep.subr.mxu0 %v1590
        %1654 = vmatpush1.msra.mxu0 %v1589
        %1655 = vmatprep.subr.mxu0 %v1592
        %1656 = vmatpush1.msra.mxu0 %v1591
        %1657 = vmatprep.subr.mxu0 %v1594
        %1658 = vmatpush1.msra.mxu0 %v1593
        %1659 = vmatprep.subr.mxu0 %v1596
        %1660 = vmatpush1.msra.mxu0 %v1595
        %1661 = vmatprep.subr.mxu0 %v1598
        %1662 = vmatpush1.msra.mxu0 %v1597
        %1663 = vmatprep.subr.mxu0 %v1600
        %1664 = vmatpush1.msra.mxu0 %v1599
        %1665 = vmatprep.subr.mxu0 %v1602
        %1666 = vmatpush1.msra.mxu0 %v1601
        %1667 = vmatprep.subr.mxu0 %v1604
        %1668 = vmatpush1.msra.mxu0 %v1603
        %1669 = vmatprep.subr.mxu0 %v1606
        %1670 = vmatpush1.msra.mxu0 %v1605
        %1671 = vmatprep.subr.mxu0 %v1608
        %1672 = vmatpush1.msra.mxu0 %v1607
        %1673 = vmatprep.subr.mxu0 %v1610
        %1674 = vmatpush1.msra.mxu0 %v1609
        %1675 = vmatprep.subr.mxu0 %v1612
        %1676 = vmatpush1.msra.mxu0 %v1611
        %1677 = vmatprep.subr.mxu0 %v1614
        %1678 = vmatpush1.msra.mxu0 %v1613
        %1679 = vmatprep.subr.mxu0 %v1616
        %1680 = vmatpush1.msra.mxu0 %v1615
        %1681 = vmatprep.subr.mxu0 %v1618
        %1682 = vmatpush1.msra.mxu0 %v1617
        %1683 = vmatprep.subr.mxu0 %v1620
        %1684 = vmatpush1.msra.mxu0 %v1619
        %1685 = vmatprep.subr.mxu0 %v1622
        %1686 = vmatpush1.msra.mxu0 %v1621
        %1687 = vmatprep.subr.mxu0 %v1624
        %1688 = vmatpush1.msra.mxu0 %v1623
        %1689 = vmatprep.subr.mxu0 %v1626
        %1690 = vmatpush1.msra.mxu0 %v1625
        %1691 = vmatprep.subr.mxu0 %v1628
        %1692 = vmatpush1.msra.mxu0 %v1627
        %1693 = vmatprep.subr.mxu0 %v1630
        %1694 = vmatpush1.msra.mxu0 %v1629
        %1695 = vmatprep.subr.mxu0 %v1632
        %1696 = vmatpush1.msra.mxu0 %v1631
        %1697 = vmatprep.subr.mxu0 %v1634
        %1698 = vmatpush1.msra.mxu0 %v1633
        %1699 = vmatprep.subr.mxu0 %v1636
        %1700 = vmatpush1.msra.mxu0 %v1635
        %1701 = vmatprep.mubr.f32.mxu0 %v934
        %1702 = vmatmul.mubr.f32.gmra.mrb[0].mxu0 %v933
        %v1703 = vpop.f32.mrb[0].mxu0
        %v1704 = vadd.f32 0.0, %v1703
        %v1705 = vpop.f32.mrb[0].mxu0
        %v1706 = vadd.f32 0.0, %v1705
        %1707 = vdwg.mxu0
        %s1708 = scalar_lea.vmem [#allocation7], 24
        %v1709 = vld [vmem:[%s1708] sm:$0xff]
        %v1711 = vsel %vm1209, %v1709, 0
        %1713 = vmatprep.subr.mxu0 %v1706
        %1714 = vmatpush1.msra.mxu0 %v1704
        %1715 = vmatprep.subr.mxu0 0.0
        %1716 = vmatpush1.msra.mxu0 0.0
        %1717 = vmatprep.subr.mxu0 0.0
        %1718 = vmatpush1.msra.mxu0 0.0
        %1719 = vmatprep.subr.mxu0 0.0
        %1720 = vmatpush1.msra.mxu0 0.0
        %1721 = vmatprep.subr.mxu0 0.0
        %1722 = vmatpush1.msra.mxu0 0.0
        %1723 = vmatprep.subr.mxu0 0.0
        %1724 = vmatpush1.msra.mxu0 0.0
        %1725 = vmatprep.subr.mxu0 0.0
        %1726 = vmatpush1.msra.mxu0 0.0
        %1727 = vmatprep.subr.mxu0 0.0
        %1728 = vmatpush1.msra.mxu0 0.0
        %1729 = vmatprep.subr.mxu0 0.0
        %1730 = vmatpush1.msra.mxu0 0.0
        %1731 = vmatprep.subr.mxu0 0.0
        %1732 = vmatpush1.msra.mxu0 0.0
        %1733 = vmatprep.subr.mxu0 0.0
        %1734 = vmatpush1.msra.mxu0 0.0
        %1735 = vmatprep.subr.mxu0 0.0
        %1736 = vmatpush1.msra.mxu0 0.0
        %1737 = vmatprep.subr.mxu0 0.0
        %1738 = vmatpush1.msra.mxu0 0.0
        %1739 = vmatprep.subr.mxu0 0.0
        %1740 = vmatpush1.msra.mxu0 0.0
        %1741 = vmatprep.subr.mxu0 0.0
        %1742 = vmatpush1.msra.mxu0 0.0
        %1743 = vmatprep.subr.mxu0 0.0
        %1744 = vmatpush1.msra.mxu0 0.0
        %1745 = vmatprep.subr.mxu0 0.0
        %1746 = vmatpush1.msra.mxu0 0.0
        %1747 = vmatprep.subr.mxu0 0.0
        %1748 = vmatpush1.msra.mxu0 0.0
        %1749 = vmatprep.subr.mxu0 0.0
        %1750 = vmatpush1.msra.mxu0 0.0
        %1751 = vmatprep.subr.mxu0 0.0
        %1752 = vmatpush1.msra.mxu0 0.0
        %1753 = vmatprep.subr.mxu0 0.0
        %1754 = vmatpush1.msra.mxu0 0.0
        %1755 = vmatprep.subr.mxu0 0.0
        %1756 = vmatpush1.msra.mxu0 0.0
        %1757 = vmatprep.subr.mxu0 0.0
        %1758 = vmatpush1.msra.mxu0 0.0
        %1759 = vmatprep.subr.mxu0 0.0
        %1760 = vmatpush1.msra.mxu0 0.0
        %1761 = vmatprep.subr.mxu0 0.0
        %1762 = vmatpush1.msra.mxu0 0.0
        %1763 = vmatprep.subr.mxu0 0.0
        %1764 = vmatpush1.msra.mxu0 0.0
        %1765 = vmatprep.subr.mxu0 0.0
        %1766 = vmatpush1.msra.mxu0 0.0
        %1767 = vmatprep.subr.mxu0 0.0
        %1768 = vmatpush1.msra.mxu0 0.0
        %1769 = vmatprep.subr.mxu0 0.0
        %1770 = vmatpush1.msra.mxu0 0.0
        %1771 = vmatprep.subr.mxu0 0.0
        %1772 = vmatpush1.msra.mxu0 0.0
        %1773 = vmatprep.subr.mxu0 0.0
        %1774 = vmatpush1.msra.mxu0 0.0
        %1775 = vmatprep.subr.mxu0 0.0
        %1776 = vmatpush1.msra.mxu0 0.0
        %1777 = vmatprep.mubr.f32.mxu0 0.0
        %1778 = vmatmul.mubr.f32.gmra.mrb[0].mxu0 %v1711
        %v1779 = vpop.f32.mrb[0].mxu0
        %v1780 = vadd.f32 0.0, %v1779
        %v1781 = vpop.f32.mrb[0].mxu0
        %v1782 = vadd.f32 0.0, %v1781
        %1783 = vdwg.mxu0
        %v1784 = vadd.f32 %v1570, %v1780
        %v1785 = vadd.f32 %v1571, %v1782
        %s1786 = scalar_lea.vmem [#allocation3], 2048
        %v1787 = vld [vmem:[%s1786] sm:$0xff]
        %v1788 = vld [vmem:[%s1786 + $0x8] sm:$0xff]
        %v1789 = vld [vmem:[%s1786 + $0x10] sm:$0xff]
        %v1790 = vld [vmem:[%s1786 + $0x18] sm:$0xff]
        %v1791 = vld [vmem:[%s1786 + $0x20] sm:$0xff]
        %v1792 = vld [vmem:[%s1786 + $0x28] sm:$0xff]
        %v1793 = vld [vmem:[%s1786 + $0x30] sm:$0xff]
        %v1794 = vld [vmem:[%s1786 + $0x38] sm:$0xff]
        %v1795 = vld [vmem:[%s1786 + $0x40] sm:$0xff]
        %v1796 = vld [vmem:[%s1786 + $0x48] sm:$0xff]
        %v1797 = vld [vmem:[%s1786 + $0x50] sm:$0xff]
        %v1798 = vld [vmem:[%s1786 + $0x58] sm:$0xff]
        %v1799 = vld [vmem:[%s1786 + $0x60] sm:$0xff]
        %v1800 = vld [vmem:[%s1786 + $0x68] sm:$0xff]
        %v1801 = vld [vmem:[%s1786 + $0x70] sm:$0xff]
        %v1802 = vld [vmem:[%s1786 + $0x78] sm:$0xff]
        %v1803 = vld [vmem:[%s1786 + $0x80] sm:$0xff]
        %v1804 = vld [vmem:[%s1786 + $0x88] sm:$0xff]
        %v1805 = vld [vmem:[%s1786 + $0x90] sm:$0xff]
        %v1806 = vld [vmem:[%s1786 + $0x98] sm:$0xff]
        %v1807 = vld [vmem:[%s1786 + $0xa0] sm:$0xff]
        %v1808 = vld [vmem:[%s1786 + $0xa8] sm:$0xff]
        %v1809 = vld [vmem:[%s1786 + $0xb0] sm:$0xff]
        %v1810 = vld [vmem:[%s1786 + $0xb8] sm:$0xff]
        %v1811 = vld [vmem:[%s1786 + $0xc0] sm:$0xff]
        %v1812 = vld [vmem:[%s1786 + $0xc8] sm:$0xff]
        %v1813 = vld [vmem:[%s1786 + $0xd0] sm:$0xff]
        %v1814 = vld [vmem:[%s1786 + $0xd8] sm:$0xff]
        %v1815 = vld [vmem:[%s1786 + $0xe0] sm:$0xff]
        %v1816 = vld [vmem:[%s1786 + $0xe8] sm:$0xff]
        %v1817 = vld [vmem:[%s1786 + $0xf0] sm:$0xff]
        %v1818 = vld [vmem:[%s1786 + $0xf8] sm:$0xff]
        %v1819 = vld [vmem:[%s1786 + $0x100] sm:$0xff]
        %v1820 = vld [vmem:[%s1786 + $0x108] sm:$0xff]
        %v1821 = vld [vmem:[%s1786 + $0x110] sm:$0xff]
        %v1822 = vld [vmem:[%s1786 + $0x118] sm:$0xff]
        %v1823 = vld [vmem:[%s1786 + $0x120] sm:$0xff]
        %v1824 = vld [vmem:[%s1786 + $0x128] sm:$0xff]
        %v1825 = vld [vmem:[%s1786 + $0x130] sm:$0xff]
        %v1826 = vld [vmem:[%s1786 + $0x138] sm:$0xff]
        %v1827 = vld [vmem:[%s1786 + $0x140] sm:$0xff]
        %v1828 = vld [vmem:[%s1786 + $0x148] sm:$0xff]
        %v1829 = vld [vmem:[%s1786 + $0x150] sm:$0xff]
        %v1830 = vld [vmem:[%s1786 + $0x158] sm:$0xff]
        %v1831 = vld [vmem:[%s1786 + $0x160] sm:$0xff]
        %v1832 = vld [vmem:[%s1786 + $0x168] sm:$0xff]
        %v1833 = vld [vmem:[%s1786 + $0x170] sm:$0xff]
        %v1834 = vld [vmem:[%s1786 + $0x178] sm:$0xff]
        %v1835 = vld [vmem:[%s1786 + $0x180] sm:$0xff]
        %v1836 = vld [vmem:[%s1786 + $0x188] sm:$0xff]
        %v1837 = vld [vmem:[%s1786 + $0x190] sm:$0xff]
        %v1838 = vld [vmem:[%s1786 + $0x198] sm:$0xff]
        %v1839 = vld [vmem:[%s1786 + $0x1a0] sm:$0xff]
        %v1840 = vld [vmem:[%s1786 + $0x1a8] sm:$0xff]
        %v1841 = vld [vmem:[%s1786 + $0x1b0] sm:$0xff]
        %v1842 = vld [vmem:[%s1786 + $0x1b8] sm:$0xff]
        %v1843 = vld [vmem:[%s1786 + $0x1c0] sm:$0xff]
        %v1844 = vld [vmem:[%s1786 + $0x1c8] sm:$0xff]
        %v1845 = vld [vmem:[%s1786 + $0x1d0] sm:$0xff]
        %v1846 = vld [vmem:[%s1786 + $0x1d8] sm:$0xff]
        %v1847 = vld [vmem:[%s1786 + $0x1e0] sm:$0xff]
        %v1848 = vld [vmem:[%s1786 + $0x1e8] sm:$0xff]
        %v1849 = vld [vmem:[%s1786 + $0x1f0] sm:$0xff]
        %v1850 = vld [vmem:[%s1786 + $0x1f8] sm:$0xff]
        %1851 = vmatprep.subr.mxu0 %v1788
        %1852 = vmatpush1.msra.mxu0 %v1787
        %1853 = vmatprep.subr.mxu0 %v1790
        %1854 = vmatpush1.msra.mxu0 %v1789
        %1855 = vmatprep.subr.mxu0 %v1792
        %1856 = vmatpush1.msra.mxu0 %v1791
        %1857 = vmatprep.subr.mxu0 %v1794
        %1858 = vmatpush1.msra.mxu0 %v1793
        %1859 = vmatprep.subr.mxu0 %v1796
        %1860 = vmatpush1.msra.mxu0 %v1795
        %1861 = vmatprep.subr.mxu0 %v1798
        %1862 = vmatpush1.msra.mxu0 %v1797
        %1863 = vmatprep.subr.mxu0 %v1800
        %1864 = vmatpush1.msra.mxu0 %v1799
        %1865 = vmatprep.subr.mxu0 %v1802
        %1866 = vmatpush1.msra.mxu0 %v1801
        %1867 = vmatprep.subr.mxu0 %v1804
        %1868 = vmatpush1.msra.mxu0 %v1803
        %1869 = vmatprep.subr.mxu0 %v1806
        %1870 = vmatpush1.msra.mxu0 %v1805
        %1871 = vmatprep.subr.mxu0 %v1808
        %1872 = vmatpush1.msra.mxu0 %v1807
        %1873 = vmatprep.subr.mxu0 %v1810
        %1874 = vmatpush1.msra.mxu0 %v1809
        %1875 = vmatprep.subr.mxu0 %v1812
        %1876 = vmatpush1.msra.mxu0 %v1811
        %1877 = vmatprep.subr.mxu0 %v1814
        %1878 = vmatpush1.msra.mxu0 %v1813
        %1879 = vmatprep.subr.mxu0 %v1816
        %1880 = vmatpush1.msra.mxu0 %v1815
        %1881 = vmatprep.subr.mxu0 %v1818
        %1882 = vmatpush1.msra.mxu0 %v1817
        %1883 = vmatprep.subr.mxu0 %v1820
        %1884 = vmatpush1.msra.mxu0 %v1819
        %1885 = vmatprep.subr.mxu0 %v1822
        %1886 = vmatpush1.msra.mxu0 %v1821
        %1887 = vmatprep.subr.mxu0 %v1824
        %1888 = vmatpush1.msra.mxu0 %v1823
        %1889 = vmatprep.subr.mxu0 %v1826
        %1890 = vmatpush1.msra.mxu0 %v1825
        %1891 = vmatprep.subr.mxu0 %v1828
        %1892 = vmatpush1.msra.mxu0 %v1827
        %1893 = vmatprep.subr.mxu0 %v1830
        %1894 = vmatpush1.msra.mxu0 %v1829
        %1895 = vmatprep.subr.mxu0 %v1832
        %1896 = vmatpush1.msra.mxu0 %v1831
        %1897 = vmatprep.subr.mxu0 %v1834
        %1898 = vmatpush1.msra.mxu0 %v1833
        %1899 = vmatprep.subr.mxu0 %v1836
        %1900 = vmatpush1.msra.mxu0 %v1835
        %1901 = vmatprep.subr.mxu0 %v1838
        %1902 = vmatpush1.msra.mxu0 %v1837
        %1903 = vmatprep.subr.mxu0 %v1840
        %1904 = vmatpush1.msra.mxu0 %v1839
        %1905 = vmatprep.subr.mxu0 %v1842
        %1906 = vmatpush1.msra.mxu0 %v1841
        %1907 = vmatprep.subr.mxu0 %v1844
        %1908 = vmatpush1.msra.mxu0 %v1843
        %1909 = vmatprep.subr.mxu0 %v1846
        %1910 = vmatpush1.msra.mxu0 %v1845
        %1911 = vmatprep.subr.mxu0 %v1848
        %1912 = vmatpush1.msra.mxu0 %v1847
        %1913 = vmatprep.subr.mxu0 %v1850
        %1914 = vmatpush1.msra.mxu0 %v1849
        %1915 = vmatprep.mubr.f32.mxu0 %v934
        %1916 = vmatmul.mubr.f32.gmra.mrb[0].mxu0 %v933
        %v1917 = vpop.f32.mrb[0].mxu0
        %v1918 = vadd.f32 0.0, %v1917
        %v1919 = vpop.f32.mrb[0].mxu0
        %v1920 = vadd.f32 0.0, %v1919
        %1921 = vdwg.mxu0
        %s1922 = scalar_lea.vmem [#allocation7], 32
        %v1923 = vld [vmem:[%s1922] sm:$0xff]
        %v1925 = vsel %vm1209, %v1923, 0
        %1927 = vmatprep.subr.mxu0 %v1920
        %1928 = vmatpush1.msra.mxu0 %v1918
        %1929 = vmatprep.subr.mxu0 0.0
        %1930 = vmatpush1.msra.mxu0 0.0
        %1931 = vmatprep.subr.mxu0 0.0
        %1932 = vmatpush1.msra.mxu0 0.0
        %1933 = vmatprep.subr.mxu0 0.0
        %1934 = vmatpush1.msra.mxu0 0.0
        %1935 = vmatprep.subr.mxu0 0.0
        %1936 = vmatpush1.msra.mxu0 0.0
        %1937 = vmatprep.subr.mxu0 0.0
        %1938 = vmatpush1.msra.mxu0 0.0
        %1939 = vmatprep.subr.mxu0 0.0
        %1940 = vmatpush1.msra.mxu0 0.0
        %1941 = vmatprep.subr.mxu0 0.0
        %1942 = vmatpush1.msra.mxu0 0.0
        %1943 = vmatprep.subr.mxu0 0.0
        %1944 = vmatpush1.msra.mxu0 0.0
        %1945 = vmatprep.subr.mxu0 0.0
        %1946 = vmatpush1.msra.mxu0 0.0
        %1947 = vmatprep.subr.mxu0 0.0
        %1948 = vmatpush1.msra.mxu0 0.0
        %1949 = vmatprep.subr.mxu0 0.0
        %1950 = vmatpush1.msra.mxu0 0.0
        %1951 = vmatprep.subr.mxu0 0.0
        %1952 = vmatpush1.msra.mxu0 0.0
        %1953 = vmatprep.subr.mxu0 0.0
        %1954 = vmatpush1.msra.mxu0 0.0
        %1955 = vmatprep.subr.mxu0 0.0
        %1956 = vmatpush1.msra.mxu0 0.0
        %1957 = vmatprep.subr.mxu0 0.0
        %1958 = vmatpush1.msra.mxu0 0.0
        %1959 = vmatprep.subr.mxu0 0.0
        %1960 = vmatpush1.msra.mxu0 0.0
        %1961 = vmatprep.subr.mxu0 0.0
        %1962 = vmatpush1.msra.mxu0 0.0
        %1963 = vmatprep.subr.mxu0 0.0
        %1964 = vmatpush1.msra.mxu0 0.0
        %1965 = vmatprep.subr.mxu0 0.0
        %1966 = vmatpush1.msra.mxu0 0.0
        %1967 = vmatprep.subr.mxu0 0.0
        %1968 = vmatpush1.msra.mxu0 0.0
        %1969 = vmatprep.subr.mxu0 0.0
        %1970 = vmatpush1.msra.mxu0 0.0
        %1971 = vmatprep.subr.mxu0 0.0
        %1972 = vmatpush1.msra.mxu0 0.0
        %1973 = vmatprep.subr.mxu0 0.0
        %1974 = vmatpush1.msra.mxu0 0.0
        %1975 = vmatprep.subr.mxu0 0.0
        %1976 = vmatpush1.msra.mxu0 0.0
        %1977 = vmatprep.subr.mxu0 0.0
        %1978 = vmatpush1.msra.mxu0 0.0
        %1979 = vmatprep.subr.mxu0 0.0
        %1980 = vmatpush1.msra.mxu0 0.0
        %1981 = vmatprep.subr.mxu0 0.0
        %1982 = vmatpush1.msra.mxu0 0.0
        %1983 = vmatprep.subr.mxu0 0.0
        %1984 = vmatpush1.msra.mxu0 0.0
        %1985 = vmatprep.subr.mxu0 0.0
        %1986 = vmatpush1.msra.mxu0 0.0
        %1987 = vmatprep.subr.mxu0 0.0
        %1988 = vmatpush1.msra.mxu0 0.0
        %1989 = vmatprep.subr.mxu0 0.0
        %1990 = vmatpush1.msra.mxu0 0.0
        %1991 = vmatprep.mubr.f32.mxu0 0.0
        %1992 = vmatmul.mubr.f32.gmra.mrb[0].mxu0 %v1925
        %v1993 = vpop.f32.mrb[0].mxu0
        %v1994 = vadd.f32 0.0, %v1993
        %v1995 = vpop.f32.mrb[0].mxu0
        %v1996 = vadd.f32 0.0, %v1995
        %1997 = vdwg.mxu0
        %v1998 = vadd.f32 %v1784, %v1994
        %v1999 = vadd.f32 %v1785, %v1996
        %s2000 = scalar_lea.vmem [#allocation3], 2560
        %v2001 = vld [vmem:[%s2000] sm:$0xff]
        %v2002 = vld [vmem:[%s2000 + $0x8] sm:$0xff]
        %v2003 = vld [vmem:[%s2000 + $0x10] sm:$0xff]
        %v2004 = vld [vmem:[%s2000 + $0x18] sm:$0xff]
        %v2005 = vld [vmem:[%s2000 + $0x20] sm:$0xff]
        %v2006 = vld [vmem:[%s2000 + $0x28] sm:$0xff]
        %v2007 = vld [vmem:[%s2000 + $0x30] sm:$0xff]
        %v2008 = vld [vmem:[%s2000 + $0x38] sm:$0xff]
        %v2009 = vld [vmem:[%s2000 + $0x40] sm:$0xff]
        %v2010 = vld [vmem:[%s2000 + $0x48] sm:$0xff]
        %v2011 = vld [vmem:[%s2000 + $0x50] sm:$0xff]
        %v2012 = vld [vmem:[%s2000 + $0x58] sm:$0xff]
        %v2013 = vld [vmem:[%s2000 + $0x60] sm:$0xff]
        %v2014 = vld [vmem:[%s2000 + $0x68] sm:$0xff]
        %v2015 = vld [vmem:[%s2000 + $0x70] sm:$0xff]
        %v2016 = vld [vmem:[%s2000 + $0x78] sm:$0xff]
        %v2017 = vld [vmem:[%s2000 + $0x80] sm:$0xff]
        %v2018 = vld [vmem:[%s2000 + $0x88] sm:$0xff]
        %v2019 = vld [vmem:[%s2000 + $0x90] sm:$0xff]
        %v2020 = vld [vmem:[%s2000 + $0x98] sm:$0xff]
        %v2021 = vld [vmem:[%s2000 + $0xa0] sm:$0xff]
        %v2022 = vld [vmem:[%s2000 + $0xa8] sm:$0xff]
        %v2023 = vld [vmem:[%s2000 + $0xb0] sm:$0xff]
        %v2024 = vld [vmem:[%s2000 + $0xb8] sm:$0xff]
        %v2025 = vld [vmem:[%s2000 + $0xc0] sm:$0xff]
        %v2026 = vld [vmem:[%s2000 + $0xc8] sm:$0xff]
        %v2027 = vld [vmem:[%s2000 + $0xd0] sm:$0xff]
        %v2028 = vld [vmem:[%s2000 + $0xd8] sm:$0xff]
        %v2029 = vld [vmem:[%s2000 + $0xe0] sm:$0xff]
        %v2030 = vld [vmem:[%s2000 + $0xe8] sm:$0xff]
        %v2031 = vld [vmem:[%s2000 + $0xf0] sm:$0xff]
        %v2032 = vld [vmem:[%s2000 + $0xf8] sm:$0xff]
        %v2033 = vld [vmem:[%s2000 + $0x100] sm:$0xff]
        %v2034 = vld [vmem:[%s2000 + $0x108] sm:$0xff]
        %v2035 = vld [vmem:[%s2000 + $0x110] sm:$0xff]
        %v2036 = vld [vmem:[%s2000 + $0x118] sm:$0xff]
        %v2037 = vld [vmem:[%s2000 + $0x120] sm:$0xff]
        %v2038 = vld [vmem:[%s2000 + $0x128] sm:$0xff]
        %v2039 = vld [vmem:[%s2000 + $0x130] sm:$0xff]
        %v2040 = vld [vmem:[%s2000 + $0x138] sm:$0xff]
        %v2041 = vld [vmem:[%s2000 + $0x140] sm:$0xff]
        %v2042 = vld [vmem:[%s2000 + $0x148] sm:$0xff]
        %v2043 = vld [vmem:[%s2000 + $0x150] sm:$0xff]
        %v2044 = vld [vmem:[%s2000 + $0x158] sm:$0xff]
        %v2045 = vld [vmem:[%s2000 + $0x160] sm:$0xff]
        %v2046 = vld [vmem:[%s2000 + $0x168] sm:$0xff]
        %v2047 = vld [vmem:[%s2000 + $0x170] sm:$0xff]
        %v2048 = vld [vmem:[%s2000 + $0x178] sm:$0xff]
        %v2049 = vld [vmem:[%s2000 + $0x180] sm:$0xff]
        %v2050 = vld [vmem:[%s2000 + $0x188] sm:$0xff]
        %v2051 = vld [vmem:[%s2000 + $0x190] sm:$0xff]
        %v2052 = vld [vmem:[%s2000 + $0x198] sm:$0xff]
        %v2053 = vld [vmem:[%s2000 + $0x1a0] sm:$0xff]
        %v2054 = vld [vmem:[%s2000 + $0x1a8] sm:$0xff]
        %v2055 = vld [vmem:[%s2000 + $0x1b0] sm:$0xff]
        %v2056 = vld [vmem:[%s2000 + $0x1b8] sm:$0xff]
        %v2057 = vld [vmem:[%s2000 + $0x1c0] sm:$0xff]
        %v2058 = vld [vmem:[%s2000 + $0x1c8] sm:$0xff]
        %v2059 = vld [vmem:[%s2000 + $0x1d0] sm:$0xff]
        %v2060 = vld [vmem:[%s2000 + $0x1d8] sm:$0xff]
        %v2061 = vld [vmem:[%s2000 + $0x1e0] sm:$0xff]
        %v2062 = vld [vmem:[%s2000 + $0x1e8] sm:$0xff]
        %v2063 = vld [vmem:[%s2000 + $0x1f0] sm:$0xff]
        %v2064 = vld [vmem:[%s2000 + $0x1f8] sm:$0xff]
        %2065 = vmatprep.subr.mxu0 %v2002
        %2066 = vmatpush1.msra.mxu0 %v2001
        %2067 = vmatprep.subr.mxu0 %v2004
        %2068 = vmatpush1.msra.mxu0 %v2003
        %2069 = vmatprep.subr.mxu0 %v2006
        %2070 = vmatpush1.msra.mxu0 %v2005
        %2071 = vmatprep.subr.mxu0 %v2008
        %2072 = vmatpush1.msra.mxu0 %v2007
        %2073 = vmatprep.subr.mxu0 %v2010
        %2074 = vmatpush1.msra.mxu0 %v2009
        %2075 = vmatprep.subr.mxu0 %v2012
        %2076 = vmatpush1.msra.mxu0 %v2011
        %2077 = vmatprep.subr.mxu0 %v2014
        %2078 = vmatpush1.msra.mxu0 %v2013
        %2079 = vmatprep.subr.mxu0 %v2016
        %2080 = vmatpush1.msra.mxu0 %v2015
        %2081 = vmatprep.subr.mxu0 %v2018
        %2082 = vmatpush1.msra.mxu0 %v2017
        %2083 = vmatprep.subr.mxu0 %v2020
        %2084 = vmatpush1.msra.mxu0 %v2019
        %2085 = vmatprep.subr.mxu0 %v2022
        %2086 = vmatpush1.msra.mxu0 %v2021
        %2087 = vmatprep.subr.mxu0 %v2024
        %2088 = vmatpush1.msra.mxu0 %v2023
        %2089 = vmatprep.subr.mxu0 %v2026
        %2090 = vmatpush1.msra.mxu0 %v2025
        %2091 = vmatprep.subr.mxu0 %v2028
        %2092 = vmatpush1.msra.mxu0 %v2027
        %2093 = vmatprep.subr.mxu0 %v2030
        %2094 = vmatpush1.msra.mxu0 %v2029
        %2095 = vmatprep.subr.mxu0 %v2032
        %2096 = vmatpush1.msra.mxu0 %v2031
        %2097 = vmatprep.subr.mxu0 %v2034
        %2098 = vmatpush1.msra.mxu0 %v2033
        %2099 = vmatprep.subr.mxu0 %v2036
        %2100 = vmatpush1.msra.mxu0 %v2035
        %2101 = vmatprep.subr.mxu0 %v2038
        %2102 = vmatpush1.msra.mxu0 %v2037
        %2103 = vmatprep.subr.mxu0 %v2040
        %2104 = vmatpush1.msra.mxu0 %v2039
        %2105 = vmatprep.subr.mxu0 %v2042
        %2106 = vmatpush1.msra.mxu0 %v2041
        %2107 = vmatprep.subr.mxu0 %v2044
        %2108 = vmatpush1.msra.mxu0 %v2043
        %2109 = vmatprep.subr.mxu0 %v2046
        %2110 = vmatpush1.msra.mxu0 %v2045
        %2111 = vmatprep.subr.mxu0 %v2048
        %2112 = vmatpush1.msra.mxu0 %v2047
        %2113 = vmatprep.subr.mxu0 %v2050
        %2114 = vmatpush1.msra.mxu0 %v2049
        %2115 = vmatprep.subr.mxu0 %v2052
        %2116 = vmatpush1.msra.mxu0 %v2051
        %2117 = vmatprep.subr.mxu0 %v2054
        %2118 = vmatpush1.msra.mxu0 %v2053
        %2119 = vmatprep.subr.mxu0 %v2056
        %2120 = vmatpush1.msra.mxu0 %v2055
        %2121 = vmatprep.subr.mxu0 %v2058
        %2122 = vmatpush1.msra.mxu0 %v2057
        %2123 = vmatprep.subr.mxu0 %v2060
        %2124 = vmatpush1.msra.mxu0 %v2059
        %2125 = vmatprep.subr.mxu0 %v2062
        %2126 = vmatpush1.msra.mxu0 %v2061
        %2127 = vmatprep.subr.mxu0 %v2064
        %2128 = vmatpush1.msra.mxu0 %v2063
        %2129 = vmatprep.mubr.f32.mxu0 %v934
        %2130 = vmatmul.mubr.f32.gmra.mrb[0].mxu0 %v933
        %v2131 = vpop.f32.mrb[0].mxu0
        %v2132 = vadd.f32 0.0, %v2131
        %v2133 = vpop.f32.mrb[0].mxu0
        %v2134 = vadd.f32 0.0, %v2133
        %2135 = vdwg.mxu0
        %s2136 = scalar_lea.vmem [#allocation7], 40
        %v2137 = vld [vmem:[%s2136] sm:$0xff]
        %v2139 = vsel %vm1209, %v2137, 0
        %2141 = vmatprep.subr.mxu0 %v2134
        %2142 = vmatpush1.msra.mxu0 %v2132
        %2143 = vmatprep.subr.mxu0 0.0
        %2144 = vmatpush1.msra.mxu0 0.0
        %2145 = vmatprep.subr.mxu0 0.0
        %2146 = vmatpush1.msra.mxu0 0.0
        %2147 = vmatprep.subr.mxu0 0.0
        %2148 = vmatpush1.msra.mxu0 0.0
        %2149 = vmatprep.subr.mxu0 0.0
        %2150 = vmatpush1.msra.mxu0 0.0
        %2151 = vmatprep.subr.mxu0 0.0
        %2152 = vmatpush1.msra.mxu0 0.0
        %2153 = vmatprep.subr.mxu0 0.0
        %2154 = vmatpush1.msra.mxu0 0.0
        %2155 = vmatprep.subr.mxu0 0.0
        %2156 = vmatpush1.msra.mxu0 0.0
        %2157 = vmatprep.subr.mxu0 0.0
        %2158 = vmatpush1.msra.mxu0 0.0
        %2159 = vmatprep.subr.mxu0 0.0
        %2160 = vmatpush1.msra.mxu0 0.0
        %2161 = vmatprep.subr.mxu0 0.0
        %2162 = vmatpush1.msra.mxu0 0.0
        %2163 = vmatprep.subr.mxu0 0.0
        %2164 = vmatpush1.msra.mxu0 0.0
        %2165 = vmatprep.subr.mxu0 0.0
        %2166 = vmatpush1.msra.mxu0 0.0
        %2167 = vmatprep.subr.mxu0 0.0
        %2168 = vmatpush1.msra.mxu0 0.0
        %2169 = vmatprep.subr.mxu0 0.0
        %2170 = vmatpush1.msra.mxu0 0.0
        %2171 = vmatprep.subr.mxu0 0.0
        %2172 = vmatpush1.msra.mxu0 0.0
        %2173 = vmatprep.subr.mxu0 0.0
        %2174 = vmatpush1.msra.mxu0 0.0
        %2175 = vmatprep.subr.mxu0 0.0
        %2176 = vmatpush1.msra.mxu0 0.0
        %2177 = vmatprep.subr.mxu0 0.0
        %2178 = vmatpush1.msra.mxu0 0.0
        %2179 = vmatprep.subr.mxu0 0.0
        %2180 = vmatpush1.msra.mxu0 0.0
        %2181 = vmatprep.subr.mxu0 0.0
        %2182 = vmatpush1.msra.mxu0 0.0
        %2183 = vmatprep.subr.mxu0 0.0
        %2184 = vmatpush1.msra.mxu0 0.0
        %2185 = vmatprep.subr.mxu0 0.0
        %2186 = vmatpush1.msra.mxu0 0.0
        %2187 = vmatprep.subr.mxu0 0.0
        %2188 = vmatpush1.msra.mxu0 0.0
        %2189 = vmatprep.subr.mxu0 0.0
        %2190 = vmatpush1.msra.mxu0 0.0
        %2191 = vmatprep.subr.mxu0 0.0
        %2192 = vmatpush1.msra.mxu0 0.0
        %2193 = vmatprep.subr.mxu0 0.0
        %2194 = vmatpush1.msra.mxu0 0.0
        %2195 = vmatprep.subr.mxu0 0.0
        %2196 = vmatpush1.msra.mxu0 0.0
        %2197 = vmatprep.subr.mxu0 0.0
        %2198 = vmatpush1.msra.mxu0 0.0
        %2199 = vmatprep.subr.mxu0 0.0
        %2200 = vmatpush1.msra.mxu0 0.0
        %2201 = vmatprep.subr.mxu0 0.0
        %2202 = vmatpush1.msra.mxu0 0.0
        %2203 = vmatprep.subr.mxu0 0.0
        %2204 = vmatpush1.msra.mxu0 0.0
        %2205 = vmatprep.mubr.f32.mxu0 0.0
        %2206 = vmatmul.mubr.f32.gmra.mrb[0].mxu0 %v2139
        %v2207 = vpop.f32.mrb[0].mxu0
        %v2208 = vadd.f32 0.0, %v2207
        %v2209 = vpop.f32.mrb[0].mxu0
        %v2210 = vadd.f32 0.0, %v2209
        %2211 = vdwg.mxu0
        %v2212 = vadd.f32 %v1998, %v2208
        %v2213 = vadd.f32 %v1999, %v2210
        %s2214 = scalar_lea.vmem [#allocation3], 3072
        %v2215 = vld [vmem:[%s2214] sm:$0xff]
        %v2216 = vld [vmem:[%s2214 + $0x8] sm:$0xff]
        %v2217 = vld [vmem:[%s2214 + $0x10] sm:$0xff]
        %v2218 = vld [vmem:[%s2214 + $0x18] sm:$0xff]
        %v2219 = vld [vmem:[%s2214 + $0x20] sm:$0xff]
        %v2220 = vld [vmem:[%s2214 + $0x28] sm:$0xff]
        %v2221 = vld [vmem:[%s2214 + $0x30] sm:$0xff]
        %v2222 = vld [vmem:[%s2214 + $0x38] sm:$0xff]
        %v2223 = vld [vmem:[%s2214 + $0x40] sm:$0xff]
        %v2224 = vld [vmem:[%s2214 + $0x48] sm:$0xff]
        %v2225 = vld [vmem:[%s2214 + $0x50] sm:$0xff]
        %v2226 = vld [vmem:[%s2214 + $0x58] sm:$0xff]
        %v2227 = vld [vmem:[%s2214 + $0x60] sm:$0xff]
        %v2228 = vld [vmem:[%s2214 + $0x68] sm:$0xff]
        %v2229 = vld [vmem:[%s2214 + $0x70] sm:$0xff]
        %v2230 = vld [vmem:[%s2214 + $0x78] sm:$0xff]
        %v2231 = vld [vmem:[%s2214 + $0x80] sm:$0xff]
        %v2232 = vld [vmem:[%s2214 + $0x88] sm:$0xff]
        %v2233 = vld [vmem:[%s2214 + $0x90] sm:$0xff]
        %v2234 = vld [vmem:[%s2214 + $0x98] sm:$0xff]
        %v2235 = vld [vmem:[%s2214 + $0xa0] sm:$0xff]
        %v2236 = vld [vmem:[%s2214 + $0xa8] sm:$0xff]
        %v2237 = vld [vmem:[%s2214 + $0xb0] sm:$0xff]
        %v2238 = vld [vmem:[%s2214 + $0xb8] sm:$0xff]
        %v2239 = vld [vmem:[%s2214 + $0xc0] sm:$0xff]
        %v2240 = vld [vmem:[%s2214 + $0xc8] sm:$0xff]
        %v2241 = vld [vmem:[%s2214 + $0xd0] sm:$0xff]
        %v2242 = vld [vmem:[%s2214 + $0xd8] sm:$0xff]
        %v2243 = vld [vmem:[%s2214 + $0xe0] sm:$0xff]
        %v2244 = vld [vmem:[%s2214 + $0xe8] sm:$0xff]
        %v2245 = vld [vmem:[%s2214 + $0xf0] sm:$0xff]
        %v2246 = vld [vmem:[%s2214 + $0xf8] sm:$0xff]
        %v2247 = vld [vmem:[%s2214 + $0x100] sm:$0xff]
        %v2248 = vld [vmem:[%s2214 + $0x108] sm:$0xff]
        %v2249 = vld [vmem:[%s2214 + $0x110] sm:$0xff]
        %v2250 = vld [vmem:[%s2214 + $0x118] sm:$0xff]
        %v2251 = vld [vmem:[%s2214 + $0x120] sm:$0xff]
        %v2252 = vld [vmem:[%s2214 + $0x128] sm:$0xff]
        %v2253 = vld [vmem:[%s2214 + $0x130] sm:$0xff]
        %v2254 = vld [vmem:[%s2214 + $0x138] sm:$0xff]
        %v2255 = vld [vmem:[%s2214 + $0x140] sm:$0xff]
        %v2256 = vld [vmem:[%s2214 + $0x148] sm:$0xff]
        %v2257 = vld [vmem:[%s2214 + $0x150] sm:$0xff]
        %v2258 = vld [vmem:[%s2214 + $0x158] sm:$0xff]
        %v2259 = vld [vmem:[%s2214 + $0x160] sm:$0xff]
        %v2260 = vld [vmem:[%s2214 + $0x168] sm:$0xff]
        %v2261 = vld [vmem:[%s2214 + $0x170] sm:$0xff]
        %v2262 = vld [vmem:[%s2214 + $0x178] sm:$0xff]
        %v2263 = vld [vmem:[%s2214 + $0x180] sm:$0xff]
        %v2264 = vld [vmem:[%s2214 + $0x188] sm:$0xff]
        %v2265 = vld [vmem:[%s2214 + $0x190] sm:$0xff]
        %v2266 = vld [vmem:[%s2214 + $0x198] sm:$0xff]
        %v2267 = vld [vmem:[%s2214 + $0x1a0] sm:$0xff]
        %v2268 = vld [vmem:[%s2214 + $0x1a8] sm:$0xff]
        %v2269 = vld [vmem:[%s2214 + $0x1b0] sm:$0xff]
        %v2270 = vld [vmem:[%s2214 + $0x1b8] sm:$0xff]
        %v2271 = vld [vmem:[%s2214 + $0x1c0] sm:$0xff]
        %v2272 = vld [vmem:[%s2214 + $0x1c8] sm:$0xff]
        %v2273 = vld [vmem:[%s2214 + $0x1d0] sm:$0xff]
        %v2274 = vld [vmem:[%s2214 + $0x1d8] sm:$0xff]
        %v2275 = vld [vmem:[%s2214 + $0x1e0] sm:$0xff]
        %v2276 = vld [vmem:[%s2214 + $0x1e8] sm:$0xff]
        %v2277 = vld [vmem:[%s2214 + $0x1f0] sm:$0xff]
        %v2278 = vld [vmem:[%s2214 + $0x1f8] sm:$0xff]
        %2279 = vmatprep.subr.mxu0 %v2216
        %2280 = vmatpush1.msra.mxu0 %v2215
        %2281 = vmatprep.subr.mxu0 %v2218
        %2282 = vmatpush1.msra.mxu0 %v2217
        %2283 = vmatprep.subr.mxu0 %v2220
        %2284 = vmatpush1.msra.mxu0 %v2219
        %2285 = vmatprep.subr.mxu0 %v2222
        %2286 = vmatpush1.msra.mxu0 %v2221
        %2287 = vmatprep.subr.mxu0 %v2224
        %2288 = vmatpush1.msra.mxu0 %v2223
        %2289 = vmatprep.subr.mxu0 %v2226
        %2290 = vmatpush1.msra.mxu0 %v2225
        %2291 = vmatprep.subr.mxu0 %v2228
        %2292 = vmatpush1.msra.mxu0 %v2227
        %2293 = vmatprep.subr.mxu0 %v2230
        %2294 = vmatpush1.msra.mxu0 %v2229
        %2295 = vmatprep.subr.mxu0 %v2232
        %2296 = vmatpush1.msra.mxu0 %v2231
        %2297 = vmatprep.subr.mxu0 %v2234
        %2298 = vmatpush1.msra.mxu0 %v2233
        %2299 = vmatprep.subr.mxu0 %v2236
        %2300 = vmatpush1.msra.mxu0 %v2235
        %2301 = vmatprep.subr.mxu0 %v2238
        %2302 = vmatpush1.msra.mxu0 %v2237
        %2303 = vmatprep.subr.mxu0 %v2240
        %2304 = vmatpush1.msra.mxu0 %v2239
        %2305 = vmatprep.subr.mxu0 %v2242
        %2306 = vmatpush1.msra.mxu0 %v2241
        %2307 = vmatprep.subr.mxu0 %v2244
        %2308 = vmatpush1.msra.mxu0 %v2243
        %2309 = vmatprep.subr.mxu0 %v2246
        %2310 = vmatpush1.msra.mxu0 %v2245
        %2311 = vmatprep.subr.mxu0 %v2248
        %2312 = vmatpush1.msra.mxu0 %v2247
        %2313 = vmatprep.subr.mxu0 %v2250
        %2314 = vmatpush1.msra.mxu0 %v2249
        %2315 = vmatprep.subr.mxu0 %v2252
        %2316 = vmatpush1.msra.mxu0 %v2251
        %2317 = vmatprep.subr.mxu0 %v2254
        %2318 = vmatpush1.msra.mxu0 %v2253
        %2319 = vmatprep.subr.mxu0 %v2256
        %2320 = vmatpush1.msra.mxu0 %v2255
        %2321 = vmatprep.subr.mxu0 %v2258
        %2322 = vmatpush1.msra.mxu0 %v2257
        %2323 = vmatprep.subr.mxu0 %v2260
        %2324 = vmatpush1.msra.mxu0 %v2259
        %2325 = vmatprep.subr.mxu0 %v2262
        %2326 = vmatpush1.msra.mxu0 %v2261
        %2327 = vmatprep.subr.mxu0 %v2264
        %2328 = vmatpush1.msra.mxu0 %v2263
        %2329 = vmatprep.subr.mxu0 %v2266
        %2330 = vmatpush1.msra.mxu0 %v2265
        %2331 = vmatprep.subr.mxu0 %v2268
        %2332 = vmatpush1.msra.mxu0 %v2267
        %2333 = vmatprep.subr.mxu0 %v2270
        %2334 = vmatpush1.msra.mxu0 %v2269
        %2335 = vmatprep.subr.mxu0 %v2272
        %2336 = vmatpush1.msra.mxu0 %v2271
        %2337 = vmatprep.subr.mxu0 %v2274
        %2338 = vmatpush1.msra.mxu0 %v2273
        %2339 = vmatprep.subr.mxu0 %v2276
        %2340 = vmatpush1.msra.mxu0 %v2275
        %2341 = vmatprep.subr.mxu0 %v2278
        %2342 = vmatpush1.msra.mxu0 %v2277
        %2343 = vmatprep.mubr.f32.mxu0 %v934
        %2344 = vmatmul.mubr.f32.gmra.mrb[0].mxu0 %v933
        %v2345 = vpop.f32.mrb[0].mxu0
        %v2346 = vadd.f32 0.0, %v2345
        %v2347 = vpop.f32.mrb[0].mxu0
        %v2348 = vadd.f32 0.0, %v2347
        %2349 = vdwg.mxu0
        %s2350 = scalar_lea.vmem [#allocation7], 48
        %v2351 = vld [vmem:[%s2350] sm:$0xff]
        %v2353 = vsel %vm1209, %v2351, 0
        %2355 = vmatprep.subr.mxu0 %v2348
        %2356 = vmatpush1.msra.mxu0 %v2346
        %2357 = vmatprep.subr.mxu0 0.0
        %2358 = vmatpush1.msra.mxu0 0.0
        %2359 = vmatprep.subr.mxu0 0.0
        %2360 = vmatpush1.msra.mxu0 0.0
        %2361 = vmatprep.subr.mxu0 0.0
        %2362 = vmatpush1.msra.mxu0 0.0
        %2363 = vmatprep.subr.mxu0 0.0
        %2364 = vmatpush1.msra.mxu0 0.0
        %2365 = vmatprep.subr.mxu0 0.0
        %2366 = vmatpush1.msra.mxu0 0.0
        %2367 = vmatprep.subr.mxu0 0.0
        %2368 = vmatpush1.msra.mxu0 0.0
        %2369 = vmatprep.subr.mxu0 0.0
        %2370 = vmatpush1.msra.mxu0 0.0
        %2371 = vmatprep.subr.mxu0 0.0
        %2372 = vmatpush1.msra.mxu0 0.0
        %2373 = vmatprep.subr.mxu0 0.0
        %2374 = vmatpush1.msra.mxu0 0.0
        %2375 = vmatprep.subr.mxu0 0.0
        %2376 = vmatpush1.msra.mxu0 0.0
        %2377 = vmatprep.subr.mxu0 0.0
        %2378 = vmatpush1.msra.mxu0 0.0
        %2379 = vmatprep.subr.mxu0 0.0
        %2380 = vmatpush1.msra.mxu0 0.0
        %2381 = vmatprep.subr.mxu0 0.0
        %2382 = vmatpush1.msra.mxu0 0.0
        %2383 = vmatprep.subr.mxu0 0.0
        %2384 = vmatpush1.msra.mxu0 0.0
        %2385 = vmatprep.subr.mxu0 0.0
        %2386 = vmatpush1.msra.mxu0 0.0
        %2387 = vmatprep.subr.mxu0 0.0
        %2388 = vmatpush1.msra.mxu0 0.0
        %2389 = vmatprep.subr.mxu0 0.0
        %2390 = vmatpush1.msra.mxu0 0.0
        %2391 = vmatprep.subr.mxu0 0.0
        %2392 = vmatpush1.msra.mxu0 0.0
        %2393 = vmatprep.subr.mxu0 0.0
        %2394 = vmatpush1.msra.mxu0 0.0
        %2395 = vmatprep.subr.mxu0 0.0
        %2396 = vmatpush1.msra.mxu0 0.0
        %2397 = vmatprep.subr.mxu0 0.0
        %2398 = vmatpush1.msra.mxu0 0.0
        %2399 = vmatprep.subr.mxu0 0.0
        %2400 = vmatpush1.msra.mxu0 0.0
        %2401 = vmatprep.subr.mxu0 0.0
        %2402 = vmatpush1.msra.mxu0 0.0
        %2403 = vmatprep.subr.mxu0 0.0
        %2404 = vmatpush1.msra.mxu0 0.0
        %2405 = vmatprep.subr.mxu0 0.0
        %2406 = vmatpush1.msra.mxu0 0.0
        %2407 = vmatprep.subr.mxu0 0.0
        %2408 = vmatpush1.msra.mxu0 0.0
        %2409 = vmatprep.subr.mxu0 0.0
        %2410 = vmatpush1.msra.mxu0 0.0
        %2411 = vmatprep.subr.mxu0 0.0
        %2412 = vmatpush1.msra.mxu0 0.0
        %2413 = vmatprep.subr.mxu0 0.0
        %2414 = vmatpush1.msra.mxu0 0.0
        %2415 = vmatprep.subr.mxu0 0.0
        %2416 = vmatpush1.msra.mxu0 0.0
        %2417 = vmatprep.subr.mxu0 0.0
        %2418 = vmatpush1.msra.mxu0 0.0
        %2419 = vmatprep.mubr.f32.mxu0 0.0
        %2420 = vmatmul.mubr.f32.gmra.mrb[0].mxu0 %v2353
        %v2421 = vpop.f32.mrb[0].mxu0
        %v2422 = vadd.f32 0.0, %v2421
        %v2423 = vpop.f32.mrb[0].mxu0
        %v2424 = vadd.f32 0.0, %v2423
        %2425 = vdwg.mxu0
        %v2426 = vadd.f32 %v2212, %v2422
        %v2427 = vadd.f32 %v2213, %v2424
        %s2428 = scalar_lea.vmem [#allocation3], 3584
        %v2429 = vld [vmem:[%s2428] sm:$0xff]
        %v2430 = vld [vmem:[%s2428 + $0x8] sm:$0xff]
        %v2431 = vld [vmem:[%s2428 + $0x10] sm:$0xff]
        %v2432 = vld [vmem:[%s2428 + $0x18] sm:$0xff]
        %v2433 = vld [vmem:[%s2428 + $0x20] sm:$0xff]
        %v2434 = vld [vmem:[%s2428 + $0x28] sm:$0xff]
        %v2435 = vld [vmem:[%s2428 + $0x30] sm:$0xff]
        %v2436 = vld [vmem:[%s2428 + $0x38] sm:$0xff]
        %v2437 = vld [vmem:[%s2428 + $0x40] sm:$0xff]
        %v2438 = vld [vmem:[%s2428 + $0x48] sm:$0xff]
        %v2439 = vld [vmem:[%s2428 + $0x50] sm:$0xff]
        %v2440 = vld [vmem:[%s2428 + $0x58] sm:$0xff]
        %v2441 = vld [vmem:[%s2428 + $0x60] sm:$0xff]
        %v2442 = vld [vmem:[%s2428 + $0x68] sm:$0xff]
        %v2443 = vld [vmem:[%s2428 + $0x70] sm:$0xff]
        %v2444 = vld [vmem:[%s2428 + $0x78] sm:$0xff]
        %v2445 = vld [vmem:[%s2428 + $0x80] sm:$0xff]
        %v2446 = vld [vmem:[%s2428 + $0x88] sm:$0xff]
        %v2447 = vld [vmem:[%s2428 + $0x90] sm:$0xff]
        %v2448 = vld [vmem:[%s2428 + $0x98] sm:$0xff]
        %v2449 = vld [vmem:[%s2428 + $0xa0] sm:$0xff]
        %v2450 = vld [vmem:[%s2428 + $0xa8] sm:$0xff]
        %v2451 = vld [vmem:[%s2428 + $0xb0] sm:$0xff]
        %v2452 = vld [vmem:[%s2428 + $0xb8] sm:$0xff]
        %v2453 = vld [vmem:[%s2428 + $0xc0] sm:$0xff]
        %v2454 = vld [vmem:[%s2428 + $0xc8] sm:$0xff]
        %v2455 = vld [vmem:[%s2428 + $0xd0] sm:$0xff]
        %v2456 = vld [vmem:[%s2428 + $0xd8] sm:$0xff]
        %v2457 = vld [vmem:[%s2428 + $0xe0] sm:$0xff]
        %v2458 = vld [vmem:[%s2428 + $0xe8] sm:$0xff]
        %v2459 = vld [vmem:[%s2428 + $0xf0] sm:$0xff]
        %v2460 = vld [vmem:[%s2428 + $0xf8] sm:$0xff]
        %v2461 = vld [vmem:[%s2428 + $0x100] sm:$0xff]
        %v2462 = vld [vmem:[%s2428 + $0x108] sm:$0xff]
        %v2463 = vld [vmem:[%s2428 + $0x110] sm:$0xff]
        %v2464 = vld [vmem:[%s2428 + $0x118] sm:$0xff]
        %v2465 = vld [vmem:[%s2428 + $0x120] sm:$0xff]
        %v2466 = vld [vmem:[%s2428 + $0x128] sm:$0xff]
        %v2467 = vld [vmem:[%s2428 + $0x130] sm:$0xff]
        %v2468 = vld [vmem:[%s2428 + $0x138] sm:$0xff]
        %v2469 = vld [vmem:[%s2428 + $0x140] sm:$0xff]
        %v2470 = vld [vmem:[%s2428 + $0x148] sm:$0xff]
        %v2471 = vld [vmem:[%s2428 + $0x150] sm:$0xff]
        %v2472 = vld [vmem:[%s2428 + $0x158] sm:$0xff]
        %v2473 = vld [vmem:[%s2428 + $0x160] sm:$0xff]
        %v2474 = vld [vmem:[%s2428 + $0x168] sm:$0xff]
        %v2475 = vld [vmem:[%s2428 + $0x170] sm:$0xff]
        %v2476 = vld [vmem:[%s2428 + $0x178] sm:$0xff]
        %v2477 = vld [vmem:[%s2428 + $0x180] sm:$0xff]
        %v2478 = vld [vmem:[%s2428 + $0x188] sm:$0xff]
        %v2479 = vld [vmem:[%s2428 + $0x190] sm:$0xff]
        %v2480 = vld [vmem:[%s2428 + $0x198] sm:$0xff]
        %v2481 = vld [vmem:[%s2428 + $0x1a0] sm:$0xff]
        %v2482 = vld [vmem:[%s2428 + $0x1a8] sm:$0xff]
        %v2483 = vld [vmem:[%s2428 + $0x1b0] sm:$0xff]
        %v2484 = vld [vmem:[%s2428 + $0x1b8] sm:$0xff]
        %v2485 = vld [vmem:[%s2428 + $0x1c0] sm:$0xff]
        %v2486 = vld [vmem:[%s2428 + $0x1c8] sm:$0xff]
        %v2487 = vld [vmem:[%s2428 + $0x1d0] sm:$0xff]
        %v2488 = vld [vmem:[%s2428 + $0x1d8] sm:$0xff]
        %v2489 = vld [vmem:[%s2428 + $0x1e0] sm:$0xff]
        %v2490 = vld [vmem:[%s2428 + $0x1e8] sm:$0xff]
        %v2491 = vld [vmem:[%s2428 + $0x1f0] sm:$0xff]
        %v2492 = vld [vmem:[%s2428 + $0x1f8] sm:$0xff]
        %2493 = vmatprep.subr.mxu0 %v2430
        %2494 = vmatpush1.msra.mxu0 %v2429
        %2495 = vmatprep.subr.mxu0 %v2432
        %2496 = vmatpush1.msra.mxu0 %v2431
        %2497 = vmatprep.subr.mxu0 %v2434
        %2498 = vmatpush1.msra.mxu0 %v2433
        %2499 = vmatprep.subr.mxu0 %v2436
        %2500 = vmatpush1.msra.mxu0 %v2435
        %2501 = vmatprep.subr.mxu0 %v2438
        %2502 = vmatpush1.msra.mxu0 %v2437
        %2503 = vmatprep.subr.mxu0 %v2440
        %2504 = vmatpush1.msra.mxu0 %v2439
        %2505 = vmatprep.subr.mxu0 %v2442
        %2506 = vmatpush1.msra.mxu0 %v2441
        %2507 = vmatprep.subr.mxu0 %v2444
        %2508 = vmatpush1.msra.mxu0 %v2443
        %2509 = vmatprep.subr.mxu0 %v2446
        %2510 = vmatpush1.msra.mxu0 %v2445
        %2511 = vmatprep.subr.mxu0 %v2448
        %2512 = vmatpush1.msra.mxu0 %v2447
        %2513 = vmatprep.subr.mxu0 %v2450
        %2514 = vmatpush1.msra.mxu0 %v2449
        %2515 = vmatprep.subr.mxu0 %v2452
        %2516 = vmatpush1.msra.mxu0 %v2451
        %2517 = vmatprep.subr.mxu0 %v2454
        %2518 = vmatpush1.msra.mxu0 %v2453
        %2519 = vmatprep.subr.mxu0 %v2456
        %2520 = vmatpush1.msra.mxu0 %v2455
        %2521 = vmatprep.subr.mxu0 %v2458
        %2522 = vmatpush1.msra.mxu0 %v2457
        %2523 = vmatprep.subr.mxu0 %v2460
        %2524 = vmatpush1.msra.mxu0 %v2459
        %2525 = vmatprep.subr.mxu0 %v2462
        %2526 = vmatpush1.msra.mxu0 %v2461
        %2527 = vmatprep.subr.mxu0 %v2464
        %2528 = vmatpush1.msra.mxu0 %v2463
        %2529 = vmatprep.subr.mxu0 %v2466
        %2530 = vmatpush1.msra.mxu0 %v2465
        %2531 = vmatprep.subr.mxu0 %v2468
        %2532 = vmatpush1.msra.mxu0 %v2467
        %2533 = vmatprep.subr.mxu0 %v2470
        %2534 = vmatpush1.msra.mxu0 %v2469
        %2535 = vmatprep.subr.mxu0 %v2472
        %2536 = vmatpush1.msra.mxu0 %v2471
        %2537 = vmatprep.subr.mxu0 %v2474
        %2538 = vmatpush1.msra.mxu0 %v2473
        %2539 = vmatprep.subr.mxu0 %v2476
        %2540 = vmatpush1.msra.mxu0 %v2475
        %2541 = vmatprep.subr.mxu0 %v2478
        %2542 = vmatpush1.msra.mxu0 %v2477
        %2543 = vmatprep.subr.mxu0 %v2480
        %2544 = vmatpush1.msra.mxu0 %v2479
        %2545 = vmatprep.subr.mxu0 %v2482
        %2546 = vmatpush1.msra.mxu0 %v2481
        %2547 = vmatprep.subr.mxu0 %v2484
        %2548 = vmatpush1.msra.mxu0 %v2483
        %2549 = vmatprep.subr.mxu0 %v2486
        %2550 = vmatpush1.msra.mxu0 %v2485
        %2551 = vmatprep.subr.mxu0 %v2488
        %2552 = vmatpush1.msra.mxu0 %v2487
        %2553 = vmatprep.subr.mxu0 %v2490
        %2554 = vmatpush1.msra.mxu0 %v2489
        %2555 = vmatprep.subr.mxu0 %v2492
        %2556 = vmatpush1.msra.mxu0 %v2491
        %2557 = vmatprep.mubr.f32.mxu0 %v934
        %2558 = vmatmul.mubr.f32.gmra.mrb[0].mxu0 %v933
        %v2559 = vpop.f32.mrb[0].mxu0
        %v2560 = vadd.f32 0.0, %v2559
        %v2561 = vpop.f32.mrb[0].mxu0
        %v2562 = vadd.f32 0.0, %v2561
        %2563 = vdwg.mxu0
        %s2564 = scalar_lea.vmem [#allocation7], 56
        %v2565 = vld [vmem:[%s2564] sm:$0xff]
        %v2567 = vsel %vm1209, %v2565, 0
        %2569 = vmatprep.subr.mxu0 %v2562
        %2570 = vmatpush1.msra.mxu0 %v2560
        %2571 = vmatprep.subr.mxu0 0.0
        %2572 = vmatpush1.msra.mxu0 0.0
        %2573 = vmatprep.subr.mxu0 0.0
        %2574 = vmatpush1.msra.mxu0 0.0
        %2575 = vmatprep.subr.mxu0 0.0
        %2576 = vmatpush1.msra.mxu0 0.0
        %2577 = vmatprep.subr.mxu0 0.0
        %2578 = vmatpush1.msra.mxu0 0.0
        %2579 = vmatprep.subr.mxu0 0.0
        %2580 = vmatpush1.msra.mxu0 0.0
        %2581 = vmatprep.subr.mxu0 0.0
        %2582 = vmatpush1.msra.mxu0 0.0
        %2583 = vmatprep.subr.mxu0 0.0
        %2584 = vmatpush1.msra.mxu0 0.0
        %2585 = vmatprep.subr.mxu0 0.0
        %2586 = vmatpush1.msra.mxu0 0.0
        %2587 = vmatprep.subr.mxu0 0.0
        %2588 = vmatpush1.msra.mxu0 0.0
        %2589 = vmatprep.subr.mxu0 0.0
        %2590 = vmatpush1.msra.mxu0 0.0
        %2591 = vmatprep.subr.mxu0 0.0
        %2592 = vmatpush1.msra.mxu0 0.0
        %2593 = vmatprep.subr.mxu0 0.0
        %2594 = vmatpush1.msra.mxu0 0.0
        %2595 = vmatprep.subr.mxu0 0.0
        %2596 = vmatpush1.msra.mxu0 0.0
        %2597 = vmatprep.subr.mxu0 0.0
        %2598 = vmatpush1.msra.mxu0 0.0
        %2599 = vmatprep.subr.mxu0 0.0
        %2600 = vmatpush1.msra.mxu0 0.0
        %2601 = vmatprep.subr.mxu0 0.0
        %2602 = vmatpush1.msra.mxu0 0.0
        %2603 = vmatprep.subr.mxu0 0.0
        %2604 = vmatpush1.msra.mxu0 0.0
        %2605 = vmatprep.subr.mxu0 0.0
        %2606 = vmatpush1.msra.mxu0 0.0
        %2607 = vmatprep.subr.mxu0 0.0
        %2608 = vmatpush1.msra.mxu0 0.0
        %2609 = vmatprep.subr.mxu0 0.0
        %2610 = vmatpush1.msra.mxu0 0.0
        %2611 = vmatprep.subr.mxu0 0.0
        %2612 = vmatpush1.msra.mxu0 0.0
        %2613 = vmatprep.subr.mxu0 0.0
        %2614 = vmatpush1.msra.mxu0 0.0
        %2615 = vmatprep.subr.mxu0 0.0
        %2616 = vmatpush1.msra.mxu0 0.0
        %2617 = vmatprep.subr.mxu0 0.0
        %2618 = vmatpush1.msra.mxu0 0.0
        %2619 = vmatprep.subr.mxu0 0.0
        %2620 = vmatpush1.msra.mxu0 0.0
        %2621 = vmatprep.subr.mxu0 0.0
        %2622 = vmatpush1.msra.mxu0 0.0
        %2623 = vmatprep.subr.mxu0 0.0
        %2624 = vmatpush1.msra.mxu0 0.0
        %2625 = vmatprep.subr.mxu0 0.0
        %2626 = vmatpush1.msra.mxu0 0.0
        %2627 = vmatprep.subr.mxu0 0.0
        %2628 = vmatpush1.msra.mxu0 0.0
        %2629 = vmatprep.subr.mxu0 0.0
        %2630 = vmatpush1.msra.mxu0 0.0
        %2631 = vmatprep.subr.mxu0 0.0
        %2632 = vmatpush1.msra.mxu0 0.0
        %2633 = vmatprep.mubr.f32.mxu0 0.0
        %2634 = vmatmul.mubr.f32.gmra.mrb[0].mxu0 %v2567
        %v2635 = vpop.f32.mrb[0].mxu0
        %v2636 = vadd.f32 0.0, %v2635
        %v2637 = vpop.f32.mrb[0].mxu0
        %v2638 = vadd.f32 0.0, %v2637
        %2639 = vdwg.mxu0
        %v2640 = vadd.f32 %v2426, %v2636
        %v2641 = vadd.f32 %v2427, %v2638
        %s2642 = scalar_lea.vmem [#allocation3], 4096
        %v2643 = vld [vmem:[%s2642] sm:$0xff]
        %v2644 = vld [vmem:[%s2642 + $0x8] sm:$0xff]
        %v2645 = vld [vmem:[%s2642 + $0x10] sm:$0xff]
        %v2646 = vld [vmem:[%s2642 + $0x18] sm:$0xff]
        %v2647 = vld [vmem:[%s2642 + $0x20] sm:$0xff]
        %v2648 = vld [vmem:[%s2642 + $0x28] sm:$0xff]
        %v2649 = vld [vmem:[%s2642 + $0x30] sm:$0xff]
        %v2650 = vld [vmem:[%s2642 + $0x38] sm:$0xff]
        %v2651 = vld [vmem:[%s2642 + $0x40] sm:$0xff]
        %v2652 = vld [vmem:[%s2642 + $0x48] sm:$0xff]
        %v2653 = vld [vmem:[%s2642 + $0x50] sm:$0xff]
        %v2654 = vld [vmem:[%s2642 + $0x58] sm:$0xff]
        %v2655 = vld [vmem:[%s2642 + $0x60] sm:$0xff]
        %v2656 = vld [vmem:[%s2642 + $0x68] sm:$0xff]
        %v2657 = vld [vmem:[%s2642 + $0x70] sm:$0xff]
        %v2658 = vld [vmem:[%s2642 + $0x78] sm:$0xff]
        %v2659 = vld [vmem:[%s2642 + $0x80] sm:$0xff]
        %v2660 = vld [vmem:[%s2642 + $0x88] sm:$0xff]
        %v2661 = vld [vmem:[%s2642 + $0x90] sm:$0xff]
        %v2662 = vld [vmem:[%s2642 + $0x98] sm:$0xff]
        %v2663 = vld [vmem:[%s2642 + $0xa0] sm:$0xff]
        %v2664 = vld [vmem:[%s2642 + $0xa8] sm:$0xff]
        %v2665 = vld [vmem:[%s2642 + $0xb0] sm:$0xff]
        %v2666 = vld [vmem:[%s2642 + $0xb8] sm:$0xff]
        %v2667 = vld [vmem:[%s2642 + $0xc0] sm:$0xff]
        %v2668 = vld [vmem:[%s2642 + $0xc8] sm:$0xff]
        %v2669 = vld [vmem:[%s2642 + $0xd0] sm:$0xff]
        %v2670 = vld [vmem:[%s2642 + $0xd8] sm:$0xff]
        %v2671 = vld [vmem:[%s2642 + $0xe0] sm:$0xff]
        %v2672 = vld [vmem:[%s2642 + $0xe8] sm:$0xff]
        %v2673 = vld [vmem:[%s2642 + $0xf0] sm:$0xff]
        %v2674 = vld [vmem:[%s2642 + $0xf8] sm:$0xff]
        %v2675 = vld [vmem:[%s2642 + $0x100] sm:$0xff]
        %v2676 = vld [vmem:[%s2642 + $0x108] sm:$0xff]
        %v2677 = vld [vmem:[%s2642 + $0x110] sm:$0xff]
        %v2678 = vld [vmem:[%s2642 + $0x118] sm:$0xff]
        %v2679 = vld [vmem:[%s2642 + $0x120] sm:$0xff]
        %v2680 = vld [vmem:[%s2642 + $0x128] sm:$0xff]
        %v2681 = vld [vmem:[%s2642 + $0x130] sm:$0xff]
        %v2682 = vld [vmem:[%s2642 + $0x138] sm:$0xff]
        %v2683 = vld [vmem:[%s2642 + $0x140] sm:$0xff]
        %v2684 = vld [vmem:[%s2642 + $0x148] sm:$0xff]
        %v2685 = vld [vmem:[%s2642 + $0x150] sm:$0xff]
        %v2686 = vld [vmem:[%s2642 + $0x158] sm:$0xff]
        %v2687 = vld [vmem:[%s2642 + $0x160] sm:$0xff]
        %v2688 = vld [vmem:[%s2642 + $0x168] sm:$0xff]
        %v2689 = vld [vmem:[%s2642 + $0x170] sm:$0xff]
        %v2690 = vld [vmem:[%s2642 + $0x178] sm:$0xff]
        %v2691 = vld [vmem:[%s2642 + $0x180] sm:$0xff]
        %v2692 = vld [vmem:[%s2642 + $0x188] sm:$0xff]
        %v2693 = vld [vmem:[%s2642 + $0x190] sm:$0xff]
        %v2694 = vld [vmem:[%s2642 + $0x198] sm:$0xff]
        %v2695 = vld [vmem:[%s2642 + $0x1a0] sm:$0xff]
        %v2696 = vld [vmem:[%s2642 + $0x1a8] sm:$0xff]
        %v2697 = vld [vmem:[%s2642 + $0x1b0] sm:$0xff]
        %v2698 = vld [vmem:[%s2642 + $0x1b8] sm:$0xff]
        %v2699 = vld [vmem:[%s2642 + $0x1c0] sm:$0xff]
        %v2700 = vld [vmem:[%s2642 + $0x1c8] sm:$0xff]
        %v2701 = vld [vmem:[%s2642 + $0x1d0] sm:$0xff]
        %v2702 = vld [vmem:[%s2642 + $0x1d8] sm:$0xff]
        %v2703 = vld [vmem:[%s2642 + $0x1e0] sm:$0xff]
        %v2704 = vld [vmem:[%s2642 + $0x1e8] sm:$0xff]
        %v2705 = vld [vmem:[%s2642 + $0x1f0] sm:$0xff]
        %v2706 = vld [vmem:[%s2642 + $0x1f8] sm:$0xff]
        %2707 = vmatprep.subr.mxu0 %v2644
        %2708 = vmatpush1.msra.mxu0 %v2643
        %2709 = vmatprep.subr.mxu0 %v2646
        %2710 = vmatpush1.msra.mxu0 %v2645
        %2711 = vmatprep.subr.mxu0 %v2648
        %2712 = vmatpush1.msra.mxu0 %v2647
        %2713 = vmatprep.subr.mxu0 %v2650
        %2714 = vmatpush1.msra.mxu0 %v2649
        %2715 = vmatprep.subr.mxu0 %v2652
        %2716 = vmatpush1.msra.mxu0 %v2651
        %2717 = vmatprep.subr.mxu0 %v2654
        %2718 = vmatpush1.msra.mxu0 %v2653
        %2719 = vmatprep.subr.mxu0 %v2656
        %2720 = vmatpush1.msra.mxu0 %v2655
        %2721 = vmatprep.subr.mxu0 %v2658
        %2722 = vmatpush1.msra.mxu0 %v2657
        %2723 = vmatprep.subr.mxu0 %v2660
        %2724 = vmatpush1.msra.mxu0 %v2659
        %2725 = vmatprep.subr.mxu0 %v2662
        %2726 = vmatpush1.msra.mxu0 %v2661
        %2727 = vmatprep.subr.mxu0 %v2664
        %2728 = vmatpush1.msra.mxu0 %v2663
        %2729 = vmatprep.subr.mxu0 %v2666
        %2730 = vmatpush1.msra.mxu0 %v2665
        %2731 = vmatprep.subr.mxu0 %v2668
        %2732 = vmatpush1.msra.mxu0 %v2667
        %2733 = vmatprep.subr.mxu0 %v2670
        %2734 = vmatpush1.msra.mxu0 %v2669
        %2735 = vmatprep.subr.mxu0 %v2672
        %2736 = vmatpush1.msra.mxu0 %v2671
        %2737 = vmatprep.subr.mxu0 %v2674
        %2738 = vmatpush1.msra.mxu0 %v2673
        %2739 = vmatprep.subr.mxu0 %v2676
        %2740 = vmatpush1.msra.mxu0 %v2675
        %2741 = vmatprep.subr.mxu0 %v2678
        %2742 = vmatpush1.msra.mxu0 %v2677
        %2743 = vmatprep.subr.mxu0 %v2680
        %2744 = vmatpush1.msra.mxu0 %v2679
        %2745 = vmatprep.subr.mxu0 %v2682
        %2746 = vmatpush1.msra.mxu0 %v2681
        %2747 = vmatprep.subr.mxu0 %v2684
        %2748 = vmatpush1.msra.mxu0 %v2683
        %2749 = vmatprep.subr.mxu0 %v2686
        %2750 = vmatpush1.msra.mxu0 %v2685
        %2751 = vmatprep.subr.mxu0 %v2688
        %2752 = vmatpush1.msra.mxu0 %v2687
        %2753 = vmatprep.subr.mxu0 %v2690
        %2754 = vmatpush1.msra.mxu0 %v2689
        %2755 = vmatprep.subr.mxu0 %v2692
        %2756 = vmatpush1.msra.mxu0 %v2691
        %2757 = vmatprep.subr.mxu0 %v2694
        %2758 = vmatpush1.msra.mxu0 %v2693
        %2759 = vmatprep.subr.mxu0 %v2696
        %2760 = vmatpush1.msra.mxu0 %v2695
        %2761 = vmatprep.subr.mxu0 %v2698
        %2762 = vmatpush1.msra.mxu0 %v2697
        %2763 = vmatprep.subr.mxu0 %v2700
        %2764 = vmatpush1.msra.mxu0 %v2699
        %2765 = vmatprep.subr.mxu0 %v2702
        %2766 = vmatpush1.msra.mxu0 %v2701
        %2767 = vmatprep.subr.mxu0 %v2704
        %2768 = vmatpush1.msra.mxu0 %v2703
        %2769 = vmatprep.subr.mxu0 %v2706
        %2770 = vmatpush1.msra.mxu0 %v2705
        %2771 = vmatprep.mubr.f32.mxu0 %v934
        %2772 = vmatmul.mubr.f32.gmra.mrb[0].mxu0 %v933
        %v2773 = vpop.f32.mrb[0].mxu0
        %v2774 = vadd.f32 0.0, %v2773
        %v2775 = vpop.f32.mrb[0].mxu0
        %v2776 = vadd.f32 0.0, %v2775
        %2777 = vdwg.mxu0
        %s2778 = scalar_lea.vmem [#allocation7], 64
        %v2779 = vld [vmem:[%s2778] sm:$0xff]
        %v2781 = vsel %vm1209, %v2779, 0
        %2783 = vmatprep.subr.mxu0 %v2776
        %2784 = vmatpush1.msra.mxu0 %v2774
        %2785 = vmatprep.subr.mxu0 0.0
        %2786 = vmatpush1.msra.mxu0 0.0
        %2787 = vmatprep.subr.mxu0 0.0
        %2788 = vmatpush1.msra.mxu0 0.0
        %2789 = vmatprep.subr.mxu0 0.0
        %2790 = vmatpush1.msra.mxu0 0.0
        %2791 = vmatprep.subr.mxu0 0.0
        %2792 = vmatpush1.msra.mxu0 0.0
        %2793 = vmatprep.subr.mxu0 0.0
        %2794 = vmatpush1.msra.mxu0 0.0
        %2795 = vmatprep.subr.mxu0 0.0
        %2796 = vmatpush1.msra.mxu0 0.0
        %2797 = vmatprep.subr.mxu0 0.0
        %2798 = vmatpush1.msra.mxu0 0.0
        %2799 = vmatprep.subr.mxu0 0.0
        %2800 = vmatpush1.msra.mxu0 0.0
        %2801 = vmatprep.subr.mxu0 0.0
        %2802 = vmatpush1.msra.mxu0 0.0
        %2803 = vmatprep.subr.mxu0 0.0
        %2804 = vmatpush1.msra.mxu0 0.0
        %2805 = vmatprep.subr.mxu0 0.0
        %2806 = vmatpush1.msra.mxu0 0.0
        %2807 = vmatprep.subr.mxu0 0.0
        %2808 = vmatpush1.msra.mxu0 0.0
        %2809 = vmatprep.subr.mxu0 0.0
        %2810 = vmatpush1.msra.mxu0 0.0
        %2811 = vmatprep.subr.mxu0 0.0
        %2812 = vmatpush1.msra.mxu0 0.0
        %2813 = vmatprep.subr.mxu0 0.0
        %2814 = vmatpush1.msra.mxu0 0.0
        %2815 = vmatprep.subr.mxu0 0.0
        %2816 = vmatpush1.msra.mxu0 0.0
        %2817 = vmatprep.subr.mxu0 0.0
        %2818 = vmatpush1.msra.mxu0 0.0
        %2819 = vmatprep.subr.mxu0 0.0
        %2820 = vmatpush1.msra.mxu0 0.0
        %2821 = vmatprep.subr.mxu0 0.0
        %2822 = vmatpush1.msra.mxu0 0.0
        %2823 = vmatprep.subr.mxu0 0.0
        %2824 = vmatpush1.msra.mxu0 0.0
        %2825 = vmatprep.subr.mxu0 0.0
        %2826 = vmatpush1.msra.mxu0 0.0
        %2827 = vmatprep.subr.mxu0 0.0
        %2828 = vmatpush1.msra.mxu0 0.0
        %2829 = vmatprep.subr.mxu0 0.0
        %2830 = vmatpush1.msra.mxu0 0.0
        %2831 = vmatprep.subr.mxu0 0.0
        %2832 = vmatpush1.msra.mxu0 0.0
        %2833 = vmatprep.subr.mxu0 0.0
        %2834 = vmatpush1.msra.mxu0 0.0
        %2835 = vmatprep.subr.mxu0 0.0
        %2836 = vmatpush1.msra.mxu0 0.0
        %2837 = vmatprep.subr.mxu0 0.0
        %2838 = vmatpush1.msra.mxu0 0.0
        %2839 = vmatprep.subr.mxu0 0.0
        %2840 = vmatpush1.msra.mxu0 0.0
        %2841 = vmatprep.subr.mxu0 0.0
        %2842 = vmatpush1.msra.mxu0 0.0
        %2843 = vmatprep.subr.mxu0 0.0
        %2844 = vmatpush1.msra.mxu0 0.0
        %2845 = vmatprep.subr.mxu0 0.0
        %2846 = vmatpush1.msra.mxu0 0.0
        %2847 = vmatprep.mubr.f32.mxu0 0.0
        %2848 = vmatmul.mubr.f32.gmra.mrb[0].mxu0 %v2781
        %v2849 = vpop.f32.mrb[0].mxu0
        %v2850 = vadd.f32 0.0, %v2849
        %v2851 = vpop.f32.mrb[0].mxu0
        %v2852 = vadd.f32 0.0, %v2851
        %2853 = vdwg.mxu0
        %v2854 = vadd.f32 %v2640, %v2850
        %v2855 = vadd.f32 %v2641, %v2852
        %v2856 = vld [vmem:[%s8] sm:$0xff]
        %2858 = vset.pattern.permute.xlu0 0
        %2859 = vperm.xlu0 %2858, %v2856
        %v2860 = vpop.permute.xlu0 %2859
        %v2862 = vadd.f32 %v2854, %v2860
        %v2863 = vadd.f32 %v2855, %v2860
        %vm2864 = vcmp.gt.f32.partialorder %v2862, 0.0
        %vm2865 = vcmp.gt.f32.partialorder %v2863, 0.0
        %v2866 = vmul.f32 %v2862, 0.2
        %v2867 = vmul.f32 %v2863, 0.2
        %v2868 = vsel %vm2864, %v2862, %v2866
        %v2869 = vsel %vm2865, %v2863, %v2867
        %v2870 = vmul.f32 %v2868, 0.16343011
        %v2871 = vmul.f32 %v2869, 0.16343011
        %2872 = vmatprep.subr.mxu0 %v936
        %2873 = vmatpush1.msra.mxu0 %v935
        %2874 = vmatprep.subr.mxu0 %v938
        %2875 = vmatpush1.msra.mxu0 %v937
        %2876 = vmatprep.subr.mxu0 %v940
        %2877 = vmatpush1.msra.mxu0 %v939
        %2878 = vmatprep.subr.mxu0 %v942
        %2879 = vmatpush1.msra.mxu0 %v941
        %2880 = vmatprep.subr.mxu0 %v944
        %2881 = vmatpush1.msra.mxu0 %v943
        %2882 = vmatprep.subr.mxu0 %v946
        %2883 = vmatpush1.msra.mxu0 %v945
        %2884 = vmatprep.subr.mxu0 %v948
        %2885 = vmatpush1.msra.mxu0 %v947
        %2886 = vmatprep.subr.mxu0 %v950
        %2887 = vmatpush1.msra.mxu0 %v949
        %2888 = vmatprep.subr.mxu0 %v952
        %2889 = vmatpush1.msra.mxu0 %v951
        %2890 = vmatprep.subr.mxu0 %v954
        %2891 = vmatpush1.msra.mxu0 %v953
        %2892 = vmatprep.subr.mxu0 %v956
        %2893 = vmatpush1.msra.mxu0 %v955
        %2894 = vmatprep.subr.mxu0 %v958
        %2895 = vmatpush1.msra.mxu0 %v957
        %2896 = vmatprep.subr.mxu0 %v960
        %2897 = vmatpush1.msra.mxu0 %v959
        %2898 = vmatprep.subr.mxu0 %v962
        %2899 = vmatpush1.msra.mxu0 %v961
        %2900 = vmatprep.subr.mxu0 %v964
        %2901 = vmatpush1.msra.mxu0 %v963
        %2902 = vmatprep.subr.mxu0 %v966
        %2903 = vmatpush1.msra.mxu0 %v965
        %2904 = vmatprep.subr.mxu0 %v968
        %2905 = vmatpush1.msra.mxu0 %v967
        %2906 = vmatprep.subr.mxu0 %v970
        %2907 = vmatpush1.msra.mxu0 %v969
        %2908 = vmatprep.subr.mxu0 %v972
        %2909 = vmatpush1.msra.mxu0 %v971
        %2910 = vmatprep.subr.mxu0 %v974
        %2911 = vmatpush1.msra.mxu0 %v973
        %2912 = vmatprep.subr.mxu0 %v976
        %2913 = vmatpush1.msra.mxu0 %v975
        %2914 = vmatprep.subr.mxu0 %v978
        %2915 = vmatpush1.msra.mxu0 %v977
        %2916 = vmatprep.subr.mxu0 %v980
        %2917 = vmatpush1.msra.mxu0 %v979
        %2918 = vmatprep.subr.mxu0 %v982
        %2919 = vmatpush1.msra.mxu0 %v981
        %2920 = vmatprep.subr.mxu0 %v984
        %2921 = vmatpush1.msra.mxu0 %v983
        %2922 = vmatprep.subr.mxu0 %v986
        %2923 = vmatpush1.msra.mxu0 %v985
        %2924 = vmatprep.subr.mxu0 %v988
        %2925 = vmatpush1.msra.mxu0 %v987
        %2926 = vmatprep.subr.mxu0 %v990
        %2927 = vmatpush1.msra.mxu0 %v989
        %2928 = vmatprep.subr.mxu0 %v992
        %2929 = vmatpush1.msra.mxu0 %v991
        %2930 = vmatprep.subr.mxu0 %v994
        %2931 = vmatpush1.msra.mxu0 %v993
        %2932 = vmatprep.subr.mxu0 %v996
        %2933 = vmatpush1.msra.mxu0 %v995
        %2934 = vmatprep.subr.mxu0 %v998
        %2935 = vmatpush1.msra.mxu0 %v997
        %2936 = vmatprep.mubr.f32.mxu0 %v2871
        %2937 = vmatmul.mubr.f32.gmra.mrb[0].mxu0 %v2870
        %v2938 = vpop.f32.mrb[0].mxu0
        %v2939 = vadd.f32 0.0, %v2938
        %v2940 = vpop.f32.mrb[0].mxu0
        %v2941 = vadd.f32 0.0, %v2940
        %2942 = vdwg.mxu0
        %v2943 = vld [vmem:[%s9] sm:$0xff]
        %v2944 = vld [vmem:[%s9 + $0x8] sm:$0xff]
        %2945 = vmatprep.subr.mxu0 %v1073
        %2946 = vmatpush1.msra.mxu0 %v1072
        %2947 = vmatprep.subr.mxu0 %v1075
        %2948 = vmatpush1.msra.mxu0 %v1074
        %2949 = vmatprep.subr.mxu0 %v1077
        %2950 = vmatpush1.msra.mxu0 %v1076
        %2951 = vmatprep.subr.mxu0 %v1079
        %2952 = vmatpush1.msra.mxu0 %v1078
        %2953 = vmatprep.subr.mxu0 %v1081
        %2954 = vmatpush1.msra.mxu0 %v1080
        %2955 = vmatprep.subr.mxu0 %v1083
        %2956 = vmatpush1.msra.mxu0 %v1082
        %2957 = vmatprep.subr.mxu0 %v1085
        %2958 = vmatpush1.msra.mxu0 %v1084
        %2959 = vmatprep.subr.mxu0 %v1087
        %2960 = vmatpush1.msra.mxu0 %v1086
        %2961 = vmatprep.subr.mxu0 %v1089
        %2962 = vmatpush1.msra.mxu0 %v1088
        %2963 = vmatprep.subr.mxu0 %v1091
        %2964 = vmatpush1.msra.mxu0 %v1090
        %2965 = vmatprep.subr.mxu0 %v1093
        %2966 = vmatpush1.msra.mxu0 %v1092
        %2967 = vmatprep.subr.mxu0 %v1095
        %2968 = vmatpush1.msra.mxu0 %v1094
        %2969 = vmatprep.subr.mxu0 %v1097
        %2970 = vmatpush1.msra.mxu0 %v1096
        %2971 = vmatprep.subr.mxu0 %v1099
        %2972 = vmatpush1.msra.mxu0 %v1098
        %2973 = vmatprep.subr.mxu0 %v1101
        %2974 = vmatpush1.msra.mxu0 %v1100
        %2975 = vmatprep.subr.mxu0 %v1103
        %2976 = vmatpush1.msra.mxu0 %v1102
        %2977 = vmatprep.subr.mxu0 %v1105
        %2978 = vmatpush1.msra.mxu0 %v1104
        %2979 = vmatprep.subr.mxu0 %v1107
        %2980 = vmatpush1.msra.mxu0 %v1106
        %2981 = vmatprep.subr.mxu0 %v1109
        %2982 = vmatpush1.msra.mxu0 %v1108
        %2983 = vmatprep.subr.mxu0 %v1111
        %2984 = vmatpush1.msra.mxu0 %v1110
        %2985 = vmatprep.subr.mxu0 %v1113
        %2986 = vmatpush1.msra.mxu0 %v1112
        %2987 = vmatprep.subr.mxu0 %v1115
        %2988 = vmatpush1.msra.mxu0 %v1114
        %2989 = vmatprep.subr.mxu0 %v1117
        %2990 = vmatpush1.msra.mxu0 %v1116
        %2991 = vmatprep.subr.mxu0 %v1119
        %2992 = vmatpush1.msra.mxu0 %v1118
        %2993 = vmatprep.subr.mxu0 %v1121
        %2994 = vmatpush1.msra.mxu0 %v1120
        %2995 = vmatprep.subr.mxu0 %v1123
        %2996 = vmatpush1.msra.mxu0 %v1122
        %2997 = vmatprep.subr.mxu0 %v1125
        %2998 = vmatpush1.msra.mxu0 %v1124
        %2999 = vmatprep.subr.mxu0 %v1127
        %3000 = vmatpush1.msra.mxu0 %v1126
        %3001 = vmatprep.subr.mxu0 %v1129
        %3002 = vmatpush1.msra.mxu0 %v1128
        %3003 = vmatprep.subr.mxu0 %v1131
        %3004 = vmatpush1.msra.mxu0 %v1130
        %3005 = vmatprep.subr.mxu0 %v1133
        %3006 = vmatpush1.msra.mxu0 %v1132
        %3007 = vmatprep.subr.mxu0 %v1135
        %3008 = vmatpush1.msra.mxu0 %v1134
        %3009 = vmatprep.mubr.f32.mxu0 %v2871
        %3010 = vmatmul.mubr.f32.gmra.mrb[0].mxu0 %v2870
        %v3011 = vpop.f32.mrb[0].mxu0
        %v3012 = vadd.f32 0.0, %v3011
        %v3013 = vpop.f32.mrb[0].mxu0
        %v3014 = vadd.f32 0.0, %v3013
        %3015 = vdwg.mxu0
        %s3016 = scalar_lea.vmem %s9, 16
        %v3017 = vld [vmem:[%s3016] sm:$0xff]
        %v3018 = vld [vmem:[%s3016 + $0x8] sm:$0xff]
        %v3020 = vsel %vm1209, %v3017, 0
        %v3023 = vsel %vm1209, %v3018, 0
        %3025 = vmatprep.subr.mxu0 %v3014
        %3026 = vmatpush1.msra.mxu0 %v3012
        %3027 = vmatprep.subr.mxu0 0.0
        %3028 = vmatpush1.msra.mxu0 0.0
        %3029 = vmatprep.subr.mxu0 0.0
        %3030 = vmatpush1.msra.mxu0 0.0
        %3031 = vmatprep.subr.mxu0 0.0
        %3032 = vmatpush1.msra.mxu0 0.0
        %3033 = vmatprep.subr.mxu0 0.0
        %3034 = vmatpush1.msra.mxu0 0.0
        %3035 = vmatprep.subr.mxu0 0.0
        %3036 = vmatpush1.msra.mxu0 0.0
        %3037 = vmatprep.subr.mxu0 0.0
        %3038 = vmatpush1.msra.mxu0 0.0
        %3039 = vmatprep.subr.mxu0 0.0
        %3040 = vmatpush1.msra.mxu0 0.0
        %3041 = vmatprep.subr.mxu0 0.0
        %3042 = vmatpush1.msra.mxu0 0.0
        %3043 = vmatprep.subr.mxu0 0.0
        %3044 = vmatpush1.msra.mxu0 0.0
        %3045 = vmatprep.subr.mxu0 0.0
        %3046 = vmatpush1.msra.mxu0 0.0
        %3047 = vmatprep.subr.mxu0 0.0
        %3048 = vmatpush1.msra.mxu0 0.0
        %3049 = vmatprep.subr.mxu0 0.0
        %3050 = vmatpush1.msra.mxu0 0.0
        %3051 = vmatprep.subr.mxu0 0.0
        %3052 = vmatpush1.msra.mxu0 0.0
        %3053 = vmatprep.subr.mxu0 0.0
        %3054 = vmatpush1.msra.mxu0 0.0
        %3055 = vmatprep.subr.mxu0 0.0
        %3056 = vmatpush1.msra.mxu0 0.0
        %3057 = vmatprep.subr.mxu0 0.0
        %3058 = vmatpush1.msra.mxu0 0.0
        %3059 = vmatprep.subr.mxu0 0.0
        %3060 = vmatpush1.msra.mxu0 0.0
        %3061 = vmatprep.subr.mxu0 0.0
        %3062 = vmatpush1.msra.mxu0 0.0
        %3063 = vmatprep.subr.mxu0 0.0
        %3064 = vmatpush1.msra.mxu0 0.0
        %3065 = vmatprep.subr.mxu0 0.0
        %3066 = vmatpush1.msra.mxu0 0.0
        %3067 = vmatprep.subr.mxu0 0.0
        %3068 = vmatpush1.msra.mxu0 0.0
        %3069 = vmatprep.subr.mxu0 0.0
        %3070 = vmatpush1.msra.mxu0 0.0
        %3071 = vmatprep.subr.mxu0 0.0
        %3072 = vmatpush1.msra.mxu0 0.0
        %3073 = vmatprep.subr.mxu0 0.0
        %3074 = vmatpush1.msra.mxu0 0.0
        %3075 = vmatprep.subr.mxu0 0.0
        %3076 = vmatpush1.msra.mxu0 0.0
        %3077 = vmatprep.subr.mxu0 0.0
        %3078 = vmatpush1.msra.mxu0 0.0
        %3079 = vmatprep.subr.mxu0 0.0
        %3080 = vmatpush1.msra.mxu0 0.0
        %3081 = vmatprep.subr.mxu0 0.0
        %3082 = vmatpush1.msra.mxu0 0.0
        %3083 = vmatprep.subr.mxu0 0.0
        %3084 = vmatpush1.msra.mxu0 0.0
        %3085 = vmatprep.subr.mxu0 0.0
        %3086 = vmatpush1.msra.mxu0 0.0
        %3087 = vmatprep.subr.mxu0 0.0
        %3088 = vmatpush1.msra.mxu0 0.0
        %3089 = vmatprep.mubr.f32.mxu0 0.0
        %3090 = vmatmul.mubr.f32.gmra.mrb[0].mxu0 %v3020
        %v3091 = vpop.f32.mrb[0].mxu0
        %v3092 = vadd.f32 0.0, %v3091
        %v3093 = vpop.f32.mrb[0].mxu0
        %v3094 = vadd.f32 0.0, %v3093
        %3095 = vmatprep.mubr.f32.mxu0 0.0
        %3096 = vmatmul.mubr.f32.gmra.mrb[0].mxu0 %v3023
        %v3097 = vpop.f32.mrb[0].mxu0
        %v3098 = vadd.f32 0.0, %v3097
        %v3099 = vpop.f32.mrb[0].mxu0
        %v3100 = vadd.f32 0.0, %v3099
        %3101 = vdwg.mxu0
        %v3103 = vsel %vm1209, %v2943, 0
        %v3106 = vsel %vm1209, %v2944, 0
        %3108 = vmatprep.subr.mxu0 %v2941
        %3109 = vmatpush1.msra.mxu0 %v2939
        %3110 = vmatprep.subr.mxu0 0.0
        %3111 = vmatpush1.msra.mxu0 0.0
        %3112 = vmatprep.subr.mxu0 0.0
        %3113 = vmatpush1.msra.mxu0 0.0
        %3114 = vmatprep.subr.mxu0 0.0
        %3115 = vmatpush1.msra.mxu0 0.0
        %3116 = vmatprep.subr.mxu0 0.0
        %3117 = vmatpush1.msra.mxu0 0.0
        %3118 = vmatprep.subr.mxu0 0.0
        %3119 = vmatpush1.msra.mxu0 0.0
        %3120 = vmatprep.subr.mxu0 0.0
        %3121 = vmatpush1.msra.mxu0 0.0
        %3122 = vmatprep.subr.mxu0 0.0
        %3123 = vmatpush1.msra.mxu0 0.0
        %3124 = vmatprep.subr.mxu0 0.0
        %3125 = vmatpush1.msra.mxu0 0.0
        %3126 = vmatprep.subr.mxu0 0.0
        %3127 = vmatpush1.msra.mxu0 0.0
        %3128 = vmatprep.subr.mxu0 0.0
        %3129 = vmatpush1.msra.mxu0 0.0
        %3130 = vmatprep.subr.mxu0 0.0
        %3131 = vmatpush1.msra.mxu0 0.0
        %3132 = vmatprep.subr.mxu0 0.0
        %3133 = vmatpush1.msra.mxu0 0.0
        %3134 = vmatprep.subr.mxu0 0.0
        %3135 = vmatpush1.msra.mxu0 0.0
        %3136 = vmatprep.subr.mxu0 0.0
        %3137 = vmatpush1.msra.mxu0 0.0
        %3138 = vmatprep.subr.mxu0 0.0
        %3139 = vmatpush1.msra.mxu0 0.0
        %3140 = vmatprep.subr.mxu0 0.0
        %3141 = vmatpush1.msra.mxu0 0.0
        %3142 = vmatprep.subr.mxu0 0.0
        %3143 = vmatpush1.msra.mxu0 0.0
        %3144 = vmatprep.subr.mxu0 0.0
        %3145 = vmatpush1.msra.mxu0 0.0
        %3146 = vmatprep.subr.mxu0 0.0
        %3147 = vmatpush1.msra.mxu0 0.0
        %3148 = vmatprep.subr.mxu0 0.0
        %3149 = vmatpush1.msra.mxu0 0.0
        %3150 = vmatprep.subr.mxu0 0.0
        %3151 = vmatpush1.msra.mxu0 0.0
        %3152 = vmatprep.subr.mxu0 0.0
        %3153 = vmatpush1.msra.mxu0 0.0
        %3154 = vmatprep.subr.mxu0 0.0
        %3155 = vmatpush1.msra.mxu0 0.0
        %3156 = vmatprep.subr.mxu0 0.0
        %3157 = vmatpush1.msra.mxu0 0.0
        %3158 = vmatprep.subr.mxu0 0.0
        %3159 = vmatpush1.msra.mxu0 0.0
        %3160 = vmatprep.subr.mxu0 0.0
        %3161 = vmatpush1.msra.mxu0 0.0
        %3162 = vmatprep.subr.mxu0 0.0
        %3163 = vmatpush1.msra.mxu0 0.0
        %3164 = vmatprep.subr.mxu0 0.0
        %3165 = vmatpush1.msra.mxu0 0.0
        %3166 = vmatprep.subr.mxu0 0.0
        %3167 = vmatpush1.msra.mxu0 0.0
        %3168 = vmatprep.subr.mxu0 0.0
        %3169 = vmatpush1.msra.mxu0 0.0
        %3170 = vmatprep.subr.mxu0 0.0
        %3171 = vmatpush1.msra.mxu0 0.0
        %3172 = vmatprep.mubr.f32.mxu0 0.0
        %3173 = vmatmul.mubr.f32.gmra.mrb[0].mxu0 %v3103
        %v3174 = vpop.f32.mrb[0].mxu0
        %v3175 = vadd.f32 %v3092, %v3174
        %v3176 = vpop.f32.mrb[0].mxu0
        %v3177 = vadd.f32 %v3094, %v3176
        %3178 = vmatprep.mubr.f32.mxu0 0.0
        %3179 = vmatmul.mubr.f32.gmra.mrb[0].mxu0 %v3106
        %v3180 = vpop.f32.mrb[0].mxu0
        %v3181 = vadd.f32 %v3098, %v3180
        %v3182 = vpop.f32.mrb[0].mxu0
        %v3183 = vadd.f32 %v3100, %v3182
        %3184 = vdwg.mxu0
        %3185 = vmatprep.subr.mxu0 %v1360
        %3186 = vmatpush1.msra.mxu0 %v1359
        %3187 = vmatprep.subr.mxu0 %v1362
        %3188 = vmatpush1.msra.mxu0 %v1361
        %3189 = vmatprep.subr.mxu0 %v1364
        %3190 = vmatpush1.msra.mxu0 %v1363
        %3191 = vmatprep.subr.mxu0 %v1366
        %3192 = vmatpush1.msra.mxu0 %v1365
        %3193 = vmatprep.subr.mxu0 %v1368
        %3194 = vmatpush1.msra.mxu0 %v1367
        %3195 = vmatprep.subr.mxu0 %v1370
        %3196 = vmatpush1.msra.mxu0 %v1369
        %3197 = vmatprep.subr.mxu0 %v1372
        %3198 = vmatpush1.msra.mxu0 %v1371
        %3199 = vmatprep.subr.mxu0 %v1374
        %3200 = vmatpush1.msra.mxu0 %v1373
        %3201 = vmatprep.subr.mxu0 %v1376
        %3202 = vmatpush1.msra.mxu0 %v1375
        %3203 = vmatprep.subr.mxu0 %v1378
        %3204 = vmatpush1.msra.mxu0 %v1377
        %3205 = vmatprep.subr.mxu0 %v1380
        %3206 = vmatpush1.msra.mxu0 %v1379
        %3207 = vmatprep.subr.mxu0 %v1382
        %3208 = vmatpush1.msra.mxu0 %v1381
        %3209 = vmatprep.subr.mxu0 %v1384
        %3210 = vmatpush1.msra.mxu0 %v1383
        %3211 = vmatprep.subr.mxu0 %v1386
        %3212 = vmatpush1.msra.mxu0 %v1385
        %3213 = vmatprep.subr.mxu0 %v1388
        %3214 = vmatpush1.msra.mxu0 %v1387
        %3215 = vmatprep.subr.mxu0 %v1390
        %3216 = vmatpush1.msra.mxu0 %v1389
        %3217 = vmatprep.subr.mxu0 %v1392
        %3218 = vmatpush1.msra.mxu0 %v1391
        %3219 = vmatprep.subr.mxu0 %v1394
        %3220 = vmatpush1.msra.mxu0 %v1393
        %3221 = vmatprep.subr.mxu0 %v1396
        %3222 = vmatpush1.msra.mxu0 %v1395
        %3223 = vmatprep.subr.mxu0 %v1398
        %3224 = vmatpush1.msra.mxu0 %v1397
        %3225 = vmatprep.subr.mxu0 %v1400
        %3226 = vmatpush1.msra.mxu0 %v1399
        %3227 = vmatprep.subr.mxu0 %v1402
        %3228 = vmatpush1.msra.mxu0 %v1401
        %3229 = vmatprep.subr.mxu0 %v1404
        %3230 = vmatpush1.msra.mxu0 %v1403
        %3231 = vmatprep.subr.mxu0 %v1406
        %3232 = vmatpush1.msra.mxu0 %v1405
        %3233 = vmatprep.subr.mxu0 %v1408
        %3234 = vmatpush1.msra.mxu0 %v1407
        %3235 = vmatprep.subr.mxu0 %v1410
        %3236 = vmatpush1.msra.mxu0 %v1409
        %3237 = vmatprep.subr.mxu0 %v1412
        %3238 = vmatpush1.msra.mxu0 %v1411
        %3239 = vmatprep.subr.mxu0 %v1414
        %3240 = vmatpush1.msra.mxu0 %v1413
        %3241 = vmatprep.subr.mxu0 %v1416
        %3242 = vmatpush1.msra.mxu0 %v1415
        %3243 = vmatprep.subr.mxu0 %v1418
        %3244 = vmatpush1.msra.mxu0 %v1417
        %3245 = vmatprep.subr.mxu0 %v1420
        %3246 = vmatpush1.msra.mxu0 %v1419
        %3247 = vmatprep.subr.mxu0 %v1422
        %3248 = vmatpush1.msra.mxu0 %v1421
        %3249 = vmatprep.mubr.f32.mxu0 %v2871
        %3250 = vmatmul.mubr.f32.gmra.mrb[0].mxu0 %v2870
        %v3251 = vpop.f32.mrb[0].mxu0
        %v3252 = vadd.f32 0.0, %v3251
        %v3253 = vpop.f32.mrb[0].mxu0
        %v3254 = vadd.f32 0.0, %v3253
        %3255 = vdwg.mxu0
        %s3256 = scalar_lea.vmem %s9, 32
        %v3257 = vld [vmem:[%s3256] sm:$0xff]
        %v3258 = vld [vmem:[%s3256 + $0x8] sm:$0xff]
        %v3260 = vsel %vm1209, %v3257, 0
        %v3263 = vsel %vm1209, %v3258, 0
        %3265 = vmatprep.subr.mxu0 %v3254
        %3266 = vmatpush1.msra.mxu0 %v3252
        %3267 = vmatprep.subr.mxu0 0.0
        %3268 = vmatpush1.msra.mxu0 0.0
        %3269 = vmatprep.subr.mxu0 0.0
        %3270 = vmatpush1.msra.mxu0 0.0
        %3271 = vmatprep.subr.mxu0 0.0
        %3272 = vmatpush1.msra.mxu0 0.0
        %3273 = vmatprep.subr.mxu0 0.0
        %3274 = vmatpush1.msra.mxu0 0.0
        %3275 = vmatprep.subr.mxu0 0.0
        %3276 = vmatpush1.msra.mxu0 0.0
        %3277 = vmatprep.subr.mxu0 0.0
        %3278 = vmatpush1.msra.mxu0 0.0
        %3279 = vmatprep.subr.mxu0 0.0
        %3280 = vmatpush1.msra.mxu0 0.0
        %3281 = vmatprep.subr.mxu0 0.0
        %3282 = vmatpush1.msra.mxu0 0.0
        %3283 = vmatprep.subr.mxu0 0.0
        %3284 = vmatpush1.msra.mxu0 0.0
        %3285 = vmatprep.subr.mxu0 0.0
        %3286 = vmatpush1.msra.mxu0 0.0
        %3287 = vmatprep.subr.mxu0 0.0
        %3288 = vmatpush1.msra.mxu0 0.0
        %3289 = vmatprep.subr.mxu0 0.0
        %3290 = vmatpush1.msra.mxu0 0.0
        %3291 = vmatprep.subr.mxu0 0.0
        %3292 = vmatpush1.msra.mxu0 0.0
        %3293 = vmatprep.subr.mxu0 0.0
        %3294 = vmatpush1.msra.mxu0 0.0
        %3295 = vmatprep.subr.mxu0 0.0
        %3296 = vmatpush1.msra.mxu0 0.0
        %3297 = vmatprep.subr.mxu0 0.0
        %3298 = vmatpush1.msra.mxu0 0.0
        %3299 = vmatprep.subr.mxu0 0.0
        %3300 = vmatpush1.msra.mxu0 0.0
        %3301 = vmatprep.subr.mxu0 0.0
        %3302 = vmatpush1.msra.mxu0 0.0
        %3303 = vmatprep.subr.mxu0 0.0
        %3304 = vmatpush1.msra.mxu0 0.0
        %3305 = vmatprep.subr.mxu0 0.0
        %3306 = vmatpush1.msra.mxu0 0.0
        %3307 = vmatprep.subr.mxu0 0.0
        %3308 = vmatpush1.msra.mxu0 0.0
        %3309 = vmatprep.subr.mxu0 0.0
        %3310 = vmatpush1.msra.mxu0 0.0
        %3311 = vmatprep.subr.mxu0 0.0
        %3312 = vmatpush1.msra.mxu0 0.0
        %3313 = vmatprep.subr.mxu0 0.0
        %3314 = vmatpush1.msra.mxu0 0.0
        %3315 = vmatprep.subr.mxu0 0.0
        %3316 = vmatpush1.msra.mxu0 0.0
        %3317 = vmatprep.subr.mxu0 0.0
        %3318 = vmatpush1.msra.mxu0 0.0
        %3319 = vmatprep.subr.mxu0 0.0
        %3320 = vmatpush1.msra.mxu0 0.0
        %3321 = vmatprep.subr.mxu0 0.0
        %3322 = vmatpush1.msra.mxu0 0.0
        %3323 = vmatprep.subr.mxu0 0.0
        %3324 = vmatpush1.msra.mxu0 0.0
        %3325 = vmatprep.subr.mxu0 0.0
        %3326 = vmatpush1.msra.mxu0 0.0
        %3327 = vmatprep.subr.mxu0 0.0
        %3328 = vmatpush1.msra.mxu0 0.0
        %3329 = vmatprep.mubr.f32.mxu0 0.0
        %3330 = vmatmul.mubr.f32.gmra.mrb[0].mxu0 %v3260
        %v3331 = vpop.f32.mrb[0].mxu0
        %v3332 = vadd.f32 0.0, %v3331
        %v3333 = vpop.f32.mrb[0].mxu0
        %v3334 = vadd.f32 0.0, %v3333
        %3335 = vmatprep.mubr.f32.mxu0 0.0
        %3336 = vmatmul.mubr.f32.gmra.mrb[0].mxu0 %v3263
        %v3337 = vpop.f32.mrb[0].mxu0
        %v3338 = vadd.f32 0.0, %v3337
        %v3339 = vpop.f32.mrb[0].mxu0
        %v3340 = vadd.f32 0.0, %v3339
        %3341 = vdwg.mxu0
        %v3342 = vadd.f32 %v3175, %v3332
        %v3343 = vadd.f32 %v3177, %v3334
        %v3344 = vadd.f32 %v3181, %v3338
        %v3345 = vadd.f32 %v3183, %v3340
        %3346 = vmatprep.subr.mxu0 %v1574
        %3347 = vmatpush1.msra.mxu0 %v1573
        %3348 = vmatprep.subr.mxu0 %v1576
        %3349 = vmatpush1.msra.mxu0 %v1575
        %3350 = vmatprep.subr.mxu0 %v1578
        %3351 = vmatpush1.msra.mxu0 %v1577
        %3352 = vmatprep.subr.mxu0 %v1580
        %3353 = vmatpush1.msra.mxu0 %v1579
        %3354 = vmatprep.subr.mxu0 %v1582
        %3355 = vmatpush1.msra.mxu0 %v1581
        %3356 = vmatprep.subr.mxu0 %v1584
        %3357 = vmatpush1.msra.mxu0 %v1583
        %3358 = vmatprep.subr.mxu0 %v1586
        %3359 = vmatpush1.msra.mxu0 %v1585
        %3360 = vmatprep.subr.mxu0 %v1588
        %3361 = vmatpush1.msra.mxu0 %v1587
        %3362 = vmatprep.subr.mxu0 %v1590
        %3363 = vmatpush1.msra.mxu0 %v1589
        %3364 = vmatprep.subr.mxu0 %v1592
        %3365 = vmatpush1.msra.mxu0 %v1591
        %3366 = vmatprep.subr.mxu0 %v1594
        %3367 = vmatpush1.msra.mxu0 %v1593
        %3368 = vmatprep.subr.mxu0 %v1596
        %3369 = vmatpush1.msra.mxu0 %v1595
        %3370 = vmatprep.subr.mxu0 %v1598
        %3371 = vmatpush1.msra.mxu0 %v1597
        %3372 = vmatprep.subr.mxu0 %v1600
        %3373 = vmatpush1.msra.mxu0 %v1599
        %3374 = vmatprep.subr.mxu0 %v1602
        %3375 = vmatpush1.msra.mxu0 %v1601
        %3376 = vmatprep.subr.mxu0 %v1604
        %3377 = vmatpush1.msra.mxu0 %v1603
        %3378 = vmatprep.subr.mxu0 %v1606
        %3379 = vmatpush1.msra.mxu0 %v1605
        %3380 = vmatprep.subr.mxu0 %v1608
        %3381 = vmatpush1.msra.mxu0 %v1607
        %3382 = vmatprep.subr.mxu0 %v1610
        %3383 = vmatpush1.msra.mxu0 %v1609
        %3384 = vmatprep.subr.mxu0 %v1612
        %3385 = vmatpush1.msra.mxu0 %v1611
        %3386 = vmatprep.subr.mxu0 %v1614
        %3387 = vmatpush1.msra.mxu0 %v1613
        %3388 = vmatprep.subr.mxu0 %v1616
        %3389 = vmatpush1.msra.mxu0 %v1615
        %3390 = vmatprep.subr.mxu0 %v1618
        %3391 = vmatpush1.msra.mxu0 %v1617
        %3392 = vmatprep.subr.mxu0 %v1620
        %3393 = vmatpush1.msra.mxu0 %v1619
        %3394 = vmatprep.subr.mxu0 %v1622
        %3395 = vmatpush1.msra.mxu0 %v1621
        %3396 = vmatprep.subr.mxu0 %v1624
        %3397 = vmatpush1.msra.mxu0 %v1623
        %3398 = vmatprep.subr.mxu0 %v1626
        %3399 = vmatpush1.msra.mxu0 %v1625
        %3400 = vmatprep.subr.mxu0 %v1628
        %3401 = vmatpush1.msra.mxu0 %v1627
        %3402 = vmatprep.subr.mxu0 %v1630
        %3403 = vmatpush1.msra.mxu0 %v1629
        %3404 = vmatprep.subr.mxu0 %v1632
        %3405 = vmatpush1.msra.mxu0 %v1631
        %3406 = vmatprep.subr.mxu0 %v1634
        %3407 = vmatpush1.msra.mxu0 %v1633
        %3408 = vmatprep.subr.mxu0 %v1636
        %3409 = vmatpush1.msra.mxu0 %v1635
        %3410 = vmatprep.mubr.f32.mxu0 %v2871
        %3411 = vmatmul.mubr.f32.gmra.mrb[0].mxu0 %v2870
        %v3412 = vpop.f32.mrb[0].mxu0
        %v3413 = vadd.f32 0.0, %v3412
        %v3414 = vpop.f32.mrb[0].mxu0
        %v3415 = vadd.f32 0.0, %v3414
        %3416 = vdwg.mxu0
        %s3417 = scalar_lea.vmem %s9, 48
        %v3418 = vld [vmem:[%s3417] sm:$0xff]
        %v3419 = vld [vmem:[%s3417 + $0x8] sm:$0xff]
        %v3421 = vsel %vm1209, %v3418, 0
        %v3424 = vsel %vm1209, %v3419, 0
        %3426 = vmatprep.subr.mxu0 %v3415
        %3427 = vmatpush1.msra.mxu0 %v3413
        %3428 = vmatprep.subr.mxu0 0.0
        %3429 = vmatpush1.msra.mxu0 0.0
        %3430 = vmatprep.subr.mxu0 0.0
        %3431 = vmatpush1.msra.mxu0 0.0
        %3432 = vmatprep.subr.mxu0 0.0
        %3433 = vmatpush1.msra.mxu0 0.0
        %3434 = vmatprep.subr.mxu0 0.0
        %3435 = vmatpush1.msra.mxu0 0.0
        %3436 = vmatprep.subr.mxu0 0.0
        %3437 = vmatpush1.msra.mxu0 0.0
        %3438 = vmatprep.subr.mxu0 0.0
        %3439 = vmatpush1.msra.mxu0 0.0
        %3440 = vmatprep.subr.mxu0 0.0
        %3441 = vmatpush1.msra.mxu0 0.0
        %3442 = vmatprep.subr.mxu0 0.0
        %3443 = vmatpush1.msra.mxu0 0.0
        %3444 = vmatprep.subr.mxu0 0.0
        %3445 = vmatpush1.msra.mxu0 0.0
        %3446 = vmatprep.subr.mxu0 0.0
        %3447 = vmatpush1.msra.mxu0 0.0
        %3448 = vmatprep.subr.mxu0 0.0
        %3449 = vmatpush1.msra.mxu0 0.0
        %3450 = vmatprep.subr.mxu0 0.0
        %3451 = vmatpush1.msra.mxu0 0.0
        %3452 = vmatprep.subr.mxu0 0.0
        %3453 = vmatpush1.msra.mxu0 0.0
        %3454 = vmatprep.subr.mxu0 0.0
        %3455 = vmatpush1.msra.mxu0 0.0
        %3456 = vmatprep.subr.mxu0 0.0
        %3457 = vmatpush1.msra.mxu0 0.0
        %3458 = vmatprep.subr.mxu0 0.0
        %3459 = vmatpush1.msra.mxu0 0.0
        %3460 = vmatprep.subr.mxu0 0.0
        %3461 = vmatpush1.msra.mxu0 0.0
        %3462 = vmatprep.subr.mxu0 0.0
        %3463 = vmatpush1.msra.mxu0 0.0
        %3464 = vmatprep.subr.mxu0 0.0
        %3465 = vmatpush1.msra.mxu0 0.0
        %3466 = vmatprep.subr.mxu0 0.0
        %3467 = vmatpush1.msra.mxu0 0.0
        %3468 = vmatprep.subr.mxu0 0.0
        %3469 = vmatpush1.msra.mxu0 0.0
        %3470 = vmatprep.subr.mxu0 0.0
        %3471 = vmatpush1.msra.mxu0 0.0
        %3472 = vmatprep.subr.mxu0 0.0
        %3473 = vmatpush1.msra.mxu0 0.0
        %3474 = vmatprep.subr.mxu0 0.0
        %3475 = vmatpush1.msra.mxu0 0.0
        %3476 = vmatprep.subr.mxu0 0.0
        %3477 = vmatpush1.msra.mxu0 0.0
        %3478 = vmatprep.subr.mxu0 0.0
        %3479 = vmatpush1.msra.mxu0 0.0
        %3480 = vmatprep.subr.mxu0 0.0
        %3481 = vmatpush1.msra.mxu0 0.0
        %3482 = vmatprep.subr.mxu0 0.0
        %3483 = vmatpush1.msra.mxu0 0.0
        %3484 = vmatprep.subr.mxu0 0.0
        %3485 = vmatpush1.msra.mxu0 0.0
        %3486 = vmatprep.subr.mxu0 0.0
        %3487 = vmatpush1.msra.mxu0 0.0
        %3488 = vmatprep.subr.mxu0 0.0
        %3489 = vmatpush1.msra.mxu0 0.0
        %3490 = vmatprep.mubr.f32.mxu0 0.0
        %3491 = vmatmul.mubr.f32.gmra.mrb[0].mxu0 %v3421
        %v3492 = vpop.f32.mrb[0].mxu0
        %v3493 = vadd.f32 0.0, %v3492
        %v3494 = vpop.f32.mrb[0].mxu0
        %v3495 = vadd.f32 0.0, %v3494
        %3496 = vmatprep.mubr.f32.mxu0 0.0
        %3497 = vmatmul.mubr.f32.gmra.mrb[0].mxu0 %v3424
        %v3498 = vpop.f32.mrb[0].mxu0
        %v3499 = vadd.f32 0.0, %v3498
        %v3500 = vpop.f32.mrb[0].mxu0
        %v3501 = vadd.f32 0.0, %v3500
        %3502 = vdwg.mxu0
        %v3503 = vadd.f32 %v3342, %v3493
        %v3504 = vadd.f32 %v3343, %v3495
        %v3505 = vadd.f32 %v3344, %v3499
        %v3506 = vadd.f32 %v3345, %v3501
        %3507 = vmatprep.subr.mxu0 %v1788
        %3508 = vmatpush1.msra.mxu0 %v1787
        %3509 = vmatprep.subr.mxu0 %v1790
        %3510 = vmatpush1.msra.mxu0 %v1789
        %3511 = vmatprep.subr.mxu0 %v1792
        %3512 = vmatpush1.msra.mxu0 %v1791
        %3513 = vmatprep.subr.mxu0 %v1794
        %3514 = vmatpush1.msra.mxu0 %v1793
        %3515 = vmatprep.subr.mxu0 %v1796
        %3516 = vmatpush1.msra.mxu0 %v1795
        %3517 = vmatprep.subr.mxu0 %v1798
        %3518 = vmatpush1.msra.mxu0 %v1797
        %3519 = vmatprep.subr.mxu0 %v1800
        %3520 = vmatpush1.msra.mxu0 %v1799
        %3521 = vmatprep.subr.mxu0 %v1802
        %3522 = vmatpush1.msra.mxu0 %v1801
        %3523 = vmatprep.subr.mxu0 %v1804
        %3524 = vmatpush1.msra.mxu0 %v1803
        %3525 = vmatprep.subr.mxu0 %v1806
        %3526 = vmatpush1.msra.mxu0 %v1805
        %3527 = vmatprep.subr.mxu0 %v1808
        %3528 = vmatpush1.msra.mxu0 %v1807
        %3529 = vmatprep.subr.mxu0 %v1810
        %3530 = vmatpush1.msra.mxu0 %v1809
        %3531 = vmatprep.subr.mxu0 %v1812
        %3532 = vmatpush1.msra.mxu0 %v1811
        %3533 = vmatprep.subr.mxu0 %v1814
        %3534 = vmatpush1.msra.mxu0 %v1813
        %3535 = vmatprep.subr.mxu0 %v1816
        %3536 = vmatpush1.msra.mxu0 %v1815
        %3537 = vmatprep.subr.mxu0 %v1818
        %3538 = vmatpush1.msra.mxu0 %v1817
        %3539 = vmatprep.subr.mxu0 %v1820
        %3540 = vmatpush1.msra.mxu0 %v1819
        %3541 = vmatprep.subr.mxu0 %v1822
        %3542 = vmatpush1.msra.mxu0 %v1821
        %3543 = vmatprep.subr.mxu0 %v1824
        %3544 = vmatpush1.msra.mxu0 %v1823
        %3545 = vmatprep.subr.mxu0 %v1826
        %3546 = vmatpush1.msra.mxu0 %v1825
        %3547 = vmatprep.subr.mxu0 %v1828
        %3548 = vmatpush1.msra.mxu0 %v1827
        %3549 = vmatprep.subr.mxu0 %v1830
        %3550 = vmatpush1.msra.mxu0 %v1829
        %3551 = vmatprep.subr.mxu0 %v1832
        %3552 = vmatpush1.msra.mxu0 %v1831
        %3553 = vmatprep.subr.mxu0 %v1834
        %3554 = vmatpush1.msra.mxu0 %v1833
        %3555 = vmatprep.subr.mxu0 %v1836
        %3556 = vmatpush1.msra.mxu0 %v1835
        %3557 = vmatprep.subr.mxu0 %v1838
        %3558 = vmatpush1.msra.mxu0 %v1837
        %3559 = vmatprep.subr.mxu0 %v1840
        %3560 = vmatpush1.msra.mxu0 %v1839
        %3561 = vmatprep.subr.mxu0 %v1842
        %3562 = vmatpush1.msra.mxu0 %v1841
        %3563 = vmatprep.subr.mxu0 %v1844
        %3564 = vmatpush1.msra.mxu0 %v1843
        %3565 = vmatprep.subr.mxu0 %v1846
        %3566 = vmatpush1.msra.mxu0 %v1845
        %3567 = vmatprep.subr.mxu0 %v1848
        %3568 = vmatpush1.msra.mxu0 %v1847
        %3569 = vmatprep.subr.mxu0 %v1850
        %3570 = vmatpush1.msra.mxu0 %v1849
        %3571 = vmatprep.mubr.f32.mxu0 %v2871
        %3572 = vmatmul.mubr.f32.gmra.mrb[0].mxu0 %v2870
        %v3573 = vpop.f32.mrb[0].mxu0
        %v3574 = vadd.f32 0.0, %v3573
        %v3575 = vpop.f32.mrb[0].mxu0
        %v3576 = vadd.f32 0.0, %v3575
        %3577 = vdwg.mxu0
        %s3578 = scalar_lea.vmem %s9, 64
        %v3579 = vld [vmem:[%s3578] sm:$0xff]
        %v3580 = vld [vmem:[%s3578 + $0x8] sm:$0xff]
        %v3582 = vsel %vm1209, %v3579, 0
        %v3585 = vsel %vm1209, %v3580, 0
        %3587 = vmatprep.subr.mxu0 %v3576
        %3588 = vmatpush1.msra.mxu0 %v3574
        %3589 = vmatprep.subr.mxu0 0.0
        %3590 = vmatpush1.msra.mxu0 0.0
        %3591 = vmatprep.subr.mxu0 0.0
        %3592 = vmatpush1.msra.mxu0 0.0
        %3593 = vmatprep.subr.mxu0 0.0
        %3594 = vmatpush1.msra.mxu0 0.0
        %3595 = vmatprep.subr.mxu0 0.0
        %3596 = vmatpush1.msra.mxu0 0.0
        %3597 = vmatprep.subr.mxu0 0.0
        %3598 = vmatpush1.msra.mxu0 0.0
        %3599 = vmatprep.subr.mxu0 0.0
        %3600 = vmatpush1.msra.mxu0 0.0
        %3601 = vmatprep.subr.mxu0 0.0
        %3602 = vmatpush1.msra.mxu0 0.0
        %3603 = vmatprep.subr.mxu0 0.0
        %3604 = vmatpush1.msra.mxu0 0.0
        %3605 = vmatprep.subr.mxu0 0.0
        %3606 = vmatpush1.msra.mxu0 0.0
        %3607 = vmatprep.subr.mxu0 0.0
        %3608 = vmatpush1.msra.mxu0 0.0
        %3609 = vmatprep.subr.mxu0 0.0
        %3610 = vmatpush1.msra.mxu0 0.0
        %3611 = vmatprep.subr.mxu0 0.0
        %3612 = vmatpush1.msra.mxu0 0.0
        %3613 = vmatprep.subr.mxu0 0.0
        %3614 = vmatpush1.msra.mxu0 0.0
        %3615 = vmatprep.subr.mxu0 0.0
        %3616 = vmatpush1.msra.mxu0 0.0
        %3617 = vmatprep.subr.mxu0 0.0
        %3618 = vmatpush1.msra.mxu0 0.0
        %3619 = vmatprep.subr.mxu0 0.0
        %3620 = vmatpush1.msra.mxu0 0.0
        %3621 = vmatprep.subr.mxu0 0.0
        %3622 = vmatpush1.msra.mxu0 0.0
        %3623 = vmatprep.subr.mxu0 0.0
        %3624 = vmatpush1.msra.mxu0 0.0
        %3625 = vmatprep.subr.mxu0 0.0
        %3626 = vmatpush1.msra.mxu0 0.0
        %3627 = vmatprep.subr.mxu0 0.0
        %3628 = vmatpush1.msra.mxu0 0.0
        %3629 = vmatprep.subr.mxu0 0.0
        %3630 = vmatpush1.msra.mxu0 0.0
        %3631 = vmatprep.subr.mxu0 0.0
        %3632 = vmatpush1.msra.mxu0 0.0
        %3633 = vmatprep.subr.mxu0 0.0
        %3634 = vmatpush1.msra.mxu0 0.0
        %3635 = vmatprep.subr.mxu0 0.0
        %3636 = vmatpush1.msra.mxu0 0.0
        %3637 = vmatprep.subr.mxu0 0.0
        %3638 = vmatpush1.msra.mxu0 0.0
        %3639 = vmatprep.subr.mxu0 0.0
        %3640 = vmatpush1.msra.mxu0 0.0
        %3641 = vmatprep.subr.mxu0 0.0
        %3642 = vmatpush1.msra.mxu0 0.0
        %3643 = vmatprep.subr.mxu0 0.0
        %3644 = vmatpush1.msra.mxu0 0.0
        %3645 = vmatprep.subr.mxu0 0.0
        %3646 = vmatpush1.msra.mxu0 0.0
        %3647 = vmatprep.subr.mxu0 0.0
        %3648 = vmatpush1.msra.mxu0 0.0
        %3649 = vmatprep.subr.mxu0 0.0
        %3650 = vmatpush1.msra.mxu0 0.0
        %3651 = vmatprep.mubr.f32.mxu0 0.0
        %3652 = vmatmul.mubr.f32.gmra.mrb[0].mxu0 %v3582
        %v3653 = vpop.f32.mrb[0].mxu0
        %v3654 = vadd.f32 0.0, %v3653
        %v3655 = vpop.f32.mrb[0].mxu0
        %v3656 = vadd.f32 0.0, %v3655
        %3657 = vmatprep.mubr.f32.mxu0 0.0
        %3658 = vmatmul.mubr.f32.gmra.mrb[0].mxu0 %v3585
        %v3659 = vpop.f32.mrb[0].mxu0
        %v3660 = vadd.f32 0.0, %v3659
        %v3661 = vpop.f32.mrb[0].mxu0
        %v3662 = vadd.f32 0.0, %v3661
        %3663 = vdwg.mxu0
        %v3664 = vadd.f32 %v3503, %v3654
        %v3665 = vadd.f32 %v3504, %v3656
        %v3666 = vadd.f32 %v3505, %v3660
        %v3667 = vadd.f32 %v3506, %v3662
        %3668 = vmatprep.subr.mxu0 %v2002
        %3669 = vmatpush1.msra.mxu0 %v2001
        %3670 = vmatprep.subr.mxu0 %v2004
        %3671 = vmatpush1.msra.mxu0 %v2003
        %3672 = vmatprep.subr.mxu0 %v2006
        %3673 = vmatpush1.msra.mxu0 %v2005
        %3674 = vmatprep.subr.mxu0 %v2008
        %3675 = vmatpush1.msra.mxu0 %v2007
        %3676 = vmatprep.subr.mxu0 %v2010
        %3677 = vmatpush1.msra.mxu0 %v2009
        %3678 = vmatprep.subr.mxu0 %v2012
        %3679 = vmatpush1.msra.mxu0 %v2011
        %3680 = vmatprep.subr.mxu0 %v2014
        %3681 = vmatpush1.msra.mxu0 %v2013
        %3682 = vmatprep.subr.mxu0 %v2016
        %3683 = vmatpush1.msra.mxu0 %v2015
        %3684 = vmatprep.subr.mxu0 %v2018
        %3685 = vmatpush1.msra.mxu0 %v2017
        %3686 = vmatprep.subr.mxu0 %v2020
        %3687 = vmatpush1.msra.mxu0 %v2019
        %3688 = vmatprep.subr.mxu0 %v2022
        %3689 = vmatpush1.msra.mxu0 %v2021
        %3690 = vmatprep.subr.mxu0 %v2024
        %3691 = vmatpush1.msra.mxu0 %v2023
        %3692 = vmatprep.subr.mxu0 %v2026
        %3693 = vmatpush1.msra.mxu0 %v2025
        %3694 = vmatprep.subr.mxu0 %v2028
        %3695 = vmatpush1.msra.mxu0 %v2027
        %3696 = vmatprep.subr.mxu0 %v2030
        %3697 = vmatpush1.msra.mxu0 %v2029
        %3698 = vmatprep.subr.mxu0 %v2032
        %3699 = vmatpush1.msra.mxu0 %v2031
        %3700 = vmatprep.subr.mxu0 %v2034
        %3701 = vmatpush1.msra.mxu0 %v2033
        %3702 = vmatprep.subr.mxu0 %v2036
        %3703 = vmatpush1.msra.mxu0 %v2035
        %3704 = vmatprep.subr.mxu0 %v2038
        %3705 = vmatpush1.msra.mxu0 %v2037
        %3706 = vmatprep.subr.mxu0 %v2040
        %3707 = vmatpush1.msra.mxu0 %v2039
        %3708 = vmatprep.subr.mxu0 %v2042
        %3709 = vmatpush1.msra.mxu0 %v2041
        %3710 = vmatprep.subr.mxu0 %v2044
        %3711 = vmatpush1.msra.mxu0 %v2043
        %3712 = vmatprep.subr.mxu0 %v2046
        %3713 = vmatpush1.msra.mxu0 %v2045
        %3714 = vmatprep.subr.mxu0 %v2048
        %3715 = vmatpush1.msra.mxu0 %v2047
        %3716 = vmatprep.subr.mxu0 %v2050
        %3717 = vmatpush1.msra.mxu0 %v2049
        %3718 = vmatprep.subr.mxu0 %v2052
        %3719 = vmatpush1.msra.mxu0 %v2051
        %3720 = vmatprep.subr.mxu0 %v2054
        %3721 = vmatpush1.msra.mxu0 %v2053
        %3722 = vmatprep.subr.mxu0 %v2056
        %3723 = vmatpush1.msra.mxu0 %v2055
        %3724 = vmatprep.subr.mxu0 %v2058
        %3725 = vmatpush1.msra.mxu0 %v2057
        %3726 = vmatprep.subr.mxu0 %v2060
        %3727 = vmatpush1.msra.mxu0 %v2059
        %3728 = vmatprep.subr.mxu0 %v2062
        %3729 = vmatpush1.msra.mxu0 %v2061
        %3730 = vmatprep.subr.mxu0 %v2064
        %3731 = vmatpush1.msra.mxu0 %v2063
        %3732 = vmatprep.mubr.f32.mxu0 %v2871
        %3733 = vmatmul.mubr.f32.gmra.mrb[0].mxu0 %v2870
        %v3734 = vpop.f32.mrb[0].mxu0
        %v3735 = vadd.f32 0.0, %v3734
        %v3736 = vpop.f32.mrb[0].mxu0
        %v3737 = vadd.f32 0.0, %v3736
        %3738 = vdwg.mxu0
        %s3739 = scalar_lea.vmem %s9, 80
        %v3740 = vld [vmem:[%s3739] sm:$0xff]
        %v3741 = vld [vmem:[%s3739 + $0x8] sm:$0xff]
        %v3743 = vsel %vm1209, %v3740, 0
        %v3746 = vsel %vm1209, %v3741, 0
        %3748 = vmatprep.subr.mxu0 %v3737
        %3749 = vmatpush1.msra.mxu0 %v3735
        %3750 = vmatprep.subr.mxu0 0.0
        %3751 = vmatpush1.msra.mxu0 0.0
        %3752 = vmatprep.subr.mxu0 0.0
        %3753 = vmatpush1.msra.mxu0 0.0
        %3754 = vmatprep.subr.mxu0 0.0
        %3755 = vmatpush1.msra.mxu0 0.0
        %3756 = vmatprep.subr.mxu0 0.0
        %3757 = vmatpush1.msra.mxu0 0.0
        %3758 = vmatprep.subr.mxu0 0.0
        %3759 = vmatpush1.msra.mxu0 0.0
        %3760 = vmatprep.subr.mxu0 0.0
        %3761 = vmatpush1.msra.mxu0 0.0
        %3762 = vmatprep.subr.mxu0 0.0
        %3763 = vmatpush1.msra.mxu0 0.0
        %3764 = vmatprep.subr.mxu0 0.0
        %3765 = vmatpush1.msra.mxu0 0.0
        %3766 = vmatprep.subr.mxu0 0.0
        %3767 = vmatpush1.msra.mxu0 0.0
        %3768 = vmatprep.subr.mxu0 0.0
        %3769 = vmatpush1.msra.mxu0 0.0
        %3770 = vmatprep.subr.mxu0 0.0
        %3771 = vmatpush1.msra.mxu0 0.0
        %3772 = vmatprep.subr.mxu0 0.0
        %3773 = vmatpush1.msra.mxu0 0.0
        %3774 = vmatprep.subr.mxu0 0.0
        %3775 = vmatpush1.msra.mxu0 0.0
        %3776 = vmatprep.subr.mxu0 0.0
        %3777 = vmatpush1.msra.mxu0 0.0
        %3778 = vmatprep.subr.mxu0 0.0
        %3779 = vmatpush1.msra.mxu0 0.0
        %3780 = vmatprep.subr.mxu0 0.0
        %3781 = vmatpush1.msra.mxu0 0.0
        %3782 = vmatprep.subr.mxu0 0.0
        %3783 = vmatpush1.msra.mxu0 0.0
        %3784 = vmatprep.subr.mxu0 0.0
        %3785 = vmatpush1.msra.mxu0 0.0
        %3786 = vmatprep.subr.mxu0 0.0
        %3787 = vmatpush1.msra.mxu0 0.0
        %3788 = vmatprep.subr.mxu0 0.0
        %3789 = vmatpush1.msra.mxu0 0.0
        %3790 = vmatprep.subr.mxu0 0.0
        %3791 = vmatpush1.msra.mxu0 0.0
        %3792 = vmatprep.subr.mxu0 0.0
        %3793 = vmatpush1.msra.mxu0 0.0
        %3794 = vmatprep.subr.mxu0 0.0
        %3795 = vmatpush1.msra.mxu0 0.0
        %3796 = vmatprep.subr.mxu0 0.0
        %3797 = vmatpush1.msra.mxu0 0.0
        %3798 = vmatprep.subr.mxu0 0.0
        %3799 = vmatpush1.msra.mxu0 0.0
        %3800 = vmatprep.subr.mxu0 0.0
        %3801 = vmatpush1.msra.mxu0 0.0
        %3802 = vmatprep.subr.mxu0 0.0
        %3803 = vmatpush1.msra.mxu0 0.0
        %3804 = vmatprep.subr.mxu0 0.0
        %3805 = vmatpush1.msra.mxu0 0.0
        %3806 = vmatprep.subr.mxu0 0.0
        %3807 = vmatpush1.msra.mxu0 0.0
        %3808 = vmatprep.subr.mxu0 0.0
        %3809 = vmatpush1.msra.mxu0 0.0
        %3810 = vmatprep.subr.mxu0 0.0
        %3811 = vmatpush1.msra.mxu0 0.0
        %3812 = vmatprep.mubr.f32.mxu0 0.0
        %3813 = vmatmul.mubr.f32.gmra.mrb[0].mxu0 %v3743
        %v3814 = vpop.f32.mrb[0].mxu0
        %v3815 = vadd.f32 0.0, %v3814
        %v3816 = vpop.f32.mrb[0].mxu0
        %v3817 = vadd.f32 0.0, %v3816
        %3818 = vmatprep.mubr.f32.mxu0 0.0
        %3819 = vmatmul.mubr.f32.gmra.mrb[0].mxu0 %v3746
        %v3820 = vpop.f32.mrb[0].mxu0
        %v3821 = vadd.f32 0.0, %v3820
        %v3822 = vpop.f32.mrb[0].mxu0
        %v3823 = vadd.f32 0.0, %v3822
        %3824 = vdwg.mxu0
        %v3825 = vadd.f32 %v3664, %v3815
        %v3826 = vadd.f32 %v3665, %v3817
        %v3827 = vadd.f32 %v3666, %v3821
        %v3828 = vadd.f32 %v3667, %v3823
        %3829 = vmatprep.subr.mxu0 %v2216
        %3830 = vmatpush1.msra.mxu0 %v2215
        %3831 = vmatprep.subr.mxu0 %v2218
        %3832 = vmatpush1.msra.mxu0 %v2217
        %3833 = vmatprep.subr.mxu0 %v2220
        %3834 = vmatpush1.msra.mxu0 %v2219
        %3835 = vmatprep.subr.mxu0 %v2222
        %3836 = vmatpush1.msra.mxu0 %v2221
        %3837 = vmatprep.subr.mxu0 %v2224
        %3838 = vmatpush1.msra.mxu0 %v2223
        %3839 = vmatprep.subr.mxu0 %v2226
        %3840 = vmatpush1.msra.mxu0 %v2225
        %3841 = vmatprep.subr.mxu0 %v2228
        %3842 = vmatpush1.msra.mxu0 %v2227
        %3843 = vmatprep.subr.mxu0 %v2230
        %3844 = vmatpush1.msra.mxu0 %v2229
        %3845 = vmatprep.subr.mxu0 %v2232
        %3846 = vmatpush1.msra.mxu0 %v2231
        %3847 = vmatprep.subr.mxu0 %v2234
        %3848 = vmatpush1.msra.mxu0 %v2233
        %3849 = vmatprep.subr.mxu0 %v2236
        %3850 = vmatpush1.msra.mxu0 %v2235
        %3851 = vmatprep.subr.mxu0 %v2238
        %3852 = vmatpush1.msra.mxu0 %v2237
        %3853 = vmatprep.subr.mxu0 %v2240
        %3854 = vmatpush1.msra.mxu0 %v2239
        %3855 = vmatprep.subr.mxu0 %v2242
        %3856 = vmatpush1.msra.mxu0 %v2241
        %3857 = vmatprep.subr.mxu0 %v2244
        %3858 = vmatpush1.msra.mxu0 %v2243
        %3859 = vmatprep.subr.mxu0 %v2246
        %3860 = vmatpush1.msra.mxu0 %v2245
        %3861 = vmatprep.subr.mxu0 %v2248
        %3862 = vmatpush1.msra.mxu0 %v2247
        %3863 = vmatprep.subr.mxu0 %v2250
        %3864 = vmatpush1.msra.mxu0 %v2249
        %3865 = vmatprep.subr.mxu0 %v2252
        %3866 = vmatpush1.msra.mxu0 %v2251
        %3867 = vmatprep.subr.mxu0 %v2254
        %3868 = vmatpush1.msra.mxu0 %v2253
        %3869 = vmatprep.subr.mxu0 %v2256
        %3870 = vmatpush1.msra.mxu0 %v2255
        %3871 = vmatprep.subr.mxu0 %v2258
        %3872 = vmatpush1.msra.mxu0 %v2257
        %3873 = vmatprep.subr.mxu0 %v2260
        %3874 = vmatpush1.msra.mxu0 %v2259
        %3875 = vmatprep.subr.mxu0 %v2262
        %3876 = vmatpush1.msra.mxu0 %v2261
        %3877 = vmatprep.subr.mxu0 %v2264
        %3878 = vmatpush1.msra.mxu0 %v2263
        %3879 = vmatprep.subr.mxu0 %v2266
        %3880 = vmatpush1.msra.mxu0 %v2265
        %3881 = vmatprep.subr.mxu0 %v2268
        %3882 = vmatpush1.msra.mxu0 %v2267
        %3883 = vmatprep.subr.mxu0 %v2270
        %3884 = vmatpush1.msra.mxu0 %v2269
        %3885 = vmatprep.subr.mxu0 %v2272
        %3886 = vmatpush1.msra.mxu0 %v2271
        %3887 = vmatprep.subr.mxu0 %v2274
        %3888 = vmatpush1.msra.mxu0 %v2273
        %3889 = vmatprep.subr.mxu0 %v2276
        %3890 = vmatpush1.msra.mxu0 %v2275
        %3891 = vmatprep.subr.mxu0 %v2278
        %3892 = vmatpush1.msra.mxu0 %v2277
        %3893 = vmatprep.mubr.f32.mxu0 %v2871
        %3894 = vmatmul.mubr.f32.gmra.mrb[0].mxu0 %v2870
        %v3895 = vpop.f32.mrb[0].mxu0
        %v3896 = vadd.f32 0.0, %v3895
        %v3897 = vpop.f32.mrb[0].mxu0
        %v3898 = vadd.f32 0.0, %v3897
        %3899 = vdwg.mxu0
        %s3900 = scalar_lea.vmem %s9, 96
        %v3901 = vld [vmem:[%s3900] sm:$0xff]
        %v3902 = vld [vmem:[%s3900 + $0x8] sm:$0xff]
        %v3904 = vsel %vm1209, %v3901, 0
        %v3907 = vsel %vm1209, %v3902, 0
        %3909 = vmatprep.subr.mxu0 %v3898
        %3910 = vmatpush1.msra.mxu0 %v3896
        %3911 = vmatprep.subr.mxu0 0.0
        %3912 = vmatpush1.msra.mxu0 0.0
        %3913 = vmatprep.subr.mxu0 0.0
        %3914 = vmatpush1.msra.mxu0 0.0
        %3915 = vmatprep.subr.mxu0 0.0
        %3916 = vmatpush1.msra.mxu0 0.0
        %3917 = vmatprep.subr.mxu0 0.0
        %3918 = vmatpush1.msra.mxu0 0.0
        %3919 = vmatprep.subr.mxu0 0.0
        %3920 = vmatpush1.msra.mxu0 0.0
        %3921 = vmatprep.subr.mxu0 0.0
        %3922 = vmatpush1.msra.mxu0 0.0
        %3923 = vmatprep.subr.mxu0 0.0
        %3924 = vmatpush1.msra.mxu0 0.0
        %3925 = vmatprep.subr.mxu0 0.0
        %3926 = vmatpush1.msra.mxu0 0.0
        %3927 = vmatprep.subr.mxu0 0.0
        %3928 = vmatpush1.msra.mxu0 0.0
        %3929 = vmatprep.subr.mxu0 0.0
        %3930 = vmatpush1.msra.mxu0 0.0
        %3931 = vmatprep.subr.mxu0 0.0
        %3932 = vmatpush1.msra.mxu0 0.0
        %3933 = vmatprep.subr.mxu0 0.0
        %3934 = vmatpush1.msra.mxu0 0.0
        %3935 = vmatprep.subr.mxu0 0.0
        %3936 = vmatpush1.msra.mxu0 0.0
        %3937 = vmatprep.subr.mxu0 0.0
        %3938 = vmatpush1.msra.mxu0 0.0
        %3939 = vmatprep.subr.mxu0 0.0
        %3940 = vmatpush1.msra.mxu0 0.0
        %3941 = vmatprep.subr.mxu0 0.0
        %3942 = vmatpush1.msra.mxu0 0.0
        %3943 = vmatprep.subr.mxu0 0.0
        %3944 = vmatpush1.msra.mxu0 0.0
        %3945 = vmatprep.subr.mxu0 0.0
        %3946 = vmatpush1.msra.mxu0 0.0
        %3947 = vmatprep.subr.mxu0 0.0
        %3948 = vmatpush1.msra.mxu0 0.0
        %3949 = vmatprep.subr.mxu0 0.0
        %3950 = vmatpush1.msra.mxu0 0.0
        %3951 = vmatprep.subr.mxu0 0.0
        %3952 = vmatpush1.msra.mxu0 0.0
        %3953 = vmatprep.subr.mxu0 0.0
        %3954 = vmatpush1.msra.mxu0 0.0
        %3955 = vmatprep.subr.mxu0 0.0
        %3956 = vmatpush1.msra.mxu0 0.0
        %3957 = vmatprep.subr.mxu0 0.0
        %3958 = vmatpush1.msra.mxu0 0.0
        %3959 = vmatprep.subr.mxu0 0.0
        %3960 = vmatpush1.msra.mxu0 0.0
        %3961 = vmatprep.subr.mxu0 0.0
        %3962 = vmatpush1.msra.mxu0 0.0
        %3963 = vmatprep.subr.mxu0 0.0
        %3964 = vmatpush1.msra.mxu0 0.0
        %3965 = vmatprep.subr.mxu0 0.0
        %3966 = vmatpush1.msra.mxu0 0.0
        %3967 = vmatprep.subr.mxu0 0.0
        %3968 = vmatpush1.msra.mxu0 0.0
        %3969 = vmatprep.subr.mxu0 0.0
        %3970 = vmatpush1.msra.mxu0 0.0
        %3971 = vmatprep.subr.mxu0 0.0
        %3972 = vmatpush1.msra.mxu0 0.0
        %3973 = vmatprep.mubr.f32.mxu0 0.0
        %3974 = vmatmul.mubr.f32.gmra.mrb[0].mxu0 %v3904
        %v3975 = vpop.f32.mrb[0].mxu0
        %v3976 = vadd.f32 0.0, %v3975
        %v3977 = vpop.f32.mrb[0].mxu0
        %v3978 = vadd.f32 0.0, %v3977
        %3979 = vmatprep.mubr.f32.mxu0 0.0
        %3980 = vmatmul.mubr.f32.gmra.mrb[0].mxu0 %v3907
        %v3981 = vpop.f32.mrb[0].mxu0
        %v3982 = vadd.f32 0.0, %v3981
        %v3983 = vpop.f32.mrb[0].mxu0
        %v3984 = vadd.f32 0.0, %v3983
        %3985 = vdwg.mxu0
        %v3986 = vadd.f32 %v3825, %v3976
        %v3987 = vadd.f32 %v3826, %v3978
        %v3988 = vadd.f32 %v3827, %v3982
        %v3989 = vadd.f32 %v3828, %v3984
        %3990 = vmatprep.subr.mxu0 %v2430
        %3991 = vmatpush1.msra.mxu0 %v2429
        %3992 = vmatprep.subr.mxu0 %v2432
        %3993 = vmatpush1.msra.mxu0 %v2431
        %3994 = vmatprep.subr.mxu0 %v2434
        %3995 = vmatpush1.msra.mxu0 %v2433
        %3996 = vmatprep.subr.mxu0 %v2436
        %3997 = vmatpush1.msra.mxu0 %v2435
        %3998 = vmatprep.subr.mxu0 %v2438
        %3999 = vmatpush1.msra.mxu0 %v2437
        %4000 = vmatprep.subr.mxu0 %v2440
        %4001 = vmatpush1.msra.mxu0 %v2439
        %4002 = vmatprep.subr.mxu0 %v2442
        %4003 = vmatpush1.msra.mxu0 %v2441
        %4004 = vmatprep.subr.mxu0 %v2444
        %4005 = vmatpush1.msra.mxu0 %v2443
        %4006 = vmatprep.subr.mxu0 %v2446
        %4007 = vmatpush1.msra.mxu0 %v2445
        %4008 = vmatprep.subr.mxu0 %v2448
        %4009 = vmatpush1.msra.mxu0 %v2447
        %4010 = vmatprep.subr.mxu0 %v2450
        %4011 = vmatpush1.msra.mxu0 %v2449
        %4012 = vmatprep.subr.mxu0 %v2452
        %4013 = vmatpush1.msra.mxu0 %v2451
        %4014 = vmatprep.subr.mxu0 %v2454
        %4015 = vmatpush1.msra.mxu0 %v2453
        %4016 = vmatprep.subr.mxu0 %v2456
        %4017 = vmatpush1.msra.mxu0 %v2455
        %4018 = vmatprep.subr.mxu0 %v2458
        %4019 = vmatpush1.msra.mxu0 %v2457
        %4020 = vmatprep.subr.mxu0 %v2460
        %4021 = vmatpush1.msra.mxu0 %v2459
        %4022 = vmatprep.subr.mxu0 %v2462
        %4023 = vmatpush1.msra.mxu0 %v2461
        %4024 = vmatprep.subr.mxu0 %v2464
        %4025 = vmatpush1.msra.mxu0 %v2463
        %4026 = vmatprep.subr.mxu0 %v2466
        %4027 = vmatpush1.msra.mxu0 %v2465
        %4028 = vmatprep.subr.mxu0 %v2468
        %4029 = vmatpush1.msra.mxu0 %v2467
        %4030 = vmatprep.subr.mxu0 %v2470
        %4031 = vmatpush1.msra.mxu0 %v2469
        %4032 = vmatprep.subr.mxu0 %v2472
        %4033 = vmatpush1.msra.mxu0 %v2471
        %4034 = vmatprep.subr.mxu0 %v2474
        %4035 = vmatpush1.msra.mxu0 %v2473
        %4036 = vmatprep.subr.mxu0 %v2476
        %4037 = vmatpush1.msra.mxu0 %v2475
        %4038 = vmatprep.subr.mxu0 %v2478
        %4039 = vmatpush1.msra.mxu0 %v2477
        %4040 = vmatprep.subr.mxu0 %v2480
        %4041 = vmatpush1.msra.mxu0 %v2479
        %4042 = vmatprep.subr.mxu0 %v2482
        %4043 = vmatpush1.msra.mxu0 %v2481
        %4044 = vmatprep.subr.mxu0 %v2484
        %4045 = vmatpush1.msra.mxu0 %v2483
        %4046 = vmatprep.subr.mxu0 %v2486
        %4047 = vmatpush1.msra.mxu0 %v2485
        %4048 = vmatprep.subr.mxu0 %v2488
        %4049 = vmatpush1.msra.mxu0 %v2487
        %4050 = vmatprep.subr.mxu0 %v2490
        %4051 = vmatpush1.msra.mxu0 %v2489
        %4052 = vmatprep.subr.mxu0 %v2492
        %4053 = vmatpush1.msra.mxu0 %v2491
        %4054 = vmatprep.mubr.f32.mxu0 %v2871
        %4055 = vmatmul.mubr.f32.gmra.mrb[0].mxu0 %v2870
        %v4056 = vpop.f32.mrb[0].mxu0
        %v4057 = vadd.f32 0.0, %v4056
        %v4058 = vpop.f32.mrb[0].mxu0
        %v4059 = vadd.f32 0.0, %v4058
        %4060 = vdwg.mxu0
        %s4061 = scalar_lea.vmem %s9, 112
        %v4062 = vld [vmem:[%s4061] sm:$0xff]
        %v4063 = vld [vmem:[%s4061 + $0x8] sm:$0xff]
        %v4065 = vsel %vm1209, %v4062, 0
        %v4068 = vsel %vm1209, %v4063, 0
        %4070 = vmatprep.subr.mxu0 %v4059
        %4071 = vmatpush1.msra.mxu0 %v4057
        %4072 = vmatprep.subr.mxu0 0.0
        %4073 = vmatpush1.msra.mxu0 0.0
        %4074 = vmatprep.subr.mxu0 0.0
        %4075 = vmatpush1.msra.mxu0 0.0
        %4076 = vmatprep.subr.mxu0 0.0
        %4077 = vmatpush1.msra.mxu0 0.0
        %4078 = vmatprep.subr.mxu0 0.0
        %4079 = vmatpush1.msra.mxu0 0.0
        %4080 = vmatprep.subr.mxu0 0.0
        %4081 = vmatpush1.msra.mxu0 0.0
        %4082 = vmatprep.subr.mxu0 0.0
        %4083 = vmatpush1.msra.mxu0 0.0
        %4084 = vmatprep.subr.mxu0 0.0
        %4085 = vmatpush1.msra.mxu0 0.0
        %4086 = vmatprep.subr.mxu0 0.0
        %4087 = vmatpush1.msra.mxu0 0.0
        %4088 = vmatprep.subr.mxu0 0.0
        %4089 = vmatpush1.msra.mxu0 0.0
        %4090 = vmatprep.subr.mxu0 0.0
        %4091 = vmatpush1.msra.mxu0 0.0
        %4092 = vmatprep.subr.mxu0 0.0
        %4093 = vmatpush1.msra.mxu0 0.0
        %4094 = vmatprep.subr.mxu0 0.0
        %4095 = vmatpush1.msra.mxu0 0.0
        %4096 = vmatprep.subr.mxu0 0.0
        %4097 = vmatpush1.msra.mxu0 0.0
        %4098 = vmatprep.subr.mxu0 0.0
        %4099 = vmatpush1.msra.mxu0 0.0
        %4100 = vmatprep.subr.mxu0 0.0
        %4101 = vmatpush1.msra.mxu0 0.0
        %4102 = vmatprep.subr.mxu0 0.0
        %4103 = vmatpush1.msra.mxu0 0.0
        %4104 = vmatprep.subr.mxu0 0.0
        %4105 = vmatpush1.msra.mxu0 0.0
        %4106 = vmatprep.subr.mxu0 0.0
        %4107 = vmatpush1.msra.mxu0 0.0
        %4108 = vmatprep.subr.mxu0 0.0
        %4109 = vmatpush1.msra.mxu0 0.0
        %4110 = vmatprep.subr.mxu0 0.0
        %4111 = vmatpush1.msra.mxu0 0.0
        %4112 = vmatprep.subr.mxu0 0.0
        %4113 = vmatpush1.msra.mxu0 0.0
        %4114 = vmatprep.subr.mxu0 0.0
        %4115 = vmatpush1.msra.mxu0 0.0
        %4116 = vmatprep.subr.mxu0 0.0
        %4117 = vmatpush1.msra.mxu0 0.0
        %4118 = vmatprep.subr.mxu0 0.0
        %4119 = vmatpush1.msra.mxu0 0.0
        %4120 = vmatprep.subr.mxu0 0.0
        %4121 = vmatpush1.msra.mxu0 0.0
        %4122 = vmatprep.subr.mxu0 0.0
        %4123 = vmatpush1.msra.mxu0 0.0
        %4124 = vmatprep.subr.mxu0 0.0
        %4125 = vmatpush1.msra.mxu0 0.0
        %4126 = vmatprep.subr.mxu0 0.0
        %4127 = vmatpush1.msra.mxu0 0.0
        %4128 = vmatprep.subr.mxu0 0.0
        %4129 = vmatpush1.msra.mxu0 0.0
        %4130 = vmatprep.subr.mxu0 0.0
        %4131 = vmatpush1.msra.mxu0 0.0
        %4132 = vmatprep.subr.mxu0 0.0
        %4133 = vmatpush1.msra.mxu0 0.0
        %4134 = vmatprep.mubr.f32.mxu0 0.0
        %4135 = vmatmul.mubr.f32.gmra.mrb[0].mxu0 %v4065
        %v4136 = vpop.f32.mrb[0].mxu0
        %v4137 = vadd.f32 0.0, %v4136
        %v4138 = vpop.f32.mrb[0].mxu0
        %v4139 = vadd.f32 0.0, %v4138
        %4140 = vmatprep.mubr.f32.mxu0 0.0
        %4141 = vmatmul.mubr.f32.gmra.mrb[0].mxu0 %v4068
        %v4142 = vpop.f32.mrb[0].mxu0
        %v4143 = vadd.f32 0.0, %v4142
        %v4144 = vpop.f32.mrb[0].mxu0
        %v4145 = vadd.f32 0.0, %v4144
        %4146 = vdwg.mxu0
        %v4147 = vadd.f32 %v3986, %v4137
        %v4148 = vadd.f32 %v3987, %v4139
        %v4149 = vadd.f32 %v3988, %v4143
        %v4150 = vadd.f32 %v3989, %v4145
        %4151 = vmatprep.subr.mxu0 %v2644
        %4152 = vmatpush1.msra.mxu0 %v2643
        %4153 = vmatprep.subr.mxu0 %v2646
        %4154 = vmatpush1.msra.mxu0 %v2645
        %4155 = vmatprep.subr.mxu0 %v2648
        %4156 = vmatpush1.msra.mxu0 %v2647
        %4157 = vmatprep.subr.mxu0 %v2650
        %4158 = vmatpush1.msra.mxu0 %v2649
        %4159 = vmatprep.subr.mxu0 %v2652
        %4160 = vmatpush1.msra.mxu0 %v2651
        %4161 = vmatprep.subr.mxu0 %v2654
        %4162 = vmatpush1.msra.mxu0 %v2653
        %4163 = vmatprep.subr.mxu0 %v2656
        %4164 = vmatpush1.msra.mxu0 %v2655
        %4165 = vmatprep.subr.mxu0 %v2658
        %4166 = vmatpush1.msra.mxu0 %v2657
        %4167 = vmatprep.subr.mxu0 %v2660
        %4168 = vmatpush1.msra.mxu0 %v2659
        %4169 = vmatprep.subr.mxu0 %v2662
        %4170 = vmatpush1.msra.mxu0 %v2661
        %4171 = vmatprep.subr.mxu0 %v2664
        %4172 = vmatpush1.msra.mxu0 %v2663
        %4173 = vmatprep.subr.mxu0 %v2666
        %4174 = vmatpush1.msra.mxu0 %v2665
        %4175 = vmatprep.subr.mxu0 %v2668
        %4176 = vmatpush1.msra.mxu0 %v2667
        %4177 = vmatprep.subr.mxu0 %v2670
        %4178 = vmatpush1.msra.mxu0 %v2669
        %4179 = vmatprep.subr.mxu0 %v2672
        %4180 = vmatpush1.msra.mxu0 %v2671
        %4181 = vmatprep.subr.mxu0 %v2674
        %4182 = vmatpush1.msra.mxu0 %v2673
        %4183 = vmatprep.subr.mxu0 %v2676
        %4184 = vmatpush1.msra.mxu0 %v2675
        %4185 = vmatprep.subr.mxu0 %v2678
        %4186 = vmatpush1.msra.mxu0 %v2677
        %4187 = vmatprep.subr.mxu0 %v2680
        %4188 = vmatpush1.msra.mxu0 %v2679
        %4189 = vmatprep.subr.mxu0 %v2682
        %4190 = vmatpush1.msra.mxu0 %v2681
        %4191 = vmatprep.subr.mxu0 %v2684
        %4192 = vmatpush1.msra.mxu0 %v2683
        %4193 = vmatprep.subr.mxu0 %v2686
        %4194 = vmatpush1.msra.mxu0 %v2685
        %4195 = vmatprep.subr.mxu0 %v2688
        %4196 = vmatpush1.msra.mxu0 %v2687
        %4197 = vmatprep.subr.mxu0 %v2690
        %4198 = vmatpush1.msra.mxu0 %v2689
        %4199 = vmatprep.subr.mxu0 %v2692
        %4200 = vmatpush1.msra.mxu0 %v2691
        %4201 = vmatprep.subr.mxu0 %v2694
        %4202 = vmatpush1.msra.mxu0 %v2693
        %4203 = vmatprep.subr.mxu0 %v2696
        %4204 = vmatpush1.msra.mxu0 %v2695
        %4205 = vmatprep.subr.mxu0 %v2698
        %4206 = vmatpush1.msra.mxu0 %v2697
        %4207 = vmatprep.subr.mxu0 %v2700
        %4208 = vmatpush1.msra.mxu0 %v2699
        %4209 = vmatprep.subr.mxu0 %v2702
        %4210 = vmatpush1.msra.mxu0 %v2701
        %4211 = vmatprep.subr.mxu0 %v2704
        %4212 = vmatpush1.msra.mxu0 %v2703
        %4213 = vmatprep.subr.mxu0 %v2706
        %4214 = vmatpush1.msra.mxu0 %v2705
        %4215 = vmatprep.mubr.f32.mxu0 %v2871
        %4216 = vmatmul.mubr.f32.gmra.mrb[0].mxu0 %v2870
        %v4217 = vpop.f32.mrb[0].mxu0
        %v4218 = vadd.f32 0.0, %v4217
        %v4219 = vpop.f32.mrb[0].mxu0
        %v4220 = vadd.f32 0.0, %v4219
        %4221 = vdwg.mxu0
        %s4222 = scalar_lea.vmem %s9, 128
        %v4223 = vld [vmem:[%s4222] sm:$0xff]
        %v4224 = vld [vmem:[%s4222 + $0x8] sm:$0xff]
        %v4226 = vsel %vm1209, %v4223, 0
        %v4229 = vsel %vm1209, %v4224, 0
        %4231 = vmatprep.subr.mxu0 %v4220
        %4232 = vmatpush1.msra.mxu0 %v4218
        %4233 = vmatprep.subr.mxu0 0.0
        %4234 = vmatpush1.msra.mxu0 0.0
        %4235 = vmatprep.subr.mxu0 0.0
        %4236 = vmatpush1.msra.mxu0 0.0
        %4237 = vmatprep.subr.mxu0 0.0
        %4238 = vmatpush1.msra.mxu0 0.0
        %4239 = vmatprep.subr.mxu0 0.0
        %4240 = vmatpush1.msra.mxu0 0.0
        %4241 = vmatprep.subr.mxu0 0.0
        %4242 = vmatpush1.msra.mxu0 0.0
        %4243 = vmatprep.subr.mxu0 0.0
        %4244 = vmatpush1.msra.mxu0 0.0
        %4245 = vmatprep.subr.mxu0 0.0
        %4246 = vmatpush1.msra.mxu0 0.0
        %4247 = vmatprep.subr.mxu0 0.0
        %4248 = vmatpush1.msra.mxu0 0.0
        %4249 = vmatprep.subr.mxu0 0.0
        %4250 = vmatpush1.msra.mxu0 0.0
        %4251 = vmatprep.subr.mxu0 0.0
        %4252 = vmatpush1.msra.mxu0 0.0
        %4253 = vmatprep.subr.mxu0 0.0
        %4254 = vmatpush1.msra.mxu0 0.0
        %4255 = vmatprep.subr.mxu0 0.0
        %4256 = vmatpush1.msra.mxu0 0.0
        %4257 = vmatprep.subr.mxu0 0.0
        %4258 = vmatpush1.msra.mxu0 0.0
        %4259 = vmatprep.subr.mxu0 0.0
        %4260 = vmatpush1.msra.mxu0 0.0
        %4261 = vmatprep.subr.mxu0 0.0
        %4262 = vmatpush1.msra.mxu0 0.0
        %4263 = vmatprep.subr.mxu0 0.0
        %4264 = vmatpush1.msra.mxu0 0.0
        %4265 = vmatprep.subr.mxu0 0.0
        %4266 = vmatpush1.msra.mxu0 0.0
        %4267 = vmatprep.subr.mxu0 0.0
        %4268 = vmatpush1.msra.mxu0 0.0
        %4269 = vmatprep.subr.mxu0 0.0
        %4270 = vmatpush1.msra.mxu0 0.0
        %4271 = vmatprep.subr.mxu0 0.0
        %4272 = vmatpush1.msra.mxu0 0.0
        %4273 = vmatprep.subr.mxu0 0.0
        %4274 = vmatpush1.msra.mxu0 0.0
        %4275 = vmatprep.subr.mxu0 0.0
        %4276 = vmatpush1.msra.mxu0 0.0
        %4277 = vmatprep.subr.mxu0 0.0
        %4278 = vmatpush1.msra.mxu0 0.0
        %4279 = vmatprep.subr.mxu0 0.0
        %4280 = vmatpush1.msra.mxu0 0.0
        %4281 = vmatprep.subr.mxu0 0.0
        %4282 = vmatpush1.msra.mxu0 0.0
        %4283 = vmatprep.subr.mxu0 0.0
        %4284 = vmatpush1.msra.mxu0 0.0
        %4285 = vmatprep.subr.mxu0 0.0
        %4286 = vmatpush1.msra.mxu0 0.0
        %4287 = vmatprep.subr.mxu0 0.0
        %4288 = vmatpush1.msra.mxu0 0.0
        %4289 = vmatprep.subr.mxu0 0.0
        %4290 = vmatpush1.msra.mxu0 0.0
        %4291 = vmatprep.subr.mxu0 0.0
        %4292 = vmatpush1.msra.mxu0 0.0
        %4293 = vmatprep.subr.mxu0 0.0
        %4294 = vmatpush1.msra.mxu0 0.0
        %4295 = vmatprep.mubr.f32.mxu0 0.0
        %4296 = vmatmul.mubr.f32.gmra.mrb[0].mxu0 %v4226
        %v4297 = vpop.f32.mrb[0].mxu0
        %v4298 = vadd.f32 0.0, %v4297
        %v4299 = vpop.f32.mrb[0].mxu0
        %v4300 = vadd.f32 0.0, %v4299
        %4301 = vmatprep.mubr.f32.mxu0 0.0
        %4302 = vmatmul.mubr.f32.gmra.mrb[0].mxu0 %v4229
        %v4303 = vpop.f32.mrb[0].mxu0
        %v4304 = vadd.f32 0.0, %v4303
        %v4305 = vpop.f32.mrb[0].mxu0
        %v4306 = vadd.f32 0.0, %v4305
        %4307 = vdwg.mxu0
        %v4308 = vadd.f32 %v4147, %v4298
        %v4309 = vadd.f32 %v4148, %v4300
        %v4310 = vadd.f32 %v4149, %v4304
        %v4311 = vadd.f32 %v4150, %v4306
        %v4312 = vld [vmem:[%s10] sm:$0xff]
        %v4313 = vld [vmem:[%s10 + $0x8] sm:$0xff]
        %4315 = vset.pattern.permute.xlu0 0
        %4316 = vperm.xlu0 %4315, %v4312
        %v4317 = vpop.permute.xlu0 %4316
        %4320 = vset.pattern.permute.xlu0 0
        %4321 = vperm.xlu0 %4320, %v4313
        %v4322 = vpop.permute.xlu0 %4321
        %v4324 = vadd.f32 %v4308, %v4317
        %v4325 = vadd.f32 %v4309, %v4317
        %v4326 = vadd.f32 %v4310, %v4322
        %v4327 = vadd.f32 %v4311, %v4322
        %vm4328 = vcmp.gt.f32.partialorder %v4324, 0.0
        %vm4329 = vcmp.gt.f32.partialorder %v4325, 0.0
        %vm4330 = vcmp.gt.f32.partialorder %v4326, 0.0
        %vm4331 = vcmp.gt.f32.partialorder %v4327, 0.0
        %v4332 = vmul.f32 %v4324, 0.2
        %v4333 = vmul.f32 %v4325, 0.2
        %v4334 = vmul.f32 %v4326, 0.2
        %v4335 = vmul.f32 %v4327, 0.2
        %v4336 = vsel %vm4328, %v4324, %v4332
        %v4337 = vsel %vm4329, %v4325, %v4333
        %v4338 = vsel %vm4330, %v4326, %v4334
        %v4339 = vsel %vm4331, %v4327, %v4335
        %v4340 = vld [vmem:[%s2] sm:$0xff]
        %v4341 = vld [vmem:[%s2 + $0x8] sm:$0xff]
        %v4342 = vld [vmem:[%s2 + $0x10] sm:$0xff]
        %v4343 = vld [vmem:[%s2 + $0x18] sm:$0xff]
        %v4344 = vld [vmem:[%s2 + $0x20] sm:$0xff]
        %v4345 = vld [vmem:[%s2 + $0x28] sm:$0xff]
        %v4346 = vld [vmem:[%s2 + $0x30] sm:$0xff]
        %v4347 = vld [vmem:[%s2 + $0x38] sm:$0xff]
        %v4348 = vld [vmem:[%s2 + $0x40] sm:$0xff]
        %v4349 = vld [vmem:[%s2 + $0x48] sm:$0xff]
        %v4350 = vld [vmem:[%s2 + $0x50] sm:$0xff]
        %v4351 = vld [vmem:[%s2 + $0x58] sm:$0xff]
        %v4352 = vld [vmem:[%s2 + $0x60] sm:$0xff]
        %v4353 = vld [vmem:[%s2 + $0x68] sm:$0xff]
        %v4354 = vld [vmem:[%s2 + $0x70] sm:$0xff]
        %v4355 = vld [vmem:[%s2 + $0x78] sm:$0xff]
        %v4356 = vld [vmem:[%s2 + $0x80] sm:$0xff]
        %v4357 = vld [vmem:[%s2 + $0x88] sm:$0xff]
        %v4358 = vld [vmem:[%s2 + $0x90] sm:$0xff]
        %v4359 = vld [vmem:[%s2 + $0x98] sm:$0xff]
        %v4360 = vld [vmem:[%s2 + $0xa0] sm:$0xff]
        %v4361 = vld [vmem:[%s2 + $0xa8] sm:$0xff]
        %v4362 = vld [vmem:[%s2 + $0xb0] sm:$0xff]
        %v4363 = vld [vmem:[%s2 + $0xb8] sm:$0xff]
        %v4364 = vld [vmem:[%s2 + $0xc0] sm:$0xff]
        %v4365 = vld [vmem:[%s2 + $0xc8] sm:$0xff]
        %v4366 = vld [vmem:[%s2 + $0xd0] sm:$0xff]
        %v4367 = vld [vmem:[%s2 + $0xd8] sm:$0xff]
        %v4368 = vld [vmem:[%s2 + $0xe0] sm:$0xff]
        %v4369 = vld [vmem:[%s2 + $0xe8] sm:$0xff]
        %v4370 = vld [vmem:[%s2 + $0xf0] sm:$0xff]
        %v4371 = vld [vmem:[%s2 + $0xf8] sm:$0xff]
        %4372 = vmatprep.subr.mxu0 0.0
        %4373 = vmatpush1.msra.mxu0 %v4340
        %4374 = vmatprep.subr.mxu0 0.0
        %4375 = vmatpush1.msra.mxu0 %v4341
        %4376 = vmatprep.subr.mxu0 0.0
        %4377 = vmatpush1.msra.mxu0 %v4342
        %4378 = vmatprep.subr.mxu0 0.0
        %4379 = vmatpush1.msra.mxu0 %v4343
        %4380 = vmatprep.subr.mxu0 0.0
        %4381 = vmatpush1.msra.mxu0 %v4344
        %4382 = vmatprep.subr.mxu0 0.0
        %4383 = vmatpush1.msra.mxu0 %v4345
        %4384 = vmatprep.subr.mxu0 0.0
        %4385 = vmatpush1.msra.mxu0 %v4346
        %4386 = vmatprep.subr.mxu0 0.0
        %4387 = vmatpush1.msra.mxu0 %v4347
        %4388 = vmatprep.subr.mxu0 0.0
        %4389 = vmatpush1.msra.mxu0 %v4348
        %4390 = vmatprep.subr.mxu0 0.0
        %4391 = vmatpush1.msra.mxu0 %v4349
        %4392 = vmatprep.subr.mxu0 0.0
        %4393 = vmatpush1.msra.mxu0 %v4350
        %4394 = vmatprep.subr.mxu0 0.0
        %4395 = vmatpush1.msra.mxu0 %v4351
        %4396 = vmatprep.subr.mxu0 0.0
        %4397 = vmatpush1.msra.mxu0 %v4352
        %4398 = vmatprep.subr.mxu0 0.0
        %4399 = vmatpush1.msra.mxu0 %v4353
        %4400 = vmatprep.subr.mxu0 0.0
        %4401 = vmatpush1.msra.mxu0 %v4354
        %4402 = vmatprep.subr.mxu0 0.0
        %4403 = vmatpush1.msra.mxu0 %v4355
        %4404 = vmatprep.subr.mxu0 0.0
        %4405 = vmatpush1.msra.mxu0 %v4356
        %4406 = vmatprep.subr.mxu0 0.0
        %4407 = vmatpush1.msra.mxu0 %v4357
        %4408 = vmatprep.subr.mxu0 0.0
        %4409 = vmatpush1.msra.mxu0 %v4358
        %4410 = vmatprep.subr.mxu0 0.0
        %4411 = vmatpush1.msra.mxu0 %v4359
        %4412 = vmatprep.subr.mxu0 0.0
        %4413 = vmatpush1.msra.mxu0 %v4360
        %4414 = vmatprep.subr.mxu0 0.0
        %4415 = vmatpush1.msra.mxu0 %v4361
        %4416 = vmatprep.subr.mxu0 0.0
        %4417 = vmatpush1.msra.mxu0 %v4362
        %4418 = vmatprep.subr.mxu0 0.0
        %4419 = vmatpush1.msra.mxu0 %v4363
        %4420 = vmatprep.subr.mxu0 0.0
        %4421 = vmatpush1.msra.mxu0 %v4364
        %4422 = vmatprep.subr.mxu0 0.0
        %4423 = vmatpush1.msra.mxu0 %v4365
        %4424 = vmatprep.subr.mxu0 0.0
        %4425 = vmatpush1.msra.mxu0 %v4366
        %4426 = vmatprep.subr.mxu0 0.0
        %4427 = vmatpush1.msra.mxu0 %v4367
        %4428 = vmatprep.subr.mxu0 0.0
        %4429 = vmatpush1.msra.mxu0 %v4368
        %4430 = vmatprep.subr.mxu0 0.0
        %4431 = vmatpush1.msra.mxu0 %v4369
        %4432 = vmatprep.subr.mxu0 0.0
        %4433 = vmatpush1.msra.mxu0 %v4370
        %4434 = vmatprep.subr.mxu0 0.0
        %4435 = vmatpush1.msra.mxu0 %v4371
        %4436 = vmatprep.mubr.f32.mxu0 %v4337
        %4437 = vmatmul.mubr.f32.gmra.mrb[0].mxu0 %v4336
        %v4438 = vpop.f32.mrb[0].mxu0
        %v4439 = vadd.f32 0.0, %v4438
        %v4440 = vpop.f32.mrb[0].mxu0
        %4441 = vmatprep.mubr.f32.mxu0 %v4339
        %4442 = vmatmul.mubr.f32.gmra.mrb[0].mxu0 %v4338
        %v4443 = vpop.f32.mrb[0].mxu0
        %v4444 = vadd.f32 0.0, %v4443
        %v4445 = vpop.f32.mrb[0].mxu0
        %4446 = vdwg.mxu0
        %v4447 = vmul.f32 %v4439, 0.25
        %v4448 = vmul.f32 %v4444, 0.25
        %v4449 = vld [vmem:[#allocation8] sm:$0xf]
        %v4450 = vld [vmem:[%s12] sm:$0xf]
        %4452 = vset.pattern.permute.xlu0 0
        %4453 = vperm.xlu0 %4452, %v4450
        %v4454 = vpop.permute.xlu0 %4453
        %vm4456 = vcmask 130048
        %v4458 = vsel %vm4456, %v4449, 0
        %4460 = vmatprep.subr.mxu0 0.0
        %4461 = vmatpush1.msra.mxu0 %v4447
        %4462 = vmatprep.subr.mxu0 0.0
        %4463 = vmatpush1.msra.mxu0 %v4448
        %4464 = vmatprep.subr.mxu0 0.0
        %4465 = vmatpush1.msra.mxu0 0.0
        %4466 = vmatprep.subr.mxu0 0.0
        %4467 = vmatpush1.msra.mxu0 0.0
        %4468 = vmatprep.subr.mxu0 0.0
        %4469 = vmatpush1.msra.mxu0 0.0
        %4470 = vmatprep.subr.mxu0 0.0
        %4471 = vmatpush1.msra.mxu0 0.0
        %4472 = vmatprep.subr.mxu0 0.0
        %4473 = vmatpush1.msra.mxu0 0.0
        %4474 = vmatprep.subr.mxu0 0.0
        %4475 = vmatpush1.msra.mxu0 0.0
        %4476 = vmatprep.subr.mxu0 0.0
        %4477 = vmatpush1.msra.mxu0 0.0
        %4478 = vmatprep.subr.mxu0 0.0
        %4479 = vmatpush1.msra.mxu0 0.0
        %4480 = vmatprep.subr.mxu0 0.0
        %4481 = vmatpush1.msra.mxu0 0.0
        %4482 = vmatprep.subr.mxu0 0.0
        %4483 = vmatpush1.msra.mxu0 0.0
        %4484 = vmatprep.subr.mxu0 0.0
        %4485 = vmatpush1.msra.mxu0 0.0
        %4486 = vmatprep.subr.mxu0 0.0
        %4487 = vmatpush1.msra.mxu0 0.0
        %4488 = vmatprep.subr.mxu0 0.0
        %4489 = vmatpush1.msra.mxu0 0.0
        %4490 = vmatprep.subr.mxu0 0.0
        %4491 = vmatpush1.msra.mxu0 0.0
        %4492 = vmatprep.subr.mxu0 0.0
        %4493 = vmatpush1.msra.mxu0 0.0
        %4494 = vmatprep.subr.mxu0 0.0
        %4495 = vmatpush1.msra.mxu0 0.0
        %4496 = vmatprep.subr.mxu0 0.0
        %4497 = vmatpush1.msra.mxu0 0.0
        %4498 = vmatprep.subr.mxu0 0.0
        %4499 = vmatpush1.msra.mxu0 0.0
        %4500 = vmatprep.subr.mxu0 0.0
        %4501 = vmatpush1.msra.mxu0 0.0
        %4502 = vmatprep.subr.mxu0 0.0
        %4503 = vmatpush1.msra.mxu0 0.0
        %4504 = vmatprep.subr.mxu0 0.0
        %4505 = vmatpush1.msra.mxu0 0.0
        %4506 = vmatprep.subr.mxu0 0.0
        %4507 = vmatpush1.msra.mxu0 0.0
        %4508 = vmatprep.subr.mxu0 0.0
        %4509 = vmatpush1.msra.mxu0 0.0
        %4510 = vmatprep.subr.mxu0 0.0
        %4511 = vmatpush1.msra.mxu0 0.0
        %4512 = vmatprep.subr.mxu0 0.0
        %4513 = vmatpush1.msra.mxu0 0.0
        %4514 = vmatprep.subr.mxu0 0.0
        %4515 = vmatpush1.msra.mxu0 0.0
        %4516 = vmatprep.subr.mxu0 0.0
        %4517 = vmatpush1.msra.mxu0 0.0
        %4518 = vmatprep.subr.mxu0 0.0
        %4519 = vmatpush1.msra.mxu0 0.0
        %4520 = vmatprep.subr.mxu0 0.0
        %4521 = vmatpush1.msra.mxu0 0.0
        %4522 = vmatprep.subr.mxu0 0.0
        %4523 = vmatpush1.msra.mxu0 0.0
        %4524 = vmatprep.mubr.f32.mxu0 0.0
        %4525 = vmatmul.mubr.f32.gmra.mrb[0].mxu0 %v4458
        %v4526 = vpop.f32.mrb[0].mxu0
        %v4527 = vadd.f32 %v4454, %v4526
        %v4528 = vpop.f32.mrb[0].mxu0
        %4529 = vdwg.mxu0
        %v4530 = vld [vmem:[#allocation10] sm:$0xf]
        %v4531 = vld [vmem:[%s14] sm:$0xf]
        %4533 = vset.pattern.permute.xlu0 0
        %4534 = vperm.xlu0 %4533, %v4531
        %v4535 = vpop.permute.xlu0 %4534
        %v4538 = vsel %vm4456, %v4530, 0
        %4540 = vmatprep.subr.mxu0 0.0
        %4541 = vmatpush1.msra.mxu0 %v4447
        %4542 = vmatprep.subr.mxu0 0.0
        %4543 = vmatpush1.msra.mxu0 %v4448
        %4544 = vmatprep.subr.mxu0 0.0
        %4545 = vmatpush1.msra.mxu0 0.0
        %4546 = vmatprep.subr.mxu0 0.0
        %4547 = vmatpush1.msra.mxu0 0.0
        %4548 = vmatprep.subr.mxu0 0.0
        %4549 = vmatpush1.msra.mxu0 0.0
        %4550 = vmatprep.subr.mxu0 0.0
        %4551 = vmatpush1.msra.mxu0 0.0
        %4552 = vmatprep.subr.mxu0 0.0
        %4553 = vmatpush1.msra.mxu0 0.0
        %4554 = vmatprep.subr.mxu0 0.0
        %4555 = vmatpush1.msra.mxu0 0.0
        %4556 = vmatprep.subr.mxu0 0.0
        %4557 = vmatpush1.msra.mxu0 0.0
        %4558 = vmatprep.subr.mxu0 0.0
        %4559 = vmatpush1.msra.mxu0 0.0
        %4560 = vmatprep.subr.mxu0 0.0
        %4561 = vmatpush1.msra.mxu0 0.0
        %4562 = vmatprep.subr.mxu0 0.0
        %4563 = vmatpush1.msra.mxu0 0.0
        %4564 = vmatprep.subr.mxu0 0.0
        %4565 = vmatpush1.msra.mxu0 0.0
        %4566 = vmatprep.subr.mxu0 0.0
        %4567 = vmatpush1.msra.mxu0 0.0
        %4568 = vmatprep.subr.mxu0 0.0
        %4569 = vmatpush1.msra.mxu0 0.0
        %4570 = vmatprep.subr.mxu0 0.0
        %4571 = vmatpush1.msra.mxu0 0.0
        %4572 = vmatprep.subr.mxu0 0.0
        %4573 = vmatpush1.msra.mxu0 0.0
        %4574 = vmatprep.subr.mxu0 0.0
        %4575 = vmatpush1.msra.mxu0 0.0
        %4576 = vmatprep.subr.mxu0 0.0
        %4577 = vmatpush1.msra.mxu0 0.0
        %4578 = vmatprep.subr.mxu0 0.0
        %4579 = vmatpush1.msra.mxu0 0.0
        %4580 = vmatprep.subr.mxu0 0.0
        %4581 = vmatpush1.msra.mxu0 0.0
        %4582 = vmatprep.subr.mxu0 0.0
        %4583 = vmatpush1.msra.mxu0 0.0
        %4584 = vmatprep.subr.mxu0 0.0
        %4585 = vmatpush1.msra.mxu0 0.0
        %4586 = vmatprep.subr.mxu0 0.0
        %4587 = vmatpush1.msra.mxu0 0.0
        %4588 = vmatprep.subr.mxu0 0.0
        %4589 = vmatpush1.msra.mxu0 0.0
        %4590 = vmatprep.subr.mxu0 0.0
        %4591 = vmatpush1.msra.mxu0 0.0
        %4592 = vmatprep.subr.mxu0 0.0
        %4593 = vmatpush1.msra.mxu0 0.0
        %4594 = vmatprep.subr.mxu0 0.0
        %4595 = vmatpush1.msra.mxu0 0.0
        %4596 = vmatprep.subr.mxu0 0.0
        %4597 = vmatpush1.msra.mxu0 0.0
        %4598 = vmatprep.subr.mxu0 0.0
        %4599 = vmatpush1.msra.mxu0 0.0
        %4600 = vmatprep.subr.mxu0 0.0
        %4601 = vmatpush1.msra.mxu0 0.0
        %4602 = vmatprep.subr.mxu0 0.0
        %4603 = vmatpush1.msra.mxu0 0.0
        %4604 = vmatprep.mubr.f32.mxu0 0.0
        %4605 = vmatmul.mubr.f32.gmra.mrb[0].mxu0 %v4538
        %v4606 = vpop.f32.mrb[0].mxu0
        %v4607 = vadd.f32 %v4535, %v4606
        %v4608 = vpop.f32.mrb[0].mxu0
        %4609 = vdwg.mxu0
        %v4610 = vld [vmem:[#allocation11] sm:$0xf]
        %v4611 = vld [vmem:[%s16] sm:$0xf]
        %4613 = vset.pattern.permute.xlu0 0
        %4614 = vperm.xlu0 %4613, %v4611
        %v4615 = vpop.permute.xlu0 %4614
        %v4618 = vsel %vm4456, %v4610, 0
        %4620 = vmatprep.subr.mxu0 0.0
        %4621 = vmatpush1.msra.mxu0 %v4447
        %4622 = vmatprep.subr.mxu0 0.0
        %4623 = vmatpush1.msra.mxu0 %v4448
        %4624 = vmatprep.subr.mxu0 0.0
        %4625 = vmatpush1.msra.mxu0 0.0
        %4626 = vmatprep.subr.mxu0 0.0
        %4627 = vmatpush1.msra.mxu0 0.0
        %4628 = vmatprep.subr.mxu0 0.0
        %4629 = vmatpush1.msra.mxu0 0.0
        %4630 = vmatprep.subr.mxu0 0.0
        %4631 = vmatpush1.msra.mxu0 0.0
        %4632 = vmatprep.subr.mxu0 0.0
        %4633 = vmatpush1.msra.mxu0 0.0
        %4634 = vmatprep.subr.mxu0 0.0
        %4635 = vmatpush1.msra.mxu0 0.0
        %4636 = vmatprep.subr.mxu0 0.0
        %4637 = vmatpush1.msra.mxu0 0.0
        %4638 = vmatprep.subr.mxu0 0.0
        %4639 = vmatpush1.msra.mxu0 0.0
        %4640 = vmatprep.subr.mxu0 0.0
        %4641 = vmatpush1.msra.mxu0 0.0
        %4642 = vmatprep.subr.mxu0 0.0
        %4643 = vmatpush1.msra.mxu0 0.0
        %4644 = vmatprep.subr.mxu0 0.0
        %4645 = vmatpush1.msra.mxu0 0.0
        %4646 = vmatprep.subr.mxu0 0.0
        %4647 = vmatpush1.msra.mxu0 0.0
        %4648 = vmatprep.subr.mxu0 0.0
        %4649 = vmatpush1.msra.mxu0 0.0
        %4650 = vmatprep.subr.mxu0 0.0
        %4651 = vmatpush1.msra.mxu0 0.0
        %4652 = vmatprep.subr.mxu0 0.0
        %4653 = vmatpush1.msra.mxu0 0.0
        %4654 = vmatprep.subr.mxu0 0.0
        %4655 = vmatpush1.msra.mxu0 0.0
        %4656 = vmatprep.subr.mxu0 0.0
        %4657 = vmatpush1.msra.mxu0 0.0
        %4658 = vmatprep.subr.mxu0 0.0
        %4659 = vmatpush1.msra.mxu0 0.0
        %4660 = vmatprep.subr.mxu0 0.0
        %4661 = vmatpush1.msra.mxu0 0.0
        %4662 = vmatprep.subr.mxu0 0.0
        %4663 = vmatpush1.msra.mxu0 0.0
        %4664 = vmatprep.subr.mxu0 0.0
        %4665 = vmatpush1.msra.mxu0 0.0
        %4666 = vmatprep.subr.mxu0 0.0
        %4667 = vmatpush1.msra.mxu0 0.0
        %4668 = vmatprep.subr.mxu0 0.0
        %4669 = vmatpush1.msra.mxu0 0.0
        %4670 = vmatprep.subr.mxu0 0.0
        %4671 = vmatpush1.msra.mxu0 0.0
        %4672 = vmatprep.subr.mxu0 0.0
        %4673 = vmatpush1.msra.mxu0 0.0
        %4674 = vmatprep.subr.mxu0 0.0
        %4675 = vmatpush1.msra.mxu0 0.0
        %4676 = vmatprep.subr.mxu0 0.0
        %4677 = vmatpush1.msra.mxu0 0.0
        %4678 = vmatprep.subr.mxu0 0.0
        %4679 = vmatpush1.msra.mxu0 0.0
        %4680 = vmatprep.subr.mxu0 0.0
        %4681 = vmatpush1.msra.mxu0 0.0
        %4682 = vmatprep.subr.mxu0 0.0
        %4683 = vmatpush1.msra.mxu0 0.0
        %4684 = vmatprep.mubr.f32.mxu0 0.0
        %4685 = vmatmul.mubr.f32.gmra.mrb[0].mxu0 %v4618
        %v4686 = vpop.f32.mrb[0].mxu0
        %v4687 = vadd.f32 %v4615, %v4686
        %v4688 = vpop.f32.mrb[0].mxu0
        %4689 = vdwg.mxu0
        %4690 = vxpose.xlu0.b32.start [1/16] %v4527, 128
        %4691 = vxpose.xlu0.b32.cont [2/16] 0.0, 128
        %4692 = vxpose.xlu0.b32.cont [3/16] 0.0, 128
        %4693 = vxpose.xlu0.b32.cont [4/16] 0.0, 128
        %4694 = vxpose.xlu0.b32.cont [5/16] 0.0, 128
        %4695 = vxpose.xlu0.b32.cont [6/16] 0.0, 128
        %4696 = vxpose.xlu0.b32.cont [7/16] 0.0, 128
        %4697 = vxpose.xlu0.b32.cont [8/16] 0.0, 128
        %4698 = vxpose.xlu0.b32.cont [9/16] 0.0, 128
        %4699 = vxpose.xlu0.b32.cont [10/16] 0.0, 128
        %4700 = vxpose.xlu0.b32.cont [11/16] 0.0, 128
        %4701 = vxpose.xlu0.b32.cont [12/16] 0.0, 128
        %4702 = vxpose.xlu0.b32.cont [13/16] 0.0, 128
        %4703 = vxpose.xlu0.b32.cont [14/16] 0.0, 128
        %4704 = vxpose.xlu0.b32.cont [15/16] 0.0, 128
        %4705 = vxpose.xlu0.b32.end [16/16] 0.0, 128
        %v4706 = vpop.trf.xlu0
        %v4707 = vpop.trf.xlu0
        %v4708 = vpop.trf.xlu0
        %v4709 = vpop.trf.xlu0
        %v4710 = vpop.trf.xlu0
        %v4711 = vpop.trf.xlu0
        %v4712 = vpop.trf.xlu0
        %v4713 = vpop.trf.xlu0
        %v4714 = vpop.trf.xlu0
        %v4715 = vpop.trf.xlu0
        %v4716 = vpop.trf.xlu0
        %v4717 = vpop.trf.xlu0
        %v4718 = vpop.trf.xlu0
        %v4719 = vpop.trf.xlu0
        %v4720 = vpop.trf.xlu0
        %v4721 = vpop.trf.xlu0
        %vm4722 = vcmask 31744
        %v4724 = vsel %vm4722, %v4706, 0
        %v4727 = vsel %vm4722, %v4707, 0
        %v4730 = vsel %vm4722, %v4708, 0
        %v4733 = vsel %vm4722, %v4709, 0
        %v4736 = vsel %vm4722, %v4710, 0
        %v4739 = vsel %vm4722, %v4711, 0
        %v4742 = vsel %vm4722, %v4712, 0
        %v4745 = vsel %vm4722, %v4713, 0
        %vm4747 = vcmask 1043456
        %v4749 = vsel %vm4747, %v4607, 0
        %4751 = vmatprep.subr.mxu0 0.0
        %4752 = vmatpush1.msra.mxu0 %v4749
        %4753 = vmatprep.subr.mxu0 0.0
        %4754 = vmatpush1.msra.mxu0 0.0
        %4755 = vmatprep.subr.mxu0 0.0
        %4756 = vmatpush1.msra.mxu0 0.0
        %4757 = vmatprep.subr.mxu0 0.0
        %4758 = vmatpush1.msra.mxu0 0.0
        %4759 = vmatprep.subr.mxu0 0.0
        %4760 = vmatpush1.msra.mxu0 0.0
        %4761 = vmatprep.subr.mxu0 0.0
        %4762 = vmatpush1.msra.mxu0 0.0
        %4763 = vmatprep.subr.mxu0 0.0
        %4764 = vmatpush1.msra.mxu0 0.0
        %4765 = vmatprep.subr.mxu0 0.0
        %4766 = vmatpush1.msra.mxu0 0.0
        %4767 = vmatprep.subr.mxu0 0.0
        %4768 = vmatpush1.msra.mxu0 0.0
        %4769 = vmatprep.subr.mxu0 0.0
        %4770 = vmatpush1.msra.mxu0 0.0
        %4771 = vmatprep.subr.mxu0 0.0
        %4772 = vmatpush1.msra.mxu0 0.0
        %4773 = vmatprep.subr.mxu0 0.0
        %4774 = vmatpush1.msra.mxu0 0.0
        %4775 = vmatprep.subr.mxu0 0.0
        %4776 = vmatpush1.msra.mxu0 0.0
        %4777 = vmatprep.subr.mxu0 0.0
        %4778 = vmatpush1.msra.mxu0 0.0
        %4779 = vmatprep.subr.mxu0 0.0
        %4780 = vmatpush1.msra.mxu0 0.0
        %4781 = vmatprep.subr.mxu0 0.0
        %4782 = vmatpush1.msra.mxu0 0.0
        %4783 = vmatprep.subr.mxu0 0.0
        %4784 = vmatpush1.msra.mxu0 0.0
        %4785 = vmatprep.subr.mxu0 0.0
        %4786 = vmatpush1.msra.mxu0 0.0
        %4787 = vmatprep.subr.mxu0 0.0
        %4788 = vmatpush1.msra.mxu0 0.0
        %4789 = vmatprep.subr.mxu0 0.0
        %4790 = vmatpush1.msra.mxu0 0.0
        %4791 = vmatprep.subr.mxu0 0.0
        %4792 = vmatpush1.msra.mxu0 0.0
        %4793 = vmatprep.subr.mxu0 0.0
        %4794 = vmatpush1.msra.mxu0 0.0
        %4795 = vmatprep.subr.mxu0 0.0
        %4796 = vmatpush1.msra.mxu0 0.0
        %4797 = vmatprep.subr.mxu0 0.0
        %4798 = vmatpush1.msra.mxu0 0.0
        %4799 = vmatprep.subr.mxu0 0.0
        %4800 = vmatpush1.msra.mxu0 0.0
        %4801 = vmatprep.subr.mxu0 0.0
        %4802 = vmatpush1.msra.mxu0 0.0
        %4803 = vmatprep.subr.mxu0 0.0
        %4804 = vmatpush1.msra.mxu0 0.0
        %4805 = vmatprep.subr.mxu0 0.0
        %4806 = vmatpush1.msra.mxu0 0.0
        %4807 = vmatprep.subr.mxu0 0.0
        %4808 = vmatpush1.msra.mxu0 0.0
        %4809 = vmatprep.subr.mxu0 0.0
        %4810 = vmatpush1.msra.mxu0 0.0
        %4811 = vmatprep.subr.mxu0 0.0
        %4812 = vmatpush1.msra.mxu0 0.0
        %4813 = vmatprep.subr.mxu0 0.0
        %4814 = vmatpush1.msra.mxu0 0.0
        %4815 = vmatprep.mubr.f32.mxu0 0.0
        %4816 = vmatmul.mubr.f32.gmra.mrb[0].mxu0 %v4724
        %v4817 = vpop.f32.mrb[0].mxu0
        %v4818 = vadd.f32 0.0, %v4817
        %v4819 = vpop.f32.mrb[0].mxu0
        %4820 = vmatprep.mubr.f32.mxu0 0.0
        %4821 = vmatmul.mubr.f32.gmra.mrb[0].mxu0 %v4727
        %v4822 = vpop.f32.mrb[0].mxu0
        %v4823 = vadd.f32 0.0, %v4822
        %v4824 = vpop.f32.mrb[0].mxu0
        %4825 = vmatprep.mubr.f32.mxu0 0.0
        %4826 = vmatmul.mubr.f32.gmra.mrb[0].mxu0 %v4730
        %v4827 = vpop.f32.mrb[0].mxu0
        %v4828 = vadd.f32 0.0, %v4827
        %v4829 = vpop.f32.mrb[0].mxu0
        %4830 = vmatprep.mubr.f32.mxu0 0.0
        %4831 = vmatmul.mubr.f32.gmra.mrb[0].mxu0 %v4733
        %v4832 = vpop.f32.mrb[0].mxu0
        %v4833 = vadd.f32 0.0, %v4832
        %v4834 = vpop.f32.mrb[0].mxu0
        %4835 = vmatprep.mubr.f32.mxu0 0.0
        %4836 = vmatmul.mubr.f32.gmra.mrb[0].mxu0 %v4736
        %v4837 = vpop.f32.mrb[0].mxu0
        %v4838 = vadd.f32 0.0, %v4837
        %v4839 = vpop.f32.mrb[0].mxu0
        %4840 = vmatprep.mubr.f32.mxu0 0.0
        %4841 = vmatmul.mubr.f32.gmra.mrb[0].mxu0 %v4739
        %v4842 = vpop.f32.mrb[0].mxu0
        %v4843 = vadd.f32 0.0, %v4842
        %v4844 = vpop.f32.mrb[0].mxu0
        %4845 = vmatprep.mubr.f32.mxu0 0.0
        %4846 = vmatmul.mubr.f32.gmra.mrb[0].mxu0 %v4742
        %v4847 = vpop.f32.mrb[0].mxu0
        %v4848 = vadd.f32 0.0, %v4847
        %v4849 = vpop.f32.mrb[0].mxu0
        %4850 = vmatprep.mubr.f32.mxu0 0.0
        %4851 = vmatmul.mubr.f32.gmra.mrb[0].mxu0 %v4745
        %v4852 = vpop.f32.mrb[0].mxu0
        %v4853 = vadd.f32 0.0, %v4852
        %v4854 = vpop.f32.mrb[0].mxu0
        %4855 = vdwg.mxu0
        %vm4856 = vcmask 523264
        %v4857 = vsel %vm4856, %v4818, -inf
        %4858 = vmax.xlane.f32.xlu0 %v4857
        %v4859 = vpop.xlane.xlu0 %4858
        %v4860 = vsel %vm4856, %v4823, -inf
        %4861 = vmax.xlane.f32.xlu0 %v4860
        %v4862 = vpop.xlane.xlu0 %4861
        %v4863 = vsel %vm4856, %v4828, -inf
        %4864 = vmax.xlane.f32.xlu0 %v4863
        %v4865 = vpop.xlane.xlu0 %4864
        %v4866 = vsel %vm4856, %v4833, -inf
        %4867 = vmax.xlane.f32.xlu0 %v4866
        %v4868 = vpop.xlane.xlu0 %4867
        %v4869 = vsel %vm4856, %v4838, -inf
        %4870 = vmax.xlane.f32.xlu0 %v4869
        %v4871 = vpop.xlane.xlu0 %4870
        %v4872 = vsel %vm4856, %v4843, -inf
        %4873 = vmax.xlane.f32.xlu0 %v4872
        %v4874 = vpop.xlane.xlu0 %4873
        %v4875 = vsel %vm4856, %v4848, -inf
        %4876 = vmax.xlane.f32.xlu0 %v4875
        %v4877 = vpop.xlane.xlu0 %4876
        %v4878 = vsel %vm4856, %v4853, -inf
        %4879 = vmax.xlane.f32.xlu0 %v4878
        %v4880 = vpop.xlane.xlu0 %4879
        %v4881 = vsub.f32 %v4818, %v4859
        %v4882 = vsub.f32 %v4823, %v4862
        %v4883 = vsub.f32 %v4828, %v4865
        %v4884 = vsub.f32 %v4833, %v4868
        %v4885 = vsub.f32 %v4838, %v4871
        %v4886 = vsub.f32 %v4843, %v4874
        %v4887 = vsub.f32 %v4848, %v4877
        %v4888 = vsub.f32 %v4853, %v4880
        %v4889 = vmul.f32 %v4881, 1.442695
        %v4890 = vpow.pop %v4889
        %v4891 = vmul.f32 %v4882, 1.442695
        %v4892 = vpow.pop %v4891
        %v4893 = vmul.f32 %v4883, 1.442695
        %v4894 = vpow.pop %v4893
        %v4895 = vmul.f32 %v4884, 1.442695
        %v4896 = vpow.pop %v4895
        %v4897 = vmul.f32 %v4885, 1.442695
        %v4898 = vpow.pop %v4897
        %v4899 = vmul.f32 %v4886, 1.442695
        %v4900 = vpow.pop %v4899
        %v4901 = vmul.f32 %v4887, 1.442695
        %v4902 = vpow.pop %v4901
        %v4903 = vmul.f32 %v4888, 1.442695
        %v4904 = vpow.pop %v4903
        %v4905 = vsel %vm4856, %v4890, 0.0
        %4906 = vadd.xlane.f32.xlu0 %v4905
        %v4907 = vpop.xlane.xlu0 %4906
        %v4908 = vsel %vm4856, %v4892, 0.0
        %4909 = vadd.xlane.f32.xlu0 %v4908
        %v4910 = vpop.xlane.xlu0 %4909
        %v4911 = vsel %vm4856, %v4894, 0.0
        %4912 = vadd.xlane.f32.xlu0 %v4911
        %v4913 = vpop.xlane.xlu0 %4912
        %v4914 = vsel %vm4856, %v4896, 0.0
        %4915 = vadd.xlane.f32.xlu0 %v4914
        %v4916 = vpop.xlane.xlu0 %4915
        %v4917 = vsel %vm4856, %v4898, 0.0
        %4918 = vadd.xlane.f32.xlu0 %v4917
        %v4919 = vpop.xlane.xlu0 %4918
        %v4920 = vsel %vm4856, %v4900, 0.0
        %4921 = vadd.xlane.f32.xlu0 %v4920
        %v4922 = vpop.xlane.xlu0 %4921
        %v4923 = vsel %vm4856, %v4902, 0.0
        %4924 = vadd.xlane.f32.xlu0 %v4923
        %v4925 = vpop.xlane.xlu0 %4924
        %v4926 = vsel %vm4856, %v4904, 0.0
        %4927 = vadd.xlane.f32.xlu0 %v4926
        %v4928 = vpop.xlane.xlu0 %4927
        %v4929 = vrcp.pop %v4907
        %v4930 = vmul.f32 %v4890, %v4929
        %v4931 = vrcp.pop %v4910
        %v4932 = vmul.f32 %v4892, %v4931
        %v4933 = vrcp.pop %v4913
        %v4934 = vmul.f32 %v4894, %v4933
        %v4935 = vrcp.pop %v4916
        %v4936 = vmul.f32 %v4896, %v4935
        %v4937 = vrcp.pop %v4919
        %v4938 = vmul.f32 %v4898, %v4937
        %v4939 = vrcp.pop %v4922
        %v4940 = vmul.f32 %v4900, %v4939
        %v4941 = vrcp.pop %v4925
        %v4942 = vmul.f32 %v4902, %v4941
        %v4943 = vrcp.pop %v4928
        %v4944 = vmul.f32 %v4904, %v4943
        %v4946 = vsel %vm4856, %v4687, 0
        %v4949 = vsel %vm4856, %v4930, 0
        %v4952 = vsel %vm4856, %v4932, 0
        %v4955 = vsel %vm4856, %v4934, 0
        %v4958 = vsel %vm4856, %v4936, 0
        %v4961 = vsel %vm4856, %v4938, 0
        %v4964 = vsel %vm4856, %v4940, 0
        %v4967 = vsel %vm4856, %v4942, 0
        %v4970 = vsel %vm4856, %v4944, 0
        %4972 = vmatprep.subr.mxu0 0.0
        %4973 = vmatpush1.xpose.msra.mxu0 %v4949
        %4974 = vmatprep.subr.mxu0 0.0
        %4975 = vmatpush1.xpose.msra.mxu0 %v4952
        %4976 = vmatprep.subr.mxu0 0.0
        %4977 = vmatpush1.xpose.msra.mxu0 %v4955
        %4978 = vmatprep.subr.mxu0 0.0
        %4979 = vmatpush1.xpose.msra.mxu0 %v4958
        %4980 = vmatprep.subr.mxu0 0.0
        %4981 = vmatpush1.xpose.msra.mxu0 %v4961
        %4982 = vmatprep.subr.mxu0 0.0
        %4983 = vmatpush1.xpose.msra.mxu0 %v4964
        %4984 = vmatprep.subr.mxu0 0.0
        %4985 = vmatpush1.xpose.msra.mxu0 %v4967
        %4986 = vmatprep.subr.mxu0 0.0
        %4987 = vmatpush1.xpose.msra.mxu0 %v4970
        %4988 = vmatprep.subr.mxu0 0.0
        %4989 = vmatpush1.xpose.msra.mxu0 0.0
        %4990 = vmatprep.subr.mxu0 0.0
        %4991 = vmatpush1.xpose.msra.mxu0 0.0
        %4992 = vmatprep.subr.mxu0 0.0
        %4993 = vmatpush1.xpose.msra.mxu0 0.0
        %4994 = vmatprep.subr.mxu0 0.0
        %4995 = vmatpush1.xpose.msra.mxu0 0.0
        %4996 = vmatprep.subr.mxu0 0.0
        %4997 = vmatpush1.xpose.msra.mxu0 0.0
        %4998 = vmatprep.subr.mxu0 0.0
        %4999 = vmatpush1.xpose.msra.mxu0 0.0
        %5000 = vmatprep.subr.mxu0 0.0
        %5001 = vmatpush1.xpose.msra.mxu0 0.0
        %5002 = vmatprep.subr.mxu0 0.0
        %5003 = vmatpush1.xpose.msra.mxu0 0.0
        %5004 = vmatprep.subr.mxu0 0.0
        %5005 = vmatpush1.xpose.msra.mxu0 0.0
        %5006 = vmatprep.subr.mxu0 0.0
        %5007 = vmatpush1.xpose.msra.mxu0 0.0
        %5008 = vmatprep.subr.mxu0 0.0
        %5009 = vmatpush1.xpose.msra.mxu0 0.0
        %5010 = vmatprep.subr.mxu0 0.0
        %5011 = vmatpush1.xpose.msra.mxu0 0.0
        %5012 = vmatprep.subr.mxu0 0.0
        %5013 = vmatpush1.xpose.msra.mxu0 0.0
        %5014 = vmatprep.subr.mxu0 0.0
        %5015 = vmatpush1.xpose.msra.mxu0 0.0
        %5016 = vmatprep.subr.mxu0 0.0
        %5017 = vmatpush1.xpose.msra.mxu0 0.0
        %5018 = vmatprep.subr.mxu0 0.0
        %5019 = vmatpush1.xpose.msra.mxu0 0.0
        %5020 = vmatprep.subr.mxu0 0.0
        %5021 = vmatpush1.xpose.msra.mxu0 0.0
        %5022 = vmatprep.subr.mxu0 0.0
        %5023 = vmatpush1.xpose.msra.mxu0 0.0
        %5024 = vmatprep.subr.mxu0 0.0
        %5025 = vmatpush1.xpose.msra.mxu0 0.0
        %5026 = vmatprep.subr.mxu0 0.0
        %5027 = vmatpush1.xpose.msra.mxu0 0.0
        %5028 = vmatprep.subr.mxu0 0.0
        %5029 = vmatpush1.xpose.msra.mxu0 0.0
        %5030 = vmatprep.subr.mxu0 0.0
        %5031 = vmatpush1.xpose.msra.mxu0 0.0
        %5032 = vmatprep.subr.mxu0 0.0
        %5033 = vmatpush1.xpose.msra.mxu0 0.0
        %5034 = vmatprep.subr.mxu0 0.0
        %5035 = vmatpush1.xpose.msra.mxu0 0.0
        %5036 = vmatprep.mubr.f32.mxu0 0.0
        %5037 = vmatmul.mubr.f32.gmra.mrb[0].mxu0 %v4946
        %v5038 = vpop.f32.mrb[0].mxu0
        %v5039 = vadd.f32 0.0, %v5038
        %v5040 = vpop.f32.mrb[0].mxu0
        %5041 = vdwg.mxu0
        %v5042 = vmul.f32 %v5039, 0.5
        %v5043 = vld [vmem:[%s17] sm:$0xff]
        %v5044 = vld [vmem:[%s17 + $0x8] sm:$0xff]
        %v5045 = vld [vmem:[%s18] sm:$0xff]
        %v5046 = vld [vmem:[%s18 + $0x8] sm:$0xff]
        %5048 = vset.pattern.permute.xlu0 0
        %5049 = vperm.xlu0 %5048, %v5045
        %v5050 = vpop.permute.xlu0 %5049
        %5053 = vset.pattern.permute.xlu0 0
        %5054 = vperm.xlu0 %5053, %v5046
        %v5055 = vpop.permute.xlu0 %5054
        %v5058 = vsel %vm4722, %v5043, 0
        %v5061 = vsel %vm4722, %v5044, 0
        %v5064 = vsel %vm4747, %v5042, 0
        %5066 = vmatprep.subr.mxu0 0.0
        %5067 = vmatpush1.msra.mxu0 %v5064
        %5068 = vmatprep.subr.mxu0 0.0
        %5069 = vmatpush1.msra.mxu0 0.0
        %5070 = vmatprep.subr.mxu0 0.0
        %5071 = vmatpush1.msra.mxu0 0.0
        %5072 = vmatprep.subr.mxu0 0.0
        %5073 = vmatpush1.msra.mxu0 0.0
        %5074 = vmatprep.subr.mxu0 0.0
        %5075 = vmatpush1.msra.mxu0 0.0
        %5076 = vmatprep.subr.mxu0 0.0
        %5077 = vmatpush1.msra.mxu0 0.0
        %5078 = vmatprep.subr.mxu0 0.0
        %5079 = vmatpush1.msra.mxu0 0.0
        %5080 = vmatprep.subr.mxu0 0.0
        %5081 = vmatpush1.msra.mxu0 0.0
        %5082 = vmatprep.subr.mxu0 0.0
        %5083 = vmatpush1.msra.mxu0 0.0
        %5084 = vmatprep.subr.mxu0 0.0
        %5085 = vmatpush1.msra.mxu0 0.0
        %5086 = vmatprep.subr.mxu0 0.0
        %5087 = vmatpush1.msra.mxu0 0.0
        %5088 = vmatprep.subr.mxu0 0.0
        %5089 = vmatpush1.msra.mxu0 0.0
        %5090 = vmatprep.subr.mxu0 0.0
        %5091 = vmatpush1.msra.mxu0 0.0
        %5092 = vmatprep.subr.mxu0 0.0
        %5093 = vmatpush1.msra.mxu0 0.0
        %5094 = vmatprep.subr.mxu0 0.0
        %5095 = vmatpush1.msra.mxu0 0.0
        %5096 = vmatprep.subr.mxu0 0.0
        %5097 = vmatpush1.msra.mxu0 0.0
        %5098 = vmatprep.subr.mxu0 0.0
        %5099 = vmatpush1.msra.mxu0 0.0
        %5100 = vmatprep.subr.mxu0 0.0
        %5101 = vmatpush1.msra.mxu0 0.0
        %5102 = vmatprep.subr.mxu0 0.0
        %5103 = vmatpush1.msra.mxu0 0.0
        %5104 = vmatprep.subr.mxu0 0.0
        %5105 = vmatpush1.msra.mxu0 0.0
        %5106 = vmatprep.subr.mxu0 0.0
        %5107 = vmatpush1.msra.mxu0 0.0
        %5108 = vmatprep.subr.mxu0 0.0
        %5109 = vmatpush1.msra.mxu0 0.0
        %5110 = vmatprep.subr.mxu0 0.0
        %5111 = vmatpush1.msra.mxu0 0.0
        %5112 = vmatprep.subr.mxu0 0.0
        %5113 = vmatpush1.msra.mxu0 0.0
        %5114 = vmatprep.subr.mxu0 0.0
        %5115 = vmatpush1.msra.mxu0 0.0
        %5116 = vmatprep.subr.mxu0 0.0
        %5117 = vmatpush1.msra.mxu0 0.0
        %5118 = vmatprep.subr.mxu0 0.0
        %5119 = vmatpush1.msra.mxu0 0.0
        %5120 = vmatprep.subr.mxu0 0.0
        %5121 = vmatpush1.msra.mxu0 0.0
        %5122 = vmatprep.subr.mxu0 0.0
        %5123 = vmatpush1.msra.mxu0 0.0
        %5124 = vmatprep.subr.mxu0 0.0
        %5125 = vmatpush1.msra.mxu0 0.0
        %5126 = vmatprep.subr.mxu0 0.0
        %5127 = vmatpush1.msra.mxu0 0.0
        %5128 = vmatprep.subr.mxu0 0.0
        %5129 = vmatpush1.msra.mxu0 0.0
        %5130 = vmatprep.mubr.f32.mxu0 0.0
        %5131 = vmatmul.mubr.f32.gmra.mrb[0].mxu0 %v5058
        %v5132 = vpop.f32.mrb[0].mxu0
        %v5133 = vadd.f32 %v5050, %v5132
        %v5134 = vpop.f32.mrb[0].mxu0
        %5135 = vmatprep.mubr.f32.mxu0 0.0
        %5136 = vmatmul.mubr.f32.gmra.mrb[0].mxu0 %v5061
        %v5137 = vpop.f32.mrb[0].mxu0
        %v5138 = vadd.f32 %v5055, %v5137
        %v5139 = vpop.f32.mrb[0].mxu0
        %5140 = vdwg.mxu0
        %v5141 = vld [vmem:[#allocation2] sm:$0x1]
        %s5142 = vtos %v5141
        %v5143 = vstv %s5142
        %v5144 = vmul.f32 %v5143, %v5133
        %v5145 = vmul.f32 %v5143, %v5138
        %v5146 = vadd.f32 %v5144, %v4439
        %v5147 = vadd.f32 %v5145, %v4444
        %v5148 = vmul.f32 %v5146, 0.11556254
        %v5149 = vmul.f32 %v5147, 0.11556254
        %v5150 = vld [vmem:[#allocation5] sm:$0xff]
        %v5151 = vld [vmem:[#allocation5 + $0x8] sm:$0xff]
        %v5152 = vld [vmem:[#allocation5 + $0x10] sm:$0xff]
        %v5153 = vld [vmem:[#allocation5 + $0x18] sm:$0xff]
        %v5154 = vld [vmem:[#allocation5 + $0x20] sm:$0xff]
        %v5155 = vld [vmem:[#allocation5 + $0x28] sm:$0xff]
        %v5156 = vld [vmem:[#allocation5 + $0x30] sm:$0xff]
        %v5157 = vld [vmem:[#allocation5 + $0x38] sm:$0xff]
        %v5159 = vsel %vm4856, %v5148, 0
        %v5162 = vsel %vm4856, %v5149, 0
        %5164 = vmatprep.subr.mxu0 0.0
        %5165 = vmatpush1.msra.mxu0 %v5150
        %5166 = vmatprep.subr.mxu0 0.0
        %5167 = vmatpush1.msra.mxu0 %v5151
        %5168 = vmatprep.subr.mxu0 0.0
        %5169 = vmatpush1.msra.mxu0 %v5152
        %5170 = vmatprep.subr.mxu0 0.0
        %5171 = vmatpush1.msra.mxu0 %v5153
        %5172 = vmatprep.subr.mxu0 0.0
        %5173 = vmatpush1.msra.mxu0 %v5154
        %5174 = vmatprep.subr.mxu0 0.0
        %5175 = vmatpush1.msra.mxu0 %v5155
        %5176 = vmatprep.subr.mxu0 0.0
        %5177 = vmatpush1.msra.mxu0 %v5156
        %5178 = vmatprep.subr.mxu0 0.0
        %5179 = vmatpush1.msra.mxu0 %v5157
        %5180 = vmatprep.subr.mxu0 0.0
        %5181 = vmatpush1.msra.mxu0 0.0
        %5182 = vmatprep.subr.mxu0 0.0
        %5183 = vmatpush1.msra.mxu0 0.0
        %5184 = vmatprep.subr.mxu0 0.0
        %5185 = vmatpush1.msra.mxu0 0.0
        %5186 = vmatprep.subr.mxu0 0.0
        %5187 = vmatpush1.msra.mxu0 0.0
        %5188 = vmatprep.subr.mxu0 0.0
        %5189 = vmatpush1.msra.mxu0 0.0
        %5190 = vmatprep.subr.mxu0 0.0
        %5191 = vmatpush1.msra.mxu0 0.0
        %5192 = vmatprep.subr.mxu0 0.0
        %5193 = vmatpush1.msra.mxu0 0.0
        %5194 = vmatprep.subr.mxu0 0.0
        %5195 = vmatpush1.msra.mxu0 0.0
        %5196 = vmatprep.subr.mxu0 0.0
        %5197 = vmatpush1.msra.mxu0 0.0
        %5198 = vmatprep.subr.mxu0 0.0
        %5199 = vmatpush1.msra.mxu0 0.0
        %5200 = vmatprep.subr.mxu0 0.0
        %5201 = vmatpush1.msra.mxu0 0.0
        %5202 = vmatprep.subr.mxu0 0.0
        %5203 = vmatpush1.msra.mxu0 0.0
        %5204 = vmatprep.subr.mxu0 0.0
        %5205 = vmatpush1.msra.mxu0 0.0
        %5206 = vmatprep.subr.mxu0 0.0
        %5207 = vmatpush1.msra.mxu0 0.0
        %5208 = vmatprep.subr.mxu0 0.0
        %5209 = vmatpush1.msra.mxu0 0.0
        %5210 = vmatprep.subr.mxu0 0.0
        %5211 = vmatpush1.msra.mxu0 0.0
        %5212 = vmatprep.subr.mxu0 0.0
        %5213 = vmatpush1.msra.mxu0 0.0
        %5214 = vmatprep.subr.mxu0 0.0
        %5215 = vmatpush1.msra.mxu0 0.0
        %5216 = vmatprep.subr.mxu0 0.0
        %5217 = vmatpush1.msra.mxu0 0.0
        %5218 = vmatprep.subr.mxu0 0.0
        %5219 = vmatpush1.msra.mxu0 0.0
        %5220 = vmatprep.subr.mxu0 0.0
        %5221 = vmatpush1.msra.mxu0 0.0
        %5222 = vmatprep.subr.mxu0 0.0
        %5223 = vmatpush1.msra.mxu0 0.0
        %5224 = vmatprep.subr.mxu0 0.0
        %5225 = vmatpush1.msra.mxu0 0.0
        %5226 = vmatprep.subr.mxu0 0.0
        %5227 = vmatpush1.msra.mxu0 0.0
        %5228 = vmatprep.mubr.f32.mxu0 0.0
        %5229 = vmatmul.mubr.f32.gmra.mrb[0].mxu0 %v5159
        %v5230 = vpop.f32.mrb[0].mxu0
        %v5231 = vadd.f32 0.0, %v5230
        %v5232 = vpop.f32.mrb[0].mxu0
        %5233 = vmatprep.mubr.f32.mxu0 0.0
        %5234 = vmatmul.mubr.f32.gmra.mrb[0].mxu0 %v5162
        %v5235 = vpop.f32.mrb[0].mxu0
        %v5236 = vadd.f32 0.0, %v5235
        %v5237 = vpop.f32.mrb[0].mxu0
        %5238 = vdwg.mxu0
        %v5239 = vld [vmem:[#allocation13] sm:$0xff]
        %v5240 = vld [vmem:[#allocation13 + $0x8] sm:$0xff]
        %s5241 = scalar_lea.vmem [#allocation5], 64
        %v5242 = vld [vmem:[%s5241] sm:$0xff]
        %v5243 = vld [vmem:[%s5241 + $0x8] sm:$0xff]
        %v5244 = vld [vmem:[%s5241 + $0x10] sm:$0xff]
        %v5245 = vld [vmem:[%s5241 + $0x18] sm:$0xff]
        %v5246 = vld [vmem:[%s5241 + $0x20] sm:$0xff]
        %v5247 = vld [vmem:[%s5241 + $0x28] sm:$0xff]
        %v5248 = vld [vmem:[%s5241 + $0x30] sm:$0xff]
        %v5249 = vld [vmem:[%s5241 + $0x38] sm:$0xff]
        %5250 = vmatprep.subr.mxu0 0.0
        %5251 = vmatpush1.msra.mxu0 %v5242
        %5252 = vmatprep.subr.mxu0 0.0
        %5253 = vmatpush1.msra.mxu0 %v5243
        %5254 = vmatprep.subr.mxu0 0.0
        %5255 = vmatpush1.msra.mxu0 %v5244
        %5256 = vmatprep.subr.mxu0 0.0
        %5257 = vmatpush1.msra.mxu0 %v5245
        %5258 = vmatprep.subr.mxu0 0.0
        %5259 = vmatpush1.msra.mxu0 %v5246
        %5260 = vmatprep.subr.mxu0 0.0
        %5261 = vmatpush1.msra.mxu0 %v5247
        %5262 = vmatprep.subr.mxu0 0.0
        %5263 = vmatpush1.msra.mxu0 %v5248
        %5264 = vmatprep.subr.mxu0 0.0
        %5265 = vmatpush1.msra.mxu0 %v5249
        %5266 = vmatprep.subr.mxu0 0.0
        %5267 = vmatpush1.msra.mxu0 0.0
        %5268 = vmatprep.subr.mxu0 0.0
        %5269 = vmatpush1.msra.mxu0 0.0
        %5270 = vmatprep.subr.mxu0 0.0
        %5271 = vmatpush1.msra.mxu0 0.0
        %5272 = vmatprep.subr.mxu0 0.0
        %5273 = vmatpush1.msra.mxu0 0.0
        %5274 = vmatprep.subr.mxu0 0.0
        %5275 = vmatpush1.msra.mxu0 0.0
        %5276 = vmatprep.subr.mxu0 0.0
        %5277 = vmatpush1.msra.mxu0 0.0
        %5278 = vmatprep.subr.mxu0 0.0
        %5279 = vmatpush1.msra.mxu0 0.0
        %5280 = vmatprep.subr.mxu0 0.0
        %5281 = vmatpush1.msra.mxu0 0.0
        %5282 = vmatprep.subr.mxu0 0.0
        %5283 = vmatpush1.msra.mxu0 0.0
        %5284 = vmatprep.subr.mxu0 0.0
        %5285 = vmatpush1.msra.mxu0 0.0
        %5286 = vmatprep.subr.mxu0 0.0
        %5287 = vmatpush1.msra.mxu0 0.0
        %5288 = vmatprep.subr.mxu0 0.0
        %5289 = vmatpush1.msra.mxu0 0.0
        %5290 = vmatprep.subr.mxu0 0.0
        %5291 = vmatpush1.msra.mxu0 0.0
        %5292 = vmatprep.subr.mxu0 0.0
        %5293 = vmatpush1.msra.mxu0 0.0
        %5294 = vmatprep.subr.mxu0 0.0
        %5295 = vmatpush1.msra.mxu0 0.0
        %5296 = vmatprep.subr.mxu0 0.0
        %5297 = vmatpush1.msra.mxu0 0.0
        %5298 = vmatprep.subr.mxu0 0.0
        %5299 = vmatpush1.msra.mxu0 0.0
        %5300 = vmatprep.subr.mxu0 0.0
        %5301 = vmatpush1.msra.mxu0 0.0
        %5302 = vmatprep.subr.mxu0 0.0
        %5303 = vmatpush1.msra.mxu0 0.0
        %5304 = vmatprep.subr.mxu0 0.0
        %5305 = vmatpush1.msra.mxu0 0.0
        %5306 = vmatprep.subr.mxu0 0.0
        %5307 = vmatpush1.msra.mxu0 0.0
        %5308 = vmatprep.subr.mxu0 0.0
        %5309 = vmatpush1.msra.mxu0 0.0
        %5310 = vmatprep.subr.mxu0 0.0
        %5311 = vmatpush1.msra.mxu0 0.0
        %5312 = vmatprep.subr.mxu0 0.0
        %5313 = vmatpush1.msra.mxu0 0.0
        %5314 = vmatprep.mubr.f32.mxu0 0.0
        %5315 = vmatmul.mubr.f32.gmra.mrb[0].mxu0 %v5159
        %v5316 = vpop.f32.mrb[0].mxu0
        %v5317 = vadd.f32 0.0, %v5316
        %v5318 = vpop.f32.mrb[0].mxu0
        %5319 = vmatprep.mubr.f32.mxu0 0.0
        %5320 = vmatmul.mubr.f32.gmra.mrb[0].mxu0 %v5162
        %v5321 = vpop.f32.mrb[0].mxu0
        %v5322 = vadd.f32 0.0, %v5321
        %v5323 = vpop.f32.mrb[0].mxu0
        %5324 = vdwg.mxu0
        %s5325 = scalar_lea.vmem [#allocation13], 16
        %v5326 = vld [vmem:[%s5325] sm:$0xff]
        %v5327 = vld [vmem:[%s5325 + $0x8] sm:$0xff]
        %v5329 = vsel %vm4456, %v5326, 0
        %v5332 = vsel %vm4456, %v5327, 0
        %5334 = vmatprep.subr.mxu0 0.0
        %5335 = vmatpush1.msra.mxu0 %v5317
        %5336 = vmatprep.subr.mxu0 0.0
        %5337 = vmatpush1.msra.mxu0 %v5322
        %5338 = vmatprep.subr.mxu0 0.0
        %5339 = vmatpush1.msra.mxu0 0.0
        %5340 = vmatprep.subr.mxu0 0.0
        %5341 = vmatpush1.msra.mxu0 0.0
        %5342 = vmatprep.subr.mxu0 0.0
        %5343 = vmatpush1.msra.mxu0 0.0
        %5344 = vmatprep.subr.mxu0 0.0
        %5345 = vmatpush1.msra.mxu0 0.0
        %5346 = vmatprep.subr.mxu0 0.0
        %5347 = vmatpush1.msra.mxu0 0.0
        %5348 = vmatprep.subr.mxu0 0.0
        %5349 = vmatpush1.msra.mxu0 0.0
        %5350 = vmatprep.subr.mxu0 0.0
        %5351 = vmatpush1.msra.mxu0 0.0
        %5352 = vmatprep.subr.mxu0 0.0
        %5353 = vmatpush1.msra.mxu0 0.0
        %5354 = vmatprep.subr.mxu0 0.0
        %5355 = vmatpush1.msra.mxu0 0.0
        %5356 = vmatprep.subr.mxu0 0.0
        %5357 = vmatpush1.msra.mxu0 0.0
        %5358 = vmatprep.subr.mxu0 0.0
        %5359 = vmatpush1.msra.mxu0 0.0
        %5360 = vmatprep.subr.mxu0 0.0
        %5361 = vmatpush1.msra.mxu0 0.0
        %5362 = vmatprep.subr.mxu0 0.0
        %5363 = vmatpush1.msra.mxu0 0.0
        %5364 = vmatprep.subr.mxu0 0.0
        %5365 = vmatpush1.msra.mxu0 0.0
        %5366 = vmatprep.subr.mxu0 0.0
        %5367 = vmatpush1.msra.mxu0 0.0
        %5368 = vmatprep.subr.mxu0 0.0
        %5369 = vmatpush1.msra.mxu0 0.0
        %5370 = vmatprep.subr.mxu0 0.0
        %5371 = vmatpush1.msra.mxu0 0.0
        %5372 = vmatprep.subr.mxu0 0.0
        %5373 = vmatpush1.msra.mxu0 0.0
        %5374 = vmatprep.subr.mxu0 0.0
        %5375 = vmatpush1.msra.mxu0 0.0
        %5376 = vmatprep.subr.mxu0 0.0
        %5377 = vmatpush1.msra.mxu0 0.0
        %5378 = vmatprep.subr.mxu0 0.0
        %5379 = vmatpush1.msra.mxu0 0.0
        %5380 = vmatprep.subr.mxu0 0.0
        %5381 = vmatpush1.msra.mxu0 0.0
        %5382 = vmatprep.subr.mxu0 0.0
        %5383 = vmatpush1.msra.mxu0 0.0
        %5384 = vmatprep.subr.mxu0 0.0
        %5385 = vmatpush1.msra.mxu0 0.0
        %5386 = vmatprep.subr.mxu0 0.0
        %5387 = vmatpush1.msra.mxu0 0.0
        %5388 = vmatprep.subr.mxu0 0.0
        %5389 = vmatpush1.msra.mxu0 0.0
        %5390 = vmatprep.subr.mxu0 0.0
        %5391 = vmatpush1.msra.mxu0 0.0
        %5392 = vmatprep.subr.mxu0 0.0
        %5393 = vmatpush1.msra.mxu0 0.0
        %5394 = vmatprep.subr.mxu0 0.0
        %5395 = vmatpush1.msra.mxu0 0.0
        %5396 = vmatprep.subr.mxu0 0.0
        %5397 = vmatpush1.msra.mxu0 0.0
        %5398 = vmatprep.mubr.f32.mxu0 0.0
        %5399 = vmatmul.mubr.f32.gmra.mrb[0].mxu0 %v5329
        %v5400 = vpop.f32.mrb[0].mxu0
        %v5401 = vadd.f32 0.0, %v5400
        %v5402 = vpop.f32.mrb[0].mxu0
        %5403 = vmatprep.mubr.f32.mxu0 0.0
        %5404 = vmatmul.mubr.f32.gmra.mrb[0].mxu0 %v5332
        %v5405 = vpop.f32.mrb[0].mxu0
        %v5406 = vadd.f32 0.0, %v5405
        %v5407 = vpop.f32.mrb[0].mxu0
        %5408 = vdwg.mxu0
        %v5410 = vsel %vm4456, %v5239, 0
        %v5413 = vsel %vm4456, %v5240, 0
        %5415 = vmatprep.subr.mxu0 0.0
        %5416 = vmatpush1.msra.mxu0 %v5231
        %5417 = vmatprep.subr.mxu0 0.0
        %5418 = vmatpush1.msra.mxu0 %v5236
        %5419 = vmatprep.subr.mxu0 0.0
        %5420 = vmatpush1.msra.mxu0 0.0
        %5421 = vmatprep.subr.mxu0 0.0
        %5422 = vmatpush1.msra.mxu0 0.0
        %5423 = vmatprep.subr.mxu0 0.0
        %5424 = vmatpush1.msra.mxu0 0.0
        %5425 = vmatprep.subr.mxu0 0.0
        %5426 = vmatpush1.msra.mxu0 0.0
        %5427 = vmatprep.subr.mxu0 0.0
        %5428 = vmatpush1.msra.mxu0 0.0
        %5429 = vmatprep.subr.mxu0 0.0
        %5430 = vmatpush1.msra.mxu0 0.0
        %5431 = vmatprep.subr.mxu0 0.0
        %5432 = vmatpush1.msra.mxu0 0.0
        %5433 = vmatprep.subr.mxu0 0.0
        %5434 = vmatpush1.msra.mxu0 0.0
        %5435 = vmatprep.subr.mxu0 0.0
        %5436 = vmatpush1.msra.mxu0 0.0
        %5437 = vmatprep.subr.mxu0 0.0
        %5438 = vmatpush1.msra.mxu0 0.0
        %5439 = vmatprep.subr.mxu0 0.0
        %5440 = vmatpush1.msra.mxu0 0.0
        %5441 = vmatprep.subr.mxu0 0.0
        %5442 = vmatpush1.msra.mxu0 0.0
        %5443 = vmatprep.subr.mxu0 0.0
        %5444 = vmatpush1.msra.mxu0 0.0
        %5445 = vmatprep.subr.mxu0 0.0
        %5446 = vmatpush1.msra.mxu0 0.0
        %5447 = vmatprep.subr.mxu0 0.0
        %5448 = vmatpush1.msra.mxu0 0.0
        %5449 = vmatprep.subr.mxu0 0.0
        %5450 = vmatpush1.msra.mxu0 0.0
        %5451 = vmatprep.subr.mxu0 0.0
        %5452 = vmatpush1.msra.mxu0 0.0
        %5453 = vmatprep.subr.mxu0 0.0
        %5454 = vmatpush1.msra.mxu0 0.0
        %5455 = vmatprep.subr.mxu0 0.0
        %5456 = vmatpush1.msra.mxu0 0.0
        %5457 = vmatprep.subr.mxu0 0.0
        %5458 = vmatpush1.msra.mxu0 0.0
        %5459 = vmatprep.subr.mxu0 0.0
        %5460 = vmatpush1.msra.mxu0 0.0
        %5461 = vmatprep.subr.mxu0 0.0
        %5462 = vmatpush1.msra.mxu0 0.0
        %5463 = vmatprep.subr.mxu0 0.0
        %5464 = vmatpush1.msra.mxu0 0.0
        %5465 = vmatprep.subr.mxu0 0.0
        %5466 = vmatpush1.msra.mxu0 0.0
        %5467 = vmatprep.subr.mxu0 0.0
        %5468 = vmatpush1.msra.mxu0 0.0
        %5469 = vmatprep.subr.mxu0 0.0
        %5470 = vmatpush1.msra.mxu0 0.0
        %5471 = vmatprep.subr.mxu0 0.0
        %5472 = vmatpush1.msra.mxu0 0.0
        %5473 = vmatprep.subr.mxu0 0.0
        %5474 = vmatpush1.msra.mxu0 0.0
        %5475 = vmatprep.subr.mxu0 0.0
        %5476 = vmatpush1.msra.mxu0 0.0
        %5477 = vmatprep.subr.mxu0 0.0
        %5478 = vmatpush1.msra.mxu0 0.0
        %5479 = vmatprep.mubr.f32.mxu0 0.0
        %5480 = vmatmul.mubr.f32.gmra.mrb[0].mxu0 %v5410
        %v5481 = vpop.f32.mrb[0].mxu0
        %v5482 = vadd.f32 %v5401, %v5481
        %v5483 = vpop.f32.mrb[0].mxu0
        %5484 = vmatprep.mubr.f32.mxu0 0.0
        %5485 = vmatmul.mubr.f32.gmra.mrb[0].mxu0 %v5413
        %v5486 = vpop.f32.mrb[0].mxu0
        %v5487 = vadd.f32 %v5406, %v5486
        %v5488 = vpop.f32.mrb[0].mxu0
        %5489 = vdwg.mxu0
        %s5490 = scalar_lea.vmem [#allocation5], 128
        %v5491 = vld [vmem:[%s5490] sm:$0xff]
        %v5492 = vld [vmem:[%s5490 + $0x8] sm:$0xff]
        %v5493 = vld [vmem:[%s5490 + $0x10] sm:$0xff]
        %v5494 = vld [vmem:[%s5490 + $0x18] sm:$0xff]
        %v5495 = vld [vmem:[%s5490 + $0x20] sm:$0xff]
        %v5496 = vld [vmem:[%s5490 + $0x28] sm:$0xff]
        %v5497 = vld [vmem:[%s5490 + $0x30] sm:$0xff]
        %v5498 = vld [vmem:[%s5490 + $0x38] sm:$0xff]
        %5499 = vmatprep.subr.mxu0 0.0
        %5500 = vmatpush1.msra.mxu0 %v5491
        %5501 = vmatprep.subr.mxu0 0.0
        %5502 = vmatpush1.msra.mxu0 %v5492
        %5503 = vmatprep.subr.mxu0 0.0
        %5504 = vmatpush1.msra.mxu0 %v5493
        %5505 = vmatprep.subr.mxu0 0.0
        %5506 = vmatpush1.msra.mxu0 %v5494
        %5507 = vmatprep.subr.mxu0 0.0
        %5508 = vmatpush1.msra.mxu0 %v5495
        %5509 = vmatprep.subr.mxu0 0.0
        %5510 = vmatpush1.msra.mxu0 %v5496
        %5511 = vmatprep.subr.mxu0 0.0
        %5512 = vmatpush1.msra.mxu0 %v5497
        %5513 = vmatprep.subr.mxu0 0.0
        %5514 = vmatpush1.msra.mxu0 %v5498
        %5515 = vmatprep.subr.mxu0 0.0
        %5516 = vmatpush1.msra.mxu0 0.0
        %5517 = vmatprep.subr.mxu0 0.0
        %5518 = vmatpush1.msra.mxu0 0.0
        %5519 = vmatprep.subr.mxu0 0.0
        %5520 = vmatpush1.msra.mxu0 0.0
        %5521 = vmatprep.subr.mxu0 0.0
        %5522 = vmatpush1.msra.mxu0 0.0
        %5523 = vmatprep.subr.mxu0 0.0
        %5524 = vmatpush1.msra.mxu0 0.0
        %5525 = vmatprep.subr.mxu0 0.0
        %5526 = vmatpush1.msra.mxu0 0.0
        %5527 = vmatprep.subr.mxu0 0.0
        %5528 = vmatpush1.msra.mxu0 0.0
        %5529 = vmatprep.subr.mxu0 0.0
        %5530 = vmatpush1.msra.mxu0 0.0
        %5531 = vmatprep.subr.mxu0 0.0
        %5532 = vmatpush1.msra.mxu0 0.0
        %5533 = vmatprep.subr.mxu0 0.0
        %5534 = vmatpush1.msra.mxu0 0.0
        %5535 = vmatprep.subr.mxu0 0.0
        %5536 = vmatpush1.msra.mxu0 0.0
        %5537 = vmatprep.subr.mxu0 0.0
        %5538 = vmatpush1.msra.mxu0 0.0
        %5539 = vmatprep.subr.mxu0 0.0
        %5540 = vmatpush1.msra.mxu0 0.0
        %5541 = vmatprep.subr.mxu0 0.0
        %5542 = vmatpush1.msra.mxu0 0.0
        %5543 = vmatprep.subr.mxu0 0.0
        %5544 = vmatpush1.msra.mxu0 0.0
        %5545 = vmatprep.subr.mxu0 0.0
        %5546 = vmatpush1.msra.mxu0 0.0
        %5547 = vmatprep.subr.mxu0 0.0
        %5548 = vmatpush1.msra.mxu0 0.0
        %5549 = vmatprep.subr.mxu0 0.0
        %5550 = vmatpush1.msra.mxu0 0.0
        %5551 = vmatprep.subr.mxu0 0.0
        %5552 = vmatpush1.msra.mxu0 0.0
        %5553 = vmatprep.subr.mxu0 0.0
        %5554 = vmatpush1.msra.mxu0 0.0
        %5555 = vmatprep.subr.mxu0 0.0
        %5556 = vmatpush1.msra.mxu0 0.0
        %5557 = vmatprep.subr.mxu0 0.0
        %5558 = vmatpush1.msra.mxu0 0.0
        %5559 = vmatprep.subr.mxu0 0.0
        %5560 = vmatpush1.msra.mxu0 0.0
        %5561 = vmatprep.subr.mxu0 0.0
        %5562 = vmatpush1.msra.mxu0 0.0
        %5563 = vmatprep.mubr.f32.mxu0 0.0
        %5564 = vmatmul.mubr.f32.gmra.mrb[0].mxu0 %v5159
        %v5565 = vpop.f32.mrb[0].mxu0
        %v5566 = vadd.f32 0.0, %v5565
        %v5567 = vpop.f32.mrb[0].mxu0
        %5568 = vmatprep.mubr.f32.mxu0 0.0
        %5569 = vmatmul.mubr.f32.gmra.mrb[0].mxu0 %v5162
        %v5570 = vpop.f32.mrb[0].mxu0
        %v5571 = vadd.f32 0.0, %v5570
        %v5572 = vpop.f32.mrb[0].mxu0
        %5573 = vdwg.mxu0
        %s5574 = scalar_lea.vmem [#allocation13], 32
        %v5575 = vld [vmem:[%s5574] sm:$0xff]
        %v5576 = vld [vmem:[%s5574 + $0x8] sm:$0xff]
        %v5578 = vsel %vm4456, %v5575, 0
        %v5581 = vsel %vm4456, %v5576, 0
        %5583 = vmatprep.subr.mxu0 0.0
        %5584 = vmatpush1.msra.mxu0 %v5566
        %5585 = vmatprep.subr.mxu0 0.0
        %5586 = vmatpush1.msra.mxu0 %v5571
        %5587 = vmatprep.subr.mxu0 0.0
        %5588 = vmatpush1.msra.mxu0 0.0
        %5589 = vmatprep.subr.mxu0 0.0
        %5590 = vmatpush1.msra.mxu0 0.0
        %5591 = vmatprep.subr.mxu0 0.0
        %5592 = vmatpush1.msra.mxu0 0.0
        %5593 = vmatprep.subr.mxu0 0.0
        %5594 = vmatpush1.msra.mxu0 0.0
        %5595 = vmatprep.subr.mxu0 0.0
        %5596 = vmatpush1.msra.mxu0 0.0
        %5597 = vmatprep.subr.mxu0 0.0
        %5598 = vmatpush1.msra.mxu0 0.0
        %5599 = vmatprep.subr.mxu0 0.0
        %5600 = vmatpush1.msra.mxu0 0.0
        %5601 = vmatprep.subr.mxu0 0.0
        %5602 = vmatpush1.msra.mxu0 0.0
        %5603 = vmatprep.subr.mxu0 0.0
        %5604 = vmatpush1.msra.mxu0 0.0
        %5605 = vmatprep.subr.mxu0 0.0
        %5606 = vmatpush1.msra.mxu0 0.0
        %5607 = vmatprep.subr.mxu0 0.0
        %5608 = vmatpush1.msra.mxu0 0.0
        %5609 = vmatprep.subr.mxu0 0.0
        %5610 = vmatpush1.msra.mxu0 0.0
        %5611 = vmatprep.subr.mxu0 0.0
        %5612 = vmatpush1.msra.mxu0 0.0
        %5613 = vmatprep.subr.mxu0 0.0
        %5614 = vmatpush1.msra.mxu0 0.0
        %5615 = vmatprep.subr.mxu0 0.0
        %5616 = vmatpush1.msra.mxu0 0.0
        %5617 = vmatprep.subr.mxu0 0.0
        %5618 = vmatpush1.msra.mxu0 0.0
        %5619 = vmatprep.subr.mxu0 0.0
        %5620 = vmatpush1.msra.mxu0 0.0
        %5621 = vmatprep.subr.mxu0 0.0
        %5622 = vmatpush1.msra.mxu0 0.0
        %5623 = vmatprep.subr.mxu0 0.0
        %5624 = vmatpush1.msra.mxu0 0.0
        %5625 = vmatprep.subr.mxu0 0.0
        %5626 = vmatpush1.msra.mxu0 0.0
        %5627 = vmatprep.subr.mxu0 0.0
        %5628 = vmatpush1.msra.mxu0 0.0
        %5629 = vmatprep.subr.mxu0 0.0
        %5630 = vmatpush1.msra.mxu0 0.0
        %5631 = vmatprep.subr.mxu0 0.0
        %5632 = vmatpush1.msra.mxu0 0.0
        %5633 = vmatprep.subr.mxu0 0.0
        %5634 = vmatpush1.msra.mxu0 0.0
        %5635 = vmatprep.subr.mxu0 0.0
        %5636 = vmatpush1.msra.mxu0 0.0
        %5637 = vmatprep.subr.mxu0 0.0
        %5638 = vmatpush1.msra.mxu0 0.0
        %5639 = vmatprep.subr.mxu0 0.0
        %5640 = vmatpush1.msra.mxu0 0.0
        %5641 = vmatprep.subr.mxu0 0.0
        %5642 = vmatpush1.msra.mxu0 0.0
        %5643 = vmatprep.subr.mxu0 0.0
        %5644 = vmatpush1.msra.mxu0 0.0
        %5645 = vmatprep.subr.mxu0 0.0
        %5646 = vmatpush1.msra.mxu0 0.0
        %5647 = vmatprep.mubr.f32.mxu0 0.0
        %5648 = vmatmul.mubr.f32.gmra.mrb[0].mxu0 %v5578
        %v5649 = vpop.f32.mrb[0].mxu0
        %v5650 = vadd.f32 0.0, %v5649
        %v5651 = vpop.f32.mrb[0].mxu0
        %5652 = vmatprep.mubr.f32.mxu0 0.0
        %5653 = vmatmul.mubr.f32.gmra.mrb[0].mxu0 %v5581
        %v5654 = vpop.f32.mrb[0].mxu0
        %v5655 = vadd.f32 0.0, %v5654
        %v5656 = vpop.f32.mrb[0].mxu0
        %5657 = vdwg.mxu0
        %v5658 = vadd.f32 %v5482, %v5650
        %v5659 = vadd.f32 %v5487, %v5655
        %s5660 = scalar_lea.vmem [#allocation5], 192
        %v5661 = vld [vmem:[%s5660] sm:$0xff]
        %v5662 = vld [vmem:[%s5660 + $0x8] sm:$0xff]
        %v5663 = vld [vmem:[%s5660 + $0x10] sm:$0xff]
        %v5664 = vld [vmem:[%s5660 + $0x18] sm:$0xff]
        %v5665 = vld [vmem:[%s5660 + $0x20] sm:$0xff]
        %v5666 = vld [vmem:[%s5660 + $0x28] sm:$0xff]
        %v5667 = vld [vmem:[%s5660 + $0x30] sm:$0xff]
        %v5668 = vld [vmem:[%s5660 + $0x38] sm:$0xff]
        %5669 = vmatprep.subr.mxu0 0.0
        %5670 = vmatpush1.msra.mxu0 %v5661
        %5671 = vmatprep.subr.mxu0 0.0
        %5672 = vmatpush1.msra.mxu0 %v5662
        %5673 = vmatprep.subr.mxu0 0.0
        %5674 = vmatpush1.msra.mxu0 %v5663
        %5675 = vmatprep.subr.mxu0 0.0
        %5676 = vmatpush1.msra.mxu0 %v5664
        %5677 = vmatprep.subr.mxu0 0.0
        %5678 = vmatpush1.msra.mxu0 %v5665
        %5679 = vmatprep.subr.mxu0 0.0
        %5680 = vmatpush1.msra.mxu0 %v5666
        %5681 = vmatprep.subr.mxu0 0.0
        %5682 = vmatpush1.msra.mxu0 %v5667
        %5683 = vmatprep.subr.mxu0 0.0
        %5684 = vmatpush1.msra.mxu0 %v5668
        %5685 = vmatprep.subr.mxu0 0.0
        %5686 = vmatpush1.msra.mxu0 0.0
        %5687 = vmatprep.subr.mxu0 0.0
        %5688 = vmatpush1.msra.mxu0 0.0
        %5689 = vmatprep.subr.mxu0 0.0
        %5690 = vmatpush1.msra.mxu0 0.0
        %5691 = vmatprep.subr.mxu0 0.0
        %5692 = vmatpush1.msra.mxu0 0.0
        %5693 = vmatprep.subr.mxu0 0.0
        %5694 = vmatpush1.msra.mxu0 0.0
        %5695 = vmatprep.subr.mxu0 0.0
        %5696 = vmatpush1.msra.mxu0 0.0
        %5697 = vmatprep.subr.mxu0 0.0
        %5698 = vmatpush1.msra.mxu0 0.0
        %5699 = vmatprep.subr.mxu0 0.0
        %5700 = vmatpush1.msra.mxu0 0.0
        %5701 = vmatprep.subr.mxu0 0.0
        %5702 = vmatpush1.msra.mxu0 0.0
        %5703 = vmatprep.subr.mxu0 0.0
        %5704 = vmatpush1.msra.mxu0 0.0
        %5705 = vmatprep.subr.mxu0 0.0
        %5706 = vmatpush1.msra.mxu0 0.0
        %5707 = vmatprep.subr.mxu0 0.0
        %5708 = vmatpush1.msra.mxu0 0.0
        %5709 = vmatprep.subr.mxu0 0.0
        %5710 = vmatpush1.msra.mxu0 0.0
        %5711 = vmatprep.subr.mxu0 0.0
        %5712 = vmatpush1.msra.mxu0 0.0
        %5713 = vmatprep.subr.mxu0 0.0
        %5714 = vmatpush1.msra.mxu0 0.0
        %5715 = vmatprep.subr.mxu0 0.0
        %5716 = vmatpush1.msra.mxu0 0.0
        %5717 = vmatprep.subr.mxu0 0.0
        %5718 = vmatpush1.msra.mxu0 0.0
        %5719 = vmatprep.subr.mxu0 0.0
        %5720 = vmatpush1.msra.mxu0 0.0
        %5721 = vmatprep.subr.mxu0 0.0
        %5722 = vmatpush1.msra.mxu0 0.0
        %5723 = vmatprep.subr.mxu0 0.0
        %5724 = vmatpush1.msra.mxu0 0.0
        %5725 = vmatprep.subr.mxu0 0.0
        %5726 = vmatpush1.msra.mxu0 0.0
        %5727 = vmatprep.subr.mxu0 0.0
        %5728 = vmatpush1.msra.mxu0 0.0
        %5729 = vmatprep.subr.mxu0 0.0
        %5730 = vmatpush1.msra.mxu0 0.0
        %5731 = vmatprep.subr.mxu0 0.0
        %5732 = vmatpush1.msra.mxu0 0.0
        %5733 = vmatprep.mubr.f32.mxu0 0.0
        %5734 = vmatmul.mubr.f32.gmra.mrb[0].mxu0 %v5159
        %v5735 = vpop.f32.mrb[0].mxu0
        %v5736 = vadd.f32 0.0, %v5735
        %v5737 = vpop.f32.mrb[0].mxu0
        %5738 = vmatprep.mubr.f32.mxu0 0.0
        %5739 = vmatmul.mubr.f32.gmra.mrb[0].mxu0 %v5162
        %v5740 = vpop.f32.mrb[0].mxu0
        %v5741 = vadd.f32 0.0, %v5740
        %v5742 = vpop.f32.mrb[0].mxu0
        %5743 = vdwg.mxu0
        %s5744 = scalar_lea.vmem [#allocation13], 48
        %v5745 = vld [vmem:[%s5744] sm:$0xff]
        %v5746 = vld [vmem:[%s5744 + $0x8] sm:$0xff]
        %v5748 = vsel %vm4456, %v5745, 0
        %v5751 = vsel %vm4456, %v5746, 0
        %5753 = vmatprep.subr.mxu0 0.0
        %5754 = vmatpush1.msra.mxu0 %v5736
        %5755 = vmatprep.subr.mxu0 0.0
        %5756 = vmatpush1.msra.mxu0 %v5741
        %5757 = vmatprep.subr.mxu0 0.0
        %5758 = vmatpush1.msra.mxu0 0.0
        %5759 = vmatprep.subr.mxu0 0.0
        %5760 = vmatpush1.msra.mxu0 0.0
        %5761 = vmatprep.subr.mxu0 0.0
        %5762 = vmatpush1.msra.mxu0 0.0
        %5763 = vmatprep.subr.mxu0 0.0
        %5764 = vmatpush1.msra.mxu0 0.0
        %5765 = vmatprep.subr.mxu0 0.0
        %5766 = vmatpush1.msra.mxu0 0.0
        %5767 = vmatprep.subr.mxu0 0.0
        %5768 = vmatpush1.msra.mxu0 0.0
        %5769 = vmatprep.subr.mxu0 0.0
        %5770 = vmatpush1.msra.mxu0 0.0
        %5771 = vmatprep.subr.mxu0 0.0
        %5772 = vmatpush1.msra.mxu0 0.0
        %5773 = vmatprep.subr.mxu0 0.0
        %5774 = vmatpush1.msra.mxu0 0.0
        %5775 = vmatprep.subr.mxu0 0.0
        %5776 = vmatpush1.msra.mxu0 0.0
        %5777 = vmatprep.subr.mxu0 0.0
        %5778 = vmatpush1.msra.mxu0 0.0
        %5779 = vmatprep.subr.mxu0 0.0
        %5780 = vmatpush1.msra.mxu0 0.0
        %5781 = vmatprep.subr.mxu0 0.0
        %5782 = vmatpush1.msra.mxu0 0.0
        %5783 = vmatprep.subr.mxu0 0.0
        %5784 = vmatpush1.msra.mxu0 0.0
        %5785 = vmatprep.subr.mxu0 0.0
        %5786 = vmatpush1.msra.mxu0 0.0
        %5787 = vmatprep.subr.mxu0 0.0
        %5788 = vmatpush1.msra.mxu0 0.0
        %5789 = vmatprep.subr.mxu0 0.0
        %5790 = vmatpush1.msra.mxu0 0.0
        %5791 = vmatprep.subr.mxu0 0.0
        %5792 = vmatpush1.msra.mxu0 0.0
        %5793 = vmatprep.subr.mxu0 0.0
        %5794 = vmatpush1.msra.mxu0 0.0
        %5795 = vmatprep.subr.mxu0 0.0
        %5796 = vmatpush1.msra.mxu0 0.0
        %5797 = vmatprep.subr.mxu0 0.0
        %5798 = vmatpush1.msra.mxu0 0.0
        %5799 = vmatprep.subr.mxu0 0.0
        %5800 = vmatpush1.msra.mxu0 0.0
        %5801 = vmatprep.subr.mxu0 0.0
        %5802 = vmatpush1.msra.mxu0 0.0
        %5803 = vmatprep.subr.mxu0 0.0
        %5804 = vmatpush1.msra.mxu0 0.0
        %5805 = vmatprep.subr.mxu0 0.0
        %5806 = vmatpush1.msra.mxu0 0.0
        %5807 = vmatprep.subr.mxu0 0.0
        %5808 = vmatpush1.msra.mxu0 0.0
        %5809 = vmatprep.subr.mxu0 0.0
        %5810 = vmatpush1.msra.mxu0 0.0
        %5811 = vmatprep.subr.mxu0 0.0
        %5812 = vmatpush1.msra.mxu0 0.0
        %5813 = vmatprep.subr.mxu0 0.0
        %5814 = vmatpush1.msra.mxu0 0.0
        %5815 = vmatprep.subr.mxu0 0.0
        %5816 = vmatpush1.msra.mxu0 0.0
        %5817 = vmatprep.mubr.f32.mxu0 0.0
        %5818 = vmatmul.mubr.f32.gmra.mrb[0].mxu0 %v5748
        %v5819 = vpop.f32.mrb[0].mxu0
        %v5820 = vadd.f32 0.0, %v5819
        %v5821 = vpop.f32.mrb[0].mxu0
        %5822 = vmatprep.mubr.f32.mxu0 0.0
        %5823 = vmatmul.mubr.f32.gmra.mrb[0].mxu0 %v5751
        %v5824 = vpop.f32.mrb[0].mxu0
        %v5825 = vadd.f32 0.0, %v5824
        %v5826 = vpop.f32.mrb[0].mxu0
        %5827 = vdwg.mxu0
        %v5828 = vadd.f32 %v5658, %v5820
        %v5829 = vadd.f32 %v5659, %v5825
        %s5830 = scalar_lea.vmem [#allocation5], 256
        %v5831 = vld [vmem:[%s5830] sm:$0xff]
        %v5832 = vld [vmem:[%s5830 + $0x8] sm:$0xff]
        %v5833 = vld [vmem:[%s5830 + $0x10] sm:$0xff]
        %v5834 = vld [vmem:[%s5830 + $0x18] sm:$0xff]
        %v5835 = vld [vmem:[%s5830 + $0x20] sm:$0xff]
        %v5836 = vld [vmem:[%s5830 + $0x28] sm:$0xff]
        %v5837 = vld [vmem:[%s5830 + $0x30] sm:$0xff]
        %v5838 = vld [vmem:[%s5830 + $0x38] sm:$0xff]
        %5839 = vmatprep.subr.mxu0 0.0
        %5840 = vmatpush1.msra.mxu0 %v5831
        %5841 = vmatprep.subr.mxu0 0.0
        %5842 = vmatpush1.msra.mxu0 %v5832
        %5843 = vmatprep.subr.mxu0 0.0
        %5844 = vmatpush1.msra.mxu0 %v5833
        %5845 = vmatprep.subr.mxu0 0.0
        %5846 = vmatpush1.msra.mxu0 %v5834
        %5847 = vmatprep.subr.mxu0 0.0
        %5848 = vmatpush1.msra.mxu0 %v5835
        %5849 = vmatprep.subr.mxu0 0.0
        %5850 = vmatpush1.msra.mxu0 %v5836
        %5851 = vmatprep.subr.mxu0 0.0
        %5852 = vmatpush1.msra.mxu0 %v5837
        %5853 = vmatprep.subr.mxu0 0.0
        %5854 = vmatpush1.msra.mxu0 %v5838
        %5855 = vmatprep.subr.mxu0 0.0
        %5856 = vmatpush1.msra.mxu0 0.0
        %5857 = vmatprep.subr.mxu0 0.0
        %5858 = vmatpush1.msra.mxu0 0.0
        %5859 = vmatprep.subr.mxu0 0.0
        %5860 = vmatpush1.msra.mxu0 0.0
        %5861 = vmatprep.subr.mxu0 0.0
        %5862 = vmatpush1.msra.mxu0 0.0
        %5863 = vmatprep.subr.mxu0 0.0
        %5864 = vmatpush1.msra.mxu0 0.0
        %5865 = vmatprep.subr.mxu0 0.0
        %5866 = vmatpush1.msra.mxu0 0.0
        %5867 = vmatprep.subr.mxu0 0.0
        %5868 = vmatpush1.msra.mxu0 0.0
        %5869 = vmatprep.subr.mxu0 0.0
        %5870 = vmatpush1.msra.mxu0 0.0
        %5871 = vmatprep.subr.mxu0 0.0
        %5872 = vmatpush1.msra.mxu0 0.0
        %5873 = vmatprep.subr.mxu0 0.0
        %5874 = vmatpush1.msra.mxu0 0.0
        %5875 = vmatprep.subr.mxu0 0.0
        %5876 = vmatpush1.msra.mxu0 0.0
        %5877 = vmatprep.subr.mxu0 0.0
        %5878 = vmatpush1.msra.mxu0 0.0
        %5879 = vmatprep.subr.mxu0 0.0
        %5880 = vmatpush1.msra.mxu0 0.0
        %5881 = vmatprep.subr.mxu0 0.0
        %5882 = vmatpush1.msra.mxu0 0.0
        %5883 = vmatprep.subr.mxu0 0.0
        %5884 = vmatpush1.msra.mxu0 0.0
        %5885 = vmatprep.subr.mxu0 0.0
        %5886 = vmatpush1.msra.mxu0 0.0
        %5887 = vmatprep.subr.mxu0 0.0
        %5888 = vmatpush1.msra.mxu0 0.0
        %5889 = vmatprep.subr.mxu0 0.0
        %5890 = vmatpush1.msra.mxu0 0.0
        %5891 = vmatprep.subr.mxu0 0.0
        %5892 = vmatpush1.msra.mxu0 0.0
        %5893 = vmatprep.subr.mxu0 0.0
        %5894 = vmatpush1.msra.mxu0 0.0
        %5895 = vmatprep.subr.mxu0 0.0
        %5896 = vmatpush1.msra.mxu0 0.0
        %5897 = vmatprep.subr.mxu0 0.0
        %5898 = vmatpush1.msra.mxu0 0.0
        %5899 = vmatprep.subr.mxu0 0.0
        %5900 = vmatpush1.msra.mxu0 0.0
        %5901 = vmatprep.subr.mxu0 0.0
        %5902 = vmatpush1.msra.mxu0 0.0
        %5903 = vmatprep.mubr.f32.mxu0 0.0
        %5904 = vmatmul.mubr.f32.gmra.mrb[0].mxu0 %v5159
        %v5905 = vpop.f32.mrb[0].mxu0
        %v5906 = vadd.f32 0.0, %v5905
        %v5907 = vpop.f32.mrb[0].mxu0
        %5908 = vmatprep.mubr.f32.mxu0 0.0
        %5909 = vmatmul.mubr.f32.gmra.mrb[0].mxu0 %v5162
        %v5910 = vpop.f32.mrb[0].mxu0
        %v5911 = vadd.f32 0.0, %v5910
        %v5912 = vpop.f32.mrb[0].mxu0
        %5913 = vdwg.mxu0
        %s5914 = scalar_lea.vmem [#allocation13], 64
        %v5915 = vld [vmem:[%s5914] sm:$0xff]
        %v5916 = vld [vmem:[%s5914 + $0x8] sm:$0xff]
        %v5918 = vsel %vm4456, %v5915, 0
        %v5921 = vsel %vm4456, %v5916, 0
        %5923 = vmatprep.subr.mxu0 0.0
        %5924 = vmatpush1.msra.mxu0 %v5906
        %5925 = vmatprep.subr.mxu0 0.0
        %5926 = vmatpush1.msra.mxu0 %v5911
        %5927 = vmatprep.subr.mxu0 0.0
        %5928 = vmatpush1.msra.mxu0 0.0
        %5929 = vmatprep.subr.mxu0 0.0
        %5930 = vmatpush1.msra.mxu0 0.0
        %5931 = vmatprep.subr.mxu0 0.0
        %5932 = vmatpush1.msra.mxu0 0.0
        %5933 = vmatprep.subr.mxu0 0.0
        %5934 = vmatpush1.msra.mxu0 0.0
        %5935 = vmatprep.subr.mxu0 0.0
        %5936 = vmatpush1.msra.mxu0 0.0
        %5937 = vmatprep.subr.mxu0 0.0
        %5938 = vmatpush1.msra.mxu0 0.0
        %5939 = vmatprep.subr.mxu0 0.0
        %5940 = vmatpush1.msra.mxu0 0.0
        %5941 = vmatprep.subr.mxu0 0.0
        %5942 = vmatpush1.msra.mxu0 0.0
        %5943 = vmatprep.subr.mxu0 0.0
        %5944 = vmatpush1.msra.mxu0 0.0
        %5945 = vmatprep.subr.mxu0 0.0
        %5946 = vmatpush1.msra.mxu0 0.0
        %5947 = vmatprep.subr.mxu0 0.0
        %5948 = vmatpush1.msra.mxu0 0.0
        %5949 = vmatprep.subr.mxu0 0.0
        %5950 = vmatpush1.msra.mxu0 0.0
        %5951 = vmatprep.subr.mxu0 0.0
        %5952 = vmatpush1.msra.mxu0 0.0
        %5953 = vmatprep.subr.mxu0 0.0
        %5954 = vmatpush1.msra.mxu0 0.0
        %5955 = vmatprep.subr.mxu0 0.0
        %5956 = vmatpush1.msra.mxu0 0.0
        %5957 = vmatprep.subr.mxu0 0.0
        %5958 = vmatpush1.msra.mxu0 0.0
        %5959 = vmatprep.subr.mxu0 0.0
        %5960 = vmatpush1.msra.mxu0 0.0
        %5961 = vmatprep.subr.mxu0 0.0
        %5962 = vmatpush1.msra.mxu0 0.0
        %5963 = vmatprep.subr.mxu0 0.0
        %5964 = vmatpush1.msra.mxu0 0.0
        %5965 = vmatprep.subr.mxu0 0.0
        %5966 = vmatpush1.msra.mxu0 0.0
        %5967 = vmatprep.subr.mxu0 0.0
        %5968 = vmatpush1.msra.mxu0 0.0
        %5969 = vmatprep.subr.mxu0 0.0
        %5970 = vmatpush1.msra.mxu0 0.0
        %5971 = vmatprep.subr.mxu0 0.0
        %5972 = vmatpush1.msra.mxu0 0.0
        %5973 = vmatprep.subr.mxu0 0.0
        %5974 = vmatpush1.msra.mxu0 0.0
        %5975 = vmatprep.subr.mxu0 0.0
        %5976 = vmatpush1.msra.mxu0 0.0
        %5977 = vmatprep.subr.mxu0 0.0
        %5978 = vmatpush1.msra.mxu0 0.0
        %5979 = vmatprep.subr.mxu0 0.0
        %5980 = vmatpush1.msra.mxu0 0.0
        %5981 = vmatprep.subr.mxu0 0.0
        %5982 = vmatpush1.msra.mxu0 0.0
        %5983 = vmatprep.subr.mxu0 0.0
        %5984 = vmatpush1.msra.mxu0 0.0
        %5985 = vmatprep.subr.mxu0 0.0
        %5986 = vmatpush1.msra.mxu0 0.0
        %5987 = vmatprep.mubr.f32.mxu0 0.0
        %5988 = vmatmul.mubr.f32.gmra.mrb[0].mxu0 %v5918
        %v5989 = vpop.f32.mrb[0].mxu0
        %v5990 = vadd.f32 0.0, %v5989
        %v5991 = vpop.f32.mrb[0].mxu0
        %5992 = vmatprep.mubr.f32.mxu0 0.0
        %5993 = vmatmul.mubr.f32.gmra.mrb[0].mxu0 %v5921
        %v5994 = vpop.f32.mrb[0].mxu0
        %v5995 = vadd.f32 0.0, %v5994
        %v5996 = vpop.f32.mrb[0].mxu0
        %5997 = vdwg.mxu0
        %v5998 = vadd.f32 %v5828, %v5990
        %v5999 = vadd.f32 %v5829, %v5995
        %s6000 = scalar_lea.vmem [#allocation5], 320
        %v6001 = vld [vmem:[%s6000] sm:$0xff]
        %v6002 = vld [vmem:[%s6000 + $0x8] sm:$0xff]
        %v6003 = vld [vmem:[%s6000 + $0x10] sm:$0xff]
        %v6004 = vld [vmem:[%s6000 + $0x18] sm:$0xff]
        %v6005 = vld [vmem:[%s6000 + $0x20] sm:$0xff]
        %v6006 = vld [vmem:[%s6000 + $0x28] sm:$0xff]
        %v6007 = vld [vmem:[%s6000 + $0x30] sm:$0xff]
        %v6008 = vld [vmem:[%s6000 + $0x38] sm:$0xff]
        %6009 = vmatprep.subr.mxu0 0.0
        %6010 = vmatpush1.msra.mxu0 %v6001
        %6011 = vmatprep.subr.mxu0 0.0
        %6012 = vmatpush1.msra.mxu0 %v6002
        %6013 = vmatprep.subr.mxu0 0.0
        %6014 = vmatpush1.msra.mxu0 %v6003
        %6015 = vmatprep.subr.mxu0 0.0
        %6016 = vmatpush1.msra.mxu0 %v6004
        %6017 = vmatprep.subr.mxu0 0.0
        %6018 = vmatpush1.msra.mxu0 %v6005
        %6019 = vmatprep.subr.mxu0 0.0
        %6020 = vmatpush1.msra.mxu0 %v6006
        %6021 = vmatprep.subr.mxu0 0.0
        %6022 = vmatpush1.msra.mxu0 %v6007
        %6023 = vmatprep.subr.mxu0 0.0
        %6024 = vmatpush1.msra.mxu0 %v6008
        %6025 = vmatprep.subr.mxu0 0.0
        %6026 = vmatpush1.msra.mxu0 0.0
        %6027 = vmatprep.subr.mxu0 0.0
        %6028 = vmatpush1.msra.mxu0 0.0
        %6029 = vmatprep.subr.mxu0 0.0
        %6030 = vmatpush1.msra.mxu0 0.0
        %6031 = vmatprep.subr.mxu0 0.0
        %6032 = vmatpush1.msra.mxu0 0.0
        %6033 = vmatprep.subr.mxu0 0.0
        %6034 = vmatpush1.msra.mxu0 0.0
        %6035 = vmatprep.subr.mxu0 0.0
        %6036 = vmatpush1.msra.mxu0 0.0
        %6037 = vmatprep.subr.mxu0 0.0
        %6038 = vmatpush1.msra.mxu0 0.0
        %6039 = vmatprep.subr.mxu0 0.0
        %6040 = vmatpush1.msra.mxu0 0.0
        %6041 = vmatprep.subr.mxu0 0.0
        %6042 = vmatpush1.msra.mxu0 0.0
        %6043 = vmatprep.subr.mxu0 0.0
        %6044 = vmatpush1.msra.mxu0 0.0
        %6045 = vmatprep.subr.mxu0 0.0
        %6046 = vmatpush1.msra.mxu0 0.0
        %6047 = vmatprep.subr.mxu0 0.0
        %6048 = vmatpush1.msra.mxu0 0.0
        %6049 = vmatprep.subr.mxu0 0.0
        %6050 = vmatpush1.msra.mxu0 0.0
        %6051 = vmatprep.subr.mxu0 0.0
        %6052 = vmatpush1.msra.mxu0 0.0
        %6053 = vmatprep.subr.mxu0 0.0
        %6054 = vmatpush1.msra.mxu0 0.0
        %6055 = vmatprep.subr.mxu0 0.0
        %6056 = vmatpush1.msra.mxu0 0.0
        %6057 = vmatprep.subr.mxu0 0.0
        %6058 = vmatpush1.msra.mxu0 0.0
        %6059 = vmatprep.subr.mxu0 0.0
        %6060 = vmatpush1.msra.mxu0 0.0
        %6061 = vmatprep.subr.mxu0 0.0
        %6062 = vmatpush1.msra.mxu0 0.0
        %6063 = vmatprep.subr.mxu0 0.0
        %6064 = vmatpush1.msra.mxu0 0.0
        %6065 = vmatprep.subr.mxu0 0.0
        %6066 = vmatpush1.msra.mxu0 0.0
        %6067 = vmatprep.subr.mxu0 0.0
        %6068 = vmatpush1.msra.mxu0 0.0
        %6069 = vmatprep.subr.mxu0 0.0
        %6070 = vmatpush1.msra.mxu0 0.0
        %6071 = vmatprep.subr.mxu0 0.0
        %6072 = vmatpush1.msra.mxu0 0.0
        %6073 = vmatprep.mubr.f32.mxu0 0.0
        %6074 = vmatmul.mubr.f32.gmra.mrb[0].mxu0 %v5159
        %v6075 = vpop.f32.mrb[0].mxu0
        %v6076 = vadd.f32 0.0, %v6075
        %v6077 = vpop.f32.mrb[0].mxu0
        %6078 = vmatprep.mubr.f32.mxu0 0.0
        %6079 = vmatmul.mubr.f32.gmra.mrb[0].mxu0 %v5162
        %v6080 = vpop.f32.mrb[0].mxu0
        %v6081 = vadd.f32 0.0, %v6080
        %v6082 = vpop.f32.mrb[0].mxu0
        %6083 = vdwg.mxu0
        %s6084 = scalar_lea.vmem [#allocation13], 80
        %v6085 = vld [vmem:[%s6084] sm:$0xff]
        %v6086 = vld [vmem:[%s6084 + $0x8] sm:$0xff]
        %v6088 = vsel %vm4456, %v6085, 0
        %v6091 = vsel %vm4456, %v6086, 0
        %6093 = vmatprep.subr.mxu0 0.0
        %6094 = vmatpush1.msra.mxu0 %v6076
        %6095 = vmatprep.subr.mxu0 0.0
        %6096 = vmatpush1.msra.mxu0 %v6081
        %6097 = vmatprep.subr.mxu0 0.0
        %6098 = vmatpush1.msra.mxu0 0.0
        %6099 = vmatprep.subr.mxu0 0.0
        %6100 = vmatpush1.msra.mxu0 0.0
        %6101 = vmatprep.subr.mxu0 0.0
        %6102 = vmatpush1.msra.mxu0 0.0
        %6103 = vmatprep.subr.mxu0 0.0
        %6104 = vmatpush1.msra.mxu0 0.0
        %6105 = vmatprep.subr.mxu0 0.0
        %6106 = vmatpush1.msra.mxu0 0.0
        %6107 = vmatprep.subr.mxu0 0.0
        %6108 = vmatpush1.msra.mxu0 0.0
        %6109 = vmatprep.subr.mxu0 0.0
        %6110 = vmatpush1.msra.mxu0 0.0
        %6111 = vmatprep.subr.mxu0 0.0
        %6112 = vmatpush1.msra.mxu0 0.0
        %6113 = vmatprep.subr.mxu0 0.0
        %6114 = vmatpush1.msra.mxu0 0.0
        %6115 = vmatprep.subr.mxu0 0.0
        %6116 = vmatpush1.msra.mxu0 0.0
        %6117 = vmatprep.subr.mxu0 0.0
        %6118 = vmatpush1.msra.mxu0 0.0
        %6119 = vmatprep.subr.mxu0 0.0
        %6120 = vmatpush1.msra.mxu0 0.0
        %6121 = vmatprep.subr.mxu0 0.0
        %6122 = vmatpush1.msra.mxu0 0.0
        %6123 = vmatprep.subr.mxu0 0.0
        %6124 = vmatpush1.msra.mxu0 0.0
        %6125 = vmatprep.subr.mxu0 0.0
        %6126 = vmatpush1.msra.mxu0 0.0
        %6127 = vmatprep.subr.mxu0 0.0
        %6128 = vmatpush1.msra.mxu0 0.0
        %6129 = vmatprep.subr.mxu0 0.0
        %6130 = vmatpush1.msra.mxu0 0.0
        %6131 = vmatprep.subr.mxu0 0.0
        %6132 = vmatpush1.msra.mxu0 0.0
        %6133 = vmatprep.subr.mxu0 0.0
        %6134 = vmatpush1.msra.mxu0 0.0
        %6135 = vmatprep.subr.mxu0 0.0
        %6136 = vmatpush1.msra.mxu0 0.0
        %6137 = vmatprep.subr.mxu0 0.0
        %6138 = vmatpush1.msra.mxu0 0.0
        %6139 = vmatprep.subr.mxu0 0.0
        %6140 = vmatpush1.msra.mxu0 0.0
        %6141 = vmatprep.subr.mxu0 0.0
        %6142 = vmatpush1.msra.mxu0 0.0
        %6143 = vmatprep.subr.mxu0 0.0
        %6144 = vmatpush1.msra.mxu0 0.0
        %6145 = vmatprep.subr.mxu0 0.0
        %6146 = vmatpush1.msra.mxu0 0.0
        %6147 = vmatprep.subr.mxu0 0.0
        %6148 = vmatpush1.msra.mxu0 0.0
        %6149 = vmatprep.subr.mxu0 0.0
        %6150 = vmatpush1.msra.mxu0 0.0
        %6151 = vmatprep.subr.mxu0 0.0
        %6152 = vmatpush1.msra.mxu0 0.0
        %6153 = vmatprep.subr.mxu0 0.0
        %6154 = vmatpush1.msra.mxu0 0.0
        %6155 = vmatprep.subr.mxu0 0.0
        %6156 = vmatpush1.msra.mxu0 0.0
        %6157 = vmatprep.mubr.f32.mxu0 0.0
        %6158 = vmatmul.mubr.f32.gmra.mrb[0].mxu0 %v6088
        %v6159 = vpop.f32.mrb[0].mxu0
        %v6160 = vadd.f32 0.0, %v6159
        %v6161 = vpop.f32.mrb[0].mxu0
        %6162 = vmatprep.mubr.f32.mxu0 0.0
        %6163 = vmatmul.mubr.f32.gmra.mrb[0].mxu0 %v6091
        %v6164 = vpop.f32.mrb[0].mxu0
        %v6165 = vadd.f32 0.0, %v6164
        %v6166 = vpop.f32.mrb[0].mxu0
        %6167 = vdwg.mxu0
        %v6168 = vadd.f32 %v5998, %v6160
        %v6169 = vadd.f32 %v5999, %v6165
        %s6170 = scalar_lea.vmem [#allocation5], 384
        %v6171 = vld [vmem:[%s6170] sm:$0xff]
        %v6172 = vld [vmem:[%s6170 + $0x8] sm:$0xff]
        %v6173 = vld [vmem:[%s6170 + $0x10] sm:$0xff]
        %v6174 = vld [vmem:[%s6170 + $0x18] sm:$0xff]
        %v6175 = vld [vmem:[%s6170 + $0x20] sm:$0xff]
        %v6176 = vld [vmem:[%s6170 + $0x28] sm:$0xff]
        %v6177 = vld [vmem:[%s6170 + $0x30] sm:$0xff]
        %v6178 = vld [vmem:[%s6170 + $0x38] sm:$0xff]
        %6179 = vmatprep.subr.mxu0 0.0
        %6180 = vmatpush1.msra.mxu0 %v6171
        %6181 = vmatprep.subr.mxu0 0.0
        %6182 = vmatpush1.msra.mxu0 %v6172
        %6183 = vmatprep.subr.mxu0 0.0
        %6184 = vmatpush1.msra.mxu0 %v6173
        %6185 = vmatprep.subr.mxu0 0.0
        %6186 = vmatpush1.msra.mxu0 %v6174
        %6187 = vmatprep.subr.mxu0 0.0
        %6188 = vmatpush1.msra.mxu0 %v6175
        %6189 = vmatprep.subr.mxu0 0.0
        %6190 = vmatpush1.msra.mxu0 %v6176
        %6191 = vmatprep.subr.mxu0 0.0
        %6192 = vmatpush1.msra.mxu0 %v6177
        %6193 = vmatprep.subr.mxu0 0.0
        %6194 = vmatpush1.msra.mxu0 %v6178
        %6195 = vmatprep.subr.mxu0 0.0
        %6196 = vmatpush1.msra.mxu0 0.0
        %6197 = vmatprep.subr.mxu0 0.0
        %6198 = vmatpush1.msra.mxu0 0.0
        %6199 = vmatprep.subr.mxu0 0.0
        %6200 = vmatpush1.msra.mxu0 0.0
        %6201 = vmatprep.subr.mxu0 0.0
        %6202 = vmatpush1.msra.mxu0 0.0
        %6203 = vmatprep.subr.mxu0 0.0
        %6204 = vmatpush1.msra.mxu0 0.0
        %6205 = vmatprep.subr.mxu0 0.0
        %6206 = vmatpush1.msra.mxu0 0.0
        %6207 = vmatprep.subr.mxu0 0.0
        %6208 = vmatpush1.msra.mxu0 0.0
        %6209 = vmatprep.subr.mxu0 0.0
        %6210 = vmatpush1.msra.mxu0 0.0
        %6211 = vmatprep.subr.mxu0 0.0
        %6212 = vmatpush1.msra.mxu0 0.0
        %6213 = vmatprep.subr.mxu0 0.0
        %6214 = vmatpush1.msra.mxu0 0.0
        %6215 = vmatprep.subr.mxu0 0.0
        %6216 = vmatpush1.msra.mxu0 0.0
        %6217 = vmatprep.subr.mxu0 0.0
        %6218 = vmatpush1.msra.mxu0 0.0
        %6219 = vmatprep.subr.mxu0 0.0
        %6220 = vmatpush1.msra.mxu0 0.0
        %6221 = vmatprep.subr.mxu0 0.0
        %6222 = vmatpush1.msra.mxu0 0.0
        %6223 = vmatprep.subr.mxu0 0.0
        %6224 = vmatpush1.msra.mxu0 0.0
        %6225 = vmatprep.subr.mxu0 0.0
        %6226 = vmatpush1.msra.mxu0 0.0
        %6227 = vmatprep.subr.mxu0 0.0
        %6228 = vmatpush1.msra.mxu0 0.0
        %6229 = vmatprep.subr.mxu0 0.0
        %6230 = vmatpush1.msra.mxu0 0.0
        %6231 = vmatprep.subr.mxu0 0.0
        %6232 = vmatpush1.msra.mxu0 0.0
        %6233 = vmatprep.subr.mxu0 0.0
        %6234 = vmatpush1.msra.mxu0 0.0
        %6235 = vmatprep.subr.mxu0 0.0
        %6236 = vmatpush1.msra.mxu0 0.0
        %6237 = vmatprep.subr.mxu0 0.0
        %6238 = vmatpush1.msra.mxu0 0.0
        %6239 = vmatprep.subr.mxu0 0.0
        %6240 = vmatpush1.msra.mxu0 0.0
        %6241 = vmatprep.subr.mxu0 0.0
        %6242 = vmatpush1.msra.mxu0 0.0
        %6243 = vmatprep.mubr.f32.mxu0 0.0
        %6244 = vmatmul.mubr.f32.gmra.mrb[0].mxu0 %v5159
        %v6245 = vpop.f32.mrb[0].mxu0
        %v6246 = vadd.f32 0.0, %v6245
        %v6247 = vpop.f32.mrb[0].mxu0
        %6248 = vmatprep.mubr.f32.mxu0 0.0
        %6249 = vmatmul.mubr.f32.gmra.mrb[0].mxu0 %v5162
        %v6250 = vpop.f32.mrb[0].mxu0
        %v6251 = vadd.f32 0.0, %v6250
        %v6252 = vpop.f32.mrb[0].mxu0
        %6253 = vdwg.mxu0
        %s6254 = scalar_lea.vmem [#allocation13], 96
        %v6255 = vld [vmem:[%s6254] sm:$0xff]
        %v6256 = vld [vmem:[%s6254 + $0x8] sm:$0xff]
        %v6258 = vsel %vm4456, %v6255, 0
        %v6261 = vsel %vm4456, %v6256, 0
        %6263 = vmatprep.subr.mxu0 0.0
        %6264 = vmatpush1.msra.mxu0 %v6246
        %6265 = vmatprep.subr.mxu0 0.0
        %6266 = vmatpush1.msra.mxu0 %v6251
        %6267 = vmatprep.subr.mxu0 0.0
        %6268 = vmatpush1.msra.mxu0 0.0
        %6269 = vmatprep.subr.mxu0 0.0
        %6270 = vmatpush1.msra.mxu0 0.0
        %6271 = vmatprep.subr.mxu0 0.0
        %6272 = vmatpush1.msra.mxu0 0.0
        %6273 = vmatprep.subr.mxu0 0.0
        %6274 = vmatpush1.msra.mxu0 0.0
        %6275 = vmatprep.subr.mxu0 0.0
        %6276 = vmatpush1.msra.mxu0 0.0
        %6277 = vmatprep.subr.mxu0 0.0
        %6278 = vmatpush1.msra.mxu0 0.0
        %6279 = vmatprep.subr.mxu0 0.0
        %6280 = vmatpush1.msra.mxu0 0.0
        %6281 = vmatprep.subr.mxu0 0.0
        %6282 = vmatpush1.msra.mxu0 0.0
        %6283 = vmatprep.subr.mxu0 0.0
        %6284 = vmatpush1.msra.mxu0 0.0
        %6285 = vmatprep.subr.mxu0 0.0
        %6286 = vmatpush1.msra.mxu0 0.0
        %6287 = vmatprep.subr.mxu0 0.0
        %6288 = vmatpush1.msra.mxu0 0.0
        %6289 = vmatprep.subr.mxu0 0.0
        %6290 = vmatpush1.msra.mxu0 0.0
        %6291 = vmatprep.subr.mxu0 0.0
        %6292 = vmatpush1.msra.mxu0 0.0
        %6293 = vmatprep.subr.mxu0 0.0
        %6294 = vmatpush1.msra.mxu0 0.0
        %6295 = vmatprep.subr.mxu0 0.0
        %6296 = vmatpush1.msra.mxu0 0.0
        %6297 = vmatprep.subr.mxu0 0.0
        %6298 = vmatpush1.msra.mxu0 0.0
        %6299 = vmatprep.subr.mxu0 0.0
        %6300 = vmatpush1.msra.mxu0 0.0
        %6301 = vmatprep.subr.mxu0 0.0
        %6302 = vmatpush1.msra.mxu0 0.0
        %6303 = vmatprep.subr.mxu0 0.0
        %6304 = vmatpush1.msra.mxu0 0.0
        %6305 = vmatprep.subr.mxu0 0.0
        %6306 = vmatpush1.msra.mxu0 0.0
        %6307 = vmatprep.subr.mxu0 0.0
        %6308 = vmatpush1.msra.mxu0 0.0
        %6309 = vmatprep.subr.mxu0 0.0
        %6310 = vmatpush1.msra.mxu0 0.0
        %6311 = vmatprep.subr.mxu0 0.0
        %6312 = vmatpush1.msra.mxu0 0.0
        %6313 = vmatprep.subr.mxu0 0.0
        %6314 = vmatpush1.msra.mxu0 0.0
        %6315 = vmatprep.subr.mxu0 0.0
        %6316 = vmatpush1.msra.mxu0 0.0
        %6317 = vmatprep.subr.mxu0 0.0
        %6318 = vmatpush1.msra.mxu0 0.0
        %6319 = vmatprep.subr.mxu0 0.0
        %6320 = vmatpush1.msra.mxu0 0.0
        %6321 = vmatprep.subr.mxu0 0.0
        %6322 = vmatpush1.msra.mxu0 0.0
        %6323 = vmatprep.subr.mxu0 0.0
        %6324 = vmatpush1.msra.mxu0 0.0
        %6325 = vmatprep.subr.mxu0 0.0
        %6326 = vmatpush1.msra.mxu0 0.0
        %6327 = vmatprep.mubr.f32.mxu0 0.0
        %6328 = vmatmul.mubr.f32.gmra.mrb[0].mxu0 %v6258
        %v6329 = vpop.f32.mrb[0].mxu0
        %v6330 = vadd.f32 0.0, %v6329
        %v6331 = vpop.f32.mrb[0].mxu0
        %6332 = vmatprep.mubr.f32.mxu0 0.0
        %6333 = vmatmul.mubr.f32.gmra.mrb[0].mxu0 %v6261
        %v6334 = vpop.f32.mrb[0].mxu0
        %v6335 = vadd.f32 0.0, %v6334
        %v6336 = vpop.f32.mrb[0].mxu0
        %6337 = vdwg.mxu0
        %v6338 = vadd.f32 %v6168, %v6330
        %v6339 = vadd.f32 %v6169, %v6335
        %s6340 = scalar_lea.vmem [#allocation5], 448
        %v6341 = vld [vmem:[%s6340] sm:$0xff]
        %v6342 = vld [vmem:[%s6340 + $0x8] sm:$0xff]
        %v6343 = vld [vmem:[%s6340 + $0x10] sm:$0xff]
        %v6344 = vld [vmem:[%s6340 + $0x18] sm:$0xff]
        %v6345 = vld [vmem:[%s6340 + $0x20] sm:$0xff]
        %v6346 = vld [vmem:[%s6340 + $0x28] sm:$0xff]
        %v6347 = vld [vmem:[%s6340 + $0x30] sm:$0xff]
        %v6348 = vld [vmem:[%s6340 + $0x38] sm:$0xff]
        %6349 = vmatprep.subr.mxu0 0.0
        %6350 = vmatpush1.msra.mxu0 %v6341
        %6351 = vmatprep.subr.mxu0 0.0
        %6352 = vmatpush1.msra.mxu0 %v6342
        %6353 = vmatprep.subr.mxu0 0.0
        %6354 = vmatpush1.msra.mxu0 %v6343
        %6355 = vmatprep.subr.mxu0 0.0
        %6356 = vmatpush1.msra.mxu0 %v6344
        %6357 = vmatprep.subr.mxu0 0.0
        %6358 = vmatpush1.msra.mxu0 %v6345
        %6359 = vmatprep.subr.mxu0 0.0
        %6360 = vmatpush1.msra.mxu0 %v6346
        %6361 = vmatprep.subr.mxu0 0.0
        %6362 = vmatpush1.msra.mxu0 %v6347
        %6363 = vmatprep.subr.mxu0 0.0
        %6364 = vmatpush1.msra.mxu0 %v6348
        %6365 = vmatprep.subr.mxu0 0.0
        %6366 = vmatpush1.msra.mxu0 0.0
        %6367 = vmatprep.subr.mxu0 0.0
        %6368 = vmatpush1.msra.mxu0 0.0
        %6369 = vmatprep.subr.mxu0 0.0
        %6370 = vmatpush1.msra.mxu0 0.0
        %6371 = vmatprep.subr.mxu0 0.0
        %6372 = vmatpush1.msra.mxu0 0.0
        %6373 = vmatprep.subr.mxu0 0.0
        %6374 = vmatpush1.msra.mxu0 0.0
        %6375 = vmatprep.subr.mxu0 0.0
        %6376 = vmatpush1.msra.mxu0 0.0
        %6377 = vmatprep.subr.mxu0 0.0
        %6378 = vmatpush1.msra.mxu0 0.0
        %6379 = vmatprep.subr.mxu0 0.0
        %6380 = vmatpush1.msra.mxu0 0.0
        %6381 = vmatprep.subr.mxu0 0.0
        %6382 = vmatpush1.msra.mxu0 0.0
        %6383 = vmatprep.subr.mxu0 0.0
        %6384 = vmatpush1.msra.mxu0 0.0
        %6385 = vmatprep.subr.mxu0 0.0
        %6386 = vmatpush1.msra.mxu0 0.0
        %6387 = vmatprep.subr.mxu0 0.0
        %6388 = vmatpush1.msra.mxu0 0.0
        %6389 = vmatprep.subr.mxu0 0.0
        %6390 = vmatpush1.msra.mxu0 0.0
        %6391 = vmatprep.subr.mxu0 0.0
        %6392 = vmatpush1.msra.mxu0 0.0
        %6393 = vmatprep.subr.mxu0 0.0
        %6394 = vmatpush1.msra.mxu0 0.0
        %6395 = vmatprep.subr.mxu0 0.0
        %6396 = vmatpush1.msra.mxu0 0.0
        %6397 = vmatprep.subr.mxu0 0.0
        %6398 = vmatpush1.msra.mxu0 0.0
        %6399 = vmatprep.subr.mxu0 0.0
        %6400 = vmatpush1.msra.mxu0 0.0
        %6401 = vmatprep.subr.mxu0 0.0
        %6402 = vmatpush1.msra.mxu0 0.0
        %6403 = vmatprep.subr.mxu0 0.0
        %6404 = vmatpush1.msra.mxu0 0.0
        %6405 = vmatprep.subr.mxu0 0.0
        %6406 = vmatpush1.msra.mxu0 0.0
        %6407 = vmatprep.subr.mxu0 0.0
        %6408 = vmatpush1.msra.mxu0 0.0
        %6409 = vmatprep.subr.mxu0 0.0
        %6410 = vmatpush1.msra.mxu0 0.0
        %6411 = vmatprep.subr.mxu0 0.0
        %6412 = vmatpush1.msra.mxu0 0.0
        %6413 = vmatprep.mubr.f32.mxu0 0.0
        %6414 = vmatmul.mubr.f32.gmra.mrb[0].mxu0 %v5159
        %v6415 = vpop.f32.mrb[0].mxu0
        %v6416 = vadd.f32 0.0, %v6415
        %v6417 = vpop.f32.mrb[0].mxu0
        %6418 = vmatprep.mubr.f32.mxu0 0.0
        %6419 = vmatmul.mubr.f32.gmra.mrb[0].mxu0 %v5162
        %v6420 = vpop.f32.mrb[0].mxu0
        %v6421 = vadd.f32 0.0, %v6420
        %v6422 = vpop.f32.mrb[0].mxu0
        %6423 = vdwg.mxu0
        %s6424 = scalar_lea.vmem [#allocation13], 112
        %v6425 = vld [vmem:[%s6424] sm:$0xff]
        %v6426 = vld [vmem:[%s6424 + $0x8] sm:$0xff]
        %v6428 = vsel %vm4456, %v6425, 0
        %v6431 = vsel %vm4456, %v6426, 0
        %6433 = vmatprep.subr.mxu0 0.0
        %6434 = vmatpush1.msra.mxu0 %v6416
        %6435 = vmatprep.subr.mxu0 0.0
        %6436 = vmatpush1.msra.mxu0 %v6421
        %6437 = vmatprep.subr.mxu0 0.0
        %6438 = vmatpush1.msra.mxu0 0.0
        %6439 = vmatprep.subr.mxu0 0.0
        %6440 = vmatpush1.msra.mxu0 0.0
        %6441 = vmatprep.subr.mxu0 0.0
        %6442 = vmatpush1.msra.mxu0 0.0
        %6443 = vmatprep.subr.mxu0 0.0
        %6444 = vmatpush1.msra.mxu0 0.0
        %6445 = vmatprep.subr.mxu0 0.0
        %6446 = vmatpush1.msra.mxu0 0.0
        %6447 = vmatprep.subr.mxu0 0.0
        %6448 = vmatpush1.msra.mxu0 0.0
        %6449 = vmatprep.subr.mxu0 0.0
        %6450 = vmatpush1.msra.mxu0 0.0
        %6451 = vmatprep.subr.mxu0 0.0
        %6452 = vmatpush1.msra.mxu0 0.0
        %6453 = vmatprep.subr.mxu0 0.0
        %6454 = vmatpush1.msra.mxu0 0.0
        %6455 = vmatprep.subr.mxu0 0.0
        %6456 = vmatpush1.msra.mxu0 0.0
        %6457 = vmatprep.subr.mxu0 0.0
        %6458 = vmatpush1.msra.mxu0 0.0
        %6459 = vmatprep.subr.mxu0 0.0
        %6460 = vmatpush1.msra.mxu0 0.0
        %6461 = vmatprep.subr.mxu0 0.0
        %6462 = vmatpush1.msra.mxu0 0.0
        %6463 = vmatprep.subr.mxu0 0.0
        %6464 = vmatpush1.msra.mxu0 0.0
        %6465 = vmatprep.subr.mxu0 0.0
        %6466 = vmatpush1.msra.mxu0 0.0
        %6467 = vmatprep.subr.mxu0 0.0
        %6468 = vmatpush1.msra.mxu0 0.0
        %6469 = vmatprep.subr.mxu0 0.0
        %6470 = vmatpush1.msra.mxu0 0.0
        %6471 = vmatprep.subr.mxu0 0.0
        %6472 = vmatpush1.msra.mxu0 0.0
        %6473 = vmatprep.subr.mxu0 0.0
        %6474 = vmatpush1.msra.mxu0 0.0
        %6475 = vmatprep.subr.mxu0 0.0
        %6476 = vmatpush1.msra.mxu0 0.0
        %6477 = vmatprep.subr.mxu0 0.0
        %6478 = vmatpush1.msra.mxu0 0.0
        %6479 = vmatprep.subr.mxu0 0.0
        %6480 = vmatpush1.msra.mxu0 0.0
        %6481 = vmatprep.subr.mxu0 0.0
        %6482 = vmatpush1.msra.mxu0 0.0
        %6483 = vmatprep.subr.mxu0 0.0
        %6484 = vmatpush1.msra.mxu0 0.0
        %6485 = vmatprep.subr.mxu0 0.0
        %6486 = vmatpush1.msra.mxu0 0.0
        %6487 = vmatprep.subr.mxu0 0.0
        %6488 = vmatpush1.msra.mxu0 0.0
        %6489 = vmatprep.subr.mxu0 0.0
        %6490 = vmatpush1.msra.mxu0 0.0
        %6491 = vmatprep.subr.mxu0 0.0
        %6492 = vmatpush1.msra.mxu0 0.0
        %6493 = vmatprep.subr.mxu0 0.0
        %6494 = vmatpush1.msra.mxu0 0.0
        %6495 = vmatprep.subr.mxu0 0.0
        %6496 = vmatpush1.msra.mxu0 0.0
        %6497 = vmatprep.mubr.f32.mxu0 0.0
        %6498 = vmatmul.mubr.f32.gmra.mrb[0].mxu0 %v6428
        %v6499 = vpop.f32.mrb[0].mxu0
        %v6500 = vadd.f32 0.0, %v6499
        %v6501 = vpop.f32.mrb[0].mxu0
        %6502 = vmatprep.mubr.f32.mxu0 0.0
        %6503 = vmatmul.mubr.f32.gmra.mrb[0].mxu0 %v6431
        %v6504 = vpop.f32.mrb[0].mxu0
        %v6505 = vadd.f32 0.0, %v6504
        %v6506 = vpop.f32.mrb[0].mxu0
        %6507 = vdwg.mxu0
        %v6508 = vadd.f32 %v6338, %v6500
        %v6509 = vadd.f32 %v6339, %v6505
        %s6510 = scalar_lea.vmem [#allocation5], 512
        %v6511 = vld [vmem:[%s6510] sm:$0xff]
        %v6512 = vld [vmem:[%s6510 + $0x8] sm:$0xff]
        %v6513 = vld [vmem:[%s6510 + $0x10] sm:$0xff]
        %v6514 = vld [vmem:[%s6510 + $0x18] sm:$0xff]
        %v6515 = vld [vmem:[%s6510 + $0x20] sm:$0xff]
        %v6516 = vld [vmem:[%s6510 + $0x28] sm:$0xff]
        %v6517 = vld [vmem:[%s6510 + $0x30] sm:$0xff]
        %v6518 = vld [vmem:[%s6510 + $0x38] sm:$0xff]
        %6519 = vmatprep.subr.mxu0 0.0
        %6520 = vmatpush1.msra.mxu0 %v6511
        %6521 = vmatprep.subr.mxu0 0.0
        %6522 = vmatpush1.msra.mxu0 %v6512
        %6523 = vmatprep.subr.mxu0 0.0
        %6524 = vmatpush1.msra.mxu0 %v6513
        %6525 = vmatprep.subr.mxu0 0.0
        %6526 = vmatpush1.msra.mxu0 %v6514
        %6527 = vmatprep.subr.mxu0 0.0
        %6528 = vmatpush1.msra.mxu0 %v6515
        %6529 = vmatprep.subr.mxu0 0.0
        %6530 = vmatpush1.msra.mxu0 %v6516
        %6531 = vmatprep.subr.mxu0 0.0
        %6532 = vmatpush1.msra.mxu0 %v6517
        %6533 = vmatprep.subr.mxu0 0.0
        %6534 = vmatpush1.msra.mxu0 %v6518
        %6535 = vmatprep.subr.mxu0 0.0
        %6536 = vmatpush1.msra.mxu0 0.0
        %6537 = vmatprep.subr.mxu0 0.0
        %6538 = vmatpush1.msra.mxu0 0.0
        %6539 = vmatprep.subr.mxu0 0.0
        %6540 = vmatpush1.msra.mxu0 0.0
        %6541 = vmatprep.subr.mxu0 0.0
        %6542 = vmatpush1.msra.mxu0 0.0
        %6543 = vmatprep.subr.mxu0 0.0
        %6544 = vmatpush1.msra.mxu0 0.0
        %6545 = vmatprep.subr.mxu0 0.0
        %6546 = vmatpush1.msra.mxu0 0.0
        %6547 = vmatprep.subr.mxu0 0.0
        %6548 = vmatpush1.msra.mxu0 0.0
        %6549 = vmatprep.subr.mxu0 0.0
        %6550 = vmatpush1.msra.mxu0 0.0
        %6551 = vmatprep.subr.mxu0 0.0
        %6552 = vmatpush1.msra.mxu0 0.0
        %6553 = vmatprep.subr.mxu0 0.0
        %6554 = vmatpush1.msra.mxu0 0.0
        %6555 = vmatprep.subr.mxu0 0.0
        %6556 = vmatpush1.msra.mxu0 0.0
        %6557 = vmatprep.subr.mxu0 0.0
        %6558 = vmatpush1.msra.mxu0 0.0
        %6559 = vmatprep.subr.mxu0 0.0
        %6560 = vmatpush1.msra.mxu0 0.0
        %6561 = vmatprep.subr.mxu0 0.0
        %6562 = vmatpush1.msra.mxu0 0.0
        %6563 = vmatprep.subr.mxu0 0.0
        %6564 = vmatpush1.msra.mxu0 0.0
        %6565 = vmatprep.subr.mxu0 0.0
        %6566 = vmatpush1.msra.mxu0 0.0
        %6567 = vmatprep.subr.mxu0 0.0
        %6568 = vmatpush1.msra.mxu0 0.0
        %6569 = vmatprep.subr.mxu0 0.0
        %6570 = vmatpush1.msra.mxu0 0.0
        %6571 = vmatprep.subr.mxu0 0.0
        %6572 = vmatpush1.msra.mxu0 0.0
        %6573 = vmatprep.subr.mxu0 0.0
        %6574 = vmatpush1.msra.mxu0 0.0
        %6575 = vmatprep.subr.mxu0 0.0
        %6576 = vmatpush1.msra.mxu0 0.0
        %6577 = vmatprep.subr.mxu0 0.0
        %6578 = vmatpush1.msra.mxu0 0.0
        %6579 = vmatprep.subr.mxu0 0.0
        %6580 = vmatpush1.msra.mxu0 0.0
        %6581 = vmatprep.subr.mxu0 0.0
        %6582 = vmatpush1.msra.mxu0 0.0
        %6583 = vmatprep.mubr.f32.mxu0 0.0
        %6584 = vmatmul.mubr.f32.gmra.mrb[0].mxu0 %v5159
        %v6585 = vpop.f32.mrb[0].mxu0
        %v6586 = vadd.f32 0.0, %v6585
        %v6587 = vpop.f32.mrb[0].mxu0
        %6588 = vmatprep.mubr.f32.mxu0 0.0
        %6589 = vmatmul.mubr.f32.gmra.mrb[0].mxu0 %v5162
        %v6590 = vpop.f32.mrb[0].mxu0
        %v6591 = vadd.f32 0.0, %v6590
        %v6592 = vpop.f32.mrb[0].mxu0
        %6593 = vdwg.mxu0
        %s6594 = scalar_lea.vmem [#allocation13], 128
        %v6595 = vld [vmem:[%s6594] sm:$0xff]
        %v6596 = vld [vmem:[%s6594 + $0x8] sm:$0xff]
        %v6598 = vsel %vm4456, %v6595, 0
        %v6601 = vsel %vm4456, %v6596, 0
        %6603 = vmatprep.subr.mxu0 0.0
        %6604 = vmatpush1.msra.mxu0 %v6586
        %6605 = vmatprep.subr.mxu0 0.0
        %6606 = vmatpush1.msra.mxu0 %v6591
        %6607 = vmatprep.subr.mxu0 0.0
        %6608 = vmatpush1.msra.mxu0 0.0
        %6609 = vmatprep.subr.mxu0 0.0
        %6610 = vmatpush1.msra.mxu0 0.0
        %6611 = vmatprep.subr.mxu0 0.0
        %6612 = vmatpush1.msra.mxu0 0.0
        %6613 = vmatprep.subr.mxu0 0.0
        %6614 = vmatpush1.msra.mxu0 0.0
        %6615 = vmatprep.subr.mxu0 0.0
        %6616 = vmatpush1.msra.mxu0 0.0
        %6617 = vmatprep.subr.mxu0 0.0
        %6618 = vmatpush1.msra.mxu0 0.0
        %6619 = vmatprep.subr.mxu0 0.0
        %6620 = vmatpush1.msra.mxu0 0.0
        %6621 = vmatprep.subr.mxu0 0.0
        %6622 = vmatpush1.msra.mxu0 0.0
        %6623 = vmatprep.subr.mxu0 0.0
        %6624 = vmatpush1.msra.mxu0 0.0
        %6625 = vmatprep.subr.mxu0 0.0
        %6626 = vmatpush1.msra.mxu0 0.0
        %6627 = vmatprep.subr.mxu0 0.0
        %6628 = vmatpush1.msra.mxu0 0.0
        %6629 = vmatprep.subr.mxu0 0.0
        %6630 = vmatpush1.msra.mxu0 0.0
        %6631 = vmatprep.subr.mxu0 0.0
        %6632 = vmatpush1.msra.mxu0 0.0
        %6633 = vmatprep.subr.mxu0 0.0
        %6634 = vmatpush1.msra.mxu0 0.0
        %6635 = vmatprep.subr.mxu0 0.0
        %6636 = vmatpush1.msra.mxu0 0.0
        %6637 = vmatprep.subr.mxu0 0.0
        %6638 = vmatpush1.msra.mxu0 0.0
        %6639 = vmatprep.subr.mxu0 0.0
        %6640 = vmatpush1.msra.mxu0 0.0
        %6641 = vmatprep.subr.mxu0 0.0
        %6642 = vmatpush1.msra.mxu0 0.0
        %6643 = vmatprep.subr.mxu0 0.0
        %6644 = vmatpush1.msra.mxu0 0.0
        %6645 = vmatprep.subr.mxu0 0.0
        %6646 = vmatpush1.msra.mxu0 0.0
        %6647 = vmatprep.subr.mxu0 0.0
        %6648 = vmatpush1.msra.mxu0 0.0
        %6649 = vmatprep.subr.mxu0 0.0
        %6650 = vmatpush1.msra.mxu0 0.0
        %6651 = vmatprep.subr.mxu0 0.0
        %6652 = vmatpush1.msra.mxu0 0.0
        %6653 = vmatprep.subr.mxu0 0.0
        %6654 = vmatpush1.msra.mxu0 0.0
        %6655 = vmatprep.subr.mxu0 0.0
        %6656 = vmatpush1.msra.mxu0 0.0
        %6657 = vmatprep.subr.mxu0 0.0
        %6658 = vmatpush1.msra.mxu0 0.0
        %6659 = vmatprep.subr.mxu0 0.0
        %6660 = vmatpush1.msra.mxu0 0.0
        %6661 = vmatprep.subr.mxu0 0.0
        %6662 = vmatpush1.msra.mxu0 0.0
        %6663 = vmatprep.subr.mxu0 0.0
        %6664 = vmatpush1.msra.mxu0 0.0
        %6665 = vmatprep.subr.mxu0 0.0
        %6666 = vmatpush1.msra.mxu0 0.0
        %6667 = vmatprep.mubr.f32.mxu0 0.0
        %6668 = vmatmul.mubr.f32.gmra.mrb[0].mxu0 %v6598
        %v6669 = vpop.f32.mrb[0].mxu0
        %v6670 = vadd.f32 0.0, %v6669
        %v6671 = vpop.f32.mrb[0].mxu0
        %6672 = vmatprep.mubr.f32.mxu0 0.0
        %6673 = vmatmul.mubr.f32.gmra.mrb[0].mxu0 %v6601
        %v6674 = vpop.f32.mrb[0].mxu0
        %v6675 = vadd.f32 0.0, %v6674
        %v6676 = vpop.f32.mrb[0].mxu0
        %6677 = vdwg.mxu0
        %v6678 = vadd.f32 %v6508, %v6670
        %v6679 = vadd.f32 %v6509, %v6675
        %v6680 = vld [vmem:[%s21] sm:$0xff]
        %v6681 = vld [vmem:[%s21 + $0x8] sm:$0xff]
        %6683 = vset.pattern.permute.xlu0 0
        %6684 = vperm.xlu0 %6683, %v6680
        %v6685 = vpop.permute.xlu0 %6684
        %6688 = vset.pattern.permute.xlu0 0
        %6689 = vperm.xlu0 %6688, %v6681
        %v6690 = vpop.permute.xlu0 %6689
        %v6692 = vadd.f32 %v6678, %v6685
        %v6693 = vadd.f32 %v6679, %v6690
        %vm6694 = vcmp.gt.f32.partialorder %v6692, 0.0
        %vm6695 = vcmp.gt.f32.partialorder %v6693, 0.0
        %v6696 = vmul.f32 %v6692, 0.2
        %v6697 = vmul.f32 %v6693, 0.2
        %v6698 = vsel %vm6694, %v6692, %v6696
        %v6699 = vsel %vm6695, %v6693, %v6697
        %v6700 = vmul.f32 %v6698, 0.11556254
        %v6701 = vmul.f32 %v6699, 0.11556254
        %v6703 = vsel %vm4856, %v6700, 0
        %v6706 = vsel %vm4856, %v6701, 0
        %6708 = vmatprep.subr.mxu0 0.0
        %6709 = vmatpush1.msra.mxu0 %v5150
        %6710 = vmatprep.subr.mxu0 0.0
        %6711 = vmatpush1.msra.mxu0 %v5151
        %6712 = vmatprep.subr.mxu0 0.0
        %6713 = vmatpush1.msra.mxu0 %v5152
        %6714 = vmatprep.subr.mxu0 0.0
        %6715 = vmatpush1.msra.mxu0 %v5153
        %6716 = vmatprep.subr.mxu0 0.0
        %6717 = vmatpush1.msra.mxu0 %v5154
        %6718 = vmatprep.subr.mxu0 0.0
        %6719 = vmatpush1.msra.mxu0 %v5155
        %6720 = vmatprep.subr.mxu0 0.0
        %6721 = vmatpush1.msra.mxu0 %v5156
        %6722 = vmatprep.subr.mxu0 0.0
        %6723 = vmatpush1.msra.mxu0 %v5157
        %6724 = vmatprep.subr.mxu0 0.0
        %6725 = vmatpush1.msra.mxu0 0.0
        %6726 = vmatprep.subr.mxu0 0.0
        %6727 = vmatpush1.msra.mxu0 0.0
        %6728 = vmatprep.subr.mxu0 0.0
        %6729 = vmatpush1.msra.mxu0 0.0
        %6730 = vmatprep.subr.mxu0 0.0
        %6731 = vmatpush1.msra.mxu0 0.0
        %6732 = vmatprep.subr.mxu0 0.0
        %6733 = vmatpush1.msra.mxu0 0.0
        %6734 = vmatprep.subr.mxu0 0.0
        %6735 = vmatpush1.msra.mxu0 0.0
        %6736 = vmatprep.subr.mxu0 0.0
        %6737 = vmatpush1.msra.mxu0 0.0
        %6738 = vmatprep.subr.mxu0 0.0
        %6739 = vmatpush1.msra.mxu0 0.0
        %6740 = vmatprep.subr.mxu0 0.0
        %6741 = vmatpush1.msra.mxu0 0.0
        %6742 = vmatprep.subr.mxu0 0.0
        %6743 = vmatpush1.msra.mxu0 0.0
        %6744 = vmatprep.subr.mxu0 0.0
        %6745 = vmatpush1.msra.mxu0 0.0
        %6746 = vmatprep.subr.mxu0 0.0
        %6747 = vmatpush1.msra.mxu0 0.0
        %6748 = vmatprep.subr.mxu0 0.0
        %6749 = vmatpush1.msra.mxu0 0.0
        %6750 = vmatprep.subr.mxu0 0.0
        %6751 = vmatpush1.msra.mxu0 0.0
        %6752 = vmatprep.subr.mxu0 0.0
        %6753 = vmatpush1.msra.mxu0 0.0
        %6754 = vmatprep.subr.mxu0 0.0
        %6755 = vmatpush1.msra.mxu0 0.0
        %6756 = vmatprep.subr.mxu0 0.0
        %6757 = vmatpush1.msra.mxu0 0.0
        %6758 = vmatprep.subr.mxu0 0.0
        %6759 = vmatpush1.msra.mxu0 0.0
        %6760 = vmatprep.subr.mxu0 0.0
        %6761 = vmatpush1.msra.mxu0 0.0
        %6762 = vmatprep.subr.mxu0 0.0
        %6763 = vmatpush1.msra.mxu0 0.0
        %6764 = vmatprep.subr.mxu0 0.0
        %6765 = vmatpush1.msra.mxu0 0.0
        %6766 = vmatprep.subr.mxu0 0.0
        %6767 = vmatpush1.msra.mxu0 0.0
        %6768 = vmatprep.subr.mxu0 0.0
        %6769 = vmatpush1.msra.mxu0 0.0
        %6770 = vmatprep.subr.mxu0 0.0
        %6771 = vmatpush1.msra.mxu0 0.0
        %6772 = vmatprep.mubr.f32.mxu0 0.0
        %6773 = vmatmul.mubr.f32.gmra.mrb[0].mxu0 %v6703
        %v6774 = vpop.f32.mrb[0].mxu0
        %v6775 = vadd.f32 0.0, %v6774
        %v6776 = vpop.f32.mrb[0].mxu0
        %6777 = vmatprep.mubr.f32.mxu0 0.0
        %6778 = vmatmul.mubr.f32.gmra.mrb[0].mxu0 %v6706
        %v6779 = vpop.f32.mrb[0].mxu0
        %v6780 = vadd.f32 0.0, %v6779
        %v6781 = vpop.f32.mrb[0].mxu0
        %6782 = vdwg.mxu0
        %v6783 = vld [vmem:[%s22] sm:$0xff]
        %v6784 = vld [vmem:[%s22 + $0x8] sm:$0xff]
        %v6785 = vld [vmem:[%s22 + $0x10] sm:$0xff]
        %v6786 = vld [vmem:[%s22 + $0x18] sm:$0xff]
        %6787 = vmatprep.subr.mxu0 0.0
        %6788 = vmatpush1.msra.mxu0 %v5242
        %6789 = vmatprep.subr.mxu0 0.0
        %6790 = vmatpush1.msra.mxu0 %v5243
        %6791 = vmatprep.subr.mxu0 0.0
        %6792 = vmatpush1.msra.mxu0 %v5244
        %6793 = vmatprep.subr.mxu0 0.0
        %6794 = vmatpush1.msra.mxu0 %v5245
        %6795 = vmatprep.subr.mxu0 0.0
        %6796 = vmatpush1.msra.mxu0 %v5246
        %6797 = vmatprep.subr.mxu0 0.0
        %6798 = vmatpush1.msra.mxu0 %v5247
        %6799 = vmatprep.subr.mxu0 0.0
        %6800 = vmatpush1.msra.mxu0 %v5248
        %6801 = vmatprep.subr.mxu0 0.0
        %6802 = vmatpush1.msra.mxu0 %v5249
        %6803 = vmatprep.subr.mxu0 0.0
        %6804 = vmatpush1.msra.mxu0 0.0
        %6805 = vmatprep.subr.mxu0 0.0
        %6806 = vmatpush1.msra.mxu0 0.0
        %6807 = vmatprep.subr.mxu0 0.0
        %6808 = vmatpush1.msra.mxu0 0.0
        %6809 = vmatprep.subr.mxu0 0.0
        %6810 = vmatpush1.msra.mxu0 0.0
        %6811 = vmatprep.subr.mxu0 0.0
        %6812 = vmatpush1.msra.mxu0 0.0
        %6813 = vmatprep.subr.mxu0 0.0
        %6814 = vmatpush1.msra.mxu0 0.0
        %6815 = vmatprep.subr.mxu0 0.0
        %6816 = vmatpush1.msra.mxu0 0.0
        %6817 = vmatprep.subr.mxu0 0.0
        %6818 = vmatpush1.msra.mxu0 0.0
        %6819 = vmatprep.subr.mxu0 0.0
        %6820 = vmatpush1.msra.mxu0 0.0
        %6821 = vmatprep.subr.mxu0 0.0
        %6822 = vmatpush1.msra.mxu0 0.0
        %6823 = vmatprep.subr.mxu0 0.0
        %6824 = vmatpush1.msra.mxu0 0.0
        %6825 = vmatprep.subr.mxu0 0.0
        %6826 = vmatpush1.msra.mxu0 0.0
        %6827 = vmatprep.subr.mxu0 0.0
        %6828 = vmatpush1.msra.mxu0 0.0
        %6829 = vmatprep.subr.mxu0 0.0
        %6830 = vmatpush1.msra.mxu0 0.0
        %6831 = vmatprep.subr.mxu0 0.0
        %6832 = vmatpush1.msra.mxu0 0.0
        %6833 = vmatprep.subr.mxu0 0.0
        %6834 = vmatpush1.msra.mxu0 0.0
        %6835 = vmatprep.subr.mxu0 0.0
        %6836 = vmatpush1.msra.mxu0 0.0
        %6837 = vmatprep.subr.mxu0 0.0
        %6838 = vmatpush1.msra.mxu0 0.0
        %6839 = vmatprep.subr.mxu0 0.0
        %6840 = vmatpush1.msra.mxu0 0.0
        %6841 = vmatprep.subr.mxu0 0.0
        %6842 = vmatpush1.msra.mxu0 0.0
        %6843 = vmatprep.subr.mxu0 0.0
        %6844 = vmatpush1.msra.mxu0 0.0
        %6845 = vmatprep.subr.mxu0 0.0
        %6846 = vmatpush1.msra.mxu0 0.0
        %6847 = vmatprep.subr.mxu0 0.0
        %6848 = vmatpush1.msra.mxu0 0.0
        %6849 = vmatprep.subr.mxu0 0.0
        %6850 = vmatpush1.msra.mxu0 0.0
        %6851 = vmatprep.mubr.f32.mxu0 0.0
        %6852 = vmatmul.mubr.f32.gmra.mrb[0].mxu0 %v6703
        %v6853 = vpop.f32.mrb[0].mxu0
        %v6854 = vadd.f32 0.0, %v6853
        %v6855 = vpop.f32.mrb[0].mxu0
        %6856 = vmatprep.mubr.f32.mxu0 0.0
        %6857 = vmatmul.mubr.f32.gmra.mrb[0].mxu0 %v6706
        %v6858 = vpop.f32.mrb[0].mxu0
        %v6859 = vadd.f32 0.0, %v6858
        %v6860 = vpop.f32.mrb[0].mxu0
        %6861 = vdwg.mxu0
        %s6862 = scalar_lea.vmem %s22, 32
        %v6863 = vld [vmem:[%s6862] sm:$0xff]
        %v6864 = vld [vmem:[%s6862 + $0x8] sm:$0xff]
        %v6865 = vld [vmem:[%s6862 + $0x10] sm:$0xff]
        %v6866 = vld [vmem:[%s6862 + $0x18] sm:$0xff]
        %v6868 = vsel %vm4456, %v6863, 0
        %v6871 = vsel %vm4456, %v6864, 0
        %v6874 = vsel %vm4456, %v6865, 0
        %v6877 = vsel %vm4456, %v6866, 0
        %6879 = vmatprep.subr.mxu0 0.0
        %6880 = vmatpush1.msra.mxu0 %v6854
        %6881 = vmatprep.subr.mxu0 0.0
        %6882 = vmatpush1.msra.mxu0 %v6859
        %6883 = vmatprep.subr.mxu0 0.0
        %6884 = vmatpush1.msra.mxu0 0.0
        %6885 = vmatprep.subr.mxu0 0.0
        %6886 = vmatpush1.msra.mxu0 0.0
        %6887 = vmatprep.subr.mxu0 0.0
        %6888 = vmatpush1.msra.mxu0 0.0
        %6889 = vmatprep.subr.mxu0 0.0
        %6890 = vmatpush1.msra.mxu0 0.0
        %6891 = vmatprep.subr.mxu0 0.0
        %6892 = vmatpush1.msra.mxu0 0.0
        %6893 = vmatprep.subr.mxu0 0.0
        %6894 = vmatpush1.msra.mxu0 0.0
        %6895 = vmatprep.subr.mxu0 0.0
        %6896 = vmatpush1.msra.mxu0 0.0
        %6897 = vmatprep.subr.mxu0 0.0
        %6898 = vmatpush1.msra.mxu0 0.0
        %6899 = vmatprep.subr.mxu0 0.0
        %6900 = vmatpush1.msra.mxu0 0.0
        %6901 = vmatprep.subr.mxu0 0.0
        %6902 = vmatpush1.msra.mxu0 0.0
        %6903 = vmatprep.subr.mxu0 0.0
        %6904 = vmatpush1.msra.mxu0 0.0
        %6905 = vmatprep.subr.mxu0 0.0
        %6906 = vmatpush1.msra.mxu0 0.0
        %6907 = vmatprep.subr.mxu0 0.0
        %6908 = vmatpush1.msra.mxu0 0.0
        %6909 = vmatprep.subr.mxu0 0.0
        %6910 = vmatpush1.msra.mxu0 0.0
        %6911 = vmatprep.subr.mxu0 0.0
        %6912 = vmatpush1.msra.mxu0 0.0
        %6913 = vmatprep.subr.mxu0 0.0
        %6914 = vmatpush1.msra.mxu0 0.0
        %6915 = vmatprep.subr.mxu0 0.0
        %6916 = vmatpush1.msra.mxu0 0.0
        %6917 = vmatprep.subr.mxu0 0.0
        %6918 = vmatpush1.msra.mxu0 0.0
        %6919 = vmatprep.subr.mxu0 0.0
        %6920 = vmatpush1.msra.mxu0 0.0
        %6921 = vmatprep.subr.mxu0 0.0
        %6922 = vmatpush1.msra.mxu0 0.0
        %6923 = vmatprep.subr.mxu0 0.0
        %6924 = vmatpush1.msra.mxu0 0.0
        %6925 = vmatprep.subr.mxu0 0.0
        %6926 = vmatpush1.msra.mxu0 0.0
        %6927 = vmatprep.subr.mxu0 0.0
        %6928 = vmatpush1.msra.mxu0 0.0
        %6929 = vmatprep.subr.mxu0 0.0
        %6930 = vmatpush1.msra.mxu0 0.0
        %6931 = vmatprep.subr.mxu0 0.0
        %6932 = vmatpush1.msra.mxu0 0.0
        %6933 = vmatprep.subr.mxu0 0.0
        %6934 = vmatpush1.msra.mxu0 0.0
        %6935 = vmatprep.subr.mxu0 0.0
        %6936 = vmatpush1.msra.mxu0 0.0
        %6937 = vmatprep.subr.mxu0 0.0
        %6938 = vmatpush1.msra.mxu0 0.0
        %6939 = vmatprep.subr.mxu0 0.0
        %6940 = vmatpush1.msra.mxu0 0.0
        %6941 = vmatprep.subr.mxu0 0.0
        %6942 = vmatpush1.msra.mxu0 0.0
        %6943 = vmatprep.mubr.f32.mxu0 0.0
        %6944 = vmatmul.mubr.f32.gmra.mrb[0].mxu0 %v6868
        %v6945 = vpop.f32.mrb[0].mxu0
        %v6946 = vadd.f32 0.0, %v6945
        %v6947 = vpop.f32.mrb[0].mxu0
        %6948 = vmatprep.mubr.f32.mxu0 0.0
        %6949 = vmatmul.mubr.f32.gmra.mrb[0].mxu0 %v6871
        %v6950 = vpop.f32.mrb[0].mxu0
        %v6951 = vadd.f32 0.0, %v6950
        %v6952 = vpop.f32.mrb[0].mxu0
        %6953 = vmatprep.mubr.f32.mxu0 0.0
        %6954 = vmatmul.mubr.f32.gmra.mrb[0].mxu0 %v6874
        %v6955 = vpop.f32.mrb[0].mxu0
        %v6956 = vadd.f32 0.0, %v6955
        %v6957 = vpop.f32.mrb[0].mxu0
        %6958 = vmatprep.mubr.f32.mxu0 0.0
        %6959 = vmatmul.mubr.f32.gmra.mrb[0].mxu0 %v6877
        %v6960 = vpop.f32.mrb[0].mxu0
        %v6961 = vadd.f32 0.0, %v6960
        %v6962 = vpop.f32.mrb[0].mxu0
        %6963 = vdwg.mxu0
        %v6965 = vsel %vm4456, %v6783, 0
        %v6968 = vsel %vm4456, %v6784, 0
        %v6971 = vsel %vm4456, %v6785, 0
        %v6974 = vsel %vm4456, %v6786, 0
        %6976 = vmatprep.subr.mxu0 0.0
        %6977 = vmatpush1.msra.mxu0 %v6775
        %6978 = vmatprep.subr.mxu0 0.0
        %6979 = vmatpush1.msra.mxu0 %v6780
        %6980 = vmatprep.subr.mxu0 0.0
        %6981 = vmatpush1.msra.mxu0 0.0
        %6982 = vmatprep.subr.mxu0 0.0
        %6983 = vmatpush1.msra.mxu0 0.0
        %6984 = vmatprep.subr.mxu0 0.0
        %6985 = vmatpush1.msra.mxu0 0.0
        %6986 = vmatprep.subr.mxu0 0.0
        %6987 = vmatpush1.msra.mxu0 0.0
        %6988 = vmatprep.subr.mxu0 0.0
        %6989 = vmatpush1.msra.mxu0 0.0
        %6990 = vmatprep.subr.mxu0 0.0
        %6991 = vmatpush1.msra.mxu0 0.0
        %6992 = vmatprep.subr.mxu0 0.0
        %6993 = vmatpush1.msra.mxu0 0.0
        %6994 = vmatprep.subr.mxu0 0.0
        %6995 = vmatpush1.msra.mxu0 0.0
        %6996 = vmatprep.subr.mxu0 0.0
        %6997 = vmatpush1.msra.mxu0 0.0
        %6998 = vmatprep.subr.mxu0 0.0
        %6999 = vmatpush1.msra.mxu0 0.0
        %7000 = vmatprep.subr.mxu0 0.0
        %7001 = vmatpush1.msra.mxu0 0.0
        %7002 = vmatprep.subr.mxu0 0.0
        %7003 = vmatpush1.msra.mxu0 0.0
        %7004 = vmatprep.subr.mxu0 0.0
        %7005 = vmatpush1.msra.mxu0 0.0
        %7006 = vmatprep.subr.mxu0 0.0
        %7007 = vmatpush1.msra.mxu0 0.0
        %7008 = vmatprep.subr.mxu0 0.0
        %7009 = vmatpush1.msra.mxu0 0.0
        %7010 = vmatprep.subr.mxu0 0.0
        %7011 = vmatpush1.msra.mxu0 0.0
        %7012 = vmatprep.subr.mxu0 0.0
        %7013 = vmatpush1.msra.mxu0 0.0
        %7014 = vmatprep.subr.mxu0 0.0
        %7015 = vmatpush1.msra.mxu0 0.0
        %7016 = vmatprep.subr.mxu0 0.0
        %7017 = vmatpush1.msra.mxu0 0.0
        %7018 = vmatprep.subr.mxu0 0.0
        %7019 = vmatpush1.msra.mxu0 0.0
        %7020 = vmatprep.subr.mxu0 0.0
        %7021 = vmatpush1.msra.mxu0 0.0
        %7022 = vmatprep.subr.mxu0 0.0
        %7023 = vmatpush1.msra.mxu0 0.0
        %7024 = vmatprep.subr.mxu0 0.0
        %7025 = vmatpush1.msra.mxu0 0.0
        %7026 = vmatprep.subr.mxu0 0.0
        %7027 = vmatpush1.msra.mxu0 0.0
        %7028 = vmatprep.subr.mxu0 0.0
        %7029 = vmatpush1.msra.mxu0 0.0
        %7030 = vmatprep.subr.mxu0 0.0
        %7031 = vmatpush1.msra.mxu0 0.0
        %7032 = vmatprep.subr.mxu0 0.0
        %7033 = vmatpush1.msra.mxu0 0.0
        %7034 = vmatprep.subr.mxu0 0.0
        %7035 = vmatpush1.msra.mxu0 0.0
        %7036 = vmatprep.subr.mxu0 0.0
        %7037 = vmatpush1.msra.mxu0 0.0
        %7038 = vmatprep.subr.mxu0 0.0
        %7039 = vmatpush1.msra.mxu0 0.0
        %7040 = vmatprep.mubr.f32.mxu0 0.0
        %7041 = vmatmul.mubr.f32.gmra.mrb[0].mxu0 %v6965
        %v7042 = vpop.f32.mrb[0].mxu0
        %v7043 = vadd.f32 %v6946, %v7042
        %v7044 = vpop.f32.mrb[0].mxu0
        %7045 = vmatprep.mubr.f32.mxu0 0.0
        %7046 = vmatmul.mubr.f32.gmra.mrb[0].mxu0 %v6968
        %v7047 = vpop.f32.mrb[0].mxu0
        %v7048 = vadd.f32 %v6951, %v7047
        %v7049 = vpop.f32.mrb[0].mxu0
        %7050 = vmatprep.mubr.f32.mxu0 0.0
        %7051 = vmatmul.mubr.f32.gmra.mrb[0].mxu0 %v6971
        %v7052 = vpop.f32.mrb[0].mxu0
        %v7053 = vadd.f32 %v6956, %v7052
        %v7054 = vpop.f32.mrb[0].mxu0
        %7055 = vmatprep.mubr.f32.mxu0 0.0
        %7056 = vmatmul.mubr.f32.gmra.mrb[0].mxu0 %v6974
        %v7057 = vpop.f32.mrb[0].mxu0
        %v7058 = vadd.f32 %v6961, %v7057
        %v7059 = vpop.f32.mrb[0].mxu0
        %7060 = vdwg.mxu0
        %7061 = vmatprep.subr.mxu0 0.0
        %7062 = vmatpush1.msra.mxu0 %v5491
        %7063 = vmatprep.subr.mxu0 0.0
        %7064 = vmatpush1.msra.mxu0 %v5492
        %7065 = vmatprep.subr.mxu0 0.0
        %7066 = vmatpush1.msra.mxu0 %v5493
        %7067 = vmatprep.subr.mxu0 0.0
        %7068 = vmatpush1.msra.mxu0 %v5494
        %7069 = vmatprep.subr.mxu0 0.0
        %7070 = vmatpush1.msra.mxu0 %v5495
        %7071 = vmatprep.subr.mxu0 0.0
        %7072 = vmatpush1.msra.mxu0 %v5496
        %7073 = vmatprep.subr.mxu0 0.0
        %7074 = vmatpush1.msra.mxu0 %v5497
        %7075 = vmatprep.subr.mxu0 0.0
        %7076 = vmatpush1.msra.mxu0 %v5498
        %7077 = vmatprep.subr.mxu0 0.0
        %7078 = vmatpush1.msra.mxu0 0.0
        %7079 = vmatprep.subr.mxu0 0.0
        %7080 = vmatpush1.msra.mxu0 0.0
        %7081 = vmatprep.subr.mxu0 0.0
        %7082 = vmatpush1.msra.mxu0 0.0
        %7083 = vmatprep.subr.mxu0 0.0
        %7084 = vmatpush1.msra.mxu0 0.0
        %7085 = vmatprep.subr.mxu0 0.0
        %7086 = vmatpush1.msra.mxu0 0.0
        %7087 = vmatprep.subr.mxu0 0.0
        %7088 = vmatpush1.msra.mxu0 0.0
        %7089 = vmatprep.subr.mxu0 0.0
        %7090 = vmatpush1.msra.mxu0 0.0
        %7091 = vmatprep.subr.mxu0 0.0
        %7092 = vmatpush1.msra.mxu0 0.0
        %7093 = vmatprep.subr.mxu0 0.0
        %7094 = vmatpush1.msra.mxu0 0.0
        %7095 = vmatprep.subr.mxu0 0.0
        %7096 = vmatpush1.msra.mxu0 0.0
        %7097 = vmatprep.subr.mxu0 0.0
        %7098 = vmatpush1.msra.mxu0 0.0
        %7099 = vmatprep.subr.mxu0 0.0
        %7100 = vmatpush1.msra.mxu0 0.0
        %7101 = vmatprep.subr.mxu0 0.0
        %7102 = vmatpush1.msra.mxu0 0.0
        %7103 = vmatprep.subr.mxu0 0.0
        %7104 = vmatpush1.msra.mxu0 0.0
        %7105 = vmatprep.subr.mxu0 0.0
        %7106 = vmatpush1.msra.mxu0 0.0
        %7107 = vmatprep.subr.mxu0 0.0
        %7108 = vmatpush1.msra.mxu0 0.0
        %7109 = vmatprep.subr.mxu0 0.0
        %7110 = vmatpush1.msra.mxu0 0.0
        %7111 = vmatprep.subr.mxu0 0.0
        %7112 = vmatpush1.msra.mxu0 0.0
        %7113 = vmatprep.subr.mxu0 0.0
        %7114 = vmatpush1.msra.mxu0 0.0
        %7115 = vmatprep.subr.mxu0 0.0
        %7116 = vmatpush1.msra.mxu0 0.0
        %7117 = vmatprep.subr.mxu0 0.0
        %7118 = vmatpush1.msra.mxu0 0.0
        %7119 = vmatprep.subr.mxu0 0.0
        %7120 = vmatpush1.msra.mxu0 0.0
        %7121 = vmatprep.subr.mxu0 0.0
        %7122 = vmatpush1.msra.mxu0 0.0
        %7123 = vmatprep.subr.mxu0 0.0
        %7124 = vmatpush1.msra.mxu0 0.0
        %7125 = vmatprep.mubr.f32.mxu0 0.0
        %7126 = vmatmul.mubr.f32.gmra.mrb[0].mxu0 %v6703
        %v7127 = vpop.f32.mrb[0].mxu0
        %v7128 = vadd.f32 0.0, %v7127
        %v7129 = vpop.f32.mrb[0].mxu0
        %7130 = vmatprep.mubr.f32.mxu0 0.0
        %7131 = vmatmul.mubr.f32.gmra.mrb[0].mxu0 %v6706
        %v7132 = vpop.f32.mrb[0].mxu0
        %v7133 = vadd.f32 0.0, %v7132
        %v7134 = vpop.f32.mrb[0].mxu0
        %7135 = vdwg.mxu0
        %s7136 = scalar_lea.vmem %s22, 64
        %v7137 = vld [vmem:[%s7136] sm:$0xff]
        %v7138 = vld [vmem:[%s7136 + $0x8] sm:$0xff]
        %v7139 = vld [vmem:[%s7136 + $0x10] sm:$0xff]
        %v7140 = vld [vmem:[%s7136 + $0x18] sm:$0xff]
        %v7142 = vsel %vm4456, %v7137, 0
        %v7145 = vsel %vm4456, %v7138, 0
        %v7148 = vsel %vm4456, %v7139, 0
        %v7151 = vsel %vm4456, %v7140, 0
        %7153 = vmatprep.subr.mxu0 0.0
        %7154 = vmatpush1.msra.mxu0 %v7128
        %7155 = vmatprep.subr.mxu0 0.0
        %7156 = vmatpush1.msra.mxu0 %v7133
        %7157 = vmatprep.subr.mxu0 0.0
        %7158 = vmatpush1.msra.mxu0 0.0
        %7159 = vmatprep.subr.mxu0 0.0
        %7160 = vmatpush1.msra.mxu0 0.0
        %7161 = vmatprep.subr.mxu0 0.0
        %7162 = vmatpush1.msra.mxu0 0.0
        %7163 = vmatprep.subr.mxu0 0.0
        %7164 = vmatpush1.msra.mxu0 0.0
        %7165 = vmatprep.subr.mxu0 0.0
        %7166 = vmatpush1.msra.mxu0 0.0
        %7167 = vmatprep.subr.mxu0 0.0
        %7168 = vmatpush1.msra.mxu0 0.0
        %7169 = vmatprep.subr.mxu0 0.0
        %7170 = vmatpush1.msra.mxu0 0.0
        %7171 = vmatprep.subr.mxu0 0.0
        %7172 = vmatpush1.msra.mxu0 0.0
        %7173 = vmatprep.subr.mxu0 0.0
        %7174 = vmatpush1.msra.mxu0 0.0
        %7175 = vmatprep.subr.mxu0 0.0
        %7176 = vmatpush1.msra.mxu0 0.0
        %7177 = vmatprep.subr.mxu0 0.0
        %7178 = vmatpush1.msra.mxu0 0.0
        %7179 = vmatprep.subr.mxu0 0.0
        %7180 = vmatpush1.msra.mxu0 0.0
        %7181 = vmatprep.subr.mxu0 0.0
        %7182 = vmatpush1.msra.mxu0 0.0
        %7183 = vmatprep.subr.mxu0 0.0
        %7184 = vmatpush1.msra.mxu0 0.0
        %7185 = vmatprep.subr.mxu0 0.0
        %7186 = vmatpush1.msra.mxu0 0.0
        %7187 = vmatprep.subr.mxu0 0.0
        %7188 = vmatpush1.msra.mxu0 0.0
        %7189 = vmatprep.subr.mxu0 0.0
        %7190 = vmatpush1.msra.mxu0 0.0
        %7191 = vmatprep.subr.mxu0 0.0
        %7192 = vmatpush1.msra.mxu0 0.0
        %7193 = vmatprep.subr.mxu0 0.0
        %7194 = vmatpush1.msra.mxu0 0.0
        %7195 = vmatprep.subr.mxu0 0.0
        %7196 = vmatpush1.msra.mxu0 0.0
        %7197 = vmatprep.subr.mxu0 0.0
        %7198 = vmatpush1.msra.mxu0 0.0
        %7199 = vmatprep.subr.mxu0 0.0
        %7200 = vmatpush1.msra.mxu0 0.0
        %7201 = vmatprep.subr.mxu0 0.0
        %7202 = vmatpush1.msra.mxu0 0.0
        %7203 = vmatprep.subr.mxu0 0.0
        %7204 = vmatpush1.msra.mxu0 0.0
        %7205 = vmatprep.subr.mxu0 0.0
        %7206 = vmatpush1.msra.mxu0 0.0
        %7207 = vmatprep.subr.mxu0 0.0
        %7208 = vmatpush1.msra.mxu0 0.0
        %7209 = vmatprep.subr.mxu0 0.0
        %7210 = vmatpush1.msra.mxu0 0.0
        %7211 = vmatprep.subr.mxu0 0.0
        %7212 = vmatpush1.msra.mxu0 0.0
        %7213 = vmatprep.subr.mxu0 0.0
        %7214 = vmatpush1.msra.mxu0 0.0
        %7215 = vmatprep.subr.mxu0 0.0
        %7216 = vmatpush1.msra.mxu0 0.0
        %7217 = vmatprep.mubr.f32.mxu0 0.0
        %7218 = vmatmul.mubr.f32.gmra.mrb[0].mxu0 %v7142
        %v7219 = vpop.f32.mrb[0].mxu0
        %v7220 = vadd.f32 0.0, %v7219
        %v7221 = vpop.f32.mrb[0].mxu0
        %7222 = vmatprep.mubr.f32.mxu0 0.0
        %7223 = vmatmul.mubr.f32.gmra.mrb[0].mxu0 %v7145
        %v7224 = vpop.f32.mrb[0].mxu0
        %v7225 = vadd.f32 0.0, %v7224
        %v7226 = vpop.f32.mrb[0].mxu0
        %7227 = vmatprep.mubr.f32.mxu0 0.0
        %7228 = vmatmul.mubr.f32.gmra.mrb[0].mxu0 %v7148
        %v7229 = vpop.f32.mrb[0].mxu0
        %v7230 = vadd.f32 0.0, %v7229
        %v7231 = vpop.f32.mrb[0].mxu0
        %7232 = vmatprep.mubr.f32.mxu0 0.0
        %7233 = vmatmul.mubr.f32.gmra.mrb[0].mxu0 %v7151
        %v7234 = vpop.f32.mrb[0].mxu0
        %v7235 = vadd.f32 0.0, %v7234
        %v7236 = vpop.f32.mrb[0].mxu0
        %7237 = vdwg.mxu0
        %v7238 = vadd.f32 %v7043, %v7220
        %v7239 = vadd.f32 %v7048, %v7225
        %v7240 = vadd.f32 %v7053, %v7230
        %v7241 = vadd.f32 %v7058, %v7235
        %7242 = vmatprep.subr.mxu0 0.0
        %7243 = vmatpush1.msra.mxu0 %v5661
        %7244 = vmatprep.subr.mxu0 0.0
        %7245 = vmatpush1.msra.mxu0 %v5662
        %7246 = vmatprep.subr.mxu0 0.0
        %7247 = vmatpush1.msra.mxu0 %v5663
        %7248 = vmatprep.subr.mxu0 0.0
        %7249 = vmatpush1.msra.mxu0 %v5664
        %7250 = vmatprep.subr.mxu0 0.0
        %7251 = vmatpush1.msra.mxu0 %v5665
        %7252 = vmatprep.subr.mxu0 0.0
        %7253 = vmatpush1.msra.mxu0 %v5666
        %7254 = vmatprep.subr.mxu0 0.0
        %7255 = vmatpush1.msra.mxu0 %v5667
        %7256 = vmatprep.subr.mxu0 0.0
        %7257 = vmatpush1.msra.mxu0 %v5668
        %7258 = vmatprep.subr.mxu0 0.0
        %7259 = vmatpush1.msra.mxu0 0.0
        %7260 = vmatprep.subr.mxu0 0.0
        %7261 = vmatpush1.msra.mxu0 0.0
        %7262 = vmatprep.subr.mxu0 0.0
        %7263 = vmatpush1.msra.mxu0 0.0
        %7264 = vmatprep.subr.mxu0 0.0
        %7265 = vmatpush1.msra.mxu0 0.0
        %7266 = vmatprep.subr.mxu0 0.0
        %7267 = vmatpush1.msra.mxu0 0.0
        %7268 = vmatprep.subr.mxu0 0.0
        %7269 = vmatpush1.msra.mxu0 0.0
        %7270 = vmatprep.subr.mxu0 0.0
        %7271 = vmatpush1.msra.mxu0 0.0
        %7272 = vmatprep.subr.mxu0 0.0
        %7273 = vmatpush1.msra.mxu0 0.0
        %7274 = vmatprep.subr.mxu0 0.0
        %7275 = vmatpush1.msra.mxu0 0.0
        %7276 = vmatprep.subr.mxu0 0.0
        %7277 = vmatpush1.msra.mxu0 0.0
        %7278 = vmatprep.subr.mxu0 0.0
        %7279 = vmatpush1.msra.mxu0 0.0
        %7280 = vmatprep.subr.mxu0 0.0
        %7281 = vmatpush1.msra.mxu0 0.0
        %7282 = vmatprep.subr.mxu0 0.0
        %7283 = vmatpush1.msra.mxu0 0.0
        %7284 = vmatprep.subr.mxu0 0.0
        %7285 = vmatpush1.msra.mxu0 0.0
        %7286 = vmatprep.subr.mxu0 0.0
        %7287 = vmatpush1.msra.mxu0 0.0
        %7288 = vmatprep.subr.mxu0 0.0
        %7289 = vmatpush1.msra.mxu0 0.0
        %7290 = vmatprep.subr.mxu0 0.0
        %7291 = vmatpush1.msra.mxu0 0.0
        %7292 = vmatprep.subr.mxu0 0.0
        %7293 = vmatpush1.msra.mxu0 0.0
        %7294 = vmatprep.subr.mxu0 0.0
        %7295 = vmatpush1.msra.mxu0 0.0
        %7296 = vmatprep.subr.mxu0 0.0
        %7297 = vmatpush1.msra.mxu0 0.0
        %7298 = vmatprep.subr.mxu0 0.0
        %7299 = vmatpush1.msra.mxu0 0.0
        %7300 = vmatprep.subr.mxu0 0.0
        %7301 = vmatpush1.msra.mxu0 0.0
        %7302 = vmatprep.subr.mxu0 0.0
        %7303 = vmatpush1.msra.mxu0 0.0
        %7304 = vmatprep.subr.mxu0 0.0
        %7305 = vmatpush1.msra.mxu0 0.0
        %7306 = vmatprep.mubr.f32.mxu0 0.0
        %7307 = vmatmul.mubr.f32.gmra.mrb[0].mxu0 %v6703
        %v7308 = vpop.f32.mrb[0].mxu0
        %v7309 = vadd.f32 0.0, %v7308
        %v7310 = vpop.f32.mrb[0].mxu0
        %7311 = vmatprep.mubr.f32.mxu0 0.0
        %7312 = vmatmul.mubr.f32.gmra.mrb[0].mxu0 %v6706
        %v7313 = vpop.f32.mrb[0].mxu0
        %v7314 = vadd.f32 0.0, %v7313
        %v7315 = vpop.f32.mrb[0].mxu0
        %7316 = vdwg.mxu0
        %s7317 = scalar_lea.vmem %s22, 96
        %v7318 = vld [vmem:[%s7317] sm:$0xff]
        %v7319 = vld [vmem:[%s7317 + $0x8] sm:$0xff]
        %v7320 = vld [vmem:[%s7317 + $0x10] sm:$0xff]
        %v7321 = vld [vmem:[%s7317 + $0x18] sm:$0xff]
        %v7323 = vsel %vm4456, %v7318, 0
        %v7326 = vsel %vm4456, %v7319, 0
        %v7329 = vsel %vm4456, %v7320, 0
        %v7332 = vsel %vm4456, %v7321, 0
        %7334 = vmatprep.subr.mxu0 0.0
        %7335 = vmatpush1.msra.mxu0 %v7309
        %7336 = vmatprep.subr.mxu0 0.0
        %7337 = vmatpush1.msra.mxu0 %v7314
        %7338 = vmatprep.subr.mxu0 0.0
        %7339 = vmatpush1.msra.mxu0 0.0
        %7340 = vmatprep.subr.mxu0 0.0
        %7341 = vmatpush1.msra.mxu0 0.0
        %7342 = vmatprep.subr.mxu0 0.0
        %7343 = vmatpush1.msra.mxu0 0.0
        %7344 = vmatprep.subr.mxu0 0.0
        %7345 = vmatpush1.msra.mxu0 0.0
        %7346 = vmatprep.subr.mxu0 0.0
        %7347 = vmatpush1.msra.mxu0 0.0
        %7348 = vmatprep.subr.mxu0 0.0
        %7349 = vmatpush1.msra.mxu0 0.0
        %7350 = vmatprep.subr.mxu0 0.0
        %7351 = vmatpush1.msra.mxu0 0.0
        %7352 = vmatprep.subr.mxu0 0.0
        %7353 = vmatpush1.msra.mxu0 0.0
        %7354 = vmatprep.subr.mxu0 0.0
        %7355 = vmatpush1.msra.mxu0 0.0
        %7356 = vmatprep.subr.mxu0 0.0
        %7357 = vmatpush1.msra.mxu0 0.0
        %7358 = vmatprep.subr.mxu0 0.0
        %7359 = vmatpush1.msra.mxu0 0.0
        %7360 = vmatprep.subr.mxu0 0.0
        %7361 = vmatpush1.msra.mxu0 0.0
        %7362 = vmatprep.subr.mxu0 0.0
        %7363 = vmatpush1.msra.mxu0 0.0
        %7364 = vmatprep.subr.mxu0 0.0
        %7365 = vmatpush1.msra.mxu0 0.0
        %7366 = vmatprep.subr.mxu0 0.0
        %7367 = vmatpush1.msra.mxu0 0.0
        %7368 = vmatprep.subr.mxu0 0.0
        %7369 = vmatpush1.msra.mxu0 0.0
        %7370 = vmatprep.subr.mxu0 0.0
        %7371 = vmatpush1.msra.mxu0 0.0
        %7372 = vmatprep.subr.mxu0 0.0
        %7373 = vmatpush1.msra.mxu0 0.0
        %7374 = vmatprep.subr.mxu0 0.0
        %7375 = vmatpush1.msra.mxu0 0.0
        %7376 = vmatprep.subr.mxu0 0.0
        %7377 = vmatpush1.msra.mxu0 0.0
        %7378 = vmatprep.subr.mxu0 0.0
        %7379 = vmatpush1.msra.mxu0 0.0
        %7380 = vmatprep.subr.mxu0 0.0
        %7381 = vmatpush1.msra.mxu0 0.0
        %7382 = vmatprep.subr.mxu0 0.0
        %7383 = vmatpush1.msra.mxu0 0.0
        %7384 = vmatprep.subr.mxu0 0.0
        %7385 = vmatpush1.msra.mxu0 0.0
        %7386 = vmatprep.subr.mxu0 0.0
        %7387 = vmatpush1.msra.mxu0 0.0
        %7388 = vmatprep.subr.mxu0 0.0
        %7389 = vmatpush1.msra.mxu0 0.0
        %7390 = vmatprep.subr.mxu0 0.0
        %7391 = vmatpush1.msra.mxu0 0.0
        %7392 = vmatprep.subr.mxu0 0.0
        %7393 = vmatpush1.msra.mxu0 0.0
        %7394 = vmatprep.subr.mxu0 0.0
        %7395 = vmatpush1.msra.mxu0 0.0
        %7396 = vmatprep.subr.mxu0 0.0
        %7397 = vmatpush1.msra.mxu0 0.0
        %7398 = vmatprep.mubr.f32.mxu0 0.0
        %7399 = vmatmul.mubr.f32.gmra.mrb[0].mxu0 %v7323
        %v7400 = vpop.f32.mrb[0].mxu0
        %v7401 = vadd.f32 0.0, %v7400
        %v7402 = vpop.f32.mrb[0].mxu0
        %7403 = vmatprep.mubr.f32.mxu0 0.0
        %7404 = vmatmul.mubr.f32.gmra.mrb[0].mxu0 %v7326
        %v7405 = vpop.f32.mrb[0].mxu0
        %v7406 = vadd.f32 0.0, %v7405
        %v7407 = vpop.f32.mrb[0].mxu0
        %7408 = vmatprep.mubr.f32.mxu0 0.0
        %7409 = vmatmul.mubr.f32.gmra.mrb[0].mxu0 %v7329
        %v7410 = vpop.f32.mrb[0].mxu0
        %v7411 = vadd.f32 0.0, %v7410
        %v7412 = vpop.f32.mrb[0].mxu0
        %7413 = vmatprep.mubr.f32.mxu0 0.0
        %7414 = vmatmul.mubr.f32.gmra.mrb[0].mxu0 %v7332
        %v7415 = vpop.f32.mrb[0].mxu0
        %v7416 = vadd.f32 0.0, %v7415
        %v7417 = vpop.f32.mrb[0].mxu0
        %7418 = vdwg.mxu0
        %v7419 = vadd.f32 %v7238, %v7401
        %v7420 = vadd.f32 %v7239, %v7406
        %v7421 = vadd.f32 %v7240, %v7411
        %v7422 = vadd.f32 %v7241, %v7416
        %7423 = vmatprep.subr.mxu0 0.0
        %7424 = vmatpush1.msra.mxu0 %v5831
        %7425 = vmatprep.subr.mxu0 0.0
        %7426 = vmatpush1.msra.mxu0 %v5832
        %7427 = vmatprep.subr.mxu0 0.0
        %7428 = vmatpush1.msra.mxu0 %v5833
        %7429 = vmatprep.subr.mxu0 0.0
        %7430 = vmatpush1.msra.mxu0 %v5834
        %7431 = vmatprep.subr.mxu0 0.0
        %7432 = vmatpush1.msra.mxu0 %v5835
        %7433 = vmatprep.subr.mxu0 0.0
        %7434 = vmatpush1.msra.mxu0 %v5836
        %7435 = vmatprep.subr.mxu0 0.0
        %7436 = vmatpush1.msra.mxu0 %v5837
        %7437 = vmatprep.subr.mxu0 0.0
        %7438 = vmatpush1.msra.mxu0 %v5838
        %7439 = vmatprep.subr.mxu0 0.0
        %7440 = vmatpush1.msra.mxu0 0.0
        %7441 = vmatprep.subr.mxu0 0.0
        %7442 = vmatpush1.msra.mxu0 0.0
        %7443 = vmatprep.subr.mxu0 0.0
        %7444 = vmatpush1.msra.mxu0 0.0
        %7445 = vmatprep.subr.mxu0 0.0
        %7446 = vmatpush1.msra.mxu0 0.0
        %7447 = vmatprep.subr.mxu0 0.0
        %7448 = vmatpush1.msra.mxu0 0.0
        %7449 = vmatprep.subr.mxu0 0.0
        %7450 = vmatpush1.msra.mxu0 0.0
        %7451 = vmatprep.subr.mxu0 0.0
        %7452 = vmatpush1.msra.mxu0 0.0
        %7453 = vmatprep.subr.mxu0 0.0
        %7454 = vmatpush1.msra.mxu0 0.0
        %7455 = vmatprep.subr.mxu0 0.0
        %7456 = vmatpush1.msra.mxu0 0.0
        %7457 = vmatprep.subr.mxu0 0.0
        %7458 = vmatpush1.msra.mxu0 0.0
        %7459 = vmatprep.subr.mxu0 0.0
        %7460 = vmatpush1.msra.mxu0 0.0
        %7461 = vmatprep.subr.mxu0 0.0
        %7462 = vmatpush1.msra.mxu0 0.0
        %7463 = vmatprep.subr.mxu0 0.0
        %7464 = vmatpush1.msra.mxu0 0.0
        %7465 = vmatprep.subr.mxu0 0.0
        %7466 = vmatpush1.msra.mxu0 0.0
        %7467 = vmatprep.subr.mxu0 0.0
        %7468 = vmatpush1.msra.mxu0 0.0
        %7469 = vmatprep.subr.mxu0 0.0
        %7470 = vmatpush1.msra.mxu0 0.0
        %7471 = vmatprep.subr.mxu0 0.0
        %7472 = vmatpush1.msra.mxu0 0.0
        %7473 = vmatprep.subr.mxu0 0.0
        %7474 = vmatpush1.msra.mxu0 0.0
        %7475 = vmatprep.subr.mxu0 0.0
        %7476 = vmatpush1.msra.mxu0 0.0
        %7477 = vmatprep.subr.mxu0 0.0
        %7478 = vmatpush1.msra.mxu0 0.0
        %7479 = vmatprep.subr.mxu0 0.0
        %7480 = vmatpush1.msra.mxu0 0.0
        %7481 = vmatprep.subr.mxu0 0.0
        %7482 = vmatpush1.msra.mxu0 0.0
        %7483 = vmatprep.subr.mxu0 0.0
        %7484 = vmatpush1.msra.mxu0 0.0
        %7485 = vmatprep.subr.mxu0 0.0
        %7486 = vmatpush1.msra.mxu0 0.0
        %7487 = vmatprep.mubr.f32.mxu0 0.0
        %7488 = vmatmul.mubr.f32.gmra.mrb[0].mxu0 %v6703
        %v7489 = vpop.f32.mrb[0].mxu0
        %v7490 = vadd.f32 0.0, %v7489
        %v7491 = vpop.f32.mrb[0].mxu0
        %7492 = vmatprep.mubr.f32.mxu0 0.0
        %7493 = vmatmul.mubr.f32.gmra.mrb[0].mxu0 %v6706
        %v7494 = vpop.f32.mrb[0].mxu0
        %v7495 = vadd.f32 0.0, %v7494
        %v7496 = vpop.f32.mrb[0].mxu0
        %7497 = vdwg.mxu0
        %s7498 = scalar_lea.vmem %s22, 128
        %v7499 = vld [vmem:[%s7498] sm:$0xff]
        %v7500 = vld [vmem:[%s7498 + $0x8] sm:$0xff]
        %v7501 = vld [vmem:[%s7498 + $0x10] sm:$0xff]
        %v7502 = vld [vmem:[%s7498 + $0x18] sm:$0xff]
        %v7504 = vsel %vm4456, %v7499, 0
        %v7507 = vsel %vm4456, %v7500, 0
        %v7510 = vsel %vm4456, %v7501, 0
        %v7513 = vsel %vm4456, %v7502, 0
        %7515 = vmatprep.subr.mxu0 0.0
        %7516 = vmatpush1.msra.mxu0 %v7490
        %7517 = vmatprep.subr.mxu0 0.0
        %7518 = vmatpush1.msra.mxu0 %v7495
        %7519 = vmatprep.subr.mxu0 0.0
        %7520 = vmatpush1.msra.mxu0 0.0
        %7521 = vmatprep.subr.mxu0 0.0
        %7522 = vmatpush1.msra.mxu0 0.0
        %7523 = vmatprep.subr.mxu0 0.0
        %7524 = vmatpush1.msra.mxu0 0.0
        %7525 = vmatprep.subr.mxu0 0.0
        %7526 = vmatpush1.msra.mxu0 0.0
        %7527 = vmatprep.subr.mxu0 0.0
        %7528 = vmatpush1.msra.mxu0 0.0
        %7529 = vmatprep.subr.mxu0 0.0
        %7530 = vmatpush1.msra.mxu0 0.0
        %7531 = vmatprep.subr.mxu0 0.0
        %7532 = vmatpush1.msra.mxu0 0.0
        %7533 = vmatprep.subr.mxu0 0.0
        %7534 = vmatpush1.msra.mxu0 0.0
        %7535 = vmatprep.subr.mxu0 0.0
        %7536 = vmatpush1.msra.mxu0 0.0
        %7537 = vmatprep.subr.mxu0 0.0
        %7538 = vmatpush1.msra.mxu0 0.0
        %7539 = vmatprep.subr.mxu0 0.0
        %7540 = vmatpush1.msra.mxu0 0.0
        %7541 = vmatprep.subr.mxu0 0.0
        %7542 = vmatpush1.msra.mxu0 0.0
        %7543 = vmatprep.subr.mxu0 0.0
        %7544 = vmatpush1.msra.mxu0 0.0
        %7545 = vmatprep.subr.mxu0 0.0
        %7546 = vmatpush1.msra.mxu0 0.0
        %7547 = vmatprep.subr.mxu0 0.0
        %7548 = vmatpush1.msra.mxu0 0.0
        %7549 = vmatprep.subr.mxu0 0.0
        %7550 = vmatpush1.msra.mxu0 0.0
        %7551 = vmatprep.subr.mxu0 0.0
        %7552 = vmatpush1.msra.mxu0 0.0
        %7553 = vmatprep.subr.mxu0 0.0
        %7554 = vmatpush1.msra.mxu0 0.0
        %7555 = vmatprep.subr.mxu0 0.0
        %7556 = vmatpush1.msra.mxu0 0.0
        %7557 = vmatprep.subr.mxu0 0.0
        %7558 = vmatpush1.msra.mxu0 0.0
        %7559 = vmatprep.subr.mxu0 0.0
        %7560 = vmatpush1.msra.mxu0 0.0
        %7561 = vmatprep.subr.mxu0 0.0
        %7562 = vmatpush1.msra.mxu0 0.0
        %7563 = vmatprep.subr.mxu0 0.0
        %7564 = vmatpush1.msra.mxu0 0.0
        %7565 = vmatprep.subr.mxu0 0.0
        %7566 = vmatpush1.msra.mxu0 0.0
        %7567 = vmatprep.subr.mxu0 0.0
        %7568 = vmatpush1.msra.mxu0 0.0
        %7569 = vmatprep.subr.mxu0 0.0
        %7570 = vmatpush1.msra.mxu0 0.0
        %7571 = vmatprep.subr.mxu0 0.0
        %7572 = vmatpush1.msra.mxu0 0.0
        %7573 = vmatprep.subr.mxu0 0.0
        %7574 = vmatpush1.msra.mxu0 0.0
        %7575 = vmatprep.subr.mxu0 0.0
        %7576 = vmatpush1.msra.mxu0 0.0
        %7577 = vmatprep.subr.mxu0 0.0
        %7578 = vmatpush1.msra.mxu0 0.0
        %7579 = vmatprep.mubr.f32.mxu0 0.0
        %7580 = vmatmul.mubr.f32.gmra.mrb[0].mxu0 %v7504
        %v7581 = vpop.f32.mrb[0].mxu0
        %v7582 = vadd.f32 0.0, %v7581
        %v7583 = vpop.f32.mrb[0].mxu0
        %7584 = vmatprep.mubr.f32.mxu0 0.0
        %7585 = vmatmul.mubr.f32.gmra.mrb[0].mxu0 %v7507
        %v7586 = vpop.f32.mrb[0].mxu0
        %v7587 = vadd.f32 0.0, %v7586
        %v7588 = vpop.f32.mrb[0].mxu0
        %7589 = vmatprep.mubr.f32.mxu0 0.0
        %7590 = vmatmul.mubr.f32.gmra.mrb[0].mxu0 %v7510
        %v7591 = vpop.f32.mrb[0].mxu0
        %v7592 = vadd.f32 0.0, %v7591
        %v7593 = vpop.f32.mrb[0].mxu0
        %7594 = vmatprep.mubr.f32.mxu0 0.0
        %7595 = vmatmul.mubr.f32.gmra.mrb[0].mxu0 %v7513
        %v7596 = vpop.f32.mrb[0].mxu0
        %v7597 = vadd.f32 0.0, %v7596
        %v7598 = vpop.f32.mrb[0].mxu0
        %7599 = vdwg.mxu0
        %v7600 = vadd.f32 %v7419, %v7582
        %v7601 = vadd.f32 %v7420, %v7587
        %v7602 = vadd.f32 %v7421, %v7592
        %v7603 = vadd.f32 %v7422, %v7597
        %7604 = vmatprep.subr.mxu0 0.0
        %7605 = vmatpush1.msra.mxu0 %v6001
        %7606 = vmatprep.subr.mxu0 0.0
        %7607 = vmatpush1.msra.mxu0 %v6002
        %7608 = vmatprep.subr.mxu0 0.0
        %7609 = vmatpush1.msra.mxu0 %v6003
        %7610 = vmatprep.subr.mxu0 0.0
        %7611 = vmatpush1.msra.mxu0 %v6004
        %7612 = vmatprep.subr.mxu0 0.0
        %7613 = vmatpush1.msra.mxu0 %v6005
        %7614 = vmatprep.subr.mxu0 0.0
        %7615 = vmatpush1.msra.mxu0 %v6006
        %7616 = vmatprep.subr.mxu0 0.0
        %7617 = vmatpush1.msra.mxu0 %v6007
        %7618 = vmatprep.subr.mxu0 0.0
        %7619 = vmatpush1.msra.mxu0 %v6008
        %7620 = vmatprep.subr.mxu0 0.0
        %7621 = vmatpush1.msra.mxu0 0.0
        %7622 = vmatprep.subr.mxu0 0.0
        %7623 = vmatpush1.msra.mxu0 0.0
        %7624 = vmatprep.subr.mxu0 0.0
        %7625 = vmatpush1.msra.mxu0 0.0
        %7626 = vmatprep.subr.mxu0 0.0
        %7627 = vmatpush1.msra.mxu0 0.0
        %7628 = vmatprep.subr.mxu0 0.0
        %7629 = vmatpush1.msra.mxu0 0.0
        %7630 = vmatprep.subr.mxu0 0.0
        %7631 = vmatpush1.msra.mxu0 0.0
        %7632 = vmatprep.subr.mxu0 0.0
        %7633 = vmatpush1.msra.mxu0 0.0
        %7634 = vmatprep.subr.mxu0 0.0
        %7635 = vmatpush1.msra.mxu0 0.0
        %7636 = vmatprep.subr.mxu0 0.0
        %7637 = vmatpush1.msra.mxu0 0.0
        %7638 = vmatprep.subr.mxu0 0.0
        %7639 = vmatpush1.msra.mxu0 0.0
        %7640 = vmatprep.subr.mxu0 0.0
        %7641 = vmatpush1.msra.mxu0 0.0
        %7642 = vmatprep.subr.mxu0 0.0
        %7643 = vmatpush1.msra.mxu0 0.0
        %7644 = vmatprep.subr.mxu0 0.0
        %7645 = vmatpush1.msra.mxu0 0.0
        %7646 = vmatprep.subr.mxu0 0.0
        %7647 = vmatpush1.msra.mxu0 0.0
        %7648 = vmatprep.subr.mxu0 0.0
        %7649 = vmatpush1.msra.mxu0 0.0
        %7650 = vmatprep.subr.mxu0 0.0
        %7651 = vmatpush1.msra.mxu0 0.0
        %7652 = vmatprep.subr.mxu0 0.0
        %7653 = vmatpush1.msra.mxu0 0.0
        %7654 = vmatprep.subr.mxu0 0.0
        %7655 = vmatpush1.msra.mxu0 0.0
        %7656 = vmatprep.subr.mxu0 0.0
        %7657 = vmatpush1.msra.mxu0 0.0
        %7658 = vmatprep.subr.mxu0 0.0
        %7659 = vmatpush1.msra.mxu0 0.0
        %7660 = vmatprep.subr.mxu0 0.0
        %7661 = vmatpush1.msra.mxu0 0.0
        %7662 = vmatprep.subr.mxu0 0.0
        %7663 = vmatpush1.msra.mxu0 0.0
        %7664 = vmatprep.subr.mxu0 0.0
        %7665 = vmatpush1.msra.mxu0 0.0
        %7666 = vmatprep.subr.mxu0 0.0
        %7667 = vmatpush1.msra.mxu0 0.0
        %7668 = vmatprep.mubr.f32.mxu0 0.0
        %7669 = vmatmul.mubr.f32.gmra.mrb[0].mxu0 %v6703
        %v7670 = vpop.f32.mrb[0].mxu0
        %v7671 = vadd.f32 0.0, %v7670
        %v7672 = vpop.f32.mrb[0].mxu0
        %7673 = vmatprep.mubr.f32.mxu0 0.0
        %7674 = vmatmul.mubr.f32.gmra.mrb[0].mxu0 %v6706
        %v7675 = vpop.f32.mrb[0].mxu0
        %v7676 = vadd.f32 0.0, %v7675
        %v7677 = vpop.f32.mrb[0].mxu0
        %7678 = vdwg.mxu0
        %s7679 = scalar_lea.vmem %s22, 160
        %v7680 = vld [vmem:[%s7679] sm:$0xff]
        %v7681 = vld [vmem:[%s7679 + $0x8] sm:$0xff]
        %v7682 = vld [vmem:[%s7679 + $0x10] sm:$0xff]
        %v7683 = vld [vmem:[%s7679 + $0x18] sm:$0xff]
        %v7685 = vsel %vm4456, %v7680, 0
        %v7688 = vsel %vm4456, %v7681, 0
        %v7691 = vsel %vm4456, %v7682, 0
        %v7694 = vsel %vm4456, %v7683, 0
        %7696 = vmatprep.subr.mxu0 0.0
        %7697 = vmatpush1.msra.mxu0 %v7671
        %7698 = vmatprep.subr.mxu0 0.0
        %7699 = vmatpush1.msra.mxu0 %v7676
        %7700 = vmatprep.subr.mxu0 0.0
        %7701 = vmatpush1.msra.mxu0 0.0
        %7702 = vmatprep.subr.mxu0 0.0
        %7703 = vmatpush1.msra.mxu0 0.0
        %7704 = vmatprep.subr.mxu0 0.0
        %7705 = vmatpush1.msra.mxu0 0.0
        %7706 = vmatprep.subr.mxu0 0.0
        %7707 = vmatpush1.msra.mxu0 0.0
        %7708 = vmatprep.subr.mxu0 0.0
        %7709 = vmatpush1.msra.mxu0 0.0
        %7710 = vmatprep.subr.mxu0 0.0
        %7711 = vmatpush1.msra.mxu0 0.0
        %7712 = vmatprep.subr.mxu0 0.0
        %7713 = vmatpush1.msra.mxu0 0.0
        %7714 = vmatprep.subr.mxu0 0.0
        %7715 = vmatpush1.msra.mxu0 0.0
        %7716 = vmatprep.subr.mxu0 0.0
        %7717 = vmatpush1.msra.mxu0 0.0
        %7718 = vmatprep.subr.mxu0 0.0
        %7719 = vmatpush1.msra.mxu0 0.0
        %7720 = vmatprep.subr.mxu0 0.0
        %7721 = vmatpush1.msra.mxu0 0.0
        %7722 = vmatprep.subr.mxu0 0.0
        %7723 = vmatpush1.msra.mxu0 0.0
        %7724 = vmatprep.subr.mxu0 0.0
        %7725 = vmatpush1.msra.mxu0 0.0
        %7726 = vmatprep.subr.mxu0 0.0
        %7727 = vmatpush1.msra.mxu0 0.0
        %7728 = vmatprep.subr.mxu0 0.0
        %7729 = vmatpush1.msra.mxu0 0.0
        %7730 = vmatprep.subr.mxu0 0.0
        %7731 = vmatpush1.msra.mxu0 0.0
        %7732 = vmatprep.subr.mxu0 0.0
        %7733 = vmatpush1.msra.mxu0 0.0
        %7734 = vmatprep.subr.mxu0 0.0
        %7735 = vmatpush1.msra.mxu0 0.0
        %7736 = vmatprep.subr.mxu0 0.0
        %7737 = vmatpush1.msra.mxu0 0.0
        %7738 = vmatprep.subr.mxu0 0.0
        %7739 = vmatpush1.msra.mxu0 0.0
        %7740 = vmatprep.subr.mxu0 0.0
        %7741 = vmatpush1.msra.mxu0 0.0
        %7742 = vmatprep.subr.mxu0 0.0
        %7743 = vmatpush1.msra.mxu0 0.0
        %7744 = vmatprep.subr.mxu0 0.0
        %7745 = vmatpush1.msra.mxu0 0.0
        %7746 = vmatprep.subr.mxu0 0.0
        %7747 = vmatpush1.msra.mxu0 0.0
        %7748 = vmatprep.subr.mxu0 0.0
        %7749 = vmatpush1.msra.mxu0 0.0
        %7750 = vmatprep.subr.mxu0 0.0
        %7751 = vmatpush1.msra.mxu0 0.0
        %7752 = vmatprep.subr.mxu0 0.0
        %7753 = vmatpush1.msra.mxu0 0.0
        %7754 = vmatprep.subr.mxu0 0.0
        %7755 = vmatpush1.msra.mxu0 0.0
        %7756 = vmatprep.subr.mxu0 0.0
        %7757 = vmatpush1.msra.mxu0 0.0
        %7758 = vmatprep.subr.mxu0 0.0
        %7759 = vmatpush1.msra.mxu0 0.0
        %7760 = vmatprep.mubr.f32.mxu0 0.0
        %7761 = vmatmul.mubr.f32.gmra.mrb[0].mxu0 %v7685
        %v7762 = vpop.f32.mrb[0].mxu0
        %v7763 = vadd.f32 0.0, %v7762
        %v7764 = vpop.f32.mrb[0].mxu0
        %7765 = vmatprep.mubr.f32.mxu0 0.0
        %7766 = vmatmul.mubr.f32.gmra.mrb[0].mxu0 %v7688
        %v7767 = vpop.f32.mrb[0].mxu0
        %v7768 = vadd.f32 0.0, %v7767
        %v7769 = vpop.f32.mrb[0].mxu0
        %7770 = vmatprep.mubr.f32.mxu0 0.0
        %7771 = vmatmul.mubr.f32.gmra.mrb[0].mxu0 %v7691
        %v7772 = vpop.f32.mrb[0].mxu0
        %v7773 = vadd.f32 0.0, %v7772
        %v7774 = vpop.f32.mrb[0].mxu0
        %7775 = vmatprep.mubr.f32.mxu0 0.0
        %7776 = vmatmul.mubr.f32.gmra.mrb[0].mxu0 %v7694
        %v7777 = vpop.f32.mrb[0].mxu0
        %v7778 = vadd.f32 0.0, %v7777
        %v7779 = vpop.f32.mrb[0].mxu0
        %7780 = vdwg.mxu0
        %v7781 = vadd.f32 %v7600, %v7763
        %v7782 = vadd.f32 %v7601, %v7768
        %v7783 = vadd.f32 %v7602, %v7773
        %v7784 = vadd.f32 %v7603, %v7778
        %7785 = vmatprep.subr.mxu0 0.0
        %7786 = vmatpush1.msra.mxu0 %v6171
        %7787 = vmatprep.subr.mxu0 0.0
        %7788 = vmatpush1.msra.mxu0 %v6172
        %7789 = vmatprep.subr.mxu0 0.0
        %7790 = vmatpush1.msra.mxu0 %v6173
        %7791 = vmatprep.subr.mxu0 0.0
        %7792 = vmatpush1.msra.mxu0 %v6174
        %7793 = vmatprep.subr.mxu0 0.0
        %7794 = vmatpush1.msra.mxu0 %v6175
        %7795 = vmatprep.subr.mxu0 0.0
        %7796 = vmatpush1.msra.mxu0 %v6176
        %7797 = vmatprep.subr.mxu0 0.0
        %7798 = vmatpush1.msra.mxu0 %v6177
        %7799 = vmatprep.subr.mxu0 0.0
        %7800 = vmatpush1.msra.mxu0 %v6178
        %7801 = vmatprep.subr.mxu0 0.0
        %7802 = vmatpush1.msra.mxu0 0.0
        %7803 = vmatprep.subr.mxu0 0.0
        %7804 = vmatpush1.msra.mxu0 0.0
        %7805 = vmatprep.subr.mxu0 0.0
        %7806 = vmatpush1.msra.mxu0 0.0
        %7807 = vmatprep.subr.mxu0 0.0
        %7808 = vmatpush1.msra.mxu0 0.0
        %7809 = vmatprep.subr.mxu0 0.0
        %7810 = vmatpush1.msra.mxu0 0.0
        %7811 = vmatprep.subr.mxu0 0.0
        %7812 = vmatpush1.msra.mxu0 0.0
        %7813 = vmatprep.subr.mxu0 0.0
        %7814 = vmatpush1.msra.mxu0 0.0
        %7815 = vmatprep.subr.mxu0 0.0
        %7816 = vmatpush1.msra.mxu0 0.0
        %7817 = vmatprep.subr.mxu0 0.0
        %7818 = vmatpush1.msra.mxu0 0.0
        %7819 = vmatprep.subr.mxu0 0.0
        %7820 = vmatpush1.msra.mxu0 0.0
        %7821 = vmatprep.subr.mxu0 0.0
        %7822 = vmatpush1.msra.mxu0 0.0
        %7823 = vmatprep.subr.mxu0 0.0
        %7824 = vmatpush1.msra.mxu0 0.0
        %7825 = vmatprep.subr.mxu0 0.0
        %7826 = vmatpush1.msra.mxu0 0.0
        %7827 = vmatprep.subr.mxu0 0.0
        %7828 = vmatpush1.msra.mxu0 0.0
        %7829 = vmatprep.subr.mxu0 0.0
        %7830 = vmatpush1.msra.mxu0 0.0
        %7831 = vmatprep.subr.mxu0 0.0
        %7832 = vmatpush1.msra.mxu0 0.0
        %7833 = vmatprep.subr.mxu0 0.0
        %7834 = vmatpush1.msra.mxu0 0.0
        %7835 = vmatprep.subr.mxu0 0.0
        %7836 = vmatpush1.msra.mxu0 0.0
        %7837 = vmatprep.subr.mxu0 0.0
        %7838 = vmatpush1.msra.mxu0 0.0
        %7839 = vmatprep.subr.mxu0 0.0
        %7840 = vmatpush1.msra.mxu0 0.0
        %7841 = vmatprep.subr.mxu0 0.0
        %7842 = vmatpush1.msra.mxu0 0.0
        %7843 = vmatprep.subr.mxu0 0.0
        %7844 = vmatpush1.msra.mxu0 0.0
        %7845 = vmatprep.subr.mxu0 0.0
        %7846 = vmatpush1.msra.mxu0 0.0
        %7847 = vmatprep.subr.mxu0 0.0
        %7848 = vmatpush1.msra.mxu0 0.0
        %7849 = vmatprep.mubr.f32.mxu0 0.0
        %7850 = vmatmul.mubr.f32.gmra.mrb[0].mxu0 %v6703
        %v7851 = vpop.f32.mrb[0].mxu0
        %v7852 = vadd.f32 0.0, %v7851
        %v7853 = vpop.f32.mrb[0].mxu0
        %7854 = vmatprep.mubr.f32.mxu0 0.0
        %7855 = vmatmul.mubr.f32.gmra.mrb[0].mxu0 %v6706
        %v7856 = vpop.f32.mrb[0].mxu0
        %v7857 = vadd.f32 0.0, %v7856
        %v7858 = vpop.f32.mrb[0].mxu0
        %7859 = vdwg.mxu0
        %s7860 = scalar_lea.vmem %s22, 192
        %v7861 = vld [vmem:[%s7860] sm:$0xff]
        %v7862 = vld [vmem:[%s7860 + $0x8] sm:$0xff]
        %v7863 = vld [vmem:[%s7860 + $0x10] sm:$0xff]
        %v7864 = vld [vmem:[%s7860 + $0x18] sm:$0xff]
        %v7866 = vsel %vm4456, %v7861, 0
        %v7869 = vsel %vm4456, %v7862, 0
        %v7872 = vsel %vm4456, %v7863, 0
        %v7875 = vsel %vm4456, %v7864, 0
        %7877 = vmatprep.subr.mxu0 0.0
        %7878 = vmatpush1.msra.mxu0 %v7852
        %7879 = vmatprep.subr.mxu0 0.0
        %7880 = vmatpush1.msra.mxu0 %v7857
        %7881 = vmatprep.subr.mxu0 0.0
        %7882 = vmatpush1.msra.mxu0 0.0
        %7883 = vmatprep.subr.mxu0 0.0
        %7884 = vmatpush1.msra.mxu0 0.0
        %7885 = vmatprep.subr.mxu0 0.0
        %7886 = vmatpush1.msra.mxu0 0.0
        %7887 = vmatprep.subr.mxu0 0.0
        %7888 = vmatpush1.msra.mxu0 0.0
        %7889 = vmatprep.subr.mxu0 0.0
        %7890 = vmatpush1.msra.mxu0 0.0
        %7891 = vmatprep.subr.mxu0 0.0
        %7892 = vmatpush1.msra.mxu0 0.0
        %7893 = vmatprep.subr.mxu0 0.0
        %7894 = vmatpush1.msra.mxu0 0.0
        %7895 = vmatprep.subr.mxu0 0.0
        %7896 = vmatpush1.msra.mxu0 0.0
        %7897 = vmatprep.subr.mxu0 0.0
        %7898 = vmatpush1.msra.mxu0 0.0
        %7899 = vmatprep.subr.mxu0 0.0
        %7900 = vmatpush1.msra.mxu0 0.0
        %7901 = vmatprep.subr.mxu0 0.0
        %7902 = vmatpush1.msra.mxu0 0.0
        %7903 = vmatprep.subr.mxu0 0.0
        %7904 = vmatpush1.msra.mxu0 0.0
        %7905 = vmatprep.subr.mxu0 0.0
        %7906 = vmatpush1.msra.mxu0 0.0
        %7907 = vmatprep.subr.mxu0 0.0
        %7908 = vmatpush1.msra.mxu0 0.0
        %7909 = vmatprep.subr.mxu0 0.0
        %7910 = vmatpush1.msra.mxu0 0.0
        %7911 = vmatprep.subr.mxu0 0.0
        %7912 = vmatpush1.msra.mxu0 0.0
        %7913 = vmatprep.subr.mxu0 0.0
        %7914 = vmatpush1.msra.mxu0 0.0
        %7915 = vmatprep.subr.mxu0 0.0
        %7916 = vmatpush1.msra.mxu0 0.0
        %7917 = vmatprep.subr.mxu0 0.0
        %7918 = vmatpush1.msra.mxu0 0.0
        %7919 = vmatprep.subr.mxu0 0.0
        %7920 = vmatpush1.msra.mxu0 0.0
        %7921 = vmatprep.subr.mxu0 0.0
        %7922 = vmatpush1.msra.mxu0 0.0
        %7923 = vmatprep.subr.mxu0 0.0
        %7924 = vmatpush1.msra.mxu0 0.0
        %7925 = vmatprep.subr.mxu0 0.0
        %7926 = vmatpush1.msra.mxu0 0.0
        %7927 = vmatprep.subr.mxu0 0.0
        %7928 = vmatpush1.msra.mxu0 0.0
        %7929 = vmatprep.subr.mxu0 0.0
        %7930 = vmatpush1.msra.mxu0 0.0
        %7931 = vmatprep.subr.mxu0 0.0
        %7932 = vmatpush1.msra.mxu0 0.0
        %7933 = vmatprep.subr.mxu0 0.0
        %7934 = vmatpush1.msra.mxu0 0.0
        %7935 = vmatprep.subr.mxu0 0.0
        %7936 = vmatpush1.msra.mxu0 0.0
        %7937 = vmatprep.subr.mxu0 0.0
        %7938 = vmatpush1.msra.mxu0 0.0
        %7939 = vmatprep.subr.mxu0 0.0
        %7940 = vmatpush1.msra.mxu0 0.0
        %7941 = vmatprep.mubr.f32.mxu0 0.0
        %7942 = vmatmul.mubr.f32.gmra.mrb[0].mxu0 %v7866
        %v7943 = vpop.f32.mrb[0].mxu0
        %v7944 = vadd.f32 0.0, %v7943
        %v7945 = vpop.f32.mrb[0].mxu0
        %7946 = vmatprep.mubr.f32.mxu0 0.0
        %7947 = vmatmul.mubr.f32.gmra.mrb[0].mxu0 %v7869
        %v7948 = vpop.f32.mrb[0].mxu0
        %v7949 = vadd.f32 0.0, %v7948
        %v7950 = vpop.f32.mrb[0].mxu0
        %7951 = vmatprep.mubr.f32.mxu0 0.0
        %7952 = vmatmul.mubr.f32.gmra.mrb[0].mxu0 %v7872
        %v7953 = vpop.f32.mrb[0].mxu0
        %v7954 = vadd.f32 0.0, %v7953
        %v7955 = vpop.f32.mrb[0].mxu0
        %7956 = vmatprep.mubr.f32.mxu0 0.0
        %7957 = vmatmul.mubr.f32.gmra.mrb[0].mxu0 %v7875
        %v7958 = vpop.f32.mrb[0].mxu0
        %v7959 = vadd.f32 0.0, %v7958
        %v7960 = vpop.f32.mrb[0].mxu0
        %7961 = vdwg.mxu0
        %v7962 = vadd.f32 %v7781, %v7944
        %v7963 = vadd.f32 %v7782, %v7949
        %v7964 = vadd.f32 %v7783, %v7954
        %v7965 = vadd.f32 %v7784, %v7959
        %7966 = vmatprep.subr.mxu0 0.0
        %7967 = vmatpush1.msra.mxu0 %v6341
        %7968 = vmatprep.subr.mxu0 0.0
        %7969 = vmatpush1.msra.mxu0 %v6342
        %7970 = vmatprep.subr.mxu0 0.0
        %7971 = vmatpush1.msra.mxu0 %v6343
        %7972 = vmatprep.subr.mxu0 0.0
        %7973 = vmatpush1.msra.mxu0 %v6344
        %7974 = vmatprep.subr.mxu0 0.0
        %7975 = vmatpush1.msra.mxu0 %v6345
        %7976 = vmatprep.subr.mxu0 0.0
        %7977 = vmatpush1.msra.mxu0 %v6346
        %7978 = vmatprep.subr.mxu0 0.0
        %7979 = vmatpush1.msra.mxu0 %v6347
        %7980 = vmatprep.subr.mxu0 0.0
        %7981 = vmatpush1.msra.mxu0 %v6348
        %7982 = vmatprep.subr.mxu0 0.0
        %7983 = vmatpush1.msra.mxu0 0.0
        %7984 = vmatprep.subr.mxu0 0.0
        %7985 = vmatpush1.msra.mxu0 0.0
        %7986 = vmatprep.subr.mxu0 0.0
        %7987 = vmatpush1.msra.mxu0 0.0
        %7988 = vmatprep.subr.mxu0 0.0
        %7989 = vmatpush1.msra.mxu0 0.0
        %7990 = vmatprep.subr.mxu0 0.0
        %7991 = vmatpush1.msra.mxu0 0.0
        %7992 = vmatprep.subr.mxu0 0.0
        %7993 = vmatpush1.msra.mxu0 0.0
        %7994 = vmatprep.subr.mxu0 0.0
        %7995 = vmatpush1.msra.mxu0 0.0
        %7996 = vmatprep.subr.mxu0 0.0
        %7997 = vmatpush1.msra.mxu0 0.0
        %7998 = vmatprep.subr.mxu0 0.0
        %7999 = vmatpush1.msra.mxu0 0.0
        %8000 = vmatprep.subr.mxu0 0.0
        %8001 = vmatpush1.msra.mxu0 0.0
        %8002 = vmatprep.subr.mxu0 0.0
        %8003 = vmatpush1.msra.mxu0 0.0
        %8004 = vmatprep.subr.mxu0 0.0
        %8005 = vmatpush1.msra.mxu0 0.0
        %8006 = vmatprep.subr.mxu0 0.0
        %8007 = vmatpush1.msra.mxu0 0.0
        %8008 = vmatprep.subr.mxu0 0.0
        %8009 = vmatpush1.msra.mxu0 0.0
        %8010 = vmatprep.subr.mxu0 0.0
        %8011 = vmatpush1.msra.mxu0 0.0
        %8012 = vmatprep.subr.mxu0 0.0
        %8013 = vmatpush1.msra.mxu0 0.0
        %8014 = vmatprep.subr.mxu0 0.0
        %8015 = vmatpush1.msra.mxu0 0.0
        %8016 = vmatprep.subr.mxu0 0.0
        %8017 = vmatpush1.msra.mxu0 0.0
        %8018 = vmatprep.subr.mxu0 0.0
        %8019 = vmatpush1.msra.mxu0 0.0
        %8020 = vmatprep.subr.mxu0 0.0
        %8021 = vmatpush1.msra.mxu0 0.0
        %8022 = vmatprep.subr.mxu0 0.0
        %8023 = vmatpush1.msra.mxu0 0.0
        %8024 = vmatprep.subr.mxu0 0.0
        %8025 = vmatpush1.msra.mxu0 0.0
        %8026 = vmatprep.subr.mxu0 0.0
        %8027 = vmatpush1.msra.mxu0 0.0
        %8028 = vmatprep.subr.mxu0 0.0
        %8029 = vmatpush1.msra.mxu0 0.0
        %8030 = vmatprep.mubr.f32.mxu0 0.0
        %8031 = vmatmul.mubr.f32.gmra.mrb[0].mxu0 %v6703
        %v8032 = vpop.f32.mrb[0].mxu0
        %v8033 = vadd.f32 0.0, %v8032
        %v8034 = vpop.f32.mrb[0].mxu0
        %8035 = vmatprep.mubr.f32.mxu0 0.0
        %8036 = vmatmul.mubr.f32.gmra.mrb[0].mxu0 %v6706
        %v8037 = vpop.f32.mrb[0].mxu0
        %v8038 = vadd.f32 0.0, %v8037
        %v8039 = vpop.f32.mrb[0].mxu0
        %8040 = vdwg.mxu0
        %s8041 = scalar_lea.vmem %s22, 224
        %v8042 = vld [vmem:[%s8041] sm:$0xff]
        %v8043 = vld [vmem:[%s8041 + $0x8] sm:$0xff]
        %v8044 = vld [vmem:[%s8041 + $0x10] sm:$0xff]
        %v8045 = vld [vmem:[%s8041 + $0x18] sm:$0xff]
        %v8047 = vsel %vm4456, %v8042, 0
        %v8050 = vsel %vm4456, %v8043, 0
        %v8053 = vsel %vm4456, %v8044, 0
        %v8056 = vsel %vm4456, %v8045, 0
        %8058 = vmatprep.subr.mxu0 0.0
        %8059 = vmatpush1.msra.mxu0 %v8033
        %8060 = vmatprep.subr.mxu0 0.0
        %8061 = vmatpush1.msra.mxu0 %v8038
        %8062 = vmatprep.subr.mxu0 0.0
        %8063 = vmatpush1.msra.mxu0 0.0
        %8064 = vmatprep.subr.mxu0 0.0
        %8065 = vmatpush1.msra.mxu0 0.0
        %8066 = vmatprep.subr.mxu0 0.0
        %8067 = vmatpush1.msra.mxu0 0.0
        %8068 = vmatprep.subr.mxu0 0.0
        %8069 = vmatpush1.msra.mxu0 0.0
        %8070 = vmatprep.subr.mxu0 0.0
        %8071 = vmatpush1.msra.mxu0 0.0
        %8072 = vmatprep.subr.mxu0 0.0
        %8073 = vmatpush1.msra.mxu0 0.0
        %8074 = vmatprep.subr.mxu0 0.0
        %8075 = vmatpush1.msra.mxu0 0.0
        %8076 = vmatprep.subr.mxu0 0.0
        %8077 = vmatpush1.msra.mxu0 0.0
        %8078 = vmatprep.subr.mxu0 0.0
        %8079 = vmatpush1.msra.mxu0 0.0
        %8080 = vmatprep.subr.mxu0 0.0
        %8081 = vmatpush1.msra.mxu0 0.0
        %8082 = vmatprep.subr.mxu0 0.0
        %8083 = vmatpush1.msra.mxu0 0.0
        %8084 = vmatprep.subr.mxu0 0.0
        %8085 = vmatpush1.msra.mxu0 0.0
        %8086 = vmatprep.subr.mxu0 0.0
        %8087 = vmatpush1.msra.mxu0 0.0
        %8088 = vmatprep.subr.mxu0 0.0
        %8089 = vmatpush1.msra.mxu0 0.0
        %8090 = vmatprep.subr.mxu0 0.0
        %8091 = vmatpush1.msra.mxu0 0.0
        %8092 = vmatprep.subr.mxu0 0.0
        %8093 = vmatpush1.msra.mxu0 0.0
        %8094 = vmatprep.subr.mxu0 0.0
        %8095 = vmatpush1.msra.mxu0 0.0
        %8096 = vmatprep.subr.mxu0 0.0
        %8097 = vmatpush1.msra.mxu0 0.0
        %8098 = vmatprep.subr.mxu0 0.0
        %8099 = vmatpush1.msra.mxu0 0.0
        %8100 = vmatprep.subr.mxu0 0.0
        %8101 = vmatpush1.msra.mxu0 0.0
        %8102 = vmatprep.subr.mxu0 0.0
        %8103 = vmatpush1.msra.mxu0 0.0
        %8104 = vmatprep.subr.mxu0 0.0
        %8105 = vmatpush1.msra.mxu0 0.0
        %8106 = vmatprep.subr.mxu0 0.0
        %8107 = vmatpush1.msra.mxu0 0.0
        %8108 = vmatprep.subr.mxu0 0.0
        %8109 = vmatpush1.msra.mxu0 0.0
        %8110 = vmatprep.subr.mxu0 0.0
        %8111 = vmatpush1.msra.mxu0 0.0
        %8112 = vmatprep.subr.mxu0 0.0
        %8113 = vmatpush1.msra.mxu0 0.0
        %8114 = vmatprep.subr.mxu0 0.0
        %8115 = vmatpush1.msra.mxu0 0.0
        %8116 = vmatprep.subr.mxu0 0.0
        %8117 = vmatpush1.msra.mxu0 0.0
        %8118 = vmatprep.subr.mxu0 0.0
        %8119 = vmatpush1.msra.mxu0 0.0
        %8120 = vmatprep.subr.mxu0 0.0
        %8121 = vmatpush1.msra.mxu0 0.0
        %8122 = vmatprep.mubr.f32.mxu0 0.0
        %8123 = vmatmul.mubr.f32.gmra.mrb[0].mxu0 %v8047
        %v8124 = vpop.f32.mrb[0].mxu0
        %v8125 = vadd.f32 0.0, %v8124
        %v8126 = vpop.f32.mrb[0].mxu0
        %8127 = vmatprep.mubr.f32.mxu0 0.0
        %8128 = vmatmul.mubr.f32.gmra.mrb[0].mxu0 %v8050
        %v8129 = vpop.f32.mrb[0].mxu0
        %v8130 = vadd.f32 0.0, %v8129
        %v8131 = vpop.f32.mrb[0].mxu0
        %8132 = vmatprep.mubr.f32.mxu0 0.0
        %8133 = vmatmul.mubr.f32.gmra.mrb[0].mxu0 %v8053
        %v8134 = vpop.f32.mrb[0].mxu0
        %v8135 = vadd.f32 0.0, %v8134
        %v8136 = vpop.f32.mrb[0].mxu0
        %8137 = vmatprep.mubr.f32.mxu0 0.0
        %8138 = vmatmul.mubr.f32.gmra.mrb[0].mxu0 %v8056
        %v8139 = vpop.f32.mrb[0].mxu0
        %v8140 = vadd.f32 0.0, %v8139
        %v8141 = vpop.f32.mrb[0].mxu0
        %8142 = vdwg.mxu0
        %v8143 = vadd.f32 %v7962, %v8125
        %v8144 = vadd.f32 %v7963, %v8130
        %v8145 = vadd.f32 %v7964, %v8135
        %v8146 = vadd.f32 %v7965, %v8140
        %8147 = vmatprep.subr.mxu0 0.0
        %8148 = vmatpush1.msra.mxu0 %v6511
        %8149 = vmatprep.subr.mxu0 0.0
        %8150 = vmatpush1.msra.mxu0 %v6512
        %8151 = vmatprep.subr.mxu0 0.0
        %8152 = vmatpush1.msra.mxu0 %v6513
        %8153 = vmatprep.subr.mxu0 0.0
        %8154 = vmatpush1.msra.mxu0 %v6514
        %8155 = vmatprep.subr.mxu0 0.0
        %8156 = vmatpush1.msra.mxu0 %v6515
        %8157 = vmatprep.subr.mxu0 0.0
        %8158 = vmatpush1.msra.mxu0 %v6516
        %8159 = vmatprep.subr.mxu0 0.0
        %8160 = vmatpush1.msra.mxu0 %v6517
        %8161 = vmatprep.subr.mxu0 0.0
        %8162 = vmatpush1.msra.mxu0 %v6518
        %8163 = vmatprep.subr.mxu0 0.0
        %8164 = vmatpush1.msra.mxu0 0.0
        %8165 = vmatprep.subr.mxu0 0.0
        %8166 = vmatpush1.msra.mxu0 0.0
        %8167 = vmatprep.subr.mxu0 0.0
        %8168 = vmatpush1.msra.mxu0 0.0
        %8169 = vmatprep.subr.mxu0 0.0
        %8170 = vmatpush1.msra.mxu0 0.0
        %8171 = vmatprep.subr.mxu0 0.0
        %8172 = vmatpush1.msra.mxu0 0.0
        %8173 = vmatprep.subr.mxu0 0.0
        %8174 = vmatpush1.msra.mxu0 0.0
        %8175 = vmatprep.subr.mxu0 0.0
        %8176 = vmatpush1.msra.mxu0 0.0
        %8177 = vmatprep.subr.mxu0 0.0
        %8178 = vmatpush1.msra.mxu0 0.0
        %8179 = vmatprep.subr.mxu0 0.0
        %8180 = vmatpush1.msra.mxu0 0.0
        %8181 = vmatprep.subr.mxu0 0.0
        %8182 = vmatpush1.msra.mxu0 0.0
        %8183 = vmatprep.subr.mxu0 0.0
        %8184 = vmatpush1.msra.mxu0 0.0
        %8185 = vmatprep.subr.mxu0 0.0
        %8186 = vmatpush1.msra.mxu0 0.0
        %8187 = vmatprep.subr.mxu0 0.0
        %8188 = vmatpush1.msra.mxu0 0.0
        %8189 = vmatprep.subr.mxu0 0.0
        %8190 = vmatpush1.msra.mxu0 0.0
        %8191 = vmatprep.subr.mxu0 0.0
        %8192 = vmatpush1.msra.mxu0 0.0
        %8193 = vmatprep.subr.mxu0 0.0
        %8194 = vmatpush1.msra.mxu0 0.0
        %8195 = vmatprep.subr.mxu0 0.0
        %8196 = vmatpush1.msra.mxu0 0.0
        %8197 = vmatprep.subr.mxu0 0.0
        %8198 = vmatpush1.msra.mxu0 0.0
        %8199 = vmatprep.subr.mxu0 0.0
        %8200 = vmatpush1.msra.mxu0 0.0
        %8201 = vmatprep.subr.mxu0 0.0
        %8202 = vmatpush1.msra.mxu0 0.0
        %8203 = vmatprep.subr.mxu0 0.0
        %8204 = vmatpush1.msra.mxu0 0.0
        %8205 = vmatprep.subr.mxu0 0.0
        %8206 = vmatpush1.msra.mxu0 0.0
        %8207 = vmatprep.subr.mxu0 0.0
        %8208 = vmatpush1.msra.mxu0 0.0
        %8209 = vmatprep.subr.mxu0 0.0
        %8210 = vmatpush1.msra.mxu0 0.0
        %8211 = vmatprep.mubr.f32.mxu0 0.0
        %8212 = vmatmul.mubr.f32.gmra.mrb[0].mxu0 %v6703
        %v8213 = vpop.f32.mrb[0].mxu0
        %v8214 = vadd.f32 0.0, %v8213
        %v8215 = vpop.f32.mrb[0].mxu0
        %8216 = vmatprep.mubr.f32.mxu0 0.0
        %8217 = vmatmul.mubr.f32.gmra.mrb[0].mxu0 %v6706
        %v8218 = vpop.f32.mrb[0].mxu0
        %v8219 = vadd.f32 0.0, %v8218
        %v8220 = vpop.f32.mrb[0].mxu0
        %8221 = vdwg.mxu0
        %s8222 = scalar_lea.vmem %s22, 256
        %v8223 = vld [vmem:[%s8222] sm:$0xff]
        %v8224 = vld [vmem:[%s8222 + $0x8] sm:$0xff]
        %v8225 = vld [vmem:[%s8222 + $0x10] sm:$0xff]
        %v8226 = vld [vmem:[%s8222 + $0x18] sm:$0xff]
        %v8228 = vsel %vm4456, %v8223, 0
        %v8231 = vsel %vm4456, %v8224, 0
        %v8234 = vsel %vm4456, %v8225, 0
        %v8237 = vsel %vm4456, %v8226, 0
        %8239 = vmatprep.subr.mxu0 0.0
        %8240 = vmatpush1.msra.mxu0 %v8214
        %8241 = vmatprep.subr.mxu0 0.0
        %8242 = vmatpush1.msra.mxu0 %v8219
        %8243 = vmatprep.subr.mxu0 0.0
        %8244 = vmatpush1.msra.mxu0 0.0
        %8245 = vmatprep.subr.mxu0 0.0
        %8246 = vmatpush1.msra.mxu0 0.0
        %8247 = vmatprep.subr.mxu0 0.0
        %8248 = vmatpush1.msra.mxu0 0.0
        %8249 = vmatprep.subr.mxu0 0.0
        %8250 = vmatpush1.msra.mxu0 0.0
        %8251 = vmatprep.subr.mxu0 0.0
        %8252 = vmatpush1.msra.mxu0 0.0
        %8253 = vmatprep.subr.mxu0 0.0
        %8254 = vmatpush1.msra.mxu0 0.0
        %8255 = vmatprep.subr.mxu0 0.0
        %8256 = vmatpush1.msra.mxu0 0.0
        %8257 = vmatprep.subr.mxu0 0.0
        %8258 = vmatpush1.msra.mxu0 0.0
        %8259 = vmatprep.subr.mxu0 0.0
        %8260 = vmatpush1.msra.mxu0 0.0
        %8261 = vmatprep.subr.mxu0 0.0
        %8262 = vmatpush1.msra.mxu0 0.0
        %8263 = vmatprep.subr.mxu0 0.0
        %8264 = vmatpush1.msra.mxu0 0.0
        %8265 = vmatprep.subr.mxu0 0.0
        %8266 = vmatpush1.msra.mxu0 0.0
        %8267 = vmatprep.subr.mxu0 0.0
        %8268 = vmatpush1.msra.mxu0 0.0
        %8269 = vmatprep.subr.mxu0 0.0
        %8270 = vmatpush1.msra.mxu0 0.0
        %8271 = vmatprep.subr.mxu0 0.0
        %8272 = vmatpush1.msra.mxu0 0.0
        %8273 = vmatprep.subr.mxu0 0.0
        %8274 = vmatpush1.msra.mxu0 0.0
        %8275 = vmatprep.subr.mxu0 0.0
        %8276 = vmatpush1.msra.mxu0 0.0
        %8277 = vmatprep.subr.mxu0 0.0
        %8278 = vmatpush1.msra.mxu0 0.0
        %8279 = vmatprep.subr.mxu0 0.0
        %8280 = vmatpush1.msra.mxu0 0.0
        %8281 = vmatprep.subr.mxu0 0.0
        %8282 = vmatpush1.msra.mxu0 0.0
        %8283 = vmatprep.subr.mxu0 0.0
        %8284 = vmatpush1.msra.mxu0 0.0
        %8285 = vmatprep.subr.mxu0 0.0
        %8286 = vmatpush1.msra.mxu0 0.0
        %8287 = vmatprep.subr.mxu0 0.0
        %8288 = vmatpush1.msra.mxu0 0.0
        %8289 = vmatprep.subr.mxu0 0.0
        %8290 = vmatpush1.msra.mxu0 0.0
        %8291 = vmatprep.subr.mxu0 0.0
        %8292 = vmatpush1.msra.mxu0 0.0
        %8293 = vmatprep.subr.mxu0 0.0
        %8294 = vmatpush1.msra.mxu0 0.0
        %8295 = vmatprep.subr.mxu0 0.0
        %8296 = vmatpush1.msra.mxu0 0.0
        %8297 = vmatprep.subr.mxu0 0.0
        %8298 = vmatpush1.msra.mxu0 0.0
        %8299 = vmatprep.subr.mxu0 0.0
        %8300 = vmatpush1.msra.mxu0 0.0
        %8301 = vmatprep.subr.mxu0 0.0
        %8302 = vmatpush1.msra.mxu0 0.0
        %8303 = vmatprep.mubr.f32.mxu0 0.0
        %8304 = vmatmul.mubr.f32.gmra.mrb[0].mxu0 %v8228
        %v8305 = vpop.f32.mrb[0].mxu0
        %v8306 = vadd.f32 0.0, %v8305
        %v8307 = vpop.f32.mrb[0].mxu0
        %8308 = vmatprep.mubr.f32.mxu0 0.0
        %8309 = vmatmul.mubr.f32.gmra.mrb[0].mxu0 %v8231
        %v8310 = vpop.f32.mrb[0].mxu0
        %v8311 = vadd.f32 0.0, %v8310
        %v8312 = vpop.f32.mrb[0].mxu0
        %8313 = vmatprep.mubr.f32.mxu0 0.0
        %8314 = vmatmul.mubr.f32.gmra.mrb[0].mxu0 %v8234
        %v8315 = vpop.f32.mrb[0].mxu0
        %v8316 = vadd.f32 0.0, %v8315
        %v8317 = vpop.f32.mrb[0].mxu0
        %8318 = vmatprep.mubr.f32.mxu0 0.0
        %8319 = vmatmul.mubr.f32.gmra.mrb[0].mxu0 %v8237
        %v8320 = vpop.f32.mrb[0].mxu0
        %v8321 = vadd.f32 0.0, %v8320
        %v8322 = vpop.f32.mrb[0].mxu0
        %8323 = vdwg.mxu0
        %v8324 = vadd.f32 %v8143, %v8306
        %v8325 = vadd.f32 %v8144, %v8311
        %v8326 = vadd.f32 %v8145, %v8316
        %v8327 = vadd.f32 %v8146, %v8321
        %v8328 = vld [vmem:[%s23] sm:$0xff]
        %v8329 = vld [vmem:[%s23 + $0x8] sm:$0xff]
        %v8330 = vld [vmem:[%s23 + $0x10] sm:$0xff]
        %v8331 = vld [vmem:[%s23 + $0x18] sm:$0xff]
        %8333 = vset.pattern.permute.xlu0 0
        %8334 = vperm.xlu0 %8333, %v8328
        %v8335 = vpop.permute.xlu0 %8334
        %8338 = vset.pattern.permute.xlu0 0
        %8339 = vperm.xlu0 %8338, %v8329
        %v8340 = vpop.permute.xlu0 %8339
        %8343 = vset.pattern.permute.xlu0 0
        %8344 = vperm.xlu0 %8343, %v8330
        %v8345 = vpop.permute.xlu0 %8344
        %8348 = vset.pattern.permute.xlu0 0
        %8349 = vperm.xlu0 %8348, %v8331
        %v8350 = vpop.permute.xlu0 %8349
        %v8352 = vadd.f32 %v8324, %v8335
        %v8353 = vadd.f32 %v8325, %v8340
        %v8354 = vadd.f32 %v8326, %v8345
        %v8355 = vadd.f32 %v8327, %v8350
        %vm8356 = vcmp.gt.f32.partialorder %v8352, 0.0
        %vm8357 = vcmp.gt.f32.partialorder %v8353, 0.0
        %vm8358 = vcmp.gt.f32.partialorder %v8354, 0.0
        %vm8359 = vcmp.gt.f32.partialorder %v8355, 0.0
        %v8360 = vmul.f32 %v8352, 0.2
        %v8361 = vmul.f32 %v8353, 0.2
        %v8362 = vmul.f32 %v8354, 0.2
        %v8363 = vmul.f32 %v8355, 0.2
        %v8364 = vsel %vm8356, %v8352, %v8360
        %v8365 = vsel %vm8357, %v8353, %v8361
        %v8366 = vsel %vm8358, %v8354, %v8362
        %v8367 = vsel %vm8359, %v8355, %v8363
        %v8368 = vld [vmem:[%s4] sm:$0xff]
        %v8369 = vld [vmem:[%s4 + $0x8] sm:$0xff]
        %v8370 = vld [vmem:[%s4 + $0x10] sm:$0xff]
        %v8371 = vld [vmem:[%s4 + $0x18] sm:$0xff]
        %v8372 = vld [vmem:[%s4 + $0x20] sm:$0xff]
        %v8373 = vld [vmem:[%s4 + $0x28] sm:$0xff]
        %v8374 = vld [vmem:[%s4 + $0x30] sm:$0xff]
        %v8375 = vld [vmem:[%s4 + $0x38] sm:$0xff]
        %v8377 = vsel %vm4856, %v8364, 0
        %v8380 = vsel %vm4856, %v8365, 0
        %v8383 = vsel %vm4856, %v8366, 0
        %v8386 = vsel %vm4856, %v8367, 0
        %8388 = vmatprep.subr.mxu0 0.0
        %8389 = vmatpush1.msra.mxu0 %v8368
        %8390 = vmatprep.subr.mxu0 0.0
        %8391 = vmatpush1.msra.mxu0 %v8369
        %8392 = vmatprep.subr.mxu0 0.0
        %8393 = vmatpush1.msra.mxu0 %v8370
        %8394 = vmatprep.subr.mxu0 0.0
        %8395 = vmatpush1.msra.mxu0 %v8371
        %8396 = vmatprep.subr.mxu0 0.0
        %8397 = vmatpush1.msra.mxu0 %v8372
        %8398 = vmatprep.subr.mxu0 0.0
        %8399 = vmatpush1.msra.mxu0 %v8373
        %8400 = vmatprep.subr.mxu0 0.0
        %8401 = vmatpush1.msra.mxu0 %v8374
        %8402 = vmatprep.subr.mxu0 0.0
        %8403 = vmatpush1.msra.mxu0 %v8375
        %8404 = vmatprep.subr.mxu0 0.0
        %8405 = vmatpush1.msra.mxu0 0.0
        %8406 = vmatprep.subr.mxu0 0.0
        %8407 = vmatpush1.msra.mxu0 0.0
        %8408 = vmatprep.subr.mxu0 0.0
        %8409 = vmatpush1.msra.mxu0 0.0
        %8410 = vmatprep.subr.mxu0 0.0
        %8411 = vmatpush1.msra.mxu0 0.0
        %8412 = vmatprep.subr.mxu0 0.0
        %8413 = vmatpush1.msra.mxu0 0.0
        %8414 = vmatprep.subr.mxu0 0.0
        %8415 = vmatpush1.msra.mxu0 0.0
        %8416 = vmatprep.subr.mxu0 0.0
        %8417 = vmatpush1.msra.mxu0 0.0
        %8418 = vmatprep.subr.mxu0 0.0
        %8419 = vmatpush1.msra.mxu0 0.0
        %8420 = vmatprep.subr.mxu0 0.0
        %8421 = vmatpush1.msra.mxu0 0.0
        %8422 = vmatprep.subr.mxu0 0.0
        %8423 = vmatpush1.msra.mxu0 0.0
        %8424 = vmatprep.subr.mxu0 0.0
        %8425 = vmatpush1.msra.mxu0 0.0
        %8426 = vmatprep.subr.mxu0 0.0
        %8427 = vmatpush1.msra.mxu0 0.0
        %8428 = vmatprep.subr.mxu0 0.0
        %8429 = vmatpush1.msra.mxu0 0.0
        %8430 = vmatprep.subr.mxu0 0.0
        %8431 = vmatpush1.msra.mxu0 0.0
        %8432 = vmatprep.subr.mxu0 0.0
        %8433 = vmatpush1.msra.mxu0 0.0
        %8434 = vmatprep.subr.mxu0 0.0
        %8435 = vmatpush1.msra.mxu0 0.0
        %8436 = vmatprep.subr.mxu0 0.0
        %8437 = vmatpush1.msra.mxu0 0.0
        %8438 = vmatprep.subr.mxu0 0.0
        %8439 = vmatpush1.msra.mxu0 0.0
        %8440 = vmatprep.subr.mxu0 0.0
        %8441 = vmatpush1.msra.mxu0 0.0
        %8442 = vmatprep.subr.mxu0 0.0
        %8443 = vmatpush1.msra.mxu0 0.0
        %8444 = vmatprep.subr.mxu0 0.0
        %8445 = vmatpush1.msra.mxu0 0.0
        %8446 = vmatprep.subr.mxu0 0.0
        %8447 = vmatpush1.msra.mxu0 0.0
        %8448 = vmatprep.subr.mxu0 0.0
        %8449 = vmatpush1.msra.mxu0 0.0
        %8450 = vmatprep.subr.mxu0 0.0
        %8451 = vmatpush1.msra.mxu0 0.0
        %8452 = vmatprep.mubr.f32.mxu0 0.0
        %8453 = vmatmul.mubr.f32.gmra.mrb[0].mxu0 %v8377
        %v8454 = vpop.f32.mrb[0].mxu0
        %v8455 = vadd.f32 0.0, %v8454
        %v8456 = vpop.f32.mrb[0].mxu0
        %8457 = vmatprep.mubr.f32.mxu0 0.0
        %8458 = vmatmul.mubr.f32.gmra.mrb[0].mxu0 %v8380
        %v8459 = vpop.f32.mrb[0].mxu0
        %v8460 = vadd.f32 0.0, %v8459
        %v8461 = vpop.f32.mrb[0].mxu0
        %8462 = vmatprep.mubr.f32.mxu0 0.0
        %8463 = vmatmul.mubr.f32.gmra.mrb[0].mxu0 %v8383
        %v8464 = vpop.f32.mrb[0].mxu0
        %v8465 = vadd.f32 0.0, %v8464
        %v8466 = vpop.f32.mrb[0].mxu0
        %8467 = vmatprep.mubr.f32.mxu0 0.0
        %8468 = vmatmul.mubr.f32.gmra.mrb[0].mxu0 %v8386
        %v8469 = vpop.f32.mrb[0].mxu0
        %v8470 = vadd.f32 0.0, %v8469
        %v8471 = vpop.f32.mrb[0].mxu0
        %8472 = vdwg.mxu0
        %8473 = vst.msk [vmem:[%s835] sm:$0xff] %vm4456, %v8455
        %8474 = vst.msk [vmem:[%s835 + $0x8] sm:$0xff] %vm4456, %v8460
        %8475 = vst.msk [vmem:[%s835 + $0x10] sm:$0xff] %vm4456, %v8465
        %8476 = vst.msk [vmem:[%s835 + $0x18] sm:$0xff] %vm4456, %v8470
        %p8477 = scmp.lt.s32.totalorder %s41, 1
        %s8478 = scalar_select %p8477, %s41, 1
        %s8479 = smul.addr %s8478, 4
        %s8480 = smul.addr %s8479, 8
        %s8481 = scalar_lea.vmem %s24, %s8480
        // Predicated region
        $region145: #{tpu_custom_call.1} parent=115 // pred_check
          %p8482 = pneg %p568
        $region146: #{tpu_custom_call.1} parent=115 // pred_check_branch
          %8484 = sbr.rel (%p8482) target = $region148
        $region147: #{tpu_custom_call.1} parent=115 // pred_region
          _
        $region148: #{tpu_custom_call.1} parent=115 // pred_fallthru
          _
      $region116: #{tpu_custom_call.1} parent=5 // pred_fallthru
        _
      %p8485 = scmp.le.s32.totalorder 2, %s36
      // Predicated region
      $region149: #{tpu_custom_call.1} parent=5 // pred_check
        %p8486 = pneg %p8485
      $region150: #{tpu_custom_call.1} parent=5 // pred_check_branch
        %8488 = sbr.rel (%p8486) target = $region152
      $region151: #{tpu_custom_call.1} parent=5 // pred_region
        %s8489 = ssub.s32 %s36, 2
        // Predicated region
        $region153: #{tpu_custom_call.1} parent=151 // pred_check
          %p8490 = pneg %p574
        $region154: #{tpu_custom_call.1} parent=151 // pred_check_branch
          %8492 = sbr.rel (%p8490) target = $region156
        $region155: #{tpu_custom_call.1} parent=151 // pred_region
          %p8493 = scmp.lt.s32.totalorder %s42, 1
          %s8494 = scalar_select %p8493, %s42, 1
          %s8495 = smul.addr %s8494, 4
          %s8496 = smul.addr %s8495, 8
          %s8497 = scalar_lea.vmem %s24, %s8496
        $region156: #{tpu_custom_call.1} parent=151 // pred_fallthru
          _
      $region152: #{tpu_custom_call.1} parent=5 // pred_fallthru
        _
    $region6: #{tpu_custom_call.1} parent=1 // loop_footer
      %s40 = sadd.s32 1, %s36
    $region7: #{tpu_custom_call.1} parent=1 // loop_footer_branch
      %35 = sbr.rel target = $region3
    $region8: #{tpu_custom_call.1} parent=1 // loop_exit
      _
    %8498 = vsyncpa [#allocation4], 1
    %s8499 = scalar_lea.sflag [#allocation4], 1
    %8500 = vsyncpa %s8499, 1
    %8501 = vsyncpa [#allocation6], 1
    %8502 = vsyncpa [#allocation9], 1
    %8503 = vsyncpa [#allocation12], 1

</llo_original>
